<compile_context>
chip_gen: v5e
topology: v5e:2x2
jax: 0.10.0
libtpu: 0.0.40
codegen_flags: <defaults>
</compile_context>

<pallas_src>
import itertools

import jax
import jax.numpy as jnp
import numpy as np
from jax.experimental import pallas as pl
from jax.experimental.pallas import tpu as pltpu

# keep the pure-JAX reference at full f32 matmul precision for the check below
jax.config.update("jax_default_matmul_precision", "highest")

# ------------------------ small LeViT configuration ------------------------
B = 2
IMG = 64
PATCH = 16
RES = IMG // PATCH            # 4
N = RES * RES                 # 16 tokens per image
EMBED = 32                    # embed_dim[0]
KEY_DIM = 8                   # key_dim[0]
HEADS = 2                     # num_heads[0]
ATTN_RATIO = 2
MLP_RATIO = 2
DEPTH = 2
NUM_CLASSES = 16
D_HEAD = ATTN_RATIO * KEY_DIM           # 16
DH = D_HEAD * HEADS                     # 32
HEAD_STRIDE = 2 * KEY_DIM + D_HEAD      # 32 : [q(8) | k(8) | v(16)] per head
QKV_H = HEADS * HEAD_STRIDE             # 64
NHKD = HEADS * KEY_DIM                  # 16
MLP_H = EMBED * MLP_RATIO               # 64
BN_TOK = B * N                          # 32 tokens across the whole batch
ATTN_SCALE = KEY_DIM ** -0.5
EPS = 1e-5
MASK_NEG = -1e30                        # cross-batch mask (applied before exp)

# ---------------- packed-parameter buffer layout ([TOTAL_ROWS, 64] f32) ----------------
PACK_COLS = 64
# per-depth block (all sub-blocks start at 8-row-aligned offsets)
VEC_OFF = 0                                   # 8 rows: qkv_s, qkv_b, proj_s, proj_b,
                                              #         fc1_s, fc1_b, fc2_s, fc2_b
QKV_W_OFF = 8                                 # EMBED rows, [EMBED, QKV_H], cols permuted [q|k|v]
AB_OFF = QKV_W_OFF + EMBED                    # BN_TOK rows, head h at cols [h*BN_TOK:(h+1)*BN_TOK]
PROJ_W_OFF = AB_OFF + BN_TOK                  # DH rows, cols 0:EMBED
FC1_W_OFF = PROJ_W_OFF + DH                   # EMBED rows, cols 0:MLP_H
FC2_W_OFF = FC1_W_OFF + EMBED                 # MLP_H rows, cols 0:EMBED
DEPTH_ROWS = FC2_W_OFF + MLP_H                # 200
# global block
HEAD_BASE = DEPTH * DEPTH_ROWS                # 400
HEAD_VEC_OFF = HEAD_BASE                      # 8 rows: hbn_scale, hbn_shift, head_bias
HEAD_W_OFF = HEAD_VEC_OFF + 8                 # EMBED rows, cols 0:NUM_CLASSES (rest zero)
POOL_OFF = HEAD_W_OFF + EMBED                 # 8 rows: token-mean matrix, cols 0:BN_TOK
EYE_OFF = POOL_OFF + 8                        # N rows: identity, cols 0:N (MXU transpose)
TOTAL_ROWS = EYE_OFF + N                      # 464

OUT_ROWS = BN_TOK + 8                         # rows 0:BN_TOK rep, rows BN_TOK:BN_TOK+B logits

assert QKV_H <= PACK_COLS and MLP_H <= PACK_COLS
assert HEADS * BN_TOK <= PACK_COLS and BN_TOK <= PACK_COLS
assert B <= 8 and NUM_CLASSES <= EMBED
assert DEPTH_ROWS % 8 == 0 and TOTAL_ROWS % 8 == 0


def _hardswish(x):
    # x * hardtanh(x + 3, 0, 6) / 6
    return x * jnp.clip(x + 3.0, 0.0, 6.0) / 6.0


# ------------------------------ fused Pallas kernel ------------------------------
def _levit_fused_kernel(x_ref, p_ref, out_ref):
    # x_ref : [B*EMBED, N]   (NCHW feature map, free reshape only in the wrapper)
    # p_ref : [TOTAL_ROWS, PACK_COLS] packed parameters
    # out_ref : [OUT_ROWS, EMBED]  rows 0:BN_TOK = rep, rows BN_TOK:BN_TOK+8 = padded logits

    # ---- in-kernel NCHW -> token relayout: x_b^T via (I_N @ x_b^T) on the MXU ----
    eye_n = p_ref[EYE_OFF:EYE_OFF + N, 0:N]                       # [N, N]
    tok = []
    for b in range(B):
        xb = x_ref[b * EMBED:(b + 1) * EMBED, :]                  # [EMBED, N]
        tok.append(jax.lax.dot_general(                           # -> xb^T : [N, EMBED]
            eye_n, xb, (((1,), (1,)), ((), ())),
            preferred_element_type=jnp.float32))
    x = jnp.concatenate(tok, axis=0)                              # [B*N, EMBED]

    for d in range(DEPTH):                                        # static unroll
        base = d * DEPTH_ROWS
        vec = base + VEC_OFF

        # ---------------- Residual(Attention) ----------------
        # qkv Linear_BN; columns pre-permuted to [q_all|k_all|v_all]; ATTN_SCALE
        # already folded into the q columns of the fused BN scale/shift.
        qkv = jnp.dot(x, p_ref[base + QKV_W_OFF:base + QKV_W_OFF + EMBED, :],
                      preferred_element_type=jnp.float32)         # [B*N, QKV_H]
        qkv = qkv * p_ref[vec + 0:vec + 1, :] + p_ref[vec + 1:vec + 2, :]

        head_outs = []
        for h in range(HEADS):                                    # batched over B
            q = qkv[:, h * KEY_DIM:(h + 1) * KEY_DIM]             # [B*N, kd] (pre-scaled)
            k = qkv[:, NHKD + h * KEY_DIM:NHKD + (h + 1) * KEY_DIM]
            v = qkv[:, 2 * NHKD + h * D_HEAD:2 * NHKD + (h + 1) * D_HEAD]
            s = jax.lax.dot_general(q, k, (((1,), (1,)), ((), ())),
                                    preferred_element_type=jnp.float32)  # [B*N, B*N]
            # precomputed block-diagonal attention bias + (-1e30) cross-batch mask
            s = s + p_ref[base + AB_OFF:base + AB_OFF + BN_TOK,
                          h * BN_TOK:(h + 1) * BN_TOK]
            s = s - jnp.max(s, axis=-1, keepdims=True)
            e = jnp.exp(s)
            pr = e * pl.reciprocal(jnp.sum(e, axis=-1, keepdims=True), approx=True)
            head_outs.append(jnp.dot(pr, v, preferred_element_type=jnp.float32))
        o = _hardswish(jnp.concatenate(head_outs, axis=-1))        # [B*N, DH]

        # proj = Sequential(Hardswish(), Linear_BN(dh, dim))
        o = jnp.dot(o, p_ref[base + PROJ_W_OFF:base + PROJ_W_OFF + DH, 0:EMBED],
                    preferred_element_type=jnp.float32)
        o = o * p_ref[vec + 2:vec + 3, 0:EMBED] + p_ref[vec + 3:vec + 4, 0:EMBED]
        x = x + o                                                  # residual

        # ---------------- Residual(MLP) ----------------
        hdn = jnp.dot(x, p_ref[base + FC1_W_OFF:base + FC1_W_OFF + EMBED, :],
                      preferred_element_type=jnp.float32)          # [B*N, MLP_H]
        hdn = _hardswish(hdn * p_ref[vec + 4:vec + 5, :] + p_ref[vec + 5:vec + 6, :])
        m = jnp.dot(hdn, p_ref[base + FC2_W_OFF:base + FC2_W_OFF + MLP_H, 0:EMBED],
                    preferred_element_type=jnp.float32)
        m = m * p_ref[vec + 6:vec + 7, 0:EMBED] + p_ref[vec + 7:vec + 8, 0:EMBED]
        x = x + m                                                  # residual

    # rep = last block output; head = BN_Linear(mean over tokens)
    # token-mean as one matmul against the packed [8, B*N] averaging matrix
    pooled = jnp.dot(p_ref[POOL_OFF:POOL_OFF + 8, 0:BN_TOK], x,
                     preferred_element_type=jnp.float32)           # [8, EMBED]
    y = (pooled * p_ref[HEAD_VEC_OFF + 0:HEAD_VEC_OFF + 1, 0:EMBED]
         + p_ref[HEAD_VEC_OFF + 1:HEAD_VEC_OFF + 2, 0:EMBED])
    logits = (jnp.dot(y, p_ref[HEAD_W_OFF:HEAD_W_OFF + EMBED, 0:EMBED],
                      preferred_element_type=jnp.float32)
              + p_ref[HEAD_VEC_OFF + 2:HEAD_VEC_OFF + 3, 0:EMBED]) # [8, EMBED]

    out_ref[0:BN_TOK, :] = x.astype(out_ref.dtype)
    out_ref[BN_TOK:OUT_ROWS, :] = logits.astype(out_ref.dtype)


def levit_fused_call(x_flat, packed):
    return pl.pallas_call(
        _levit_fused_kernel,
        out_shape=jax.ShapeDtypeStruct((OUT_ROWS, EMBED), jnp.float32),
        grid=(1,),
        in_specs=[
            pl.BlockSpec((B * EMBED, N), lambda i: (0, 0)),
            pl.BlockSpec((TOTAL_ROWS, PACK_COLS), lambda i: (0, 0)),
        ],
        out_specs=pl.BlockSpec((OUT_ROWS, EMBED), lambda i: (0, 0)),
        compiler_params=pltpu.CompilerParams(
            dimension_semantics=("arbitrary",)),
    )(x_flat, packed)


def levit_forward(x_nchw, packed):
    Bx, C, H, W = x_nchw.shape
    # NCHW -> [B*C, H*W] is a FREE reshape; the token transpose (flatten(2).transpose(1,2))
    # is done inside the kernel, so there is no separate XLA transpose / HBM round-trip.
    x_flat = x_nchw.reshape(Bx * C, H * W)
    out = levit_fused_call(x_flat, packed)
    rep = out[:BN_TOK, :].reshape(Bx, N, EMBED)
    logits = out[BN_TOK:BN_TOK + Bx, :NUM_CLASSES]
    loss = jnp.zeros((Bx,), jnp.float32)
    return logits, loss, rep


# ------------------------------ parameter setup ------------------------------
def _fuse_bn(gamma, beta, mean, var):
    scale = gamma / jnp.sqrt(var + EPS)
    shift = beta - mean * scale
    return scale, shift


def make_linear_bn(key, a, b):
    """torch Linear(a, b, bias=False) + BatchNorm1d(b), eval-mode fused."""
    k1, k2, k3, k4, k5 = jax.random.split(key, 5)
    w = jax.random.normal(k1, (a, b), jnp.float32) / jnp.sqrt(float(a))
    gamma = 1.0 + 0.1 * jax.random.normal(k2, (b,), jnp.float32)
    beta = 0.1 * jax.random.normal(k3, (b,), jnp.float32)
    mean = 0.1 * jax.random.normal(k4, (b,), jnp.float32)
    var = jnp.abs(jax.random.normal(k5, (b,), jnp.float32)) + 0.5
    scale, shift = _fuse_bn(gamma, beta, mean, var)
    return w, scale.reshape(1, b), shift.reshape(1, b)


def make_bn_linear(key, a, b):
    """torch BatchNorm1d(a) + Linear(a, b, bias=True), eval-mode."""
    k1, k2, k3, k4, k5, k6 = jax.random.split(key, 6)
    gamma = 1.0 + 0.1 * jax.random.normal(k1, (a,), jnp.float32)
    beta = 0.1 * jax.random.normal(k2, (a,), jnp.float32)
    mean = 0.1 * jax.random.normal(k3, (a,), jnp.float32)
    var = jnp.abs(jax.random.normal(k4, (a,), jnp.float32)) + 0.5
    bn_scale, bn_shift = _fuse_bn(gamma, beta, mean, var)
    w = 0.02 * jax.random.normal(k5, (a, b), jnp.float32)   # trunc_normal approx
    bias = 0.01 * jax.random.normal(k6, (b,), jnp.float32)
    return bn_scale.reshape(1, a), bn_shift.reshape(1, a), w, bias.reshape(1, b)


def make_attention_bias(key, resolution, num_heads):
    """Replicates the attention_bias_idxs construction of the PyTorch module."""
    points = list(itertools.product(range(resolution), range(resolution)))
    offsets = {}
    idxs = []
    for p1 in points:
        for p2 in points:
            off = (abs(p1[0] - p2[0]), abs(p1[1] - p2[1]))
            if off not in offsets:
                offsets[off] = len(offsets)
            idxs.append(offsets[off])
    n = len(points)
    idxs = jnp.asarray(idxs, jnp.int32).reshape(n, n)
    biases = 0.1 * jax.random.normal(key, (num_heads, len(offsets)), jnp.float32)
    # self.ab = attention_biases[:, attention_bias_idxs] -> [H, N, N]
    return jnp.take(biases, idxs.reshape(-1), axis=1).reshape(num_heads, n, n)


def make_params(key):
    keys = jax.random.split(key, 5 * DEPTH + 1)
    acc = {k: [] for k in (
        "qkv_w", "qkv_scale", "qkv_shift", "ab",
        "proj_w", "proj_scale", "proj_shift",
        "fc1_w", "fc1_scale", "fc1_shift",
        "fc2_w", "fc2_scale", "fc2_shift")}
    for d in range(DEPTH):
        kq, kp, ka, k1, k2 = keys[5 * d:5 * d + 5]
        w, s, b = make_linear_bn(kq, EMBED, QKV_H)
        acc["qkv_w"].append(w); acc["qkv_scale"].append(s); acc["qkv_shift"].append(b)
        w, s, b = make_linear_bn(kp, DH, EMBED)
        acc["proj_w"].append(w); acc["proj_scale"].append(s); acc["proj_shift"].append(b)
        acc["ab"].append(make_attention_bias(ka, RES, HEADS))
        w, s, b = make_linear_bn(k1, EMBED, MLP_H)
        acc["fc1_w"].append(w); acc["fc1_scale"].append(s); acc["fc1_shift"].append(b)
        w, s, b = make_linear_bn(k2, MLP_H, EMBED)
        acc["fc2_w"].append(w); acc["fc2_scale"].append(s); acc["fc2_shift"].append(b)
    params = {k: jnp.stack(v, axis=0) for k, v in acc.items()}
    hbn_s, hbn_b, hw, hb = make_bn_linear(keys[-1], EMBED, NUM_CLASSES)
    params.update({"head_bn_scale": hbn_s, "head_bn_shift": hbn_b,
                   "head_w": hw, "head_b": hb})
    return params


def pack_params(p):
    """Pack all weights into one lane-dense [TOTAL_ROWS, 64] f32 buffer (single DMA)."""
    buf = np.zeros((TOTAL_ROWS, PACK_COLS), np.float32)

    # qkv column permutation: per-head interleaved [q|k|v] -> [q_all|k_all|v_all]
    perm = np.concatenate([
        np.concatenate([np.arange(h * HEAD_STRIDE, h * HEAD_STRIDE + KEY_DIM)
                        for h in range(HEADS)]),
        np.concatenate([np.arange(h * HEAD_STRIDE + KEY_DIM, h * HEAD_STRIDE + 2 * KEY_DIM)
                        for h in range(HEADS)]),
        np.concatenate([np.arange(h * HEAD_STRIDE + 2 * KEY_DIM, (h + 1) * HEAD_STRIDE)
                        for h in range(HEADS)]),
    ])
    fold = np.ones((QKV_H,), np.float32)
    fold[:NHKD] = ATTN_SCALE                      # fold attn scale into q BN scale/shift

    for d in range(DEPTH):
        base = d * DEPTH_ROWS
        qkv_w = np.asarray(p["qkv_w"][d])[:, perm]
        qkv_s = np.asarray(p["qkv_scale"][d]).reshape(-1)[perm] * fold
        qkv_b = np.asarray(p["qkv_shift"][d]).reshape(-1)[perm] * fold
        buf[base + VEC_OFF + 0, :QKV_H] = qkv_s
        buf[base + VEC_OFF + 1, :QKV_H] = qkv_b
        buf[base + VEC_OFF + 2, :EMBED] = np.asarray(p["proj_scale"][d]).reshape(-1)
        buf[base + VEC_OFF + 3, :EMBED] = np.asarray(p["proj_shift"][d]).reshape(-1)
        buf[base + VEC_OFF + 4, :MLP_H] = np.asarray(p["fc1_scale"][d]).reshape(-1)
        buf[base + VEC_OFF + 5, :MLP_H] = np.asarray(p["fc1_shift"][d]).reshape(-1)
        buf[base + VEC_OFF + 6, :EMBED] = np.asarray(p["fc2_scale"][d]).reshape(-1)
        buf[base + VEC_OFF + 7, :EMBED] = np.asarray(p["fc2_shift"][d]).reshape(-1)
        buf[base + QKV_W_OFF:base + QKV_W_OFF + EMBED, :QKV_H] = qkv_w
        # block-diagonal attention bias (+ cross-batch mask), one [B*N,B*N] per head
        ab = np.asarray(p["ab"][d])
        for h in range(HEADS):
            blk = np.full((BN_TOK, BN_TOK), MASK_NEG, np.float32)
            for b in range(B):
                blk[b * N:(b + 1) * N, b * N:(b + 1) * N] = ab[h]
            buf[base + AB_OFF:base + AB_OFF + BN_TOK,
                h * BN_TOK:(h + 1) * BN_TOK] = blk
        buf[base + PROJ_W_OFF:base + PROJ_W_OFF + DH, :EMBED] = np.asarray(p["proj_w"][d])
        buf[base + FC1_W_OFF:base + FC1_W_OFF + EMBED, :MLP_H] = np.asarray(p["fc1_w"][d])
        buf[base + FC2_W_OFF:base + FC2_W_OFF + MLP_H, :EMBED] = np.asarray(p["fc2_w"][d])

    # classification head (BN_Linear), zero-padded to EMBED lanes
    buf[HEAD_VEC_OFF + 0, :EMBED] = np.asarray(p["head_bn_scale"]).reshape(-1)
    buf[HEAD_VEC_OFF + 1, :EMBED] = np.asarray(p["head_bn_shift"]).reshape(-1)
    buf[HEAD_VEC_OFF + 2, :NUM_CLASSES] = np.asarray(p["head_b"]).reshape(-1)
    buf[HEAD_W_OFF:HEAD_W_OFF + EMBED, :NUM_CLASSES] = np.asarray(p["head_w"])
    # token-mean pooling matrix (rows >= B stay zero)
    for b in range(B):
        buf[POOL_OFF + b, b * N:(b + 1) * N] = 1.0 / N
    # identity for the in-kernel MXU transpose
    buf[EYE_OFF:EYE_OFF + N, :N] = np.eye(N, dtype=np.float32)
    return jnp.asarray(buf)


# --------------------- pure-JAX reference (correctness) ---------------------
def levit_forward_ref(x_nchw, p):
    Bx, C, H, W = x_nchw.shape
    Ntok = H * W
    x = x_nchw.reshape(Bx, C, Ntok).transpose(0, 2, 1)                 # [B, N, C]
    for d in range(DEPTH):
        xt = x.reshape(Bx * Ntok, C)
        qkv = jnp.dot(xt, p["qkv_w"][d]) * p["qkv_scale"][d] + p["qkv_shift"][d]
        qkv = qkv.reshape(Bx, Ntok, HEADS, HEAD_STRIDE)
        q = qkv[..., :KEY_DIM].transpose(0, 2, 1, 3)
        k = qkv[..., KEY_DIM:2 * KEY_DIM].transpose(0, 2, 1, 3)
        v = qkv[..., 2 * KEY_DIM:].transpose(0, 2, 1, 3)
        s = jnp.einsum("bhnk,bhmk->bhnm", q, k) * ATTN_SCALE + p["ab"][d][None]
        a = jax.nn.softmax(s, axis=-1)
        o = jnp.einsum("bhnm,bhmd->bnhd", a, v).reshape(Bx * Ntok, DH)
        o = _hardswish(o)
        o = jnp.dot(o, p["proj_w"][d]) * p["proj_scale"][d] + p["proj_shift"][d]
        x = x + o.reshape(Bx, Ntok, C)
        xt = x.reshape(Bx * Ntok, C)
        hdn = _hardswish(jnp.dot(xt, p["fc1_w"][d]) * p["fc1_scale"][d]
                         + p["fc1_shift"][d])
        m = jnp.dot(hdn, p["fc2_w"][d]) * p["fc2_scale"][d] + p["fc2_shift"][d]
        x = x + m.reshape(Bx, Ntok, C)
    rep = x
    pooled = jnp.mean(x, axis=1)
    out = jnp.dot(pooled * p["head_bn_scale"] + p["head_bn_shift"],
                  p["head_w"]) + p["head_b"]
    return out, jnp.zeros((Bx,), jnp.float32), rep


# ---------------------------------- driver ----------------------------------
if __name__ == "__main__":
    root = jax.random.PRNGKey(0)
    k_in, k_par = jax.random.split(root)
    # input: patch-embedded NCHW feature map [B, embed_dim, res, res]
    x = jax.random.normal(k_in, (B, EMBED, RES, RES), jnp.float32)
    params = make_params(k_par)
    packed = pack_params(params)          # one lane-dense buffer, packed once

    fwd = jax.jit(levit_forward)
    out, loss, rep = fwd(x, packed)
    jax.block_until_ready((out, loss, rep))

    assert out.shape == (B, NUM_CLASSES)
    assert loss.shape == (B,)
    assert rep.shape == (B, N, EMBED)

    # verify the fused kernel against a pure-JAX f32 reference (unpacked params)
    ref_out, _, ref_rep = jax.jit(levit_forward_ref)(x, params)
    np.testing.assert_allclose(np.asarray(out), np.asarray(ref_out),
                               rtol=1e-2, atol=1e-2)
    np.testing.assert_allclose(np.asarray(rep), np.asarray(ref_rep),
                               rtol=1e-2, atol=1e-2)

    print("KERNEL_OK")
</pallas_src>

<mosaic_0001>
module attributes {stable_mosaic.version = 11 : i64} {
  func.func @_levit_fused_kernel(%arg0: i32, %arg1: memref<64x16xf32, #tpu.memory_space<vmem>>, %arg2: memref<464x64xf32, #tpu.memory_space<vmem>>, %arg3: memref<40x32xf32, #tpu.memory_space<vmem>>) attributes {dimension_semantics = [#tpu.dimension_semantics<arbitrary>], iteration_bounds = array<i64: 1>, scalar_prefetch = 0 : i64, scratch_operands = 0 : i64, tpu.core_type = #tpu.core_type<tc>, window_params = [{pipeline_mode = #tpu.pipeline_mode<synchronous>, transform_indices = @transform_0, window_bounds = array<i64: 64, 16>}, {pipeline_mode = #tpu.pipeline_mode<synchronous>, transform_indices = @transform_1, window_bounds = array<i64: 464, 64>}, {pipeline_mode = #tpu.pipeline_mode<synchronous>, transform_indices = @transform_2, window_bounds = array<i64: 40, 32>}]} {
    %c448 = arith.constant 448 : index
    %c0 = arith.constant 0 : index
    %0 = vector.load %arg2[%c448, %c0] : memref<464x64xf32, #tpu.memory_space<vmem>>, vector<16x16xf32>
    %c0_0 = arith.constant 0 : index
    %c0_1 = arith.constant 0 : index
    %1 = vector.load %arg1[%c0_0, %c0_1] : memref<64x16xf32, #tpu.memory_space<vmem>>, vector<32x16xf32>
    %cst = arith.constant dense<0.000000e+00> : vector<16x32xf32>
    %2 = tpu.matmul %0, %1, %cst {dimension_numbers = #tpu.dot_dimension_numbers<[1], [1], [0], [0], [0, 0, 1, 0], [], []>, precision = #tpu.contract_precision<fp32>} : vector<16x16xf32>, vector<32x16xf32>, vector<16x32xf32> -> vector<16x32xf32>
    %c32 = arith.constant 32 : index
    %c0_2 = arith.constant 0 : index
    %3 = vector.load %arg1[%c32, %c0_2] : memref<64x16xf32, #tpu.memory_space<vmem>>, vector<32x16xf32>
    %cst_3 = arith.constant dense<0.000000e+00> : vector<16x32xf32>
    %4 = tpu.matmul %0, %3, %cst_3 {dimension_numbers = #tpu.dot_dimension_numbers<[1], [1], [0], [0], [0, 0, 1, 0], [], []>, precision = #tpu.contract_precision<fp32>} : vector<16x16xf32>, vector<32x16xf32>, vector<16x32xf32> -> vector<16x32xf32>
    %5 = tpu.concatenate %2, %4 in 0 : vector<16x32xf32>, vector<16x32xf32> -> vector<32x32xf32>
    %c8 = arith.constant 8 : index
    %c0_4 = arith.constant 0 : index
    %6 = vector.load %arg2[%c8, %c0_4] : memref<464x64xf32, #tpu.memory_space<vmem>>, vector<32x64xf32>
    %cst_5 = arith.constant dense<0.000000e+00> : vector<32x64xf32>
    %7 = tpu.matmul %5, %6, %cst_5 {dimension_numbers = #tpu.dot_dimension_numbers<[1], [0], [0], [1], [0, 0, 1, 1], [], []>, precision = #tpu.contract_precision<fp32>} : vector<32x32xf32>, vector<32x64xf32>, vector<32x64xf32> -> vector<32x64xf32>
    %c0_6 = arith.constant 0 : index
    %c0_7 = arith.constant 0 : index
    %8 = vector.load %arg2[%c0_6, %c0_7] : memref<464x64xf32, #tpu.memory_space<vmem>>, vector<1x64xf32>
    %9 = vector.broadcast %8 : vector<1x64xf32> to vector<32x64xf32>
    %10 = arith.mulf %7, %9 : vector<32x64xf32>
    %c1 = arith.constant 1 : index
    %c0_8 = arith.constant 0 : index
    %11 = vector.load %arg2[%c1, %c0_8] : memref<464x64xf32, #tpu.memory_space<vmem>>, vector<1x64xf32>
    %12 = vector.broadcast %11 : vector<1x64xf32> to vector<32x64xf32>
    %13 = arith.addf %10, %12 : vector<32x64xf32>
    %14 = vector.extract_strided_slice %13 {offsets = [0, 0], sizes = [32, 8], strides = [1, 1]} : vector<32x64xf32> to vector<32x8xf32>
    %15 = vector.extract_strided_slice %13 {offsets = [0, 16], sizes = [32, 8], strides = [1, 1]} : vector<32x64xf32> to vector<32x8xf32>
    %16 = vector.extract_strided_slice %13 {offsets = [0, 32], sizes = [32, 16], strides = [1, 1]} : vector<32x64xf32> to vector<32x16xf32>
    %cst_9 = arith.constant dense<0.000000e+00> : vector<32x32xf32>
    %17 = tpu.matmul %14, %15, %cst_9 {dimension_numbers = #tpu.dot_dimension_numbers<[1], [1], [0], [0], [0, 0, 1, 0], [], []>, precision = #tpu.contract_precision<fp32>} : vector<32x8xf32>, vector<32x8xf32>, vector<32x32xf32> -> vector<32x32xf32>
    %c40 = arith.constant 40 : index
    %c0_10 = arith.constant 0 : index
    %18 = vector.load %arg2[%c40, %c0_10] : memref<464x64xf32, #tpu.memory_space<vmem>>, vector<32x32xf32>
    %19 = arith.addf %17, %18 : vector<32x32xf32>
    %cst_11 = arith.constant dense<0xFF800000> : vector<32xf32>
    %20 = vector.multi_reduction <maximumf>, %19, %cst_11 [1] : vector<32x32xf32> to vector<32xf32>
    %21 = vector.shape_cast %20 : vector<32xf32> to vector<32x1xf32>
    %22 = vector.broadcast %21 : vector<32x1xf32> to vector<32x32xf32>
    %23 = arith.subf %19, %22 : vector<32x32xf32>
    %24 = math.exp %23 : vector<32x32xf32>
    %cst_12 = arith.constant dense<0.000000e+00> : vector<32xf32>
    %25 = vector.multi_reduction <add>, %24, %cst_12 [1] : vector<32x32xf32> to vector<32xf32>
    %26 = vector.shape_cast %25 : vector<32xf32> to vector<32x1xf32>
    %27 = tpu.reciprocal %26 {approx = true} : vector<32x1xf32> -> vector<32x1xf32>
    %28 = vector.broadcast %27 : vector<32x1xf32> to vector<32x32xf32>
    %29 = arith.mulf %24, %28 : vector<32x32xf32>
    %cst_13 = arith.constant dense<0.000000e+00> : vector<32x16xf32>
    %30 = tpu.matmul %29, %16, %cst_13 {dimension_numbers = #tpu.dot_dimension_numbers<[1], [0], [0], [1], [0, 0, 1, 1], [], []>, precision = #tpu.contract_precision<fp32>} : vector<32x32xf32>, vector<32x16xf32>, vector<32x16xf32> -> vector<32x16xf32>
    %31 = vector.extract_strided_slice %13 {offsets = [0, 8], sizes = [32, 8], strides = [1, 1]} : vector<32x64xf32> to vector<32x8xf32>
    %32 = vector.extract_strided_slice %13 {offsets = [0, 24], sizes = [32, 8], strides = [1, 1]} : vector<32x64xf32> to vector<32x8xf32>
    %33 = vector.extract_strided_slice %13 {offsets = [0, 48], sizes = [32, 16], strides = [1, 1]} : vector<32x64xf32> to vector<32x16xf32>
    %cst_14 = arith.constant dense<0.000000e+00> : vector<32x32xf32>
    %34 = tpu.matmul %31, %32, %cst_14 {dimension_numbers = #tpu.dot_dimension_numbers<[1], [1], [0], [0], [0, 0, 1, 0], [], []>, precision = #tpu.contract_precision<fp32>} : vector<32x8xf32>, vector<32x8xf32>, vector<32x32xf32> -> vector<32x32xf32>
    %c40_15 = arith.constant 40 : index
    %c32_16 = arith.constant 32 : index
    %35 = vector.load %arg2[%c40_15, %c32_16] : memref<464x64xf32, #tpu.memory_space<vmem>>, vector<32x32xf32>
    %36 = arith.addf %34, %35 : vector<32x32xf32>
    %cst_17 = arith.constant dense<0xFF800000> : vector<32xf32>
    %37 = vector.multi_reduction <maximumf>, %36, %cst_17 [1] : vector<32x32xf32> to vector<32xf32>
    %38 = vector.shape_cast %37 : vector<32xf32> to vector<32x1xf32>
    %39 = vector.broadcast %38 : vector<32x1xf32> to vector<32x32xf32>
    %40 = arith.subf %36, %39 : vector<32x32xf32>
    %41 = math.exp %40 : vector<32x32xf32>
    %cst_18 = arith.constant dense<0.000000e+00> : vector<32xf32>
    %42 = vector.multi_reduction <add>, %41, %cst_18 [1] : vector<32x32xf32> to vector<32xf32>
    %43 = vector.shape_cast %42 : vector<32xf32> to vector<32x1xf32>
    %44 = tpu.reciprocal %43 {approx = true} : vector<32x1xf32> -> vector<32x1xf32>
    %45 = vector.broadcast %44 : vector<32x1xf32> to vector<32x32xf32>
    %46 = arith.mulf %41, %45 : vector<32x32xf32>
    %cst_19 = arith.constant dense<0.000000e+00> : vector<32x16xf32>
    %47 = tpu.matmul %46, %33, %cst_19 {dimension_numbers = #tpu.dot_dimension_numbers<[1], [0], [0], [1], [0, 0, 1, 1], [], []>, precision = #tpu.contract_precision<fp32>} : vector<32x32xf32>, vector<32x16xf32>, vector<32x16xf32> -> vector<32x16xf32>
    %48 = tpu.concatenate %30, %47 in 1 : vector<32x16xf32>, vector<32x16xf32> -> vector<32x32xf32>
    %cst_20 = arith.constant 3.000000e+00 : f32
    %49 = vector.broadcast %cst_20 : f32 to vector<32x32xf32>
    %50 = arith.addf %48, %49 : vector<32x32xf32>
    %cst_21 = arith.constant 0.000000e+00 : f32
    %cst_22 = arith.constant 6.000000e+00 : f32
    %51 = vector.broadcast %cst_21 : f32 to vector<32x32xf32>
    %52 = arith.maximumf %51, %50 : vector<32x32xf32>
    %53 = vector.broadcast %cst_22 : f32 to vector<32x32xf32>
    %54 = arith.minimumf %53, %52 : vector<32x32xf32>
    %55 = arith.mulf %48, %54 : vector<32x32xf32>
    %cst_23 = arith.constant 6.000000e+00 : f32
    %56 = vector.broadcast %cst_23 : f32 to vector<32x32xf32>
    %57 = arith.divf %55, %56 : vector<32x32xf32>
    %c72 = arith.constant 72 : index
    %c0_24 = arith.constant 0 : index
    %58 = vector.load %arg2[%c72, %c0_24] : memref<464x64xf32, #tpu.memory_space<vmem>>, vector<32x32xf32>
    %cst_25 = arith.constant dense<0.000000e+00> : vector<32x32xf32>
    %59 = tpu.matmul %57, %58, %cst_25 {dimension_numbers = #tpu.dot_dimension_numbers<[1], [0], [0], [1], [0, 0, 1, 1], [], []>, precision = #tpu.contract_precision<fp32>} : vector<32x32xf32>, vector<32x32xf32>, vector<32x32xf32> -> vector<32x32xf32>
    %c2 = arith.constant 2 : index
    %c0_26 = arith.constant 0 : index
    %60 = vector.load %arg2[%c2, %c0_26] : memref<464x64xf32, #tpu.memory_space<vmem>>, vector<1x32xf32>
    %61 = vector.broadcast %60 : vector<1x32xf32> to vector<32x32xf32>
    %62 = arith.mulf %59, %61 : vector<32x32xf32>
    %c3 = arith.constant 3 : index
    %c0_27 = arith.constant 0 : index
    %63 = vector.load %arg2[%c3, %c0_27] : memref<464x64xf32, #tpu.memory_space<vmem>>, vector<1x32xf32>
    %64 = vector.broadcast %63 : vector<1x32xf32> to vector<32x32xf32>
    %65 = arith.addf %62, %64 : vector<32x32xf32>
    %66 = arith.addf %5, %65 : vector<32x32xf32>
    %c104 = arith.constant 104 : index
    %c0_28 = arith.constant 0 : index
    %67 = vector.load %arg2[%c104, %c0_28] : memref<464x64xf32, #tpu.memory_space<vmem>>, vector<32x64xf32>
    %cst_29 = arith.constant dense<0.000000e+00> : vector<32x64xf32>
    %68 = tpu.matmul %66, %67, %cst_29 {dimension_numbers = #tpu.dot_dimension_numbers<[1], [0], [0], [1], [0, 0, 1, 1], [], []>, precision = #tpu.contract_precision<fp32>} : vector<32x32xf32>, vector<32x64xf32>, vector<32x64xf32> -> vector<32x64xf32>
    %c4 = arith.constant 4 : index
    %c0_30 = arith.constant 0 : index
    %69 = vector.load %arg2[%c4, %c0_30] : memref<464x64xf32, #tpu.memory_space<vmem>>, vector<1x64xf32>
    %70 = vector.broadcast %69 : vector<1x64xf32> to vector<32x64xf32>
    %71 = arith.mulf %68, %70 : vector<32x64xf32>
    %c5 = arith.constant 5 : index
    %c0_31 = arith.constant 0 : index
    %72 = vector.load %arg2[%c5, %c0_31] : memref<464x64xf32, #tpu.memory_space<vmem>>, vector<1x64xf32>
    %73 = vector.broadcast %72 : vector<1x64xf32> to vector<32x64xf32>
    %74 = arith.addf %71, %73 : vector<32x64xf32>
    %cst_32 = arith.constant 3.000000e+00 : f32
    %75 = vector.broadcast %cst_32 : f32 to vector<32x64xf32>
    %76 = arith.addf %74, %75 : vector<32x64xf32>
    %cst_33 = arith.constant 0.000000e+00 : f32
    %cst_34 = arith.constant 6.000000e+00 : f32
    %77 = vector.broadcast %cst_33 : f32 to vector<32x64xf32>
    %78 = arith.maximumf %77, %76 : vector<32x64xf32>
    %79 = vector.broadcast %cst_34 : f32 to vector<32x64xf32>
    %80 = arith.minimumf %79, %78 : vector<32x64xf32>
    %81 = arith.mulf %74, %80 : vector<32x64xf32>
    %cst_35 = arith.constant 6.000000e+00 : f32
    %82 = vector.broadcast %cst_35 : f32 to vector<32x64xf32>
    %83 = arith.divf %81, %82 : vector<32x64xf32>
    %c136 = arith.constant 136 : index
    %c0_36 = arith.constant 0 : index
    %84 = vector.load %arg2[%c136, %c0_36] : memref<464x64xf32, #tpu.memory_space<vmem>>, vector<64x32xf32>
    %cst_37 = arith.constant dense<0.000000e+00> : vector<32x32xf32>
    %85 = tpu.matmul %83, %84, %cst_37 {dimension_numbers = #tpu.dot_dimension_numbers<[1], [0], [0], [1], [0, 0, 1, 1], [], []>, precision = #tpu.contract_precision<fp32>} : vector<32x64xf32>, vector<64x32xf32>, vector<32x32xf32> -> vector<32x32xf32>
    %c6 = arith.constant 6 : index
    %c0_38 = arith.constant 0 : index
    %86 = vector.load %arg2[%c6, %c0_38] : memref<464x64xf32, #tpu.memory_space<vmem>>, vector<1x32xf32>
    %87 = vector.broadcast %86 : vector<1x32xf32> to vector<32x32xf32>
    %88 = arith.mulf %85, %87 : vector<32x32xf32>
    %c7 = arith.constant 7 : index
    %c0_39 = arith.constant 0 : index
    %89 = vector.load %arg2[%c7, %c0_39] : memref<464x64xf32, #tpu.memory_space<vmem>>, vector<1x32xf32>
    %90 = vector.broadcast %89 : vector<1x32xf32> to vector<32x32xf32>
    %91 = arith.addf %88, %90 : vector<32x32xf32>
    %92 = arith.addf %66, %91 : vector<32x32xf32>
    %c208 = arith.constant 208 : index
    %c0_40 = arith.constant 0 : index
    %93 = vector.load %arg2[%c208, %c0_40] : memref<464x64xf32, #tpu.memory_space<vmem>>, vector<32x64xf32>
    %cst_41 = arith.constant dense<0.000000e+00> : vector<32x64xf32>
    %94 = tpu.matmul %92, %93, %cst_41 {dimension_numbers = #tpu.dot_dimension_numbers<[1], [0], [0], [1], [0, 0, 1, 1], [], []>, precision = #tpu.contract_precision<fp32>} : vector<32x32xf32>, vector<32x64xf32>, vector<32x64xf32> -> vector<32x64xf32>
    %c200 = arith.constant 200 : index
    %c0_42 = arith.constant 0 : index
    %95 = vector.load %arg2[%c200, %c0_42] : memref<464x64xf32, #tpu.memory_space<vmem>>, vector<1x64xf32>
    %96 = vector.broadcast %95 : vector<1x64xf32> to vector<32x64xf32>
    %97 = arith.mulf %94, %96 : vector<32x64xf32>
    %c201 = arith.constant 201 : index
    %c0_43 = arith.constant 0 : index
    %98 = vector.load %arg2[%c201, %c0_43] : memref<464x64xf32, #tpu.memory_space<vmem>>, vector<1x64xf32>
    %99 = vector.broadcast %98 : vector<1x64xf32> to vector<32x64xf32>
    %100 = arith.addf %97, %99 : vector<32x64xf32>
    %101 = vector.extract_strided_slice %100 {offsets = [0, 0], sizes = [32, 8], strides = [1, 1]} : vector<32x64xf32> to vector<32x8xf32>
    %102 = vector.extract_strided_slice %100 {offsets = [0, 16], sizes = [32, 8], strides = [1, 1]} : vector<32x64xf32> to vector<32x8xf32>
    %103 = vector.extract_strided_slice %100 {offsets = [0, 32], sizes = [32, 16], strides = [1, 1]} : vector<32x64xf32> to vector<32x16xf32>
    %cst_44 = arith.constant dense<0.000000e+00> : vector<32x32xf32>
    %104 = tpu.matmul %101, %102, %cst_44 {dimension_numbers = #tpu.dot_dimension_numbers<[1], [1], [0], [0], [0, 0, 1, 0], [], []>, precision = #tpu.contract_precision<fp32>} : vector<32x8xf32>, vector<32x8xf32>, vector<32x32xf32> -> vector<32x32xf32>
    %c240 = arith.constant 240 : index
    %c0_45 = arith.constant 0 : index
    %105 = vector.load %arg2[%c240, %c0_45] : memref<464x64xf32, #tpu.memory_space<vmem>>, vector<32x32xf32>
    %106 = arith.addf %104, %105 : vector<32x32xf32>
    %cst_46 = arith.constant dense<0xFF800000> : vector<32xf32>
    %107 = vector.multi_reduction <maximumf>, %106, %cst_46 [1] : vector<32x32xf32> to vector<32xf32>
    %108 = vector.shape_cast %107 : vector<32xf32> to vector<32x1xf32>
    %109 = vector.broadcast %108 : vector<32x1xf32> to vector<32x32xf32>
    %110 = arith.subf %106, %109 : vector<32x32xf32>
    %111 = math.exp %110 : vector<32x32xf32>
    %cst_47 = arith.constant dense<0.000000e+00> : vector<32xf32>
    %112 = vector.multi_reduction <add>, %111, %cst_47 [1] : vector<32x32xf32> to vector<32xf32>
    %113 = vector.shape_cast %112 : vector<32xf32> to vector<32x1xf32>
    %114 = tpu.reciprocal %113 {approx = true} : vector<32x1xf32> -> vector<32x1xf32>
    %115 = vector.broadcast %114 : vector<32x1xf32> to vector<32x32xf32>
    %116 = arith.mulf %111, %115 : vector<32x32xf32>
    %cst_48 = arith.constant dense<0.000000e+00> : vector<32x16xf32>
    %117 = tpu.matmul %116, %103, %cst_48 {dimension_numbers = #tpu.dot_dimension_numbers<[1], [0], [0], [1], [0, 0, 1, 1], [], []>, precision = #tpu.contract_precision<fp32>} : vector<32x32xf32>, vector<32x16xf32>, vector<32x16xf32> -> vector<32x16xf32>
    %118 = vector.extract_strided_slice %100 {offsets = [0, 8], sizes = [32, 8], strides = [1, 1]} : vector<32x64xf32> to vector<32x8xf32>
    %119 = vector.extract_strided_slice %100 {offsets = [0, 24], sizes = [32, 8], strides = [1, 1]} : vector<32x64xf32> to vector<32x8xf32>
    %120 = vector.extract_strided_slice %100 {offsets = [0, 48], sizes = [32, 16], strides = [1, 1]} : vector<32x64xf32> to vector<32x16xf32>
    %cst_49 = arith.constant dense<0.000000e+00> : vector<32x32xf32>
    %121 = tpu.matmul %118, %119, %cst_49 {dimension_numbers = #tpu.dot_dimension_numbers<[1], [1], [0], [0], [0, 0, 1, 0], [], []>, precision = #tpu.contract_precision<fp32>} : vector<32x8xf32>, vector<32x8xf32>, vector<32x32xf32> -> vector<32x32xf32>
    %c240_50 = arith.constant 240 : index
    %c32_51 = arith.constant 32 : index
    %122 = vector.load %arg2[%c240_50, %c32_51] : memref<464x64xf32, #tpu.memory_space<vmem>>, vector<32x32xf32>
    %123 = arith.addf %121, %122 : vector<32x32xf32>
    %cst_52 = arith.constant dense<0xFF800000> : vector<32xf32>
    %124 = vector.multi_reduction <maximumf>, %123, %cst_52 [1] : vector<32x32xf32> to vector<32xf32>
    %125 = vector.shape_cast %124 : vector<32xf32> to vector<32x1xf32>
    %126 = vector.broadcast %125 : vector<32x1xf32> to vector<32x32xf32>
    %127 = arith.subf %123, %126 : vector<32x32xf32>
    %128 = math.exp %127 : vector<32x32xf32>
    %cst_53 = arith.constant dense<0.000000e+00> : vector<32xf32>
    %129 = vector.multi_reduction <add>, %128, %cst_53 [1] : vector<32x32xf32> to vector<32xf32>
    %130 = vector.shape_cast %129 : vector<32xf32> to vector<32x1xf32>
    %131 = tpu.reciprocal %130 {approx = true} : vector<32x1xf32> -> vector<32x1xf32>
    %132 = vector.broadcast %131 : vector<32x1xf32> to vector<32x32xf32>
    %133 = arith.mulf %128, %132 : vector<32x32xf32>
    %cst_54 = arith.constant dense<0.000000e+00> : vector<32x16xf32>
    %134 = tpu.matmul %133, %120, %cst_54 {dimension_numbers = #tpu.dot_dimension_numbers<[1], [0], [0], [1], [0, 0, 1, 1], [], []>, precision = #tpu.contract_precision<fp32>} : vector<32x32xf32>, vector<32x16xf32>, vector<32x16xf32> -> vector<32x16xf32>
    %135 = tpu.concatenate %117, %134 in 1 : vector<32x16xf32>, vector<32x16xf32> -> vector<32x32xf32>
    %cst_55 = arith.constant 3.000000e+00 : f32
    %136 = vector.broadcast %cst_55 : f32 to vector<32x32xf32>
    %137 = arith.addf %135, %136 : vector<32x32xf32>
    %cst_56 = arith.constant 0.000000e+00 : f32
    %cst_57 = arith.constant 6.000000e+00 : f32
    %138 = vector.broadcast %cst_56 : f32 to vector<32x32xf32>
    %139 = arith.maximumf %138, %137 : vector<32x32xf32>
    %140 = vector.broadcast %cst_57 : f32 to vector<32x32xf32>
    %141 = arith.minimumf %140, %139 : vector<32x32xf32>
    %142 = arith.mulf %135, %141 : vector<32x32xf32>
    %cst_58 = arith.constant 6.000000e+00 : f32
    %143 = vector.broadcast %cst_58 : f32 to vector<32x32xf32>
    %144 = arith.divf %142, %143 : vector<32x32xf32>
    %c272 = arith.constant 272 : index
    %c0_59 = arith.constant 0 : index
    %145 = vector.load %arg2[%c272, %c0_59] : memref<464x64xf32, #tpu.memory_space<vmem>>, vector<32x32xf32>
    %cst_60 = arith.constant dense<0.000000e+00> : vector<32x32xf32>
    %146 = tpu.matmul %144, %145, %cst_60 {dimension_numbers = #tpu.dot_dimension_numbers<[1], [0], [0], [1], [0, 0, 1, 1], [], []>, precision = #tpu.contract_precision<fp32>} : vector<32x32xf32>, vector<32x32xf32>, vector<32x32xf32> -> vector<32x32xf32>
    %c202 = arith.constant 202 : index
    %c0_61 = arith.constant 0 : index
    %147 = vector.load %arg2[%c202, %c0_61] : memref<464x64xf32, #tpu.memory_space<vmem>>, vector<1x32xf32>
    %148 = vector.broadcast %147 : vector<1x32xf32> to vector<32x32xf32>
    %149 = arith.mulf %146, %148 : vector<32x32xf32>
    %c203 = arith.constant 203 : index
    %c0_62 = arith.constant 0 : index
    %150 = vector.load %arg2[%c203, %c0_62] : memref<464x64xf32, #tpu.memory_space<vmem>>, vector<1x32xf32>
    %151 = vector.broadcast %150 : vector<1x32xf32> to vector<32x32xf32>
    %152 = arith.addf %149, %151 : vector<32x32xf32>
    %153 = arith.addf %92, %152 : vector<32x32xf32>
    %c304 = arith.constant 304 : index
    %c0_63 = arith.constant 0 : index
    %154 = vector.load %arg2[%c304, %c0_63] : memref<464x64xf32, #tpu.memory_space<vmem>>, vector<32x64xf32>
    %cst_64 = arith.constant dense<0.000000e+00> : vector<32x64xf32>
    %155 = tpu.matmul %153, %154, %cst_64 {dimension_numbers = #tpu.dot_dimension_numbers<[1], [0], [0], [1], [0, 0, 1, 1], [], []>, precision = #tpu.contract_precision<fp32>} : vector<32x32xf32>, vector<32x64xf32>, vector<32x64xf32> -> vector<32x64xf32>
    %c204 = arith.constant 204 : index
    %c0_65 = arith.constant 0 : index
    %156 = vector.load %arg2[%c204, %c0_65] : memref<464x64xf32, #tpu.memory_space<vmem>>, vector<1x64xf32>
    %157 = vector.broadcast %156 : vector<1x64xf32> to vector<32x64xf32>
    %158 = arith.mulf %155, %157 : vector<32x64xf32>
    %c205 = arith.constant 205 : index
    %c0_66 = arith.constant 0 : index
    %159 = vector.load %arg2[%c205, %c0_66] : memref<464x64xf32, #tpu.memory_space<vmem>>, vector<1x64xf32>
    %160 = vector.broadcast %159 : vector<1x64xf32> to vector<32x64xf32>
    %161 = arith.addf %158, %160 : vector<32x64xf32>
    %cst_67 = arith.constant 3.000000e+00 : f32
    %162 = vector.broadcast %cst_67 : f32 to vector<32x64xf32>
    %163 = arith.addf %161, %162 : vector<32x64xf32>
    %cst_68 = arith.constant 0.000000e+00 : f32
    %cst_69 = arith.constant 6.000000e+00 : f32
    %164 = vector.broadcast %cst_68 : f32 to vector<32x64xf32>
    %165 = arith.maximumf %164, %163 : vector<32x64xf32>
    %166 = vector.broadcast %cst_69 : f32 to vector<32x64xf32>
    %167 = arith.minimumf %166, %165 : vector<32x64xf32>
    %168 = arith.mulf %161, %167 : vector<32x64xf32>
    %cst_70 = arith.constant 6.000000e+00 : f32
    %169 = vector.broadcast %cst_70 : f32 to vector<32x64xf32>
    %170 = arith.divf %168, %169 : vector<32x64xf32>
    %c336 = arith.constant 336 : index
    %c0_71 = arith.constant 0 : index
    %171 = vector.load %arg2[%c336, %c0_71] : memref<464x64xf32, #tpu.memory_space<vmem>>, vector<64x32xf32>
    %cst_72 = arith.constant dense<0.000000e+00> : vector<32x32xf32>
    %172 = tpu.matmul %170, %171, %cst_72 {dimension_numbers = #tpu.dot_dimension_numbers<[1], [0], [0], [1], [0, 0, 1, 1], [], []>, precision = #tpu.contract_precision<fp32>} : vector<32x64xf32>, vector<64x32xf32>, vector<32x32xf32> -> vector<32x32xf32>
    %c206 = arith.constant 206 : index
    %c0_73 = arith.constant 0 : index
    %173 = vector.load %arg2[%c206, %c0_73] : memref<464x64xf32, #tpu.memory_space<vmem>>, vector<1x32xf32>
    %174 = vector.broadcast %173 : vector<1x32xf32> to vector<32x32xf32>
    %175 = arith.mulf %172, %174 : vector<32x32xf32>
    %c207 = arith.constant 207 : index
    %c0_74 = arith.constant 0 : index
    %176 = vector.load %arg2[%c207, %c0_74] : memref<464x64xf32, #tpu.memory_space<vmem>>, vector<1x32xf32>
    %177 = vector.broadcast %176 : vector<1x32xf32> to vector<32x32xf32>
    %178 = arith.addf %175, %177 : vector<32x32xf32>
    %179 = arith.addf %153, %178 : vector<32x32xf32>
    %c440 = arith.constant 440 : index
    %c0_75 = arith.constant 0 : index
    %180 = vector.load %arg2[%c440, %c0_75] : memref<464x64xf32, #tpu.memory_space<vmem>>, vector<8x32xf32>
    %cst_76 = arith.constant dense<0.000000e+00> : vector<8x32xf32>
    %181 = tpu.matmul %180, %179, %cst_76 {dimension_numbers = #tpu.dot_dimension_numbers<[1], [0], [0], [1], [0, 0, 1, 1], [], []>, precision = #tpu.contract_precision<fp32>} : vector<8x32xf32>, vector<32x32xf32>, vector<8x32xf32> -> vector<8x32xf32>
    %c400 = arith.constant 400 : index
    %c0_77 = arith.constant 0 : index
    %182 = vector.load %arg2[%c400, %c0_77] : memref<464x64xf32, #tpu.memory_space<vmem>>, vector<1x32xf32>
    %183 = vector.broadcast %182 : vector<1x32xf32> to vector<8x32xf32>
    %184 = arith.mulf %181, %183 : vector<8x32xf32>
    %c401 = arith.constant 401 : index
    %c0_78 = arith.constant 0 : index
    %185 = vector.load %arg2[%c401, %c0_78] : memref<464x64xf32, #tpu.memory_space<vmem>>, vector<1x32xf32>
    %186 = vector.broadcast %185 : vector<1x32xf32> to vector<8x32xf32>
    %187 = arith.addf %184, %186 : vector<8x32xf32>
    %c408 = arith.constant 408 : index
    %c0_79 = arith.constant 0 : index
    %188 = vector.load %arg2[%c408, %c0_79] : memref<464x64xf32, #tpu.memory_space<vmem>>, vector<32x32xf32>
    %cst_80 = arith.constant dense<0.000000e+00> : vector<8x32xf32>
    %189 = tpu.matmul %187, %188, %cst_80 {dimension_numbers = #tpu.dot_dimension_numbers<[1], [0], [0], [1], [0, 0, 1, 1], [], []>, precision = #tpu.contract_precision<fp32>} : vector<8x32xf32>, vector<32x32xf32>, vector<8x32xf32> -> vector<8x32xf32>
    %c402 = arith.constant 402 : index
    %c0_81 = arith.constant 0 : index
    %190 = vector.load %arg2[%c402, %c0_81] : memref<464x64xf32, #tpu.memory_space<vmem>>, vector<1x32xf32>
    %191 = vector.broadcast %190 : vector<1x32xf32> to vector<8x32xf32>
    %192 = arith.addf %189, %191 : vector<8x32xf32>
    %c0_82 = arith.constant 0 : index
    %c0_83 = arith.constant 0 : index
    %193 = vector.load %arg3[%c0_82, %c0_83] : memref<40x32xf32, #tpu.memory_space<vmem>>, vector<32x32xf32>
    tpu.vector_store %arg3[%c0_82, %c0_83], %179 {strides = array<i32>} : memref<40x32xf32, #tpu.memory_space<vmem>>, vector<32x32xf32>,
    %c32_84 = arith.constant 32 : index
    %c0_85 = arith.constant 0 : index
    %194 = vector.load %arg3[%c32_84, %c0_85] : memref<40x32xf32, #tpu.memory_space<vmem>>, vector<8x32xf32>
    tpu.vector_store %arg3[%c32_84, %c0_85], %192 {strides = array<i32>} : memref<40x32xf32, #tpu.memory_space<vmem>>, vector<8x32xf32>,
    return
  }
  func.func @transform_0(%arg0: i32) -> (i32, i32) {
    %c0_i32 = arith.constant 0 : i32
    %c0_i32_0 = arith.constant 0 : i32
    %c0_i32_1 = arith.constant 0 : i32
    return %c0_i32, %c0_i32_0 : i32, i32
  }
  func.func @transform_1(%arg0: i32) -> (i32, i32) {
    %c0_i32 = arith.constant 0 : i32
    %c0_i32_0 = arith.constant 0 : i32
    %c0_i32_1 = arith.constant 0 : i32
    return %c0_i32, %c0_i32_0 : i32, i32
  }
  func.func @transform_2(%arg0: i32) -> (i32, i32) {
    %c0_i32 = arith.constant 0 : i32
    %c0_i32_0 = arith.constant 0 : i32
    %c0_i32_1 = arith.constant 0 : i32
    return %c0_i32, %c0_i32_0 : i32, i32
  }
}

</mosaic_0001>

<llo_original>
// kernel: levit_forward.1
$region0: #{levit_forward.1}
  #allocation0 [shape = 'u32[]', space=smem, size = 0x4, offset = 0x4, fixed_abs, tag = 'smem constant byte address 0x4 - core index']
  #allocation1 [shape = 'u32[72,128]{1,0:T(1,128)}', space=vmem, size = 0x9000, scoped, tag = 'internal scratch']
  %s0 = inlined_call_operand.vmem [shape: f32[64,16], index: 0, kind: input, shape index: {}]
  %s1 = inlined_call_operand.vmem [shape: f32[464,64], index: 1, kind: input, shape index: {}]
  %s2 = inlined_call_operand.vmem [shape: f32[40,32], index: 2, kind: output, shape index: {}]
  %s3 = sld [smem:[#allocation0]]
  $region18: #{levit_forward.1} parent=0
    _
  %s5 = ssub.s32 1, %s3
  %s6 = scalar_select 0, %s5, %s3
  // Predicated region
  $region2: #{levit_forward.1} parent=0 // pred_check
    _
  $region3: #{levit_forward.1} parent=0 // pred_check_branch
    %8 = sbr.rel (0) target = $region5
  $region4: #{levit_forward.1} parent=0 // pred_region
    _
  $region5: #{levit_forward.1} parent=0 // pred_fallthru
    _
  // Predicated region
  $region6: #{levit_forward.1} parent=0 // pred_check
    _
  $region7: #{levit_forward.1} parent=0 // pred_check_branch
    %10 = sbr.rel (0) target = $region9
  $region8: #{levit_forward.1} parent=0 // pred_region
    _
  $region9: #{levit_forward.1} parent=0 // pred_fallthru
    _
  %v11 = vld [vmem:[%s1 + $0x1c0] sm:$0xff]
  %v12 = vld [vmem:[%s1 + $0x1c8] sm:$0xff]
  %v13 = vld [vmem:[%s0] sm:$0xff]
  %v14 = vld [vmem:[%s0 + $0x8] sm:$0xff]
  %v15 = vld [vmem:[%s0 + $0x10] sm:$0xff]
  %v16 = vld [vmem:[%s0 + $0x18] sm:$0xff]
  %vm17 = vcmask 130048
  %v19 = vsel %vm17, %v11, 0
  %v22 = vsel %vm17, %v12, 0
  %v25 = vsel %vm17, %v13, 0
  %v28 = vsel %vm17, %v14, 0
  %v31 = vsel %vm17, %v15, 0
  %v34 = vsel %vm17, %v16, 0
  %36 = vmatpush.xpose.msra.mxu0 0.0
  %37 = vmatpush.xpose.msra.mxu0 0.0
  %38 = vmatpush.xpose.msra.mxu0 0.0
  %39 = vmatpush.xpose.msra.mxu0 0.0
  %40 = vmatpush.xpose.msra.mxu0 0.0
  %41 = vmatpush.xpose.msra.mxu0 0.0
  %42 = vmatpush.xpose.msra.mxu0 0.0
  %43 = vmatpush.xpose.msra.mxu0 0.0
  %44 = vmatpush.xpose.msra.mxu0 0.0
  %45 = vmatpush.xpose.msra.mxu0 0.0
  %46 = vmatpush.xpose.msra.mxu0 0.0
  %47 = vmatpush.xpose.msra.mxu0 0.0
  %v48 = vand.u32 %v34, 4294901760
  %49 = vmatpush.xpose.msra.mxu0 %v48
  %v50 = vand.u32 %v31, 4294901760
  %51 = vmatpush.xpose.msra.mxu0 %v50
  %v52 = vand.u32 %v28, 4294901760
  %53 = vmatpush.xpose.msra.mxu0 %v52
  %v54 = vand.u32 %v25, 4294901760
  %55 = vmatpush.xpose.msra.mxu0 %v54
  %v56 = vand.u32 %v19, 4294901760
  %v57 = vsub.f32 %v19, %v56
  %v58 = vand.u32 %v57, 4294901760
  %v59 = vsub.f32 %v57, %v58
  %v60 = vand.u32 %v59, 4294901760
  %61 = vmatmul.f32.gmra.mxu0 %v60
  %v62 = vpop.f32.mrf.mxu0
  %v63 = vadd.f32 0.0, %v62
  %v64 = vand.u32 %v22, 4294901760
  %v65 = vsub.f32 %v22, %v64
  %v66 = vand.u32 %v65, 4294901760
  %v67 = vsub.f32 %v65, %v66
  %v68 = vand.u32 %v67, 4294901760
  %69 = vmatmul.f32.gmra.mxu0 %v68
  %v70 = vpop.f32.mrf.mxu0
  %v71 = vadd.f32 0.0, %v70
  %72 = vdwg.mxu0
  %73 = vmatpush.xpose.msra.mxu0 0.0
  %74 = vmatpush.xpose.msra.mxu0 0.0
  %75 = vmatpush.xpose.msra.mxu0 0.0
  %76 = vmatpush.xpose.msra.mxu0 0.0
  %77 = vmatpush.xpose.msra.mxu0 0.0
  %78 = vmatpush.xpose.msra.mxu0 0.0
  %79 = vmatpush.xpose.msra.mxu0 0.0
  %80 = vmatpush.xpose.msra.mxu0 0.0
  %81 = vmatpush.xpose.msra.mxu0 0.0
  %82 = vmatpush.xpose.msra.mxu0 0.0
  %83 = vmatpush.xpose.msra.mxu0 0.0
  %84 = vmatpush.xpose.msra.mxu0 0.0
  %v85 = vand.u32 %v34, 4294901760
  %v86 = vsub.f32 %v34, %v85
  %v87 = vand.u32 %v86, 4294901760
  %v88 = vsub.f32 %v86, %v87
  %v89 = vand.u32 %v88, 4294901760
  %90 = vmatpush.xpose.msra.mxu0 %v89
  %v91 = vand.u32 %v31, 4294901760
  %v92 = vsub.f32 %v31, %v91
  %v93 = vand.u32 %v92, 4294901760
  %v94 = vsub.f32 %v92, %v93
  %v95 = vand.u32 %v94, 4294901760
  %96 = vmatpush.xpose.msra.mxu0 %v95
  %v97 = vand.u32 %v28, 4294901760
  %v98 = vsub.f32 %v28, %v97
  %v99 = vand.u32 %v98, 4294901760
  %v100 = vsub.f32 %v98, %v99
  %v101 = vand.u32 %v100, 4294901760
  %102 = vmatpush.xpose.msra.mxu0 %v101
  %v103 = vand.u32 %v25, 4294901760
  %v104 = vsub.f32 %v25, %v103
  %v105 = vand.u32 %v104, 4294901760
  %v106 = vsub.f32 %v104, %v105
  %v107 = vand.u32 %v106, 4294901760
  %108 = vmatpush.xpose.msra.mxu0 %v107
  %v109 = vand.u32 %v19, 4294901760
  %110 = vmatmul.f32.gmra.mxu0 %v109
  %v111 = vpop.f32.mrf.mxu0
  %v112 = vadd.f32 %v63, %v111
  %v113 = vand.u32 %v22, 4294901760
  %114 = vmatmul.f32.gmra.mxu0 %v113
  %v115 = vpop.f32.mrf.mxu0
  %v116 = vadd.f32 %v71, %v115
  %117 = vdwg.mxu0
  %118 = vmatpush.xpose.msra.mxu0 0.0
  %119 = vmatpush.xpose.msra.mxu0 0.0
  %120 = vmatpush.xpose.msra.mxu0 0.0
  %121 = vmatpush.xpose.msra.mxu0 0.0
  %122 = vmatpush.xpose.msra.mxu0 0.0
  %123 = vmatpush.xpose.msra.mxu0 0.0
  %124 = vmatpush.xpose.msra.mxu0 0.0
  %125 = vmatpush.xpose.msra.mxu0 0.0
  %126 = vmatpush.xpose.msra.mxu0 0.0
  %127 = vmatpush.xpose.msra.mxu0 0.0
  %128 = vmatpush.xpose.msra.mxu0 0.0
  %129 = vmatpush.xpose.msra.mxu0 0.0
  %v130 = vand.u32 %v34, 4294901760
  %v131 = vsub.f32 %v34, %v130
  %132 = vmatpush.xpose.msra.mxu0 %v131
  %v133 = vand.u32 %v31, 4294901760
  %v134 = vsub.f32 %v31, %v133
  %135 = vmatpush.xpose.msra.mxu0 %v134
  %v136 = vand.u32 %v28, 4294901760
  %v137 = vsub.f32 %v28, %v136
  %138 = vmatpush.xpose.msra.mxu0 %v137
  %v139 = vand.u32 %v25, 4294901760
  %v140 = vsub.f32 %v25, %v139
  %141 = vmatpush.xpose.msra.mxu0 %v140
  %v142 = vand.u32 %v19, 4294901760
  %v143 = vsub.f32 %v19, %v142
  %144 = vmatmul.f32.gmra.mxu0 %v143
  %v145 = vpop.f32.mrf.mxu0
  %v146 = vadd.f32 %v112, %v145
  %v147 = vand.u32 %v22, 4294901760
  %v148 = vsub.f32 %v22, %v147
  %149 = vmatmul.f32.gmra.mxu0 %v148
  %v150 = vpop.f32.mrf.mxu0
  %v151 = vadd.f32 %v116, %v150
  %152 = vdwg.mxu0
  %153 = vmatpush.xpose.msra.mxu0 0.0
  %154 = vmatpush.xpose.msra.mxu0 0.0
  %155 = vmatpush.xpose.msra.mxu0 0.0
  %156 = vmatpush.xpose.msra.mxu0 0.0
  %157 = vmatpush.xpose.msra.mxu0 0.0
  %158 = vmatpush.xpose.msra.mxu0 0.0
  %159 = vmatpush.xpose.msra.mxu0 0.0
  %160 = vmatpush.xpose.msra.mxu0 0.0
  %161 = vmatpush.xpose.msra.mxu0 0.0
  %162 = vmatpush.xpose.msra.mxu0 0.0
  %163 = vmatpush.xpose.msra.mxu0 0.0
  %164 = vmatpush.xpose.msra.mxu0 0.0
  %v165 = vand.u32 %v34, 4294901760
  %166 = vmatpush.xpose.msra.mxu0 %v165
  %v167 = vand.u32 %v31, 4294901760
  %168 = vmatpush.xpose.msra.mxu0 %v167
  %v169 = vand.u32 %v28, 4294901760
  %170 = vmatpush.xpose.msra.mxu0 %v169
  %v171 = vand.u32 %v25, 4294901760
  %172 = vmatpush.xpose.msra.mxu0 %v171
  %v173 = vand.u32 %v19, 4294901760
  %v174 = vsub.f32 %v19, %v173
  %v175 = vand.u32 %v174, 4294901760
  %176 = vmatmul.f32.gmra.mxu0 %v175
  %v177 = vpop.f32.mrf.mxu0
  %v178 = vadd.f32 %v146, %v177
  %v179 = vand.u32 %v22, 4294901760
  %v180 = vsub.f32 %v22, %v179
  %v181 = vand.u32 %v180, 4294901760
  %182 = vmatmul.f32.gmra.mxu0 %v181
  %v183 = vpop.f32.mrf.mxu0
  %v184 = vadd.f32 %v151, %v183
  %185 = vdwg.mxu0
  %186 = vmatpush.xpose.msra.mxu0 0.0
  %187 = vmatpush.xpose.msra.mxu0 0.0
  %188 = vmatpush.xpose.msra.mxu0 0.0
  %189 = vmatpush.xpose.msra.mxu0 0.0
  %190 = vmatpush.xpose.msra.mxu0 0.0
  %191 = vmatpush.xpose.msra.mxu0 0.0
  %192 = vmatpush.xpose.msra.mxu0 0.0
  %193 = vmatpush.xpose.msra.mxu0 0.0
  %194 = vmatpush.xpose.msra.mxu0 0.0
  %195 = vmatpush.xpose.msra.mxu0 0.0
  %196 = vmatpush.xpose.msra.mxu0 0.0
  %197 = vmatpush.xpose.msra.mxu0 0.0
  %v198 = vand.u32 %v34, 4294901760
  %v199 = vsub.f32 %v34, %v198
  %v200 = vand.u32 %v199, 4294901760
  %201 = vmatpush.xpose.msra.mxu0 %v200
  %v202 = vand.u32 %v31, 4294901760
  %v203 = vsub.f32 %v31, %v202
  %v204 = vand.u32 %v203, 4294901760
  %205 = vmatpush.xpose.msra.mxu0 %v204
  %v206 = vand.u32 %v28, 4294901760
  %v207 = vsub.f32 %v28, %v206
  %v208 = vand.u32 %v207, 4294901760
  %209 = vmatpush.xpose.msra.mxu0 %v208
  %v210 = vand.u32 %v25, 4294901760
  %v211 = vsub.f32 %v25, %v210
  %v212 = vand.u32 %v211, 4294901760
  %213 = vmatpush.xpose.msra.mxu0 %v212
  %v214 = vand.u32 %v19, 4294901760
  %215 = vmatmul.f32.gmra.mxu0 %v214
  %v216 = vpop.f32.mrf.mxu0
  %v217 = vadd.f32 %v178, %v216
  %v218 = vand.u32 %v22, 4294901760
  %219 = vmatmul.f32.gmra.mxu0 %v218
  %v220 = vpop.f32.mrf.mxu0
  %v221 = vadd.f32 %v184, %v220
  %222 = vdwg.mxu0
  %223 = vmatpush.xpose.msra.mxu0 0.0
  %224 = vmatpush.xpose.msra.mxu0 0.0
  %225 = vmatpush.xpose.msra.mxu0 0.0
  %226 = vmatpush.xpose.msra.mxu0 0.0
  %227 = vmatpush.xpose.msra.mxu0 0.0
  %228 = vmatpush.xpose.msra.mxu0 0.0
  %229 = vmatpush.xpose.msra.mxu0 0.0
  %230 = vmatpush.xpose.msra.mxu0 0.0
  %231 = vmatpush.xpose.msra.mxu0 0.0
  %232 = vmatpush.xpose.msra.mxu0 0.0
  %233 = vmatpush.xpose.msra.mxu0 0.0
  %234 = vmatpush.xpose.msra.mxu0 0.0
  %v235 = vand.u32 %v34, 4294901760
  %236 = vmatpush.xpose.msra.mxu0 %v235
  %v237 = vand.u32 %v31, 4294901760
  %238 = vmatpush.xpose.msra.mxu0 %v237
  %v239 = vand.u32 %v28, 4294901760
  %240 = vmatpush.xpose.msra.mxu0 %v239
  %v241 = vand.u32 %v25, 4294901760
  %242 = vmatpush.xpose.msra.mxu0 %v241
  %v243 = vand.u32 %v19, 4294901760
  %244 = vmatmul.f32.gmra.mxu0 %v243
  %v245 = vpop.f32.mrf.mxu0
  %v246 = vadd.f32 %v217, %v245
  %v247 = vand.u32 %v22, 4294901760
  %248 = vmatmul.f32.gmra.mxu0 %v247
  %v249 = vpop.f32.mrf.mxu0
  %v250 = vadd.f32 %v221, %v249
  %251 = vdwg.mxu0
  %v252 = vld [vmem:[%s0 + $0x20] sm:$0xff]
  %v253 = vld [vmem:[%s0 + $0x28] sm:$0xff]
  %v254 = vld [vmem:[%s0 + $0x30] sm:$0xff]
  %v255 = vld [vmem:[%s0 + $0x38] sm:$0xff]
  %v257 = vsel %vm17, %v252, 0
  %v260 = vsel %vm17, %v253, 0
  %v263 = vsel %vm17, %v254, 0
  %v266 = vsel %vm17, %v255, 0
  %268 = vmatpush.xpose.msra.mxu0 0.0
  %269 = vmatpush.xpose.msra.mxu0 0.0
  %270 = vmatpush.xpose.msra.mxu0 0.0
  %271 = vmatpush.xpose.msra.mxu0 0.0
  %272 = vmatpush.xpose.msra.mxu0 0.0
  %273 = vmatpush.xpose.msra.mxu0 0.0
  %274 = vmatpush.xpose.msra.mxu0 0.0
  %275 = vmatpush.xpose.msra.mxu0 0.0
  %276 = vmatpush.xpose.msra.mxu0 0.0
  %277 = vmatpush.xpose.msra.mxu0 0.0
  %278 = vmatpush.xpose.msra.mxu0 0.0
  %279 = vmatpush.xpose.msra.mxu0 0.0
  %v280 = vand.u32 %v266, 4294901760
  %281 = vmatpush.xpose.msra.mxu0 %v280
  %v282 = vand.u32 %v263, 4294901760
  %283 = vmatpush.xpose.msra.mxu0 %v282
  %v284 = vand.u32 %v260, 4294901760
  %285 = vmatpush.xpose.msra.mxu0 %v284
  %v286 = vand.u32 %v257, 4294901760
  %287 = vmatpush.xpose.msra.mxu0 %v286
  %v288 = vand.u32 %v19, 4294901760
  %v289 = vsub.f32 %v19, %v288
  %v290 = vand.u32 %v289, 4294901760
  %v291 = vsub.f32 %v289, %v290
  %v292 = vand.u32 %v291, 4294901760
  %293 = vmatmul.f32.gmra.mxu0 %v292
  %v294 = vpop.f32.mrf.mxu0
  %v295 = vadd.f32 0.0, %v294
  %v296 = vand.u32 %v22, 4294901760
  %v297 = vsub.f32 %v22, %v296
  %v298 = vand.u32 %v297, 4294901760
  %v299 = vsub.f32 %v297, %v298
  %v300 = vand.u32 %v299, 4294901760
  %301 = vmatmul.f32.gmra.mxu0 %v300
  %v302 = vpop.f32.mrf.mxu0
  %v303 = vadd.f32 0.0, %v302
  %304 = vdwg.mxu0
  %305 = vmatpush.xpose.msra.mxu0 0.0
  %306 = vmatpush.xpose.msra.mxu0 0.0
  %307 = vmatpush.xpose.msra.mxu0 0.0
  %308 = vmatpush.xpose.msra.mxu0 0.0
  %309 = vmatpush.xpose.msra.mxu0 0.0
  %310 = vmatpush.xpose.msra.mxu0 0.0
  %311 = vmatpush.xpose.msra.mxu0 0.0
  %312 = vmatpush.xpose.msra.mxu0 0.0
  %313 = vmatpush.xpose.msra.mxu0 0.0
  %314 = vmatpush.xpose.msra.mxu0 0.0
  %315 = vmatpush.xpose.msra.mxu0 0.0
  %316 = vmatpush.xpose.msra.mxu0 0.0
  %v317 = vand.u32 %v266, 4294901760
  %v318 = vsub.f32 %v266, %v317
  %v319 = vand.u32 %v318, 4294901760
  %v320 = vsub.f32 %v318, %v319
  %v321 = vand.u32 %v320, 4294901760
  %322 = vmatpush.xpose.msra.mxu0 %v321
  %v323 = vand.u32 %v263, 4294901760
  %v324 = vsub.f32 %v263, %v323
  %v325 = vand.u32 %v324, 4294901760
  %v326 = vsub.f32 %v324, %v325
  %v327 = vand.u32 %v326, 4294901760
  %328 = vmatpush.xpose.msra.mxu0 %v327
  %v329 = vand.u32 %v260, 4294901760
  %v330 = vsub.f32 %v260, %v329
  %v331 = vand.u32 %v330, 4294901760
  %v332 = vsub.f32 %v330, %v331
  %v333 = vand.u32 %v332, 4294901760
  %334 = vmatpush.xpose.msra.mxu0 %v333
  %v335 = vand.u32 %v257, 4294901760
  %v336 = vsub.f32 %v257, %v335
  %v337 = vand.u32 %v336, 4294901760
  %v338 = vsub.f32 %v336, %v337
  %v339 = vand.u32 %v338, 4294901760
  %340 = vmatpush.xpose.msra.mxu0 %v339
  %v341 = vand.u32 %v19, 4294901760
  %342 = vmatmul.f32.gmra.mxu0 %v341
  %v343 = vpop.f32.mrf.mxu0
  %v344 = vadd.f32 %v295, %v343
  %v345 = vand.u32 %v22, 4294901760
  %346 = vmatmul.f32.gmra.mxu0 %v345
  %v347 = vpop.f32.mrf.mxu0
  %v348 = vadd.f32 %v303, %v347
  %349 = vdwg.mxu0
  %350 = vmatpush.xpose.msra.mxu0 0.0
  %351 = vmatpush.xpose.msra.mxu0 0.0
  %352 = vmatpush.xpose.msra.mxu0 0.0
  %353 = vmatpush.xpose.msra.mxu0 0.0
  %354 = vmatpush.xpose.msra.mxu0 0.0
  %355 = vmatpush.xpose.msra.mxu0 0.0
  %356 = vmatpush.xpose.msra.mxu0 0.0
  %357 = vmatpush.xpose.msra.mxu0 0.0
  %358 = vmatpush.xpose.msra.mxu0 0.0
  %359 = vmatpush.xpose.msra.mxu0 0.0
  %360 = vmatpush.xpose.msra.mxu0 0.0
  %361 = vmatpush.xpose.msra.mxu0 0.0
  %v362 = vand.u32 %v266, 4294901760
  %v363 = vsub.f32 %v266, %v362
  %364 = vmatpush.xpose.msra.mxu0 %v363
  %v365 = vand.u32 %v263, 4294901760
  %v366 = vsub.f32 %v263, %v365
  %367 = vmatpush.xpose.msra.mxu0 %v366
  %v368 = vand.u32 %v260, 4294901760
  %v369 = vsub.f32 %v260, %v368
  %370 = vmatpush.xpose.msra.mxu0 %v369
  %v371 = vand.u32 %v257, 4294901760
  %v372 = vsub.f32 %v257, %v371
  %373 = vmatpush.xpose.msra.mxu0 %v372
  %v374 = vand.u32 %v19, 4294901760
  %v375 = vsub.f32 %v19, %v374
  %376 = vmatmul.f32.gmra.mxu0 %v375
  %v377 = vpop.f32.mrf.mxu0
  %v378 = vadd.f32 %v344, %v377
  %v379 = vand.u32 %v22, 4294901760
  %v380 = vsub.f32 %v22, %v379
  %381 = vmatmul.f32.gmra.mxu0 %v380
  %v382 = vpop.f32.mrf.mxu0
  %v383 = vadd.f32 %v348, %v382
  %384 = vdwg.mxu0
  %385 = vmatpush.xpose.msra.mxu0 0.0
  %386 = vmatpush.xpose.msra.mxu0 0.0
  %387 = vmatpush.xpose.msra.mxu0 0.0
  %388 = vmatpush.xpose.msra.mxu0 0.0
  %389 = vmatpush.xpose.msra.mxu0 0.0
  %390 = vmatpush.xpose.msra.mxu0 0.0
  %391 = vmatpush.xpose.msra.mxu0 0.0
  %392 = vmatpush.xpose.msra.mxu0 0.0
  %393 = vmatpush.xpose.msra.mxu0 0.0
  %394 = vmatpush.xpose.msra.mxu0 0.0
  %395 = vmatpush.xpose.msra.mxu0 0.0
  %396 = vmatpush.xpose.msra.mxu0 0.0
  %v397 = vand.u32 %v266, 4294901760
  %398 = vmatpush.xpose.msra.mxu0 %v397
  %v399 = vand.u32 %v263, 4294901760
  %400 = vmatpush.xpose.msra.mxu0 %v399
  %v401 = vand.u32 %v260, 4294901760
  %402 = vmatpush.xpose.msra.mxu0 %v401
  %v403 = vand.u32 %v257, 4294901760
  %404 = vmatpush.xpose.msra.mxu0 %v403
  %v405 = vand.u32 %v19, 4294901760
  %v406 = vsub.f32 %v19, %v405
  %v407 = vand.u32 %v406, 4294901760
  %408 = vmatmul.f32.gmra.mxu0 %v407
  %v409 = vpop.f32.mrf.mxu0
  %v410 = vadd.f32 %v378, %v409
  %v411 = vand.u32 %v22, 4294901760
  %v412 = vsub.f32 %v22, %v411
  %v413 = vand.u32 %v412, 4294901760
  %414 = vmatmul.f32.gmra.mxu0 %v413
  %v415 = vpop.f32.mrf.mxu0
  %v416 = vadd.f32 %v383, %v415
  %417 = vdwg.mxu0
  %418 = vmatpush.xpose.msra.mxu0 0.0
  %419 = vmatpush.xpose.msra.mxu0 0.0
  %420 = vmatpush.xpose.msra.mxu0 0.0
  %421 = vmatpush.xpose.msra.mxu0 0.0
  %422 = vmatpush.xpose.msra.mxu0 0.0
  %423 = vmatpush.xpose.msra.mxu0 0.0
  %424 = vmatpush.xpose.msra.mxu0 0.0
  %425 = vmatpush.xpose.msra.mxu0 0.0
  %426 = vmatpush.xpose.msra.mxu0 0.0
  %427 = vmatpush.xpose.msra.mxu0 0.0
  %428 = vmatpush.xpose.msra.mxu0 0.0
  %429 = vmatpush.xpose.msra.mxu0 0.0
  %v430 = vand.u32 %v266, 4294901760
  %v431 = vsub.f32 %v266, %v430
  %v432 = vand.u32 %v431, 4294901760
  %433 = vmatpush.xpose.msra.mxu0 %v432
  %v434 = vand.u32 %v263, 4294901760
  %v435 = vsub.f32 %v263, %v434
  %v436 = vand.u32 %v435, 4294901760
  %437 = vmatpush.xpose.msra.mxu0 %v436
  %v438 = vand.u32 %v260, 4294901760
  %v439 = vsub.f32 %v260, %v438
  %v440 = vand.u32 %v439, 4294901760
  %441 = vmatpush.xpose.msra.mxu0 %v440
  %v442 = vand.u32 %v257, 4294901760
  %v443 = vsub.f32 %v257, %v442
  %v444 = vand.u32 %v443, 4294901760
  %445 = vmatpush.xpose.msra.mxu0 %v444
  %v446 = vand.u32 %v19, 4294901760
  %447 = vmatmul.f32.gmra.mxu0 %v446
  %v448 = vpop.f32.mrf.mxu0
  %v449 = vadd.f32 %v410, %v448
  %v450 = vand.u32 %v22, 4294901760
  %451 = vmatmul.f32.gmra.mxu0 %v450
  %v452 = vpop.f32.mrf.mxu0
  %v453 = vadd.f32 %v416, %v452
  %454 = vdwg.mxu0
  %455 = vmatpush.xpose.msra.mxu0 0.0
  %456 = vmatpush.xpose.msra.mxu0 0.0
  %457 = vmatpush.xpose.msra.mxu0 0.0
  %458 = vmatpush.xpose.msra.mxu0 0.0
  %459 = vmatpush.xpose.msra.mxu0 0.0
  %460 = vmatpush.xpose.msra.mxu0 0.0
  %461 = vmatpush.xpose.msra.mxu0 0.0
  %462 = vmatpush.xpose.msra.mxu0 0.0
  %463 = vmatpush.xpose.msra.mxu0 0.0
  %464 = vmatpush.xpose.msra.mxu0 0.0
  %465 = vmatpush.xpose.msra.mxu0 0.0
  %466 = vmatpush.xpose.msra.mxu0 0.0
  %v467 = vand.u32 %v266, 4294901760
  %468 = vmatpush.xpose.msra.mxu0 %v467
  %v469 = vand.u32 %v263, 4294901760
  %470 = vmatpush.xpose.msra.mxu0 %v469
  %v471 = vand.u32 %v260, 4294901760
  %472 = vmatpush.xpose.msra.mxu0 %v471
  %v473 = vand.u32 %v257, 4294901760
  %474 = vmatpush.xpose.msra.mxu0 %v473
  %v475 = vand.u32 %v19, 4294901760
  %476 = vmatmul.f32.gmra.mxu0 %v475
  %v477 = vpop.f32.mrf.mxu0
  %v478 = vadd.f32 %v449, %v477
  %v479 = vand.u32 %v22, 4294901760
  %480 = vmatmul.f32.gmra.mxu0 %v479
  %v481 = vpop.f32.mrf.mxu0
  %v482 = vadd.f32 %v453, %v481
  %483 = vdwg.mxu0
  %v484 = vld [vmem:[%s1 + $0x8] sm:$0xff]
  %v485 = vld [vmem:[%s1 + $0x10] sm:$0xff]
  %v486 = vld [vmem:[%s1 + $0x18] sm:$0xff]
  %v487 = vld [vmem:[%s1 + $0x20] sm:$0xff]
  %vm488 = vcmask 261120
  %v490 = vsel %vm488, %v246, 0
  %v493 = vsel %vm488, %v250, 0
  %v496 = vsel %vm488, %v478, 0
  %v499 = vsel %vm488, %v482, 0
  %501 = vmatpush.msra.mxu0 0.0
  %502 = vmatpush.msra.mxu0 0.0
  %503 = vmatpush.msra.mxu0 0.0
  %504 = vmatpush.msra.mxu0 0.0
  %505 = vmatpush.msra.mxu0 0.0
  %506 = vmatpush.msra.mxu0 0.0
  %507 = vmatpush.msra.mxu0 0.0
  %508 = vmatpush.msra.mxu0 0.0
  %509 = vmatpush.msra.mxu0 0.0
  %510 = vmatpush.msra.mxu0 0.0
  %511 = vmatpush.msra.mxu0 0.0
  %512 = vmatpush.msra.mxu0 0.0
  %v513 = vand.u32 %v487, 4294901760
  %514 = vmatpush.msra.mxu0 %v513
  %v515 = vand.u32 %v486, 4294901760
  %516 = vmatpush.msra.mxu0 %v515
  %v517 = vand.u32 %v485, 4294901760
  %518 = vmatpush.msra.mxu0 %v517
  %v519 = vand.u32 %v484, 4294901760
  %520 = vmatpush.msra.mxu0 %v519
  %v521 = vand.u32 %v490, 4294901760
  %v522 = vsub.f32 %v490, %v521
  %v523 = vand.u32 %v522, 4294901760
  %v524 = vsub.f32 %v522, %v523
  %v525 = vand.u32 %v524, 4294901760
  %526 = vmatmul.f32.gmra.mxu0 %v525
  %v527 = vpop.f32.mrf.mxu0
  %v528 = vadd.f32 0.0, %v527
  %v529 = vand.u32 %v493, 4294901760
  %v530 = vsub.f32 %v493, %v529
  %v531 = vand.u32 %v530, 4294901760
  %v532 = vsub.f32 %v530, %v531
  %v533 = vand.u32 %v532, 4294901760
  %534 = vmatmul.f32.gmra.mxu0 %v533
  %v535 = vpop.f32.mrf.mxu0
  %v536 = vadd.f32 0.0, %v535
  %v537 = vand.u32 %v496, 4294901760
  %v538 = vsub.f32 %v496, %v537
  %v539 = vand.u32 %v538, 4294901760
  %v540 = vsub.f32 %v538, %v539
  %v541 = vand.u32 %v540, 4294901760
  %542 = vmatmul.f32.gmra.mxu0 %v541
  %v543 = vpop.f32.mrf.mxu0
  %v544 = vadd.f32 0.0, %v543
  %v545 = vand.u32 %v499, 4294901760
  %v546 = vsub.f32 %v499, %v545
  %v547 = vand.u32 %v546, 4294901760
  %v548 = vsub.f32 %v546, %v547
  %v549 = vand.u32 %v548, 4294901760
  %550 = vmatmul.f32.gmra.mxu0 %v549
  %v551 = vpop.f32.mrf.mxu0
  %v552 = vadd.f32 0.0, %v551
  %553 = vdwg.mxu0
  %554 = vmatpush.msra.mxu0 0.0
  %555 = vmatpush.msra.mxu0 0.0
  %556 = vmatpush.msra.mxu0 0.0
  %557 = vmatpush.msra.mxu0 0.0
  %558 = vmatpush.msra.mxu0 0.0
  %559 = vmatpush.msra.mxu0 0.0
  %560 = vmatpush.msra.mxu0 0.0
  %561 = vmatpush.msra.mxu0 0.0
  %562 = vmatpush.msra.mxu0 0.0
  %563 = vmatpush.msra.mxu0 0.0
  %564 = vmatpush.msra.mxu0 0.0
  %565 = vmatpush.msra.mxu0 0.0
  %v566 = vand.u32 %v487, 4294901760
  %v567 = vsub.f32 %v487, %v566
  %v568 = vand.u32 %v567, 4294901760
  %v569 = vsub.f32 %v567, %v568
  %v570 = vand.u32 %v569, 4294901760
  %571 = vmatpush.msra.mxu0 %v570
  %v572 = vand.u32 %v486, 4294901760
  %v573 = vsub.f32 %v486, %v572
  %v574 = vand.u32 %v573, 4294901760
  %v575 = vsub.f32 %v573, %v574
  %v576 = vand.u32 %v575, 4294901760
  %577 = vmatpush.msra.mxu0 %v576
  %v578 = vand.u32 %v485, 4294901760
  %v579 = vsub.f32 %v485, %v578
  %v580 = vand.u32 %v579, 4294901760
  %v581 = vsub.f32 %v579, %v580
  %v582 = vand.u32 %v581, 4294901760
  %583 = vmatpush.msra.mxu0 %v582
  %v584 = vand.u32 %v484, 4294901760
  %v585 = vsub.f32 %v484, %v584
  %v586 = vand.u32 %v585, 4294901760
  %v587 = vsub.f32 %v585, %v586
  %v588 = vand.u32 %v587, 4294901760
  %589 = vmatpush.msra.mxu0 %v588
  %v590 = vand.u32 %v490, 4294901760
  %591 = vmatmul.f32.gmra.mxu0 %v590
  %v592 = vpop.f32.mrf.mxu0
  %v593 = vadd.f32 %v528, %v592
  %v594 = vand.u32 %v493, 4294901760
  %595 = vmatmul.f32.gmra.mxu0 %v594
  %v596 = vpop.f32.mrf.mxu0
  %v597 = vadd.f32 %v536, %v596
  %v598 = vand.u32 %v496, 4294901760
  %599 = vmatmul.f32.gmra.mxu0 %v598
  %v600 = vpop.f32.mrf.mxu0
  %v601 = vadd.f32 %v544, %v600
  %v602 = vand.u32 %v499, 4294901760
  %603 = vmatmul.f32.gmra.mxu0 %v602
  %v604 = vpop.f32.mrf.mxu0
  %v605 = vadd.f32 %v552, %v604
  %606 = vdwg.mxu0
  %607 = vmatpush.msra.mxu0 0.0
  %608 = vmatpush.msra.mxu0 0.0
  %609 = vmatpush.msra.mxu0 0.0
  %610 = vmatpush.msra.mxu0 0.0
  %611 = vmatpush.msra.mxu0 0.0
  %612 = vmatpush.msra.mxu0 0.0
  %613 = vmatpush.msra.mxu0 0.0
  %614 = vmatpush.msra.mxu0 0.0
  %615 = vmatpush.msra.mxu0 0.0
  %616 = vmatpush.msra.mxu0 0.0
  %617 = vmatpush.msra.mxu0 0.0
  %618 = vmatpush.msra.mxu0 0.0
  %v619 = vand.u32 %v487, 4294901760
  %v620 = vsub.f32 %v487, %v619
  %621 = vmatpush.msra.mxu0 %v620
  %v622 = vand.u32 %v486, 4294901760
  %v623 = vsub.f32 %v486, %v622
  %624 = vmatpush.msra.mxu0 %v623
  %v625 = vand.u32 %v485, 4294901760
  %v626 = vsub.f32 %v485, %v625
  %627 = vmatpush.msra.mxu0 %v626
  %v628 = vand.u32 %v484, 4294901760
  %v629 = vsub.f32 %v484, %v628
  %630 = vmatpush.msra.mxu0 %v629
  %v631 = vand.u32 %v490, 4294901760
  %v632 = vsub.f32 %v490, %v631
  %633 = vmatmul.f32.gmra.mxu0 %v632
  %v634 = vpop.f32.mrf.mxu0
  %v635 = vadd.f32 %v593, %v634
  %v636 = vand.u32 %v493, 4294901760
  %v637 = vsub.f32 %v493, %v636
  %638 = vmatmul.f32.gmra.mxu0 %v637
  %v639 = vpop.f32.mrf.mxu0
  %v640 = vadd.f32 %v597, %v639
  %v641 = vand.u32 %v496, 4294901760
  %v642 = vsub.f32 %v496, %v641
  %643 = vmatmul.f32.gmra.mxu0 %v642
  %v644 = vpop.f32.mrf.mxu0
  %v645 = vadd.f32 %v601, %v644
  %v646 = vand.u32 %v499, 4294901760
  %v647 = vsub.f32 %v499, %v646
  %648 = vmatmul.f32.gmra.mxu0 %v647
  %v649 = vpop.f32.mrf.mxu0
  %v650 = vadd.f32 %v605, %v649
  %651 = vdwg.mxu0
  %652 = vmatpush.msra.mxu0 0.0
  %653 = vmatpush.msra.mxu0 0.0
  %654 = vmatpush.msra.mxu0 0.0
  %655 = vmatpush.msra.mxu0 0.0
  %656 = vmatpush.msra.mxu0 0.0
  %657 = vmatpush.msra.mxu0 0.0
  %658 = vmatpush.msra.mxu0 0.0
  %659 = vmatpush.msra.mxu0 0.0
  %660 = vmatpush.msra.mxu0 0.0
  %661 = vmatpush.msra.mxu0 0.0
  %662 = vmatpush.msra.mxu0 0.0
  %663 = vmatpush.msra.mxu0 0.0
  %v664 = vand.u32 %v487, 4294901760
  %665 = vmatpush.msra.mxu0 %v664
  %v666 = vand.u32 %v486, 4294901760
  %667 = vmatpush.msra.mxu0 %v666
  %v668 = vand.u32 %v485, 4294901760
  %669 = vmatpush.msra.mxu0 %v668
  %v670 = vand.u32 %v484, 4294901760
  %671 = vmatpush.msra.mxu0 %v670
  %v672 = vand.u32 %v490, 4294901760
  %v673 = vsub.f32 %v490, %v672
  %v674 = vand.u32 %v673, 4294901760
  %675 = vmatmul.f32.gmra.mxu0 %v674
  %v676 = vpop.f32.mrf.mxu0
  %v677 = vadd.f32 %v635, %v676
  %v678 = vand.u32 %v493, 4294901760
  %v679 = vsub.f32 %v493, %v678
  %v680 = vand.u32 %v679, 4294901760
  %681 = vmatmul.f32.gmra.mxu0 %v680
  %v682 = vpop.f32.mrf.mxu0
  %v683 = vadd.f32 %v640, %v682
  %v684 = vand.u32 %v496, 4294901760
  %v685 = vsub.f32 %v496, %v684
  %v686 = vand.u32 %v685, 4294901760
  %687 = vmatmul.f32.gmra.mxu0 %v686
  %v688 = vpop.f32.mrf.mxu0
  %v689 = vadd.f32 %v645, %v688
  %v690 = vand.u32 %v499, 4294901760
  %v691 = vsub.f32 %v499, %v690
  %v692 = vand.u32 %v691, 4294901760
  %693 = vmatmul.f32.gmra.mxu0 %v692
  %v694 = vpop.f32.mrf.mxu0
  %v695 = vadd.f32 %v650, %v694
  %696 = vdwg.mxu0
  %697 = vmatpush.msra.mxu0 0.0
  %698 = vmatpush.msra.mxu0 0.0
  %699 = vmatpush.msra.mxu0 0.0
  %700 = vmatpush.msra.mxu0 0.0
  %701 = vmatpush.msra.mxu0 0.0
  %702 = vmatpush.msra.mxu0 0.0
  %703 = vmatpush.msra.mxu0 0.0
  %704 = vmatpush.msra.mxu0 0.0
  %705 = vmatpush.msra.mxu0 0.0
  %706 = vmatpush.msra.mxu0 0.0
  %707 = vmatpush.msra.mxu0 0.0
  %708 = vmatpush.msra.mxu0 0.0
  %v709 = vand.u32 %v487, 4294901760
  %v710 = vsub.f32 %v487, %v709
  %v711 = vand.u32 %v710, 4294901760
  %712 = vmatpush.msra.mxu0 %v711
  %v713 = vand.u32 %v486, 4294901760
  %v714 = vsub.f32 %v486, %v713
  %v715 = vand.u32 %v714, 4294901760
  %716 = vmatpush.msra.mxu0 %v715
  %v717 = vand.u32 %v485, 4294901760
  %v718 = vsub.f32 %v485, %v717
  %v719 = vand.u32 %v718, 4294901760
  %720 = vmatpush.msra.mxu0 %v719
  %v721 = vand.u32 %v484, 4294901760
  %v722 = vsub.f32 %v484, %v721
  %v723 = vand.u32 %v722, 4294901760
  %724 = vmatpush.msra.mxu0 %v723
  %v725 = vand.u32 %v490, 4294901760
  %726 = vmatmul.f32.gmra.mxu0 %v725
  %v727 = vpop.f32.mrf.mxu0
  %v728 = vadd.f32 %v677, %v727
  %v729 = vand.u32 %v493, 4294901760
  %730 = vmatmul.f32.gmra.mxu0 %v729
  %v731 = vpop.f32.mrf.mxu0
  %v732 = vadd.f32 %v683, %v731
  %v733 = vand.u32 %v496, 4294901760
  %734 = vmatmul.f32.gmra.mxu0 %v733
  %v735 = vpop.f32.mrf.mxu0
  %v736 = vadd.f32 %v689, %v735
  %v737 = vand.u32 %v499, 4294901760
  %738 = vmatmul.f32.gmra.mxu0 %v737
  %v739 = vpop.f32.mrf.mxu0
  %v740 = vadd.f32 %v695, %v739
  %741 = vdwg.mxu0
  %742 = vmatpush.msra.mxu0 0.0
  %743 = vmatpush.msra.mxu0 0.0
  %744 = vmatpush.msra.mxu0 0.0
  %745 = vmatpush.msra.mxu0 0.0
  %746 = vmatpush.msra.mxu0 0.0
  %747 = vmatpush.msra.mxu0 0.0
  %748 = vmatpush.msra.mxu0 0.0
  %749 = vmatpush.msra.mxu0 0.0
  %750 = vmatpush.msra.mxu0 0.0
  %751 = vmatpush.msra.mxu0 0.0
  %752 = vmatpush.msra.mxu0 0.0
  %753 = vmatpush.msra.mxu0 0.0
  %v754 = vand.u32 %v487, 4294901760
  %755 = vmatpush.msra.mxu0 %v754
  %v756 = vand.u32 %v486, 4294901760
  %757 = vmatpush.msra.mxu0 %v756
  %v758 = vand.u32 %v485, 4294901760
  %759 = vmatpush.msra.mxu0 %v758
  %v760 = vand.u32 %v484, 4294901760
  %761 = vmatpush.msra.mxu0 %v760
  %v762 = vand.u32 %v490, 4294901760
  %763 = vmatmul.f32.gmra.mxu0 %v762
  %v764 = vpop.f32.mrf.mxu0
  %v765 = vadd.f32 %v728, %v764
  %v766 = vand.u32 %v493, 4294901760
  %767 = vmatmul.f32.gmra.mxu0 %v766
  %v768 = vpop.f32.mrf.mxu0
  %v769 = vadd.f32 %v732, %v768
  %v770 = vand.u32 %v496, 4294901760
  %771 = vmatmul.f32.gmra.mxu0 %v770
  %v772 = vpop.f32.mrf.mxu0
  %v773 = vadd.f32 %v736, %v772
  %v774 = vand.u32 %v499, 4294901760
  %775 = vmatmul.f32.gmra.mxu0 %v774
  %v776 = vpop.f32.mrf.mxu0
  %v777 = vadd.f32 %v740, %v776
  %778 = vdwg.mxu0
  %v779 = vld [vmem:[%s1] sm:$0x1]
  %v780 = vperm.slane %v779, 0
  %v781 = vmul.f32 %v765, %v780
  %v782 = vmul.f32 %v769, %v780
  %v783 = vmul.f32 %v773, %v780
  %v784 = vmul.f32 %v777, %v780
  %v785 = vld [vmem:[%s1 + $0x1] sm:$0x1]
  %v786 = vperm.slane %v785, 0
  %v787 = vadd.f32 %v781, %v786
  %v788 = vadd.f32 %v782, %v786
  %v789 = vadd.f32 %v783, %v786
  %v790 = vadd.f32 %v784, %v786
  %v791 = vld [vmem:[%s1 + $0x28] sm:$0xff]
  %v792 = vld [vmem:[%s1 + $0x30] sm:$0xff]
  %v793 = vld [vmem:[%s1 + $0x38] sm:$0xff]
  %v794 = vld [vmem:[%s1 + $0x40] sm:$0xff]
  %799 = vrot.lane.b32.xlu0 %v787, 112
  %v800 = vpop.permute.xlu0 %799
  %801 = vrot.lane.b32.xlu0 %v788, 112
  %v802 = vpop.permute.xlu0 %801
  %803 = vrot.lane.b32.xlu0 %v789, 112
  %v804 = vpop.permute.xlu0 %803
  %805 = vrot.lane.b32.xlu0 %v790, 112
  %v806 = vpop.permute.xlu0 %805
  %vm807 = vcmask 64512
  %v808 = vsel %vm807, %v787, 0
  %v810 = vsel %vm807, %v788, 0
  %v812 = vsel %vm807, %v789, 0
  %v814 = vsel %vm807, %v790, 0
  %v816 = vsel %vm807, %v800, 0
  %v818 = vsel %vm807, %v802, 0
  %v820 = vsel %vm807, %v804, 0
  %v822 = vsel %vm807, %v806, 0
  %824 = vmatpush.xpose.msra.mxu0 0.0
  %825 = vmatpush.xpose.msra.mxu0 0.0
  %826 = vmatpush.xpose.msra.mxu0 0.0
  %827 = vmatpush.xpose.msra.mxu0 0.0
  %828 = vmatpush.xpose.msra.mxu0 0.0
  %829 = vmatpush.xpose.msra.mxu0 0.0
  %830 = vmatpush.xpose.msra.mxu0 0.0
  %831 = vmatpush.xpose.msra.mxu0 0.0
  %832 = vmatpush.xpose.msra.mxu0 0.0
  %833 = vmatpush.xpose.msra.mxu0 0.0
  %834 = vmatpush.xpose.msra.mxu0 0.0
  %835 = vmatpush.xpose.msra.mxu0 0.0
  %v836 = vand.u32 %v822, 4294901760
  %837 = vmatpush.xpose.msra.mxu0 %v836
  %v838 = vand.u32 %v820, 4294901760
  %839 = vmatpush.xpose.msra.mxu0 %v838
  %v840 = vand.u32 %v818, 4294901760
  %841 = vmatpush.xpose.msra.mxu0 %v840
  %v842 = vand.u32 %v816, 4294901760
  %843 = vmatpush.xpose.msra.mxu0 %v842
  %v844 = vand.u32 %v808, 4294901760
  %v845 = vsub.f32 %v808, %v844
  %v846 = vand.u32 %v845, 4294901760
  %v847 = vsub.f32 %v845, %v846
  %v848 = vand.u32 %v847, 4294901760
  %849 = vmatmul.f32.gmra.mxu0 %v848
  %v850 = vpop.f32.mrf.mxu0
  %v851 = vadd.f32 %v791, %v850
  %v852 = vand.u32 %v810, 4294901760
  %v853 = vsub.f32 %v810, %v852
  %v854 = vand.u32 %v853, 4294901760
  %v855 = vsub.f32 %v853, %v854
  %v856 = vand.u32 %v855, 4294901760
  %857 = vmatmul.f32.gmra.mxu0 %v856
  %v858 = vpop.f32.mrf.mxu0
  %v859 = vadd.f32 %v792, %v858
  %v860 = vand.u32 %v812, 4294901760
  %v861 = vsub.f32 %v812, %v860
  %v862 = vand.u32 %v861, 4294901760
  %v863 = vsub.f32 %v861, %v862
  %v864 = vand.u32 %v863, 4294901760
  %865 = vmatmul.f32.gmra.mxu0 %v864
  %v866 = vpop.f32.mrf.mxu0
  %v867 = vadd.f32 %v793, %v866
  %v868 = vand.u32 %v814, 4294901760
  %v869 = vsub.f32 %v814, %v868
  %v870 = vand.u32 %v869, 4294901760
  %v871 = vsub.f32 %v869, %v870
  %v872 = vand.u32 %v871, 4294901760
  %873 = vmatmul.f32.gmra.mxu0 %v872
  %v874 = vpop.f32.mrf.mxu0
  %v875 = vadd.f32 %v794, %v874
  %876 = vdwg.mxu0
  %877 = vmatpush.xpose.msra.mxu0 0.0
  %878 = vmatpush.xpose.msra.mxu0 0.0
  %879 = vmatpush.xpose.msra.mxu0 0.0
  %880 = vmatpush.xpose.msra.mxu0 0.0
  %881 = vmatpush.xpose.msra.mxu0 0.0
  %882 = vmatpush.xpose.msra.mxu0 0.0
  %883 = vmatpush.xpose.msra.mxu0 0.0
  %884 = vmatpush.xpose.msra.mxu0 0.0
  %885 = vmatpush.xpose.msra.mxu0 0.0
  %886 = vmatpush.xpose.msra.mxu0 0.0
  %887 = vmatpush.xpose.msra.mxu0 0.0
  %888 = vmatpush.xpose.msra.mxu0 0.0
  %v889 = vand.u32 %v822, 4294901760
  %v890 = vsub.f32 %v822, %v889
  %v891 = vand.u32 %v890, 4294901760
  %v892 = vsub.f32 %v890, %v891
  %v893 = vand.u32 %v892, 4294901760
  %894 = vmatpush.xpose.msra.mxu0 %v893
  %v895 = vand.u32 %v820, 4294901760
  %v896 = vsub.f32 %v820, %v895
  %v897 = vand.u32 %v896, 4294901760
  %v898 = vsub.f32 %v896, %v897
  %v899 = vand.u32 %v898, 4294901760
  %900 = vmatpush.xpose.msra.mxu0 %v899
  %v901 = vand.u32 %v818, 4294901760
  %v902 = vsub.f32 %v818, %v901
  %v903 = vand.u32 %v902, 4294901760
  %v904 = vsub.f32 %v902, %v903
  %v905 = vand.u32 %v904, 4294901760
  %906 = vmatpush.xpose.msra.mxu0 %v905
  %v907 = vand.u32 %v816, 4294901760
  %v908 = vsub.f32 %v816, %v907
  %v909 = vand.u32 %v908, 4294901760
  %v910 = vsub.f32 %v908, %v909
  %v911 = vand.u32 %v910, 4294901760
  %912 = vmatpush.xpose.msra.mxu0 %v911
  %v913 = vand.u32 %v808, 4294901760
  %914 = vmatmul.f32.gmra.mxu0 %v913
  %v915 = vpop.f32.mrf.mxu0
  %v916 = vadd.f32 %v851, %v915
  %v917 = vand.u32 %v810, 4294901760
  %918 = vmatmul.f32.gmra.mxu0 %v917
  %v919 = vpop.f32.mrf.mxu0
  %v920 = vadd.f32 %v859, %v919
  %v921 = vand.u32 %v812, 4294901760
  %922 = vmatmul.f32.gmra.mxu0 %v921
  %v923 = vpop.f32.mrf.mxu0
  %v924 = vadd.f32 %v867, %v923
  %v925 = vand.u32 %v814, 4294901760
  %926 = vmatmul.f32.gmra.mxu0 %v925
  %v927 = vpop.f32.mrf.mxu0
  %v928 = vadd.f32 %v875, %v927
  %929 = vdwg.mxu0
  %930 = vmatpush.xpose.msra.mxu0 0.0
  %931 = vmatpush.xpose.msra.mxu0 0.0
  %932 = vmatpush.xpose.msra.mxu0 0.0
  %933 = vmatpush.xpose.msra.mxu0 0.0
  %934 = vmatpush.xpose.msra.mxu0 0.0
  %935 = vmatpush.xpose.msra.mxu0 0.0
  %936 = vmatpush.xpose.msra.mxu0 0.0
  %937 = vmatpush.xpose.msra.mxu0 0.0
  %938 = vmatpush.xpose.msra.mxu0 0.0
  %939 = vmatpush.xpose.msra.mxu0 0.0
  %940 = vmatpush.xpose.msra.mxu0 0.0
  %941 = vmatpush.xpose.msra.mxu0 0.0
  %v942 = vand.u32 %v822, 4294901760
  %v943 = vsub.f32 %v822, %v942
  %944 = vmatpush.xpose.msra.mxu0 %v943
  %v945 = vand.u32 %v820, 4294901760
  %v946 = vsub.f32 %v820, %v945
  %947 = vmatpush.xpose.msra.mxu0 %v946
  %v948 = vand.u32 %v818, 4294901760
  %v949 = vsub.f32 %v818, %v948
  %950 = vmatpush.xpose.msra.mxu0 %v949
  %v951 = vand.u32 %v816, 4294901760
  %v952 = vsub.f32 %v816, %v951
  %953 = vmatpush.xpose.msra.mxu0 %v952
  %v954 = vand.u32 %v808, 4294901760
  %v955 = vsub.f32 %v808, %v954
  %956 = vmatmul.f32.gmra.mxu0 %v955
  %v957 = vpop.f32.mrf.mxu0
  %v958 = vadd.f32 %v916, %v957
  %v959 = vand.u32 %v810, 4294901760
  %v960 = vsub.f32 %v810, %v959
  %961 = vmatmul.f32.gmra.mxu0 %v960
  %v962 = vpop.f32.mrf.mxu0
  %v963 = vadd.f32 %v920, %v962
  %v964 = vand.u32 %v812, 4294901760
  %v965 = vsub.f32 %v812, %v964
  %966 = vmatmul.f32.gmra.mxu0 %v965
  %v967 = vpop.f32.mrf.mxu0
  %v968 = vadd.f32 %v924, %v967
  %v969 = vand.u32 %v814, 4294901760
  %v970 = vsub.f32 %v814, %v969
  %971 = vmatmul.f32.gmra.mxu0 %v970
  %v972 = vpop.f32.mrf.mxu0
  %v973 = vadd.f32 %v928, %v972
  %974 = vdwg.mxu0
  %975 = vmatpush.xpose.msra.mxu0 0.0
  %976 = vmatpush.xpose.msra.mxu0 0.0
  %977 = vmatpush.xpose.msra.mxu0 0.0
  %978 = vmatpush.xpose.msra.mxu0 0.0
  %979 = vmatpush.xpose.msra.mxu0 0.0
  %980 = vmatpush.xpose.msra.mxu0 0.0
  %981 = vmatpush.xpose.msra.mxu0 0.0
  %982 = vmatpush.xpose.msra.mxu0 0.0
  %983 = vmatpush.xpose.msra.mxu0 0.0
  %984 = vmatpush.xpose.msra.mxu0 0.0
  %985 = vmatpush.xpose.msra.mxu0 0.0
  %986 = vmatpush.xpose.msra.mxu0 0.0
  %v987 = vand.u32 %v822, 4294901760
  %988 = vmatpush.xpose.msra.mxu0 %v987
  %v989 = vand.u32 %v820, 4294901760
  %990 = vmatpush.xpose.msra.mxu0 %v989
  %v991 = vand.u32 %v818, 4294901760
  %992 = vmatpush.xpose.msra.mxu0 %v991
  %v993 = vand.u32 %v816, 4294901760
  %994 = vmatpush.xpose.msra.mxu0 %v993
  %v995 = vand.u32 %v808, 4294901760
  %v996 = vsub.f32 %v808, %v995
  %v997 = vand.u32 %v996, 4294901760
  %998 = vmatmul.f32.gmra.mxu0 %v997
  %v999 = vpop.f32.mrf.mxu0
  %v1000 = vadd.f32 %v958, %v999
  %v1001 = vand.u32 %v810, 4294901760
  %v1002 = vsub.f32 %v810, %v1001
  %v1003 = vand.u32 %v1002, 4294901760
  %1004 = vmatmul.f32.gmra.mxu0 %v1003
  %v1005 = vpop.f32.mrf.mxu0
  %v1006 = vadd.f32 %v963, %v1005
  %v1007 = vand.u32 %v812, 4294901760
  %v1008 = vsub.f32 %v812, %v1007
  %v1009 = vand.u32 %v1008, 4294901760
  %1010 = vmatmul.f32.gmra.mxu0 %v1009
  %v1011 = vpop.f32.mrf.mxu0
  %v1012 = vadd.f32 %v968, %v1011
  %v1013 = vand.u32 %v814, 4294901760
  %v1014 = vsub.f32 %v814, %v1013
  %v1015 = vand.u32 %v1014, 4294901760
  %1016 = vmatmul.f32.gmra.mxu0 %v1015
  %v1017 = vpop.f32.mrf.mxu0
  %v1018 = vadd.f32 %v973, %v1017
  %1019 = vdwg.mxu0
  %1020 = vmatpush.xpose.msra.mxu0 0.0
  %1021 = vmatpush.xpose.msra.mxu0 0.0
  %1022 = vmatpush.xpose.msra.mxu0 0.0
  %1023 = vmatpush.xpose.msra.mxu0 0.0
  %1024 = vmatpush.xpose.msra.mxu0 0.0
  %1025 = vmatpush.xpose.msra.mxu0 0.0
  %1026 = vmatpush.xpose.msra.mxu0 0.0
  %1027 = vmatpush.xpose.msra.mxu0 0.0
  %1028 = vmatpush.xpose.msra.mxu0 0.0
  %1029 = vmatpush.xpose.msra.mxu0 0.0
  %1030 = vmatpush.xpose.msra.mxu0 0.0
  %1031 = vmatpush.xpose.msra.mxu0 0.0
  %v1032 = vand.u32 %v822, 4294901760
  %v1033 = vsub.f32 %v822, %v1032
  %v1034 = vand.u32 %v1033, 4294901760
  %1035 = vmatpush.xpose.msra.mxu0 %v1034
  %v1036 = vand.u32 %v820, 4294901760
  %v1037 = vsub.f32 %v820, %v1036
  %v1038 = vand.u32 %v1037, 4294901760
  %1039 = vmatpush.xpose.msra.mxu0 %v1038
  %v1040 = vand.u32 %v818, 4294901760
  %v1041 = vsub.f32 %v818, %v1040
  %v1042 = vand.u32 %v1041, 4294901760
  %1043 = vmatpush.xpose.msra.mxu0 %v1042
  %v1044 = vand.u32 %v816, 4294901760
  %v1045 = vsub.f32 %v816, %v1044
  %v1046 = vand.u32 %v1045, 4294901760
  %1047 = vmatpush.xpose.msra.mxu0 %v1046
  %v1048 = vand.u32 %v808, 4294901760
  %1049 = vmatmul.f32.gmra.mxu0 %v1048
  %v1050 = vpop.f32.mrf.mxu0
  %v1051 = vadd.f32 %v1000, %v1050
  %v1052 = vand.u32 %v810, 4294901760
  %1053 = vmatmul.f32.gmra.mxu0 %v1052
  %v1054 = vpop.f32.mrf.mxu0
  %v1055 = vadd.f32 %v1006, %v1054
  %v1056 = vand.u32 %v812, 4294901760
  %1057 = vmatmul.f32.gmra.mxu0 %v1056
  %v1058 = vpop.f32.mrf.mxu0
  %v1059 = vadd.f32 %v1012, %v1058
  %v1060 = vand.u32 %v814, 4294901760
  %1061 = vmatmul.f32.gmra.mxu0 %v1060
  %v1062 = vpop.f32.mrf.mxu0
  %v1063 = vadd.f32 %v1018, %v1062
  %1064 = vdwg.mxu0
  %1065 = vmatpush.xpose.msra.mxu0 0.0
  %1066 = vmatpush.xpose.msra.mxu0 0.0
  %1067 = vmatpush.xpose.msra.mxu0 0.0
  %1068 = vmatpush.xpose.msra.mxu0 0.0
  %1069 = vmatpush.xpose.msra.mxu0 0.0
  %1070 = vmatpush.xpose.msra.mxu0 0.0
  %1071 = vmatpush.xpose.msra.mxu0 0.0
  %1072 = vmatpush.xpose.msra.mxu0 0.0
  %1073 = vmatpush.xpose.msra.mxu0 0.0
  %1074 = vmatpush.xpose.msra.mxu0 0.0
  %1075 = vmatpush.xpose.msra.mxu0 0.0
  %1076 = vmatpush.xpose.msra.mxu0 0.0
  %v1077 = vand.u32 %v822, 4294901760
  %1078 = vmatpush.xpose.msra.mxu0 %v1077
  %v1079 = vand.u32 %v820, 4294901760
  %1080 = vmatpush.xpose.msra.mxu0 %v1079
  %v1081 = vand.u32 %v818, 4294901760
  %1082 = vmatpush.xpose.msra.mxu0 %v1081
  %v1083 = vand.u32 %v816, 4294901760
  %1084 = vmatpush.xpose.msra.mxu0 %v1083
  %v1085 = vand.u32 %v808, 4294901760
  %1086 = vmatmul.f32.gmra.mxu0 %v1085
  %v1087 = vpop.f32.mrf.mxu0
  %v1088 = vadd.f32 %v1051, %v1087
  %v1089 = vand.u32 %v810, 4294901760
  %1090 = vmatmul.f32.gmra.mxu0 %v1089
  %v1091 = vpop.f32.mrf.mxu0
  %v1092 = vadd.f32 %v1055, %v1091
  %v1093 = vand.u32 %v812, 4294901760
  %1094 = vmatmul.f32.gmra.mxu0 %v1093
  %v1095 = vpop.f32.mrf.mxu0
  %v1096 = vadd.f32 %v1059, %v1095
  %v1097 = vand.u32 %v814, 4294901760
  %1098 = vmatmul.f32.gmra.mxu0 %v1097
  %v1099 = vpop.f32.mrf.mxu0
  %v1100 = vadd.f32 %v1063, %v1099
  %1101 = vdwg.mxu0
  %v1102 = vsel %vm488, %v1088, -inf
  %1103 = vmax.xlane.f32.xlu0 %v1102
  %v1104 = vpop.xlane.xlu0 %1103
  %v1105 = vsel %vm488, %v1092, -inf
  %1106 = vmax.xlane.f32.xlu0 %v1105
  %v1107 = vpop.xlane.xlu0 %1106
  %v1108 = vsel %vm488, %v1096, -inf
  %1109 = vmax.xlane.f32.xlu0 %v1108
  %v1110 = vpop.xlane.xlu0 %1109
  %v1111 = vsel %vm488, %v1100, -inf
  %1112 = vmax.xlane.f32.xlu0 %v1111
  %v1113 = vpop.xlane.xlu0 %1112
  %v1114 = vsub.f32 %v1088, %v1104
  %v1115 = vsub.f32 %v1092, %v1107
  %v1116 = vsub.f32 %v1096, %v1110
  %v1117 = vsub.f32 %v1100, %v1113
  %v1118 = vmul.f32 %v1114, 1.442695
  %v1119 = vpow.pop %v1118
  %v1120 = vmul.f32 %v1115, 1.442695
  %v1121 = vpow.pop %v1120
  %v1122 = vmul.f32 %v1116, 1.442695
  %v1123 = vpow.pop %v1122
  %v1124 = vmul.f32 %v1117, 1.442695
  %v1125 = vpow.pop %v1124
  %v1126 = vsel %vm488, %v1119, 0.0
  %1127 = vadd.xlane.f32.xlu0 %v1126
  %v1128 = vpop.xlane.xlu0 %1127
  %v1129 = vsel %vm488, %v1121, 0.0
  %1130 = vadd.xlane.f32.xlu0 %v1129
  %v1131 = vpop.xlane.xlu0 %1130
  %v1132 = vsel %vm488, %v1123, 0.0
  %1133 = vadd.xlane.f32.xlu0 %v1132
  %v1134 = vpop.xlane.xlu0 %1133
  %v1135 = vsel %vm488, %v1125, 0.0
  %1136 = vadd.xlane.f32.xlu0 %v1135
  %v1137 = vpop.xlane.xlu0 %1136
  %v1138 = vrcp.pop %v1128
  %v1139 = vrcp.pop %v1131
  %v1140 = vrcp.pop %v1134
  %v1141 = vrcp.pop %v1137
  %v1142 = vmul.f32 %v1119, %v1138
  %v1143 = vmul.f32 %v1121, %v1139
  %v1144 = vmul.f32 %v1123, %v1140
  %v1145 = vmul.f32 %v1125, %v1141
  %1146 = vrot.lane.b32.xlu0 %v787, 96
  %v1147 = vpop.permute.xlu0 %1146
  %1148 = vrot.lane.b32.xlu0 %v788, 96
  %v1149 = vpop.permute.xlu0 %1148
  %1150 = vrot.lane.b32.xlu0 %v789, 96
  %v1151 = vpop.permute.xlu0 %1150
  %1152 = vrot.lane.b32.xlu0 %v790, 96
  %v1153 = vpop.permute.xlu0 %1152
  %v1159 = vsel %vm488, %v1142, 0
  %v1162 = vsel %vm488, %v1143, 0
  %v1165 = vsel %vm488, %v1144, 0
  %v1168 = vsel %vm488, %v1145, 0
  %1170 = vmatpush.msra.mxu0 0.0
  %1171 = vmatpush.msra.mxu0 0.0
  %1172 = vmatpush.msra.mxu0 0.0
  %1173 = vmatpush.msra.mxu0 0.0
  %1174 = vmatpush.msra.mxu0 0.0
  %1175 = vmatpush.msra.mxu0 0.0
  %1176 = vmatpush.msra.mxu0 0.0
  %1177 = vmatpush.msra.mxu0 0.0
  %1178 = vmatpush.msra.mxu0 0.0
  %1179 = vmatpush.msra.mxu0 0.0
  %1180 = vmatpush.msra.mxu0 0.0
  %1181 = vmatpush.msra.mxu0 0.0
  %v1182 = vand.u32 %v1153, 4294901760
  %1183 = vmatpush.msra.mxu0 %v1182
  %v1184 = vand.u32 %v1151, 4294901760
  %1185 = vmatpush.msra.mxu0 %v1184
  %v1186 = vand.u32 %v1149, 4294901760
  %1187 = vmatpush.msra.mxu0 %v1186
  %v1188 = vand.u32 %v1147, 4294901760
  %1189 = vmatpush.msra.mxu0 %v1188
  %v1190 = vand.u32 %v1159, 4294901760
  %v1191 = vsub.f32 %v1159, %v1190
  %v1192 = vand.u32 %v1191, 4294901760
  %v1193 = vsub.f32 %v1191, %v1192
  %v1194 = vand.u32 %v1193, 4294901760
  %1195 = vmatmul.f32.gmra.mxu0 %v1194
  %v1196 = vpop.f32.mrf.mxu0
  %v1197 = vadd.f32 0.0, %v1196
  %v1198 = vand.u32 %v1162, 4294901760
  %v1199 = vsub.f32 %v1162, %v1198
  %v1200 = vand.u32 %v1199, 4294901760
  %v1201 = vsub.f32 %v1199, %v1200
  %v1202 = vand.u32 %v1201, 4294901760
  %1203 = vmatmul.f32.gmra.mxu0 %v1202
  %v1204 = vpop.f32.mrf.mxu0
  %v1205 = vadd.f32 0.0, %v1204
  %v1206 = vand.u32 %v1165, 4294901760
  %v1207 = vsub.f32 %v1165, %v1206
  %v1208 = vand.u32 %v1207, 4294901760
  %v1209 = vsub.f32 %v1207, %v1208
  %v1210 = vand.u32 %v1209, 4294901760
  %1211 = vmatmul.f32.gmra.mxu0 %v1210
  %v1212 = vpop.f32.mrf.mxu0
  %v1213 = vadd.f32 0.0, %v1212
  %v1214 = vand.u32 %v1168, 4294901760
  %v1215 = vsub.f32 %v1168, %v1214
  %v1216 = vand.u32 %v1215, 4294901760
  %v1217 = vsub.f32 %v1215, %v1216
  %v1218 = vand.u32 %v1217, 4294901760
  %1219 = vmatmul.f32.gmra.mxu0 %v1218
  %v1220 = vpop.f32.mrf.mxu0
  %v1221 = vadd.f32 0.0, %v1220
  %1222 = vdwg.mxu0
  %1223 = vmatpush.msra.mxu0 0.0
  %1224 = vmatpush.msra.mxu0 0.0
  %1225 = vmatpush.msra.mxu0 0.0
  %1226 = vmatpush.msra.mxu0 0.0
  %1227 = vmatpush.msra.mxu0 0.0
  %1228 = vmatpush.msra.mxu0 0.0
  %1229 = vmatpush.msra.mxu0 0.0
  %1230 = vmatpush.msra.mxu0 0.0
  %1231 = vmatpush.msra.mxu0 0.0
  %1232 = vmatpush.msra.mxu0 0.0
  %1233 = vmatpush.msra.mxu0 0.0
  %1234 = vmatpush.msra.mxu0 0.0
  %v1235 = vand.u32 %v1153, 4294901760
  %v1236 = vsub.f32 %v1153, %v1235
  %v1237 = vand.u32 %v1236, 4294901760
  %v1238 = vsub.f32 %v1236, %v1237
  %v1239 = vand.u32 %v1238, 4294901760
  %1240 = vmatpush.msra.mxu0 %v1239
  %v1241 = vand.u32 %v1151, 4294901760
  %v1242 = vsub.f32 %v1151, %v1241
  %v1243 = vand.u32 %v1242, 4294901760
  %v1244 = vsub.f32 %v1242, %v1243
  %v1245 = vand.u32 %v1244, 4294901760
  %1246 = vmatpush.msra.mxu0 %v1245
  %v1247 = vand.u32 %v1149, 4294901760
  %v1248 = vsub.f32 %v1149, %v1247
  %v1249 = vand.u32 %v1248, 4294901760
  %v1250 = vsub.f32 %v1248, %v1249
  %v1251 = vand.u32 %v1250, 4294901760
  %1252 = vmatpush.msra.mxu0 %v1251
  %v1253 = vand.u32 %v1147, 4294901760
  %v1254 = vsub.f32 %v1147, %v1253
  %v1255 = vand.u32 %v1254, 4294901760
  %v1256 = vsub.f32 %v1254, %v1255
  %v1257 = vand.u32 %v1256, 4294901760
  %1258 = vmatpush.msra.mxu0 %v1257
  %v1259 = vand.u32 %v1159, 4294901760
  %1260 = vmatmul.f32.gmra.mxu0 %v1259
  %v1261 = vpop.f32.mrf.mxu0
  %v1262 = vadd.f32 %v1197, %v1261
  %v1263 = vand.u32 %v1162, 4294901760
  %1264 = vmatmul.f32.gmra.mxu0 %v1263
  %v1265 = vpop.f32.mrf.mxu0
  %v1266 = vadd.f32 %v1205, %v1265
  %v1267 = vand.u32 %v1165, 4294901760
  %1268 = vmatmul.f32.gmra.mxu0 %v1267
  %v1269 = vpop.f32.mrf.mxu0
  %v1270 = vadd.f32 %v1213, %v1269
  %v1271 = vand.u32 %v1168, 4294901760
  %1272 = vmatmul.f32.gmra.mxu0 %v1271
  %v1273 = vpop.f32.mrf.mxu0
  %v1274 = vadd.f32 %v1221, %v1273
  %1275 = vdwg.mxu0
  %1276 = vmatpush.msra.mxu0 0.0
  %1277 = vmatpush.msra.mxu0 0.0
  %1278 = vmatpush.msra.mxu0 0.0
  %1279 = vmatpush.msra.mxu0 0.0
  %1280 = vmatpush.msra.mxu0 0.0
  %1281 = vmatpush.msra.mxu0 0.0
  %1282 = vmatpush.msra.mxu0 0.0
  %1283 = vmatpush.msra.mxu0 0.0
  %1284 = vmatpush.msra.mxu0 0.0
  %1285 = vmatpush.msra.mxu0 0.0
  %1286 = vmatpush.msra.mxu0 0.0
  %1287 = vmatpush.msra.mxu0 0.0
  %v1288 = vand.u32 %v1153, 4294901760
  %v1289 = vsub.f32 %v1153, %v1288
  %1290 = vmatpush.msra.mxu0 %v1289
  %v1291 = vand.u32 %v1151, 4294901760
  %v1292 = vsub.f32 %v1151, %v1291
  %1293 = vmatpush.msra.mxu0 %v1292
  %v1294 = vand.u32 %v1149, 4294901760
  %v1295 = vsub.f32 %v1149, %v1294
  %1296 = vmatpush.msra.mxu0 %v1295
  %v1297 = vand.u32 %v1147, 4294901760
  %v1298 = vsub.f32 %v1147, %v1297
  %1299 = vmatpush.msra.mxu0 %v1298
  %v1300 = vand.u32 %v1159, 4294901760
  %v1301 = vsub.f32 %v1159, %v1300
  %1302 = vmatmul.f32.gmra.mxu0 %v1301
  %v1303 = vpop.f32.mrf.mxu0
  %v1304 = vadd.f32 %v1262, %v1303
  %v1305 = vand.u32 %v1162, 4294901760
  %v1306 = vsub.f32 %v1162, %v1305
  %1307 = vmatmul.f32.gmra.mxu0 %v1306
  %v1308 = vpop.f32.mrf.mxu0
  %v1309 = vadd.f32 %v1266, %v1308
  %v1310 = vand.u32 %v1165, 4294901760
  %v1311 = vsub.f32 %v1165, %v1310
  %1312 = vmatmul.f32.gmra.mxu0 %v1311
  %v1313 = vpop.f32.mrf.mxu0
  %v1314 = vadd.f32 %v1270, %v1313
  %v1315 = vand.u32 %v1168, 4294901760
  %v1316 = vsub.f32 %v1168, %v1315
  %1317 = vmatmul.f32.gmra.mxu0 %v1316
  %v1318 = vpop.f32.mrf.mxu0
  %v1319 = vadd.f32 %v1274, %v1318
  %1320 = vdwg.mxu0
  %1321 = vmatpush.msra.mxu0 0.0
  %1322 = vmatpush.msra.mxu0 0.0
  %1323 = vmatpush.msra.mxu0 0.0
  %1324 = vmatpush.msra.mxu0 0.0
  %1325 = vmatpush.msra.mxu0 0.0
  %1326 = vmatpush.msra.mxu0 0.0
  %1327 = vmatpush.msra.mxu0 0.0
  %1328 = vmatpush.msra.mxu0 0.0
  %1329 = vmatpush.msra.mxu0 0.0
  %1330 = vmatpush.msra.mxu0 0.0
  %1331 = vmatpush.msra.mxu0 0.0
  %1332 = vmatpush.msra.mxu0 0.0
  %v1333 = vand.u32 %v1153, 4294901760
  %1334 = vmatpush.msra.mxu0 %v1333
  %v1335 = vand.u32 %v1151, 4294901760
  %1336 = vmatpush.msra.mxu0 %v1335
  %v1337 = vand.u32 %v1149, 4294901760
  %1338 = vmatpush.msra.mxu0 %v1337
  %v1339 = vand.u32 %v1147, 4294901760
  %1340 = vmatpush.msra.mxu0 %v1339
  %v1341 = vand.u32 %v1159, 4294901760
  %v1342 = vsub.f32 %v1159, %v1341
  %v1343 = vand.u32 %v1342, 4294901760
  %1344 = vmatmul.f32.gmra.mxu0 %v1343
  %v1345 = vpop.f32.mrf.mxu0
  %v1346 = vadd.f32 %v1304, %v1345
  %v1347 = vand.u32 %v1162, 4294901760
  %v1348 = vsub.f32 %v1162, %v1347
  %v1349 = vand.u32 %v1348, 4294901760
  %1350 = vmatmul.f32.gmra.mxu0 %v1349
  %v1351 = vpop.f32.mrf.mxu0
  %v1352 = vadd.f32 %v1309, %v1351
  %v1353 = vand.u32 %v1165, 4294901760
  %v1354 = vsub.f32 %v1165, %v1353
  %v1355 = vand.u32 %v1354, 4294901760
  %1356 = vmatmul.f32.gmra.mxu0 %v1355
  %v1357 = vpop.f32.mrf.mxu0
  %v1358 = vadd.f32 %v1314, %v1357
  %v1359 = vand.u32 %v1168, 4294901760
  %v1360 = vsub.f32 %v1168, %v1359
  %v1361 = vand.u32 %v1360, 4294901760
  %1362 = vmatmul.f32.gmra.mxu0 %v1361
  %v1363 = vpop.f32.mrf.mxu0
  %v1364 = vadd.f32 %v1319, %v1363
  %1365 = vdwg.mxu0
  %1366 = vmatpush.msra.mxu0 0.0
  %1367 = vmatpush.msra.mxu0 0.0
  %1368 = vmatpush.msra.mxu0 0.0
  %1369 = vmatpush.msra.mxu0 0.0
  %1370 = vmatpush.msra.mxu0 0.0
  %1371 = vmatpush.msra.mxu0 0.0
  %1372 = vmatpush.msra.mxu0 0.0
  %1373 = vmatpush.msra.mxu0 0.0
  %1374 = vmatpush.msra.mxu0 0.0
  %1375 = vmatpush.msra.mxu0 0.0
  %1376 = vmatpush.msra.mxu0 0.0
  %1377 = vmatpush.msra.mxu0 0.0
  %v1378 = vand.u32 %v1153, 4294901760
  %v1379 = vsub.f32 %v1153, %v1378
  %v1380 = vand.u32 %v1379, 4294901760
  %1381 = vmatpush.msra.mxu0 %v1380
  %v1382 = vand.u32 %v1151, 4294901760
  %v1383 = vsub.f32 %v1151, %v1382
  %v1384 = vand.u32 %v1383, 4294901760
  %1385 = vmatpush.msra.mxu0 %v1384
  %v1386 = vand.u32 %v1149, 4294901760
  %v1387 = vsub.f32 %v1149, %v1386
  %v1388 = vand.u32 %v1387, 4294901760
  %1389 = vmatpush.msra.mxu0 %v1388
  %v1390 = vand.u32 %v1147, 4294901760
  %v1391 = vsub.f32 %v1147, %v1390
  %v1392 = vand.u32 %v1391, 4294901760
  %1393 = vmatpush.msra.mxu0 %v1392
  %v1394 = vand.u32 %v1159, 4294901760
  %1395 = vmatmul.f32.gmra.mxu0 %v1394
  %v1396 = vpop.f32.mrf.mxu0
  %v1397 = vadd.f32 %v1346, %v1396
  %v1398 = vand.u32 %v1162, 4294901760
  %1399 = vmatmul.f32.gmra.mxu0 %v1398
  %v1400 = vpop.f32.mrf.mxu0
  %v1401 = vadd.f32 %v1352, %v1400
  %v1402 = vand.u32 %v1165, 4294901760
  %1403 = vmatmul.f32.gmra.mxu0 %v1402
  %v1404 = vpop.f32.mrf.mxu0
  %v1405 = vadd.f32 %v1358, %v1404
  %v1406 = vand.u32 %v1168, 4294901760
  %1407 = vmatmul.f32.gmra.mxu0 %v1406
  %v1408 = vpop.f32.mrf.mxu0
  %v1409 = vadd.f32 %v1364, %v1408
  %1410 = vdwg.mxu0
  %1411 = vmatpush.msra.mxu0 0.0
  %1412 = vmatpush.msra.mxu0 0.0
  %1413 = vmatpush.msra.mxu0 0.0
  %1414 = vmatpush.msra.mxu0 0.0
  %1415 = vmatpush.msra.mxu0 0.0
  %1416 = vmatpush.msra.mxu0 0.0
  %1417 = vmatpush.msra.mxu0 0.0
  %1418 = vmatpush.msra.mxu0 0.0
  %1419 = vmatpush.msra.mxu0 0.0
  %1420 = vmatpush.msra.mxu0 0.0
  %1421 = vmatpush.msra.mxu0 0.0
  %1422 = vmatpush.msra.mxu0 0.0
  %v1423 = vand.u32 %v1153, 4294901760
  %1424 = vmatpush.msra.mxu0 %v1423
  %v1425 = vand.u32 %v1151, 4294901760
  %1426 = vmatpush.msra.mxu0 %v1425
  %v1427 = vand.u32 %v1149, 4294901760
  %1428 = vmatpush.msra.mxu0 %v1427
  %v1429 = vand.u32 %v1147, 4294901760
  %1430 = vmatpush.msra.mxu0 %v1429
  %v1431 = vand.u32 %v1159, 4294901760
  %1432 = vmatmul.f32.gmra.mxu0 %v1431
  %v1433 = vpop.f32.mrf.mxu0
  %v1434 = vadd.f32 %v1397, %v1433
  %v1435 = vand.u32 %v1162, 4294901760
  %1436 = vmatmul.f32.gmra.mxu0 %v1435
  %v1437 = vpop.f32.mrf.mxu0
  %v1438 = vadd.f32 %v1401, %v1437
  %v1439 = vand.u32 %v1165, 4294901760
  %1440 = vmatmul.f32.gmra.mxu0 %v1439
  %v1441 = vpop.f32.mrf.mxu0
  %v1442 = vadd.f32 %v1405, %v1441
  %v1443 = vand.u32 %v1168, 4294901760
  %1444 = vmatmul.f32.gmra.mxu0 %v1443
  %v1445 = vpop.f32.mrf.mxu0
  %v1446 = vadd.f32 %v1409, %v1445
  %1447 = vdwg.mxu0
  %1448 = vrot.lane.b32.xlu0 %v787, 120
  %v1449 = vpop.permute.xlu0 %1448
  %1450 = vrot.lane.b32.xlu0 %v788, 120
  %v1451 = vpop.permute.xlu0 %1450
  %1452 = vrot.lane.b32.xlu0 %v789, 120
  %v1453 = vpop.permute.xlu0 %1452
  %1454 = vrot.lane.b32.xlu0 %v790, 120
  %v1455 = vpop.permute.xlu0 %1454
  %1456 = vrot.lane.b32.xlu0 %v787, 104
  %v1457 = vpop.permute.xlu0 %1456
  %1458 = vrot.lane.b32.xlu0 %v788, 104
  %v1459 = vpop.permute.xlu0 %1458
  %1460 = vrot.lane.b32.xlu0 %v789, 104
  %v1461 = vpop.permute.xlu0 %1460
  %1462 = vrot.lane.b32.xlu0 %v790, 104
  %v1463 = vpop.permute.xlu0 %1462
  %1468 = vrot.lane.b32.xlu0 %v791, 96
  %v1469 = vpop.permute.xlu0 %1468
  %1470 = vrot.lane.b32.xlu0 %v792, 96
  %v1471 = vpop.permute.xlu0 %1470
  %1472 = vrot.lane.b32.xlu0 %v793, 96
  %v1473 = vpop.permute.xlu0 %1472
  %1474 = vrot.lane.b32.xlu0 %v794, 96
  %v1475 = vpop.permute.xlu0 %1474
  %v1480 = vsel %vm807, %v1449, 0
  %v1482 = vsel %vm807, %v1451, 0
  %v1484 = vsel %vm807, %v1453, 0
  %v1486 = vsel %vm807, %v1455, 0
  %v1488 = vsel %vm807, %v1457, 0
  %v1490 = vsel %vm807, %v1459, 0
  %v1492 = vsel %vm807, %v1461, 0
  %v1494 = vsel %vm807, %v1463, 0
  %1496 = vmatpush.xpose.msra.mxu0 0.0
  %1497 = vmatpush.xpose.msra.mxu0 0.0
  %1498 = vmatpush.xpose.msra.mxu0 0.0
  %1499 = vmatpush.xpose.msra.mxu0 0.0
  %1500 = vmatpush.xpose.msra.mxu0 0.0
  %1501 = vmatpush.xpose.msra.mxu0 0.0
  %1502 = vmatpush.xpose.msra.mxu0 0.0
  %1503 = vmatpush.xpose.msra.mxu0 0.0
  %1504 = vmatpush.xpose.msra.mxu0 0.0
  %1505 = vmatpush.xpose.msra.mxu0 0.0
  %1506 = vmatpush.xpose.msra.mxu0 0.0
  %1507 = vmatpush.xpose.msra.mxu0 0.0
  %v1508 = vand.u32 %v1494, 4294901760
  %1509 = vmatpush.xpose.msra.mxu0 %v1508
  %v1510 = vand.u32 %v1492, 4294901760
  %1511 = vmatpush.xpose.msra.mxu0 %v1510
  %v1512 = vand.u32 %v1490, 4294901760
  %1513 = vmatpush.xpose.msra.mxu0 %v1512
  %v1514 = vand.u32 %v1488, 4294901760
  %1515 = vmatpush.xpose.msra.mxu0 %v1514
  %v1516 = vand.u32 %v1480, 4294901760
  %v1517 = vsub.f32 %v1480, %v1516
  %v1518 = vand.u32 %v1517, 4294901760
  %v1519 = vsub.f32 %v1517, %v1518
  %v1520 = vand.u32 %v1519, 4294901760
  %1521 = vmatmul.f32.gmra.mxu0 %v1520
  %v1522 = vpop.f32.mrf.mxu0
  %v1523 = vadd.f32 %v1469, %v1522
  %v1524 = vand.u32 %v1482, 4294901760
  %v1525 = vsub.f32 %v1482, %v1524
  %v1526 = vand.u32 %v1525, 4294901760
  %v1527 = vsub.f32 %v1525, %v1526
  %v1528 = vand.u32 %v1527, 4294901760
  %1529 = vmatmul.f32.gmra.mxu0 %v1528
  %v1530 = vpop.f32.mrf.mxu0
  %v1531 = vadd.f32 %v1471, %v1530
  %v1532 = vand.u32 %v1484, 4294901760
  %v1533 = vsub.f32 %v1484, %v1532
  %v1534 = vand.u32 %v1533, 4294901760
  %v1535 = vsub.f32 %v1533, %v1534
  %v1536 = vand.u32 %v1535, 4294901760
  %1537 = vmatmul.f32.gmra.mxu0 %v1536
  %v1538 = vpop.f32.mrf.mxu0
  %v1539 = vadd.f32 %v1473, %v1538
  %v1540 = vand.u32 %v1486, 4294901760
  %v1541 = vsub.f32 %v1486, %v1540
  %v1542 = vand.u32 %v1541, 4294901760
  %v1543 = vsub.f32 %v1541, %v1542
  %v1544 = vand.u32 %v1543, 4294901760
  %1545 = vmatmul.f32.gmra.mxu0 %v1544
  %v1546 = vpop.f32.mrf.mxu0
  %v1547 = vadd.f32 %v1475, %v1546
  %1548 = vdwg.mxu0
  %1549 = vmatpush.xpose.msra.mxu0 0.0
  %1550 = vmatpush.xpose.msra.mxu0 0.0
  %1551 = vmatpush.xpose.msra.mxu0 0.0
  %1552 = vmatpush.xpose.msra.mxu0 0.0
  %1553 = vmatpush.xpose.msra.mxu0 0.0
  %1554 = vmatpush.xpose.msra.mxu0 0.0
  %1555 = vmatpush.xpose.msra.mxu0 0.0
  %1556 = vmatpush.xpose.msra.mxu0 0.0
  %1557 = vmatpush.xpose.msra.mxu0 0.0
  %1558 = vmatpush.xpose.msra.mxu0 0.0
  %1559 = vmatpush.xpose.msra.mxu0 0.0
  %1560 = vmatpush.xpose.msra.mxu0 0.0
  %v1561 = vand.u32 %v1494, 4294901760
  %v1562 = vsub.f32 %v1494, %v1561
  %v1563 = vand.u32 %v1562, 4294901760
  %v1564 = vsub.f32 %v1562, %v1563
  %v1565 = vand.u32 %v1564, 4294901760
  %1566 = vmatpush.xpose.msra.mxu0 %v1565
  %v1567 = vand.u32 %v1492, 4294901760
  %v1568 = vsub.f32 %v1492, %v1567
  %v1569 = vand.u32 %v1568, 4294901760
  %v1570 = vsub.f32 %v1568, %v1569
  %v1571 = vand.u32 %v1570, 4294901760
  %1572 = vmatpush.xpose.msra.mxu0 %v1571
  %v1573 = vand.u32 %v1490, 4294901760
  %v1574 = vsub.f32 %v1490, %v1573
  %v1575 = vand.u32 %v1574, 4294901760
  %v1576 = vsub.f32 %v1574, %v1575
  %v1577 = vand.u32 %v1576, 4294901760
  %1578 = vmatpush.xpose.msra.mxu0 %v1577
  %v1579 = vand.u32 %v1488, 4294901760
  %v1580 = vsub.f32 %v1488, %v1579
  %v1581 = vand.u32 %v1580, 4294901760
  %v1582 = vsub.f32 %v1580, %v1581
  %v1583 = vand.u32 %v1582, 4294901760
  %1584 = vmatpush.xpose.msra.mxu0 %v1583
  %v1585 = vand.u32 %v1480, 4294901760
  %1586 = vmatmul.f32.gmra.mxu0 %v1585
  %v1587 = vpop.f32.mrf.mxu0
  %v1588 = vadd.f32 %v1523, %v1587
  %v1589 = vand.u32 %v1482, 4294901760
  %1590 = vmatmul.f32.gmra.mxu0 %v1589
  %v1591 = vpop.f32.mrf.mxu0
  %v1592 = vadd.f32 %v1531, %v1591
  %v1593 = vand.u32 %v1484, 4294901760
  %1594 = vmatmul.f32.gmra.mxu0 %v1593
  %v1595 = vpop.f32.mrf.mxu0
  %v1596 = vadd.f32 %v1539, %v1595
  %v1597 = vand.u32 %v1486, 4294901760
  %1598 = vmatmul.f32.gmra.mxu0 %v1597
  %v1599 = vpop.f32.mrf.mxu0
  %v1600 = vadd.f32 %v1547, %v1599
  %1601 = vdwg.mxu0
  %1602 = vmatpush.xpose.msra.mxu0 0.0
  %1603 = vmatpush.xpose.msra.mxu0 0.0
  %1604 = vmatpush.xpose.msra.mxu0 0.0
  %1605 = vmatpush.xpose.msra.mxu0 0.0
  %1606 = vmatpush.xpose.msra.mxu0 0.0
  %1607 = vmatpush.xpose.msra.mxu0 0.0
  %1608 = vmatpush.xpose.msra.mxu0 0.0
  %1609 = vmatpush.xpose.msra.mxu0 0.0
  %1610 = vmatpush.xpose.msra.mxu0 0.0
  %1611 = vmatpush.xpose.msra.mxu0 0.0
  %1612 = vmatpush.xpose.msra.mxu0 0.0
  %1613 = vmatpush.xpose.msra.mxu0 0.0
  %v1614 = vand.u32 %v1494, 4294901760
  %v1615 = vsub.f32 %v1494, %v1614
  %1616 = vmatpush.xpose.msra.mxu0 %v1615
  %v1617 = vand.u32 %v1492, 4294901760
  %v1618 = vsub.f32 %v1492, %v1617
  %1619 = vmatpush.xpose.msra.mxu0 %v1618
  %v1620 = vand.u32 %v1490, 4294901760
  %v1621 = vsub.f32 %v1490, %v1620
  %1622 = vmatpush.xpose.msra.mxu0 %v1621
  %v1623 = vand.u32 %v1488, 4294901760
  %v1624 = vsub.f32 %v1488, %v1623
  %1625 = vmatpush.xpose.msra.mxu0 %v1624
  %v1626 = vand.u32 %v1480, 4294901760
  %v1627 = vsub.f32 %v1480, %v1626
  %1628 = vmatmul.f32.gmra.mxu0 %v1627
  %v1629 = vpop.f32.mrf.mxu0
  %v1630 = vadd.f32 %v1588, %v1629
  %v1631 = vand.u32 %v1482, 4294901760
  %v1632 = vsub.f32 %v1482, %v1631
  %1633 = vmatmul.f32.gmra.mxu0 %v1632
  %v1634 = vpop.f32.mrf.mxu0
  %v1635 = vadd.f32 %v1592, %v1634
  %v1636 = vand.u32 %v1484, 4294901760
  %v1637 = vsub.f32 %v1484, %v1636
  %1638 = vmatmul.f32.gmra.mxu0 %v1637
  %v1639 = vpop.f32.mrf.mxu0
  %v1640 = vadd.f32 %v1596, %v1639
  %v1641 = vand.u32 %v1486, 4294901760
  %v1642 = vsub.f32 %v1486, %v1641
  %1643 = vmatmul.f32.gmra.mxu0 %v1642
  %v1644 = vpop.f32.mrf.mxu0
  %v1645 = vadd.f32 %v1600, %v1644
  %1646 = vdwg.mxu0
  %1647 = vmatpush.xpose.msra.mxu0 0.0
  %1648 = vmatpush.xpose.msra.mxu0 0.0
  %1649 = vmatpush.xpose.msra.mxu0 0.0
  %1650 = vmatpush.xpose.msra.mxu0 0.0
  %1651 = vmatpush.xpose.msra.mxu0 0.0
  %1652 = vmatpush.xpose.msra.mxu0 0.0
  %1653 = vmatpush.xpose.msra.mxu0 0.0
  %1654 = vmatpush.xpose.msra.mxu0 0.0
  %1655 = vmatpush.xpose.msra.mxu0 0.0
  %1656 = vmatpush.xpose.msra.mxu0 0.0
  %1657 = vmatpush.xpose.msra.mxu0 0.0
  %1658 = vmatpush.xpose.msra.mxu0 0.0
  %v1659 = vand.u32 %v1494, 4294901760
  %1660 = vmatpush.xpose.msra.mxu0 %v1659
  %v1661 = vand.u32 %v1492, 4294901760
  %1662 = vmatpush.xpose.msra.mxu0 %v1661
  %v1663 = vand.u32 %v1490, 4294901760
  %1664 = vmatpush.xpose.msra.mxu0 %v1663
  %v1665 = vand.u32 %v1488, 4294901760
  %1666 = vmatpush.xpose.msra.mxu0 %v1665
  %v1667 = vand.u32 %v1480, 4294901760
  %v1668 = vsub.f32 %v1480, %v1667
  %v1669 = vand.u32 %v1668, 4294901760
  %1670 = vmatmul.f32.gmra.mxu0 %v1669
  %v1671 = vpop.f32.mrf.mxu0
  %v1672 = vadd.f32 %v1630, %v1671
  %v1673 = vand.u32 %v1482, 4294901760
  %v1674 = vsub.f32 %v1482, %v1673
  %v1675 = vand.u32 %v1674, 4294901760
  %1676 = vmatmul.f32.gmra.mxu0 %v1675
  %v1677 = vpop.f32.mrf.mxu0
  %v1678 = vadd.f32 %v1635, %v1677
  %v1679 = vand.u32 %v1484, 4294901760
  %v1680 = vsub.f32 %v1484, %v1679
  %v1681 = vand.u32 %v1680, 4294901760
  %1682 = vmatmul.f32.gmra.mxu0 %v1681
  %v1683 = vpop.f32.mrf.mxu0
  %v1684 = vadd.f32 %v1640, %v1683
  %v1685 = vand.u32 %v1486, 4294901760
  %v1686 = vsub.f32 %v1486, %v1685
  %v1687 = vand.u32 %v1686, 4294901760
  %1688 = vmatmul.f32.gmra.mxu0 %v1687
  %v1689 = vpop.f32.mrf.mxu0
  %v1690 = vadd.f32 %v1645, %v1689
  %1691 = vdwg.mxu0
  %1692 = vmatpush.xpose.msra.mxu0 0.0
  %1693 = vmatpush.xpose.msra.mxu0 0.0
  %1694 = vmatpush.xpose.msra.mxu0 0.0
  %1695 = vmatpush.xpose.msra.mxu0 0.0
  %1696 = vmatpush.xpose.msra.mxu0 0.0
  %1697 = vmatpush.xpose.msra.mxu0 0.0
  %1698 = vmatpush.xpose.msra.mxu0 0.0
  %1699 = vmatpush.xpose.msra.mxu0 0.0
  %1700 = vmatpush.xpose.msra.mxu0 0.0
  %1701 = vmatpush.xpose.msra.mxu0 0.0
  %1702 = vmatpush.xpose.msra.mxu0 0.0
  %1703 = vmatpush.xpose.msra.mxu0 0.0
  %v1704 = vand.u32 %v1494, 4294901760
  %v1705 = vsub.f32 %v1494, %v1704
  %v1706 = vand.u32 %v1705, 4294901760
  %1707 = vmatpush.xpose.msra.mxu0 %v1706
  %v1708 = vand.u32 %v1492, 4294901760
  %v1709 = vsub.f32 %v1492, %v1708
  %v1710 = vand.u32 %v1709, 4294901760
  %1711 = vmatpush.xpose.msra.mxu0 %v1710
  %v1712 = vand.u32 %v1490, 4294901760
  %v1713 = vsub.f32 %v1490, %v1712
  %v1714 = vand.u32 %v1713, 4294901760
  %1715 = vmatpush.xpose.msra.mxu0 %v1714
  %v1716 = vand.u32 %v1488, 4294901760
  %v1717 = vsub.f32 %v1488, %v1716
  %v1718 = vand.u32 %v1717, 4294901760
  %1719 = vmatpush.xpose.msra.mxu0 %v1718
  %v1720 = vand.u32 %v1480, 4294901760
  %1721 = vmatmul.f32.gmra.mxu0 %v1720
  %v1722 = vpop.f32.mrf.mxu0
  %v1723 = vadd.f32 %v1672, %v1722
  %v1724 = vand.u32 %v1482, 4294901760
  %1725 = vmatmul.f32.gmra.mxu0 %v1724
  %v1726 = vpop.f32.mrf.mxu0
  %v1727 = vadd.f32 %v1678, %v1726
  %v1728 = vand.u32 %v1484, 4294901760
  %1729 = vmatmul.f32.gmra.mxu0 %v1728
  %v1730 = vpop.f32.mrf.mxu0
  %v1731 = vadd.f32 %v1684, %v1730
  %v1732 = vand.u32 %v1486, 4294901760
  %1733 = vmatmul.f32.gmra.mxu0 %v1732
  %v1734 = vpop.f32.mrf.mxu0
  %v1735 = vadd.f32 %v1690, %v1734
  %1736 = vdwg.mxu0
  %1737 = vmatpush.xpose.msra.mxu0 0.0
  %1738 = vmatpush.xpose.msra.mxu0 0.0
  %1739 = vmatpush.xpose.msra.mxu0 0.0
  %1740 = vmatpush.xpose.msra.mxu0 0.0
  %1741 = vmatpush.xpose.msra.mxu0 0.0
  %1742 = vmatpush.xpose.msra.mxu0 0.0
  %1743 = vmatpush.xpose.msra.mxu0 0.0
  %1744 = vmatpush.xpose.msra.mxu0 0.0
  %1745 = vmatpush.xpose.msra.mxu0 0.0
  %1746 = vmatpush.xpose.msra.mxu0 0.0
  %1747 = vmatpush.xpose.msra.mxu0 0.0
  %1748 = vmatpush.xpose.msra.mxu0 0.0
  %v1749 = vand.u32 %v1494, 4294901760
  %1750 = vmatpush.xpose.msra.mxu0 %v1749
  %v1751 = vand.u32 %v1492, 4294901760
  %1752 = vmatpush.xpose.msra.mxu0 %v1751
  %v1753 = vand.u32 %v1490, 4294901760
  %1754 = vmatpush.xpose.msra.mxu0 %v1753
  %v1755 = vand.u32 %v1488, 4294901760
  %1756 = vmatpush.xpose.msra.mxu0 %v1755
  %v1757 = vand.u32 %v1480, 4294901760
  %1758 = vmatmul.f32.gmra.mxu0 %v1757
  %v1759 = vpop.f32.mrf.mxu0
  %v1760 = vadd.f32 %v1723, %v1759
  %v1761 = vand.u32 %v1482, 4294901760
  %1762 = vmatmul.f32.gmra.mxu0 %v1761
  %v1763 = vpop.f32.mrf.mxu0
  %v1764 = vadd.f32 %v1727, %v1763
  %v1765 = vand.u32 %v1484, 4294901760
  %1766 = vmatmul.f32.gmra.mxu0 %v1765
  %v1767 = vpop.f32.mrf.mxu0
  %v1768 = vadd.f32 %v1731, %v1767
  %v1769 = vand.u32 %v1486, 4294901760
  %1770 = vmatmul.f32.gmra.mxu0 %v1769
  %v1771 = vpop.f32.mrf.mxu0
  %v1772 = vadd.f32 %v1735, %v1771
  %1773 = vdwg.mxu0
  %v1774 = vsel %vm488, %v1760, -inf
  %1775 = vmax.xlane.f32.xlu0 %v1774
  %v1776 = vpop.xlane.xlu0 %1775
  %v1777 = vsel %vm488, %v1764, -inf
  %1778 = vmax.xlane.f32.xlu0 %v1777
  %v1779 = vpop.xlane.xlu0 %1778
  %v1780 = vsel %vm488, %v1768, -inf
  %1781 = vmax.xlane.f32.xlu0 %v1780
  %v1782 = vpop.xlane.xlu0 %1781
  %v1783 = vsel %vm488, %v1772, -inf
  %1784 = vmax.xlane.f32.xlu0 %v1783
  %v1785 = vpop.xlane.xlu0 %1784
  %v1786 = vsub.f32 %v1760, %v1776
  %v1787 = vsub.f32 %v1764, %v1779
  %v1788 = vsub.f32 %v1768, %v1782
  %v1789 = vsub.f32 %v1772, %v1785
  %v1790 = vmul.f32 %v1786, 1.442695
  %v1791 = vpow.pop %v1790
  %v1792 = vmul.f32 %v1787, 1.442695
  %v1793 = vpow.pop %v1792
  %v1794 = vmul.f32 %v1788, 1.442695
  %v1795 = vpow.pop %v1794
  %v1796 = vmul.f32 %v1789, 1.442695
  %v1797 = vpow.pop %v1796
  %v1798 = vsel %vm488, %v1791, 0.0
  %1799 = vadd.xlane.f32.xlu0 %v1798
  %v1800 = vpop.xlane.xlu0 %1799
  %v1801 = vsel %vm488, %v1793, 0.0
  %1802 = vadd.xlane.f32.xlu0 %v1801
  %v1803 = vpop.xlane.xlu0 %1802
  %v1804 = vsel %vm488, %v1795, 0.0
  %1805 = vadd.xlane.f32.xlu0 %v1804
  %v1806 = vpop.xlane.xlu0 %1805
  %v1807 = vsel %vm488, %v1797, 0.0
  %1808 = vadd.xlane.f32.xlu0 %v1807
  %v1809 = vpop.xlane.xlu0 %1808
  %v1810 = vrcp.pop %v1800
  %v1811 = vrcp.pop %v1803
  %v1812 = vrcp.pop %v1806
  %v1813 = vrcp.pop %v1809
  %v1814 = vmul.f32 %v1791, %v1810
  %v1815 = vmul.f32 %v1793, %v1811
  %v1816 = vmul.f32 %v1795, %v1812
  %v1817 = vmul.f32 %v1797, %v1813
  %1818 = vrot.lane.b32.xlu0 %v787, 80
  %v1819 = vpop.permute.xlu0 %1818
  %1820 = vrot.lane.b32.xlu0 %v788, 80
  %v1821 = vpop.permute.xlu0 %1820
  %1822 = vrot.lane.b32.xlu0 %v789, 80
  %v1823 = vpop.permute.xlu0 %1822
  %1824 = vrot.lane.b32.xlu0 %v790, 80
  %v1825 = vpop.permute.xlu0 %1824
  %v1831 = vsel %vm488, %v1814, 0
  %v1834 = vsel %vm488, %v1815, 0
  %v1837 = vsel %vm488, %v1816, 0
  %v1840 = vsel %vm488, %v1817, 0
  %1842 = vmatpush.msra.mxu0 0.0
  %1843 = vmatpush.msra.mxu0 0.0
  %1844 = vmatpush.msra.mxu0 0.0
  %1845 = vmatpush.msra.mxu0 0.0
  %1846 = vmatpush.msra.mxu0 0.0
  %1847 = vmatpush.msra.mxu0 0.0
  %1848 = vmatpush.msra.mxu0 0.0
  %1849 = vmatpush.msra.mxu0 0.0
  %1850 = vmatpush.msra.mxu0 0.0
  %1851 = vmatpush.msra.mxu0 0.0
  %1852 = vmatpush.msra.mxu0 0.0
  %1853 = vmatpush.msra.mxu0 0.0
  %v1854 = vand.u32 %v1825, 4294901760
  %1855 = vmatpush.msra.mxu0 %v1854
  %v1856 = vand.u32 %v1823, 4294901760
  %1857 = vmatpush.msra.mxu0 %v1856
  %v1858 = vand.u32 %v1821, 4294901760
  %1859 = vmatpush.msra.mxu0 %v1858
  %v1860 = vand.u32 %v1819, 4294901760
  %1861 = vmatpush.msra.mxu0 %v1860
  %v1862 = vand.u32 %v1831, 4294901760
  %v1863 = vsub.f32 %v1831, %v1862
  %v1864 = vand.u32 %v1863, 4294901760
  %v1865 = vsub.f32 %v1863, %v1864
  %v1866 = vand.u32 %v1865, 4294901760
  %1867 = vmatmul.f32.gmra.mxu0 %v1866
  %v1868 = vpop.f32.mrf.mxu0
  %v1869 = vadd.f32 0.0, %v1868
  %v1870 = vand.u32 %v1834, 4294901760
  %v1871 = vsub.f32 %v1834, %v1870
  %v1872 = vand.u32 %v1871, 4294901760
  %v1873 = vsub.f32 %v1871, %v1872
  %v1874 = vand.u32 %v1873, 4294901760
  %1875 = vmatmul.f32.gmra.mxu0 %v1874
  %v1876 = vpop.f32.mrf.mxu0
  %v1877 = vadd.f32 0.0, %v1876
  %v1878 = vand.u32 %v1837, 4294901760
  %v1879 = vsub.f32 %v1837, %v1878
  %v1880 = vand.u32 %v1879, 4294901760
  %v1881 = vsub.f32 %v1879, %v1880
  %v1882 = vand.u32 %v1881, 4294901760
  %1883 = vmatmul.f32.gmra.mxu0 %v1882
  %v1884 = vpop.f32.mrf.mxu0
  %v1885 = vadd.f32 0.0, %v1884
  %v1886 = vand.u32 %v1840, 4294901760
  %v1887 = vsub.f32 %v1840, %v1886
  %v1888 = vand.u32 %v1887, 4294901760
  %v1889 = vsub.f32 %v1887, %v1888
  %v1890 = vand.u32 %v1889, 4294901760
  %1891 = vmatmul.f32.gmra.mxu0 %v1890
  %v1892 = vpop.f32.mrf.mxu0
  %v1893 = vadd.f32 0.0, %v1892
  %1894 = vdwg.mxu0
  %1895 = vmatpush.msra.mxu0 0.0
  %1896 = vmatpush.msra.mxu0 0.0
  %1897 = vmatpush.msra.mxu0 0.0
  %1898 = vmatpush.msra.mxu0 0.0
  %1899 = vmatpush.msra.mxu0 0.0
  %1900 = vmatpush.msra.mxu0 0.0
  %1901 = vmatpush.msra.mxu0 0.0
  %1902 = vmatpush.msra.mxu0 0.0
  %1903 = vmatpush.msra.mxu0 0.0
  %1904 = vmatpush.msra.mxu0 0.0
  %1905 = vmatpush.msra.mxu0 0.0
  %1906 = vmatpush.msra.mxu0 0.0
  %v1907 = vand.u32 %v1825, 4294901760
  %v1908 = vsub.f32 %v1825, %v1907
  %v1909 = vand.u32 %v1908, 4294901760
  %v1910 = vsub.f32 %v1908, %v1909
  %v1911 = vand.u32 %v1910, 4294901760
  %1912 = vmatpush.msra.mxu0 %v1911
  %v1913 = vand.u32 %v1823, 4294901760
  %v1914 = vsub.f32 %v1823, %v1913
  %v1915 = vand.u32 %v1914, 4294901760
  %v1916 = vsub.f32 %v1914, %v1915
  %v1917 = vand.u32 %v1916, 4294901760
  %1918 = vmatpush.msra.mxu0 %v1917
  %v1919 = vand.u32 %v1821, 4294901760
  %v1920 = vsub.f32 %v1821, %v1919
  %v1921 = vand.u32 %v1920, 4294901760
  %v1922 = vsub.f32 %v1920, %v1921
  %v1923 = vand.u32 %v1922, 4294901760
  %1924 = vmatpush.msra.mxu0 %v1923
  %v1925 = vand.u32 %v1819, 4294901760
  %v1926 = vsub.f32 %v1819, %v1925
  %v1927 = vand.u32 %v1926, 4294901760
  %v1928 = vsub.f32 %v1926, %v1927
  %v1929 = vand.u32 %v1928, 4294901760
  %1930 = vmatpush.msra.mxu0 %v1929
  %v1931 = vand.u32 %v1831, 4294901760
  %1932 = vmatmul.f32.gmra.mxu0 %v1931
  %v1933 = vpop.f32.mrf.mxu0
  %v1934 = vadd.f32 %v1869, %v1933
  %v1935 = vand.u32 %v1834, 4294901760
  %1936 = vmatmul.f32.gmra.mxu0 %v1935
  %v1937 = vpop.f32.mrf.mxu0
  %v1938 = vadd.f32 %v1877, %v1937
  %v1939 = vand.u32 %v1837, 4294901760
  %1940 = vmatmul.f32.gmra.mxu0 %v1939
  %v1941 = vpop.f32.mrf.mxu0
  %v1942 = vadd.f32 %v1885, %v1941
  %v1943 = vand.u32 %v1840, 4294901760
  %1944 = vmatmul.f32.gmra.mxu0 %v1943
  %v1945 = vpop.f32.mrf.mxu0
  %v1946 = vadd.f32 %v1893, %v1945
  %1947 = vdwg.mxu0
  %1948 = vmatpush.msra.mxu0 0.0
  %1949 = vmatpush.msra.mxu0 0.0
  %1950 = vmatpush.msra.mxu0 0.0
  %1951 = vmatpush.msra.mxu0 0.0
  %1952 = vmatpush.msra.mxu0 0.0
  %1953 = vmatpush.msra.mxu0 0.0
  %1954 = vmatpush.msra.mxu0 0.0
  %1955 = vmatpush.msra.mxu0 0.0
  %1956 = vmatpush.msra.mxu0 0.0
  %1957 = vmatpush.msra.mxu0 0.0
  %1958 = vmatpush.msra.mxu0 0.0
  %1959 = vmatpush.msra.mxu0 0.0
  %v1960 = vand.u32 %v1825, 4294901760
  %v1961 = vsub.f32 %v1825, %v1960
  %1962 = vmatpush.msra.mxu0 %v1961
  %v1963 = vand.u32 %v1823, 4294901760
  %v1964 = vsub.f32 %v1823, %v1963
  %1965 = vmatpush.msra.mxu0 %v1964
  %v1966 = vand.u32 %v1821, 4294901760
  %v1967 = vsub.f32 %v1821, %v1966
  %1968 = vmatpush.msra.mxu0 %v1967
  %v1969 = vand.u32 %v1819, 4294901760
  %v1970 = vsub.f32 %v1819, %v1969
  %1971 = vmatpush.msra.mxu0 %v1970
  %v1972 = vand.u32 %v1831, 4294901760
  %v1973 = vsub.f32 %v1831, %v1972
  %1974 = vmatmul.f32.gmra.mxu0 %v1973
  %v1975 = vpop.f32.mrf.mxu0
  %v1976 = vadd.f32 %v1934, %v1975
  %v1977 = vand.u32 %v1834, 4294901760
  %v1978 = vsub.f32 %v1834, %v1977
  %1979 = vmatmul.f32.gmra.mxu0 %v1978
  %v1980 = vpop.f32.mrf.mxu0
  %v1981 = vadd.f32 %v1938, %v1980
  %v1982 = vand.u32 %v1837, 4294901760
  %v1983 = vsub.f32 %v1837, %v1982
  %1984 = vmatmul.f32.gmra.mxu0 %v1983
  %v1985 = vpop.f32.mrf.mxu0
  %v1986 = vadd.f32 %v1942, %v1985
  %v1987 = vand.u32 %v1840, 4294901760
  %v1988 = vsub.f32 %v1840, %v1987
  %1989 = vmatmul.f32.gmra.mxu0 %v1988
  %v1990 = vpop.f32.mrf.mxu0
  %v1991 = vadd.f32 %v1946, %v1990
  %1992 = vdwg.mxu0
  %1993 = vmatpush.msra.mxu0 0.0
  %1994 = vmatpush.msra.mxu0 0.0
  %1995 = vmatpush.msra.mxu0 0.0
  %1996 = vmatpush.msra.mxu0 0.0
  %1997 = vmatpush.msra.mxu0 0.0
  %1998 = vmatpush.msra.mxu0 0.0
  %1999 = vmatpush.msra.mxu0 0.0
  %2000 = vmatpush.msra.mxu0 0.0
  %2001 = vmatpush.msra.mxu0 0.0
  %2002 = vmatpush.msra.mxu0 0.0
  %2003 = vmatpush.msra.mxu0 0.0
  %2004 = vmatpush.msra.mxu0 0.0
  %v2005 = vand.u32 %v1825, 4294901760
  %2006 = vmatpush.msra.mxu0 %v2005
  %v2007 = vand.u32 %v1823, 4294901760
  %2008 = vmatpush.msra.mxu0 %v2007
  %v2009 = vand.u32 %v1821, 4294901760
  %2010 = vmatpush.msra.mxu0 %v2009
  %v2011 = vand.u32 %v1819, 4294901760
  %2012 = vmatpush.msra.mxu0 %v2011
  %v2013 = vand.u32 %v1831, 4294901760
  %v2014 = vsub.f32 %v1831, %v2013
  %v2015 = vand.u32 %v2014, 4294901760
  %2016 = vmatmul.f32.gmra.mxu0 %v2015
  %v2017 = vpop.f32.mrf.mxu0
  %v2018 = vadd.f32 %v1976, %v2017
  %v2019 = vand.u32 %v1834, 4294901760
  %v2020 = vsub.f32 %v1834, %v2019
  %v2021 = vand.u32 %v2020, 4294901760
  %2022 = vmatmul.f32.gmra.mxu0 %v2021
  %v2023 = vpop.f32.mrf.mxu0
  %v2024 = vadd.f32 %v1981, %v2023
  %v2025 = vand.u32 %v1837, 4294901760
  %v2026 = vsub.f32 %v1837, %v2025
  %v2027 = vand.u32 %v2026, 4294901760
  %2028 = vmatmul.f32.gmra.mxu0 %v2027
  %v2029 = vpop.f32.mrf.mxu0
  %v2030 = vadd.f32 %v1986, %v2029
  %v2031 = vand.u32 %v1840, 4294901760
  %v2032 = vsub.f32 %v1840, %v2031
  %v2033 = vand.u32 %v2032, 4294901760
  %2034 = vmatmul.f32.gmra.mxu0 %v2033
  %v2035 = vpop.f32.mrf.mxu0
  %v2036 = vadd.f32 %v1991, %v2035
  %2037 = vdwg.mxu0
  %2038 = vmatpush.msra.mxu0 0.0
  %2039 = vmatpush.msra.mxu0 0.0
  %2040 = vmatpush.msra.mxu0 0.0
  %2041 = vmatpush.msra.mxu0 0.0
  %2042 = vmatpush.msra.mxu0 0.0
  %2043 = vmatpush.msra.mxu0 0.0
  %2044 = vmatpush.msra.mxu0 0.0
  %2045 = vmatpush.msra.mxu0 0.0
  %2046 = vmatpush.msra.mxu0 0.0
  %2047 = vmatpush.msra.mxu0 0.0
  %2048 = vmatpush.msra.mxu0 0.0
  %2049 = vmatpush.msra.mxu0 0.0
  %v2050 = vand.u32 %v1825, 4294901760
  %v2051 = vsub.f32 %v1825, %v2050
  %v2052 = vand.u32 %v2051, 4294901760
  %2053 = vmatpush.msra.mxu0 %v2052
  %v2054 = vand.u32 %v1823, 4294901760
  %v2055 = vsub.f32 %v1823, %v2054
  %v2056 = vand.u32 %v2055, 4294901760
  %2057 = vmatpush.msra.mxu0 %v2056
  %v2058 = vand.u32 %v1821, 4294901760
  %v2059 = vsub.f32 %v1821, %v2058
  %v2060 = vand.u32 %v2059, 4294901760
  %2061 = vmatpush.msra.mxu0 %v2060
  %v2062 = vand.u32 %v1819, 4294901760
  %v2063 = vsub.f32 %v1819, %v2062
  %v2064 = vand.u32 %v2063, 4294901760
  %2065 = vmatpush.msra.mxu0 %v2064
  %v2066 = vand.u32 %v1831, 4294901760
  %2067 = vmatmul.f32.gmra.mxu0 %v2066
  %v2068 = vpop.f32.mrf.mxu0
  %v2069 = vadd.f32 %v2018, %v2068
  %v2070 = vand.u32 %v1834, 4294901760
  %2071 = vmatmul.f32.gmra.mxu0 %v2070
  %v2072 = vpop.f32.mrf.mxu0
  %v2073 = vadd.f32 %v2024, %v2072
  %v2074 = vand.u32 %v1837, 4294901760
  %2075 = vmatmul.f32.gmra.mxu0 %v2074
  %v2076 = vpop.f32.mrf.mxu0
  %v2077 = vadd.f32 %v2030, %v2076
  %v2078 = vand.u32 %v1840, 4294901760
  %2079 = vmatmul.f32.gmra.mxu0 %v2078
  %v2080 = vpop.f32.mrf.mxu0
  %v2081 = vadd.f32 %v2036, %v2080
  %2082 = vdwg.mxu0
  %2083 = vmatpush.msra.mxu0 0.0
  %2084 = vmatpush.msra.mxu0 0.0
  %2085 = vmatpush.msra.mxu0 0.0
  %2086 = vmatpush.msra.mxu0 0.0
  %2087 = vmatpush.msra.mxu0 0.0
  %2088 = vmatpush.msra.mxu0 0.0
  %2089 = vmatpush.msra.mxu0 0.0
  %2090 = vmatpush.msra.mxu0 0.0
  %2091 = vmatpush.msra.mxu0 0.0
  %2092 = vmatpush.msra.mxu0 0.0
  %2093 = vmatpush.msra.mxu0 0.0
  %2094 = vmatpush.msra.mxu0 0.0
  %v2095 = vand.u32 %v1825, 4294901760
  %2096 = vmatpush.msra.mxu0 %v2095
  %v2097 = vand.u32 %v1823, 4294901760
  %2098 = vmatpush.msra.mxu0 %v2097
  %v2099 = vand.u32 %v1821, 4294901760
  %2100 = vmatpush.msra.mxu0 %v2099
  %v2101 = vand.u32 %v1819, 4294901760
  %2102 = vmatpush.msra.mxu0 %v2101
  %v2103 = vand.u32 %v1831, 4294901760
  %2104 = vmatmul.f32.gmra.mxu0 %v2103
  %v2105 = vpop.f32.mrf.mxu0
  %v2106 = vadd.f32 %v2069, %v2105
  %v2107 = vand.u32 %v1834, 4294901760
  %2108 = vmatmul.f32.gmra.mxu0 %v2107
  %v2109 = vpop.f32.mrf.mxu0
  %v2110 = vadd.f32 %v2073, %v2109
  %v2111 = vand.u32 %v1837, 4294901760
  %2112 = vmatmul.f32.gmra.mxu0 %v2111
  %v2113 = vpop.f32.mrf.mxu0
  %v2114 = vadd.f32 %v2077, %v2113
  %v2115 = vand.u32 %v1840, 4294901760
  %2116 = vmatmul.f32.gmra.mxu0 %v2115
  %v2117 = vpop.f32.mrf.mxu0
  %v2118 = vadd.f32 %v2081, %v2117
  %2119 = vdwg.mxu0
  %2124 = vrot.lane.b32.xlu0 %v2106, 16
  %v2125 = vpop.permute.xlu0 %2124
  %2126 = vrot.lane.b32.xlu0 %v2110, 16
  %v2127 = vpop.permute.xlu0 %2126
  %2128 = vrot.lane.b32.xlu0 %v2114, 16
  %v2129 = vpop.permute.xlu0 %2128
  %2130 = vrot.lane.b32.xlu0 %v2118, 16
  %v2131 = vpop.permute.xlu0 %2130
  %v2136 = vsel %vm17, %v1434, %v2125
  %v2137 = vsel %vm17, %v1438, %v2127
  %v2138 = vsel %vm17, %v1442, %v2129
  %v2139 = vsel %vm17, %v1446, %v2131
  %v2140 = vadd.f32 %v2136, 3.0
  %v2141 = vadd.f32 %v2137, 3.0
  %v2142 = vadd.f32 %v2138, 3.0
  %v2143 = vadd.f32 %v2139, 3.0
  %v2144 = vmax.f32 %v2140, 0.0
  %v2145 = vmax.f32 %v2141, 0.0
  %v2146 = vmax.f32 %v2142, 0.0
  %v2147 = vmax.f32 %v2143, 0.0
  %v2148 = vmin.f32 %v2144, 6.0
  %v2149 = vmin.f32 %v2145, 6.0
  %v2150 = vmin.f32 %v2146, 6.0
  %v2151 = vmin.f32 %v2147, 6.0
  %v2152 = vmul.f32 %v2136, %v2148
  %v2153 = vmul.f32 %v2137, %v2149
  %v2154 = vmul.f32 %v2138, %v2150
  %v2155 = vmul.f32 %v2139, %v2151
  %v2156 = vrcp.pop 6.0
  %v2157 = vmul.f32 6.0, %v2156
  %v2158 = vsub.f32 1.0, %v2157
  %v2159 = vmul.f32 %v2156, %v2158
  %v2160 = vadd.f32 %v2156, %v2159
  %vm2161 = vweird.f32 %v2156
  %v2162 = vsel %vm2161, %v2156, %v2160
  %v2163 = vmul.f32 %v2152, %v2162
  %v2164 = vmul.f32 %v2153, %v2162
  %v2165 = vmul.f32 %v2154, %v2162
  %v2166 = vmul.f32 %v2155, %v2162
  %v2167 = vld [vmem:[%s1 + $0x48] sm:$0xff]
  %v2168 = vld [vmem:[%s1 + $0x50] sm:$0xff]
  %v2169 = vld [vmem:[%s1 + $0x58] sm:$0xff]
  %v2170 = vld [vmem:[%s1 + $0x60] sm:$0xff]
  %v2172 = vsel %vm488, %v2163, 0
  %v2175 = vsel %vm488, %v2164, 0
  %v2178 = vsel %vm488, %v2165, 0
  %v2181 = vsel %vm488, %v2166, 0
  %2183 = vmatpush.msra.mxu0 0.0
  %2184 = vmatpush.msra.mxu0 0.0
  %2185 = vmatpush.msra.mxu0 0.0
  %2186 = vmatpush.msra.mxu0 0.0
  %2187 = vmatpush.msra.mxu0 0.0
  %2188 = vmatpush.msra.mxu0 0.0
  %2189 = vmatpush.msra.mxu0 0.0
  %2190 = vmatpush.msra.mxu0 0.0
  %2191 = vmatpush.msra.mxu0 0.0
  %2192 = vmatpush.msra.mxu0 0.0
  %2193 = vmatpush.msra.mxu0 0.0
  %2194 = vmatpush.msra.mxu0 0.0
  %v2195 = vand.u32 %v2170, 4294901760
  %2196 = vmatpush.msra.mxu0 %v2195
  %v2197 = vand.u32 %v2169, 4294901760
  %2198 = vmatpush.msra.mxu0 %v2197
  %v2199 = vand.u32 %v2168, 4294901760
  %2200 = vmatpush.msra.mxu0 %v2199
  %v2201 = vand.u32 %v2167, 4294901760
  %2202 = vmatpush.msra.mxu0 %v2201
  %v2203 = vand.u32 %v2172, 4294901760
  %v2204 = vsub.f32 %v2172, %v2203
  %v2205 = vand.u32 %v2204, 4294901760
  %v2206 = vsub.f32 %v2204, %v2205
  %v2207 = vand.u32 %v2206, 4294901760
  %2208 = vmatmul.f32.gmra.mxu0 %v2207
  %v2209 = vpop.f32.mrf.mxu0
  %v2210 = vadd.f32 0.0, %v2209
  %v2211 = vand.u32 %v2175, 4294901760
  %v2212 = vsub.f32 %v2175, %v2211
  %v2213 = vand.u32 %v2212, 4294901760
  %v2214 = vsub.f32 %v2212, %v2213
  %v2215 = vand.u32 %v2214, 4294901760
  %2216 = vmatmul.f32.gmra.mxu0 %v2215
  %v2217 = vpop.f32.mrf.mxu0
  %v2218 = vadd.f32 0.0, %v2217
  %v2219 = vand.u32 %v2178, 4294901760
  %v2220 = vsub.f32 %v2178, %v2219
  %v2221 = vand.u32 %v2220, 4294901760
  %v2222 = vsub.f32 %v2220, %v2221
  %v2223 = vand.u32 %v2222, 4294901760
  %2224 = vmatmul.f32.gmra.mxu0 %v2223
  %v2225 = vpop.f32.mrf.mxu0
  %v2226 = vadd.f32 0.0, %v2225
  %v2227 = vand.u32 %v2181, 4294901760
  %v2228 = vsub.f32 %v2181, %v2227
  %v2229 = vand.u32 %v2228, 4294901760
  %v2230 = vsub.f32 %v2228, %v2229
  %v2231 = vand.u32 %v2230, 4294901760
  %2232 = vmatmul.f32.gmra.mxu0 %v2231
  %v2233 = vpop.f32.mrf.mxu0
  %v2234 = vadd.f32 0.0, %v2233
  %2235 = vdwg.mxu0
  %2236 = vmatpush.msra.mxu0 0.0
  %2237 = vmatpush.msra.mxu0 0.0
  %2238 = vmatpush.msra.mxu0 0.0
  %2239 = vmatpush.msra.mxu0 0.0
  %2240 = vmatpush.msra.mxu0 0.0
  %2241 = vmatpush.msra.mxu0 0.0
  %2242 = vmatpush.msra.mxu0 0.0
  %2243 = vmatpush.msra.mxu0 0.0
  %2244 = vmatpush.msra.mxu0 0.0
  %2245 = vmatpush.msra.mxu0 0.0
  %2246 = vmatpush.msra.mxu0 0.0
  %2247 = vmatpush.msra.mxu0 0.0
  %v2248 = vand.u32 %v2170, 4294901760
  %v2249 = vsub.f32 %v2170, %v2248
  %v2250 = vand.u32 %v2249, 4294901760
  %v2251 = vsub.f32 %v2249, %v2250
  %v2252 = vand.u32 %v2251, 4294901760
  %2253 = vmatpush.msra.mxu0 %v2252
  %v2254 = vand.u32 %v2169, 4294901760
  %v2255 = vsub.f32 %v2169, %v2254
  %v2256 = vand.u32 %v2255, 4294901760
  %v2257 = vsub.f32 %v2255, %v2256
  %v2258 = vand.u32 %v2257, 4294901760
  %2259 = vmatpush.msra.mxu0 %v2258
  %v2260 = vand.u32 %v2168, 4294901760
  %v2261 = vsub.f32 %v2168, %v2260
  %v2262 = vand.u32 %v2261, 4294901760
  %v2263 = vsub.f32 %v2261, %v2262
  %v2264 = vand.u32 %v2263, 4294901760
  %2265 = vmatpush.msra.mxu0 %v2264
  %v2266 = vand.u32 %v2167, 4294901760
  %v2267 = vsub.f32 %v2167, %v2266
  %v2268 = vand.u32 %v2267, 4294901760
  %v2269 = vsub.f32 %v2267, %v2268
  %v2270 = vand.u32 %v2269, 4294901760
  %2271 = vmatpush.msra.mxu0 %v2270
  %v2272 = vand.u32 %v2172, 4294901760
  %2273 = vmatmul.f32.gmra.mxu0 %v2272
  %v2274 = vpop.f32.mrf.mxu0
  %v2275 = vadd.f32 %v2210, %v2274
  %v2276 = vand.u32 %v2175, 4294901760
  %2277 = vmatmul.f32.gmra.mxu0 %v2276
  %v2278 = vpop.f32.mrf.mxu0
  %v2279 = vadd.f32 %v2218, %v2278
  %v2280 = vand.u32 %v2178, 4294901760
  %2281 = vmatmul.f32.gmra.mxu0 %v2280
  %v2282 = vpop.f32.mrf.mxu0
  %v2283 = vadd.f32 %v2226, %v2282
  %v2284 = vand.u32 %v2181, 4294901760
  %2285 = vmatmul.f32.gmra.mxu0 %v2284
  %v2286 = vpop.f32.mrf.mxu0
  %v2287 = vadd.f32 %v2234, %v2286
  %2288 = vdwg.mxu0
  %2289 = vmatpush.msra.mxu0 0.0
  %2290 = vmatpush.msra.mxu0 0.0
  %2291 = vmatpush.msra.mxu0 0.0
  %2292 = vmatpush.msra.mxu0 0.0
  %2293 = vmatpush.msra.mxu0 0.0
  %2294 = vmatpush.msra.mxu0 0.0
  %2295 = vmatpush.msra.mxu0 0.0
  %2296 = vmatpush.msra.mxu0 0.0
  %2297 = vmatpush.msra.mxu0 0.0
  %2298 = vmatpush.msra.mxu0 0.0
  %2299 = vmatpush.msra.mxu0 0.0
  %2300 = vmatpush.msra.mxu0 0.0
  %v2301 = vand.u32 %v2170, 4294901760
  %v2302 = vsub.f32 %v2170, %v2301
  %2303 = vmatpush.msra.mxu0 %v2302
  %v2304 = vand.u32 %v2169, 4294901760
  %v2305 = vsub.f32 %v2169, %v2304
  %2306 = vmatpush.msra.mxu0 %v2305
  %v2307 = vand.u32 %v2168, 4294901760
  %v2308 = vsub.f32 %v2168, %v2307
  %2309 = vmatpush.msra.mxu0 %v2308
  %v2310 = vand.u32 %v2167, 4294901760
  %v2311 = vsub.f32 %v2167, %v2310
  %2312 = vmatpush.msra.mxu0 %v2311
  %v2313 = vand.u32 %v2172, 4294901760
  %v2314 = vsub.f32 %v2172, %v2313
  %2315 = vmatmul.f32.gmra.mxu0 %v2314
  %v2316 = vpop.f32.mrf.mxu0
  %v2317 = vadd.f32 %v2275, %v2316
  %v2318 = vand.u32 %v2175, 4294901760
  %v2319 = vsub.f32 %v2175, %v2318
  %2320 = vmatmul.f32.gmra.mxu0 %v2319
  %v2321 = vpop.f32.mrf.mxu0
  %v2322 = vadd.f32 %v2279, %v2321
  %v2323 = vand.u32 %v2178, 4294901760
  %v2324 = vsub.f32 %v2178, %v2323
  %2325 = vmatmul.f32.gmra.mxu0 %v2324
  %v2326 = vpop.f32.mrf.mxu0
  %v2327 = vadd.f32 %v2283, %v2326
  %v2328 = vand.u32 %v2181, 4294901760
  %v2329 = vsub.f32 %v2181, %v2328
  %2330 = vmatmul.f32.gmra.mxu0 %v2329
  %v2331 = vpop.f32.mrf.mxu0
  %v2332 = vadd.f32 %v2287, %v2331
  %2333 = vdwg.mxu0
  %2334 = vmatpush.msra.mxu0 0.0
  %2335 = vmatpush.msra.mxu0 0.0
  %2336 = vmatpush.msra.mxu0 0.0
  %2337 = vmatpush.msra.mxu0 0.0
  %2338 = vmatpush.msra.mxu0 0.0
  %2339 = vmatpush.msra.mxu0 0.0
  %2340 = vmatpush.msra.mxu0 0.0
  %2341 = vmatpush.msra.mxu0 0.0
  %2342 = vmatpush.msra.mxu0 0.0
  %2343 = vmatpush.msra.mxu0 0.0
  %2344 = vmatpush.msra.mxu0 0.0
  %2345 = vmatpush.msra.mxu0 0.0
  %v2346 = vand.u32 %v2170, 4294901760
  %2347 = vmatpush.msra.mxu0 %v2346
  %v2348 = vand.u32 %v2169, 4294901760
  %2349 = vmatpush.msra.mxu0 %v2348
  %v2350 = vand.u32 %v2168, 4294901760
  %2351 = vmatpush.msra.mxu0 %v2350
  %v2352 = vand.u32 %v2167, 4294901760
  %2353 = vmatpush.msra.mxu0 %v2352
  %v2354 = vand.u32 %v2172, 4294901760
  %v2355 = vsub.f32 %v2172, %v2354
  %v2356 = vand.u32 %v2355, 4294901760
  %2357 = vmatmul.f32.gmra.mxu0 %v2356
  %v2358 = vpop.f32.mrf.mxu0
  %v2359 = vadd.f32 %v2317, %v2358
  %v2360 = vand.u32 %v2175, 4294901760
  %v2361 = vsub.f32 %v2175, %v2360
  %v2362 = vand.u32 %v2361, 4294901760
  %2363 = vmatmul.f32.gmra.mxu0 %v2362
  %v2364 = vpop.f32.mrf.mxu0
  %v2365 = vadd.f32 %v2322, %v2364
  %v2366 = vand.u32 %v2178, 4294901760
  %v2367 = vsub.f32 %v2178, %v2366
  %v2368 = vand.u32 %v2367, 4294901760
  %2369 = vmatmul.f32.gmra.mxu0 %v2368
  %v2370 = vpop.f32.mrf.mxu0
  %v2371 = vadd.f32 %v2327, %v2370
  %v2372 = vand.u32 %v2181, 4294901760
  %v2373 = vsub.f32 %v2181, %v2372
  %v2374 = vand.u32 %v2373, 4294901760
  %2375 = vmatmul.f32.gmra.mxu0 %v2374
  %v2376 = vpop.f32.mrf.mxu0
  %v2377 = vadd.f32 %v2332, %v2376
  %2378 = vdwg.mxu0
  %2379 = vmatpush.msra.mxu0 0.0
  %2380 = vmatpush.msra.mxu0 0.0
  %2381 = vmatpush.msra.mxu0 0.0
  %2382 = vmatpush.msra.mxu0 0.0
  %2383 = vmatpush.msra.mxu0 0.0
  %2384 = vmatpush.msra.mxu0 0.0
  %2385 = vmatpush.msra.mxu0 0.0
  %2386 = vmatpush.msra.mxu0 0.0
  %2387 = vmatpush.msra.mxu0 0.0
  %2388 = vmatpush.msra.mxu0 0.0
  %2389 = vmatpush.msra.mxu0 0.0
  %2390 = vmatpush.msra.mxu0 0.0
  %v2391 = vand.u32 %v2170, 4294901760
  %v2392 = vsub.f32 %v2170, %v2391
  %v2393 = vand.u32 %v2392, 4294901760
  %2394 = vmatpush.msra.mxu0 %v2393
  %v2395 = vand.u32 %v2169, 4294901760
  %v2396 = vsub.f32 %v2169, %v2395
  %v2397 = vand.u32 %v2396, 4294901760
  %2398 = vmatpush.msra.mxu0 %v2397
  %v2399 = vand.u32 %v2168, 4294901760
  %v2400 = vsub.f32 %v2168, %v2399
  %v2401 = vand.u32 %v2400, 4294901760
  %2402 = vmatpush.msra.mxu0 %v2401
  %v2403 = vand.u32 %v2167, 4294901760
  %v2404 = vsub.f32 %v2167, %v2403
  %v2405 = vand.u32 %v2404, 4294901760
  %2406 = vmatpush.msra.mxu0 %v2405
  %v2407 = vand.u32 %v2172, 4294901760
  %2408 = vmatmul.f32.gmra.mxu0 %v2407
  %v2409 = vpop.f32.mrf.mxu0
  %v2410 = vadd.f32 %v2359, %v2409
  %v2411 = vand.u32 %v2175, 4294901760
  %2412 = vmatmul.f32.gmra.mxu0 %v2411
  %v2413 = vpop.f32.mrf.mxu0
  %v2414 = vadd.f32 %v2365, %v2413
  %v2415 = vand.u32 %v2178, 4294901760
  %2416 = vmatmul.f32.gmra.mxu0 %v2415
  %v2417 = vpop.f32.mrf.mxu0
  %v2418 = vadd.f32 %v2371, %v2417
  %v2419 = vand.u32 %v2181, 4294901760
  %2420 = vmatmul.f32.gmra.mxu0 %v2419
  %v2421 = vpop.f32.mrf.mxu0
  %v2422 = vadd.f32 %v2377, %v2421
  %2423 = vdwg.mxu0
  %2424 = vmatpush.msra.mxu0 0.0
  %2425 = vmatpush.msra.mxu0 0.0
  %2426 = vmatpush.msra.mxu0 0.0
  %2427 = vmatpush.msra.mxu0 0.0
  %2428 = vmatpush.msra.mxu0 0.0
  %2429 = vmatpush.msra.mxu0 0.0
  %2430 = vmatpush.msra.mxu0 0.0
  %2431 = vmatpush.msra.mxu0 0.0
  %2432 = vmatpush.msra.mxu0 0.0
  %2433 = vmatpush.msra.mxu0 0.0
  %2434 = vmatpush.msra.mxu0 0.0
  %2435 = vmatpush.msra.mxu0 0.0
  %v2436 = vand.u32 %v2170, 4294901760
  %2437 = vmatpush.msra.mxu0 %v2436
  %v2438 = vand.u32 %v2169, 4294901760
  %2439 = vmatpush.msra.mxu0 %v2438
  %v2440 = vand.u32 %v2168, 4294901760
  %2441 = vmatpush.msra.mxu0 %v2440
  %v2442 = vand.u32 %v2167, 4294901760
  %2443 = vmatpush.msra.mxu0 %v2442
  %v2444 = vand.u32 %v2172, 4294901760
  %2445 = vmatmul.f32.gmra.mxu0 %v2444
  %v2446 = vpop.f32.mrf.mxu0
  %v2447 = vadd.f32 %v2410, %v2446
  %v2448 = vand.u32 %v2175, 4294901760
  %2449 = vmatmul.f32.gmra.mxu0 %v2448
  %v2450 = vpop.f32.mrf.mxu0
  %v2451 = vadd.f32 %v2414, %v2450
  %v2452 = vand.u32 %v2178, 4294901760
  %2453 = vmatmul.f32.gmra.mxu0 %v2452
  %v2454 = vpop.f32.mrf.mxu0
  %v2455 = vadd.f32 %v2418, %v2454
  %v2456 = vand.u32 %v2181, 4294901760
  %2457 = vmatmul.f32.gmra.mxu0 %v2456
  %v2458 = vpop.f32.mrf.mxu0
  %v2459 = vadd.f32 %v2422, %v2458
  %2460 = vdwg.mxu0
  %v2461 = vld [vmem:[%s1 + $0x2] sm:$0x1]
  %v2462 = vperm.slane %v2461, 0
  %v2463 = vmul.f32 %v2447, %v2462
  %v2464 = vmul.f32 %v2451, %v2462
  %v2465 = vmul.f32 %v2455, %v2462
  %v2466 = vmul.f32 %v2459, %v2462
  %v2467 = vld [vmem:[%s1 + $0x3] sm:$0x1]
  %v2468 = vperm.slane %v2467, 0
  %v2469 = vadd.f32 %v2463, %v2468
  %v2470 = vadd.f32 %v2464, %v2468
  %v2471 = vadd.f32 %v2465, %v2468
  %v2472 = vadd.f32 %v2466, %v2468
  %v2473 = vadd.f32 %v246, %v2469
  %v2474 = vadd.f32 %v250, %v2470
  %v2475 = vadd.f32 %v478, %v2471
  %v2476 = vadd.f32 %v482, %v2472
  %v2477 = vld [vmem:[%s1 + $0x68] sm:$0xff]
  %v2478 = vld [vmem:[%s1 + $0x70] sm:$0xff]
  %v2479 = vld [vmem:[%s1 + $0x78] sm:$0xff]
  %v2480 = vld [vmem:[%s1 + $0x80] sm:$0xff]
  %v2482 = vsel %vm488, %v2473, 0
  %v2485 = vsel %vm488, %v2474, 0
  %v2488 = vsel %vm488, %v2475, 0
  %v2491 = vsel %vm488, %v2476, 0
  %2493 = vmatpush.msra.mxu0 0.0
  %2494 = vmatpush.msra.mxu0 0.0
  %2495 = vmatpush.msra.mxu0 0.0
  %2496 = vmatpush.msra.mxu0 0.0
  %2497 = vmatpush.msra.mxu0 0.0
  %2498 = vmatpush.msra.mxu0 0.0
  %2499 = vmatpush.msra.mxu0 0.0
  %2500 = vmatpush.msra.mxu0 0.0
  %2501 = vmatpush.msra.mxu0 0.0
  %2502 = vmatpush.msra.mxu0 0.0
  %2503 = vmatpush.msra.mxu0 0.0
  %2504 = vmatpush.msra.mxu0 0.0
  %v2505 = vand.u32 %v2480, 4294901760
  %2506 = vmatpush.msra.mxu0 %v2505
  %v2507 = vand.u32 %v2479, 4294901760
  %2508 = vmatpush.msra.mxu0 %v2507
  %v2509 = vand.u32 %v2478, 4294901760
  %2510 = vmatpush.msra.mxu0 %v2509
  %v2511 = vand.u32 %v2477, 4294901760
  %2512 = vmatpush.msra.mxu0 %v2511
  %v2513 = vand.u32 %v2482, 4294901760
  %v2514 = vsub.f32 %v2482, %v2513
  %v2515 = vand.u32 %v2514, 4294901760
  %v2516 = vsub.f32 %v2514, %v2515
  %v2517 = vand.u32 %v2516, 4294901760
  %2518 = vmatmul.f32.gmra.mxu0 %v2517
  %v2519 = vpop.f32.mrf.mxu0
  %v2520 = vadd.f32 0.0, %v2519
  %v2521 = vand.u32 %v2485, 4294901760
  %v2522 = vsub.f32 %v2485, %v2521
  %v2523 = vand.u32 %v2522, 4294901760
  %v2524 = vsub.f32 %v2522, %v2523
  %v2525 = vand.u32 %v2524, 4294901760
  %2526 = vmatmul.f32.gmra.mxu0 %v2525
  %v2527 = vpop.f32.mrf.mxu0
  %v2528 = vadd.f32 0.0, %v2527
  %v2529 = vand.u32 %v2488, 4294901760
  %v2530 = vsub.f32 %v2488, %v2529
  %v2531 = vand.u32 %v2530, 4294901760
  %v2532 = vsub.f32 %v2530, %v2531
  %v2533 = vand.u32 %v2532, 4294901760
  %2534 = vmatmul.f32.gmra.mxu0 %v2533
  %v2535 = vpop.f32.mrf.mxu0
  %v2536 = vadd.f32 0.0, %v2535
  %v2537 = vand.u32 %v2491, 4294901760
  %v2538 = vsub.f32 %v2491, %v2537
  %v2539 = vand.u32 %v2538, 4294901760
  %v2540 = vsub.f32 %v2538, %v2539
  %v2541 = vand.u32 %v2540, 4294901760
  %2542 = vmatmul.f32.gmra.mxu0 %v2541
  %v2543 = vpop.f32.mrf.mxu0
  %v2544 = vadd.f32 0.0, %v2543
  %2545 = vdwg.mxu0
  %2546 = vmatpush.msra.mxu0 0.0
  %2547 = vmatpush.msra.mxu0 0.0
  %2548 = vmatpush.msra.mxu0 0.0
  %2549 = vmatpush.msra.mxu0 0.0
  %2550 = vmatpush.msra.mxu0 0.0
  %2551 = vmatpush.msra.mxu0 0.0
  %2552 = vmatpush.msra.mxu0 0.0
  %2553 = vmatpush.msra.mxu0 0.0
  %2554 = vmatpush.msra.mxu0 0.0
  %2555 = vmatpush.msra.mxu0 0.0
  %2556 = vmatpush.msra.mxu0 0.0
  %2557 = vmatpush.msra.mxu0 0.0
  %v2558 = vand.u32 %v2480, 4294901760
  %v2559 = vsub.f32 %v2480, %v2558
  %v2560 = vand.u32 %v2559, 4294901760
  %v2561 = vsub.f32 %v2559, %v2560
  %v2562 = vand.u32 %v2561, 4294901760
  %2563 = vmatpush.msra.mxu0 %v2562
  %v2564 = vand.u32 %v2479, 4294901760
  %v2565 = vsub.f32 %v2479, %v2564
  %v2566 = vand.u32 %v2565, 4294901760
  %v2567 = vsub.f32 %v2565, %v2566
  %v2568 = vand.u32 %v2567, 4294901760
  %2569 = vmatpush.msra.mxu0 %v2568
  %v2570 = vand.u32 %v2478, 4294901760
  %v2571 = vsub.f32 %v2478, %v2570
  %v2572 = vand.u32 %v2571, 4294901760
  %v2573 = vsub.f32 %v2571, %v2572
  %v2574 = vand.u32 %v2573, 4294901760
  %2575 = vmatpush.msra.mxu0 %v2574
  %v2576 = vand.u32 %v2477, 4294901760
  %v2577 = vsub.f32 %v2477, %v2576
  %v2578 = vand.u32 %v2577, 4294901760
  %v2579 = vsub.f32 %v2577, %v2578
  %v2580 = vand.u32 %v2579, 4294901760
  %2581 = vmatpush.msra.mxu0 %v2580
  %v2582 = vand.u32 %v2482, 4294901760
  %2583 = vmatmul.f32.gmra.mxu0 %v2582
  %v2584 = vpop.f32.mrf.mxu0
  %v2585 = vadd.f32 %v2520, %v2584
  %v2586 = vand.u32 %v2485, 4294901760
  %2587 = vmatmul.f32.gmra.mxu0 %v2586
  %v2588 = vpop.f32.mrf.mxu0
  %v2589 = vadd.f32 %v2528, %v2588
  %v2590 = vand.u32 %v2488, 4294901760
  %2591 = vmatmul.f32.gmra.mxu0 %v2590
  %v2592 = vpop.f32.mrf.mxu0
  %v2593 = vadd.f32 %v2536, %v2592
  %v2594 = vand.u32 %v2491, 4294901760
  %2595 = vmatmul.f32.gmra.mxu0 %v2594
  %v2596 = vpop.f32.mrf.mxu0
  %v2597 = vadd.f32 %v2544, %v2596
  %2598 = vdwg.mxu0
  %2599 = vmatpush.msra.mxu0 0.0
  %2600 = vmatpush.msra.mxu0 0.0
  %2601 = vmatpush.msra.mxu0 0.0
  %2602 = vmatpush.msra.mxu0 0.0
  %2603 = vmatpush.msra.mxu0 0.0
  %2604 = vmatpush.msra.mxu0 0.0
  %2605 = vmatpush.msra.mxu0 0.0
  %2606 = vmatpush.msra.mxu0 0.0
  %2607 = vmatpush.msra.mxu0 0.0
  %2608 = vmatpush.msra.mxu0 0.0
  %2609 = vmatpush.msra.mxu0 0.0
  %2610 = vmatpush.msra.mxu0 0.0
  %v2611 = vand.u32 %v2480, 4294901760
  %v2612 = vsub.f32 %v2480, %v2611
  %2613 = vmatpush.msra.mxu0 %v2612
  %v2614 = vand.u32 %v2479, 4294901760
  %v2615 = vsub.f32 %v2479, %v2614
  %2616 = vmatpush.msra.mxu0 %v2615
  %v2617 = vand.u32 %v2478, 4294901760
  %v2618 = vsub.f32 %v2478, %v2617
  %2619 = vmatpush.msra.mxu0 %v2618
  %v2620 = vand.u32 %v2477, 4294901760
  %v2621 = vsub.f32 %v2477, %v2620
  %2622 = vmatpush.msra.mxu0 %v2621
  %v2623 = vand.u32 %v2482, 4294901760
  %v2624 = vsub.f32 %v2482, %v2623
  %2625 = vmatmul.f32.gmra.mxu0 %v2624
  %v2626 = vpop.f32.mrf.mxu0
  %v2627 = vadd.f32 %v2585, %v2626
  %v2628 = vand.u32 %v2485, 4294901760
  %v2629 = vsub.f32 %v2485, %v2628
  %2630 = vmatmul.f32.gmra.mxu0 %v2629
  %v2631 = vpop.f32.mrf.mxu0
  %v2632 = vadd.f32 %v2589, %v2631
  %v2633 = vand.u32 %v2488, 4294901760
  %v2634 = vsub.f32 %v2488, %v2633
  %2635 = vmatmul.f32.gmra.mxu0 %v2634
  %v2636 = vpop.f32.mrf.mxu0
  %v2637 = vadd.f32 %v2593, %v2636
  %v2638 = vand.u32 %v2491, 4294901760
  %v2639 = vsub.f32 %v2491, %v2638
  %2640 = vmatmul.f32.gmra.mxu0 %v2639
  %v2641 = vpop.f32.mrf.mxu0
  %v2642 = vadd.f32 %v2597, %v2641
  %2643 = vdwg.mxu0
  %2644 = vmatpush.msra.mxu0 0.0
  %2645 = vmatpush.msra.mxu0 0.0
  %2646 = vmatpush.msra.mxu0 0.0
  %2647 = vmatpush.msra.mxu0 0.0
  %2648 = vmatpush.msra.mxu0 0.0
  %2649 = vmatpush.msra.mxu0 0.0
  %2650 = vmatpush.msra.mxu0 0.0
  %2651 = vmatpush.msra.mxu0 0.0
  %2652 = vmatpush.msra.mxu0 0.0
  %2653 = vmatpush.msra.mxu0 0.0
  %2654 = vmatpush.msra.mxu0 0.0
  %2655 = vmatpush.msra.mxu0 0.0
  %v2656 = vand.u32 %v2480, 4294901760
  %2657 = vmatpush.msra.mxu0 %v2656
  %v2658 = vand.u32 %v2479, 4294901760
  %2659 = vmatpush.msra.mxu0 %v2658
  %v2660 = vand.u32 %v2478, 4294901760
  %2661 = vmatpush.msra.mxu0 %v2660
  %v2662 = vand.u32 %v2477, 4294901760
  %2663 = vmatpush.msra.mxu0 %v2662
  %v2664 = vand.u32 %v2482, 4294901760
  %v2665 = vsub.f32 %v2482, %v2664
  %v2666 = vand.u32 %v2665, 4294901760
  %2667 = vmatmul.f32.gmra.mxu0 %v2666
  %v2668 = vpop.f32.mrf.mxu0
  %v2669 = vadd.f32 %v2627, %v2668
  %v2670 = vand.u32 %v2485, 4294901760
  %v2671 = vsub.f32 %v2485, %v2670
  %v2672 = vand.u32 %v2671, 4294901760
  %2673 = vmatmul.f32.gmra.mxu0 %v2672
  %v2674 = vpop.f32.mrf.mxu0
  %v2675 = vadd.f32 %v2632, %v2674
  %v2676 = vand.u32 %v2488, 4294901760
  %v2677 = vsub.f32 %v2488, %v2676
  %v2678 = vand.u32 %v2677, 4294901760
  %2679 = vmatmul.f32.gmra.mxu0 %v2678
  %v2680 = vpop.f32.mrf.mxu0
  %v2681 = vadd.f32 %v2637, %v2680
  %v2682 = vand.u32 %v2491, 4294901760
  %v2683 = vsub.f32 %v2491, %v2682
  %v2684 = vand.u32 %v2683, 4294901760
  %2685 = vmatmul.f32.gmra.mxu0 %v2684
  %v2686 = vpop.f32.mrf.mxu0
  %v2687 = vadd.f32 %v2642, %v2686
  %2688 = vdwg.mxu0
  %2689 = vmatpush.msra.mxu0 0.0
  %2690 = vmatpush.msra.mxu0 0.0
  %2691 = vmatpush.msra.mxu0 0.0
  %2692 = vmatpush.msra.mxu0 0.0
  %2693 = vmatpush.msra.mxu0 0.0
  %2694 = vmatpush.msra.mxu0 0.0
  %2695 = vmatpush.msra.mxu0 0.0
  %2696 = vmatpush.msra.mxu0 0.0
  %2697 = vmatpush.msra.mxu0 0.0
  %2698 = vmatpush.msra.mxu0 0.0
  %2699 = vmatpush.msra.mxu0 0.0
  %2700 = vmatpush.msra.mxu0 0.0
  %v2701 = vand.u32 %v2480, 4294901760
  %v2702 = vsub.f32 %v2480, %v2701
  %v2703 = vand.u32 %v2702, 4294901760
  %2704 = vmatpush.msra.mxu0 %v2703
  %v2705 = vand.u32 %v2479, 4294901760
  %v2706 = vsub.f32 %v2479, %v2705
  %v2707 = vand.u32 %v2706, 4294901760
  %2708 = vmatpush.msra.mxu0 %v2707
  %v2709 = vand.u32 %v2478, 4294901760
  %v2710 = vsub.f32 %v2478, %v2709
  %v2711 = vand.u32 %v2710, 4294901760
  %2712 = vmatpush.msra.mxu0 %v2711
  %v2713 = vand.u32 %v2477, 4294901760
  %v2714 = vsub.f32 %v2477, %v2713
  %v2715 = vand.u32 %v2714, 4294901760
  %2716 = vmatpush.msra.mxu0 %v2715
  %v2717 = vand.u32 %v2482, 4294901760
  %2718 = vmatmul.f32.gmra.mxu0 %v2717
  %v2719 = vpop.f32.mrf.mxu0
  %v2720 = vadd.f32 %v2669, %v2719
  %v2721 = vand.u32 %v2485, 4294901760
  %2722 = vmatmul.f32.gmra.mxu0 %v2721
  %v2723 = vpop.f32.mrf.mxu0
  %v2724 = vadd.f32 %v2675, %v2723
  %v2725 = vand.u32 %v2488, 4294901760
  %2726 = vmatmul.f32.gmra.mxu0 %v2725
  %v2727 = vpop.f32.mrf.mxu0
  %v2728 = vadd.f32 %v2681, %v2727
  %v2729 = vand.u32 %v2491, 4294901760
  %2730 = vmatmul.f32.gmra.mxu0 %v2729
  %v2731 = vpop.f32.mrf.mxu0
  %v2732 = vadd.f32 %v2687, %v2731
  %2733 = vdwg.mxu0
  %2734 = vmatpush.msra.mxu0 0.0
  %2735 = vmatpush.msra.mxu0 0.0
  %2736 = vmatpush.msra.mxu0 0.0
  %2737 = vmatpush.msra.mxu0 0.0
  %2738 = vmatpush.msra.mxu0 0.0
  %2739 = vmatpush.msra.mxu0 0.0
  %2740 = vmatpush.msra.mxu0 0.0
  %2741 = vmatpush.msra.mxu0 0.0
  %2742 = vmatpush.msra.mxu0 0.0
  %2743 = vmatpush.msra.mxu0 0.0
  %2744 = vmatpush.msra.mxu0 0.0
  %2745 = vmatpush.msra.mxu0 0.0
  %v2746 = vand.u32 %v2480, 4294901760
  %2747 = vmatpush.msra.mxu0 %v2746
  %v2748 = vand.u32 %v2479, 4294901760
  %2749 = vmatpush.msra.mxu0 %v2748
  %v2750 = vand.u32 %v2478, 4294901760
  %2751 = vmatpush.msra.mxu0 %v2750
  %v2752 = vand.u32 %v2477, 4294901760
  %2753 = vmatpush.msra.mxu0 %v2752
  %v2754 = vand.u32 %v2482, 4294901760
  %2755 = vmatmul.f32.gmra.mxu0 %v2754
  %v2756 = vpop.f32.mrf.mxu0
  %v2757 = vadd.f32 %v2720, %v2756
  %v2758 = vand.u32 %v2485, 4294901760
  %2759 = vmatmul.f32.gmra.mxu0 %v2758
  %v2760 = vpop.f32.mrf.mxu0
  %v2761 = vadd.f32 %v2724, %v2760
  %v2762 = vand.u32 %v2488, 4294901760
  %2763 = vmatmul.f32.gmra.mxu0 %v2762
  %v2764 = vpop.f32.mrf.mxu0
  %v2765 = vadd.f32 %v2728, %v2764
  %v2766 = vand.u32 %v2491, 4294901760
  %2767 = vmatmul.f32.gmra.mxu0 %v2766
  %v2768 = vpop.f32.mrf.mxu0
  %v2769 = vadd.f32 %v2732, %v2768
  %2770 = vdwg.mxu0
  %v2771 = vld [vmem:[%s1 + $0x4] sm:$0x1]
  %v2772 = vperm.slane %v2771, 0
  %v2773 = vmul.f32 %v2757, %v2772
  %v2774 = vmul.f32 %v2761, %v2772
  %v2775 = vmul.f32 %v2765, %v2772
  %v2776 = vmul.f32 %v2769, %v2772
  %v2777 = vld [vmem:[%s1 + $0x5] sm:$0x1]
  %v2778 = vperm.slane %v2777, 0
  %v2779 = vadd.f32 %v2773, %v2778
  %v2780 = vadd.f32 %v2774, %v2778
  %v2781 = vadd.f32 %v2775, %v2778
  %v2782 = vadd.f32 %v2776, %v2778
  %v2783 = vadd.f32 %v2779, 3.0
  %v2784 = vadd.f32 %v2780, 3.0
  %v2785 = vadd.f32 %v2781, 3.0
  %v2786 = vadd.f32 %v2782, 3.0
  %v2787 = vmax.f32 %v2783, 0.0
  %v2788 = vmax.f32 %v2784, 0.0
  %v2789 = vmax.f32 %v2785, 0.0
  %v2790 = vmax.f32 %v2786, 0.0
  %v2791 = vmin.f32 %v2787, 6.0
  %v2792 = vmin.f32 %v2788, 6.0
  %v2793 = vmin.f32 %v2789, 6.0
  %v2794 = vmin.f32 %v2790, 6.0
  %v2795 = vmul.f32 %v2779, %v2791
  %v2796 = vmul.f32 %v2780, %v2792
  %v2797 = vmul.f32 %v2781, %v2793
  %v2798 = vmul.f32 %v2782, %v2794
  %v2799 = vmul.f32 %v2795, %v2162
  %v2800 = vmul.f32 %v2796, %v2162
  %v2801 = vmul.f32 %v2797, %v2162
  %v2802 = vmul.f32 %v2798, %v2162
  %v2803 = vld [vmem:[%s1 + $0x88] sm:$0xff]
  %v2804 = vld [vmem:[%s1 + $0x90] sm:$0xff]
  %v2805 = vld [vmem:[%s1 + $0x98] sm:$0xff]
  %v2806 = vld [vmem:[%s1 + $0xa0] sm:$0xff]
  %v2807 = vld [vmem:[%s1 + $0xa8] sm:$0xff]
  %v2808 = vld [vmem:[%s1 + $0xb0] sm:$0xff]
  %v2809 = vld [vmem:[%s1 + $0xb8] sm:$0xff]
  %v2810 = vld [vmem:[%s1 + $0xc0] sm:$0xff]
  %vm2811 = vcmask 523264
  %v2813 = vsel %vm2811, %v2799, 0
  %v2816 = vsel %vm2811, %v2800, 0
  %v2819 = vsel %vm2811, %v2801, 0
  %v2822 = vsel %vm2811, %v2802, 0
  %2824 = vmatpush.msra.mxu0 0.0
  %2825 = vmatpush.msra.mxu0 0.0
  %2826 = vmatpush.msra.mxu0 0.0
  %2827 = vmatpush.msra.mxu0 0.0
  %2828 = vmatpush.msra.mxu0 0.0
  %2829 = vmatpush.msra.mxu0 0.0
  %2830 = vmatpush.msra.mxu0 0.0
  %2831 = vmatpush.msra.mxu0 0.0
  %v2832 = vand.u32 %v2810, 4294901760
  %2833 = vmatpush.msra.mxu0 %v2832
  %v2834 = vand.u32 %v2809, 4294901760
  %2835 = vmatpush.msra.mxu0 %v2834
  %v2836 = vand.u32 %v2808, 4294901760
  %2837 = vmatpush.msra.mxu0 %v2836
  %v2838 = vand.u32 %v2807, 4294901760
  %2839 = vmatpush.msra.mxu0 %v2838
  %v2840 = vand.u32 %v2806, 4294901760
  %2841 = vmatpush.msra.mxu0 %v2840
  %v2842 = vand.u32 %v2805, 4294901760
  %2843 = vmatpush.msra.mxu0 %v2842
  %v2844 = vand.u32 %v2804, 4294901760
  %2845 = vmatpush.msra.mxu0 %v2844
  %v2846 = vand.u32 %v2803, 4294901760
  %2847 = vmatpush.msra.mxu0 %v2846
  %v2848 = vand.u32 %v2813, 4294901760
  %v2849 = vsub.f32 %v2813, %v2848
  %v2850 = vand.u32 %v2849, 4294901760
  %v2851 = vsub.f32 %v2849, %v2850
  %v2852 = vand.u32 %v2851, 4294901760
  %2853 = vmatmul.f32.gmra.mxu0 %v2852
  %v2854 = vpop.f32.mrf.mxu0
  %v2855 = vadd.f32 0.0, %v2854
  %v2856 = vand.u32 %v2816, 4294901760
  %v2857 = vsub.f32 %v2816, %v2856
  %v2858 = vand.u32 %v2857, 4294901760
  %v2859 = vsub.f32 %v2857, %v2858
  %v2860 = vand.u32 %v2859, 4294901760
  %2861 = vmatmul.f32.gmra.mxu0 %v2860
  %v2862 = vpop.f32.mrf.mxu0
  %v2863 = vadd.f32 0.0, %v2862
  %v2864 = vand.u32 %v2819, 4294901760
  %v2865 = vsub.f32 %v2819, %v2864
  %v2866 = vand.u32 %v2865, 4294901760
  %v2867 = vsub.f32 %v2865, %v2866
  %v2868 = vand.u32 %v2867, 4294901760
  %2869 = vmatmul.f32.gmra.mxu0 %v2868
  %v2870 = vpop.f32.mrf.mxu0
  %v2871 = vadd.f32 0.0, %v2870
  %v2872 = vand.u32 %v2822, 4294901760
  %v2873 = vsub.f32 %v2822, %v2872
  %v2874 = vand.u32 %v2873, 4294901760
  %v2875 = vsub.f32 %v2873, %v2874
  %v2876 = vand.u32 %v2875, 4294901760
  %2877 = vmatmul.f32.gmra.mxu0 %v2876
  %v2878 = vpop.f32.mrf.mxu0
  %v2879 = vadd.f32 0.0, %v2878
  %2880 = vdwg.mxu0
  %2881 = vmatpush.msra.mxu0 0.0
  %2882 = vmatpush.msra.mxu0 0.0
  %2883 = vmatpush.msra.mxu0 0.0
  %2884 = vmatpush.msra.mxu0 0.0
  %2885 = vmatpush.msra.mxu0 0.0
  %2886 = vmatpush.msra.mxu0 0.0
  %2887 = vmatpush.msra.mxu0 0.0
  %2888 = vmatpush.msra.mxu0 0.0
  %v2889 = vand.u32 %v2810, 4294901760
  %v2890 = vsub.f32 %v2810, %v2889
  %v2891 = vand.u32 %v2890, 4294901760
  %v2892 = vsub.f32 %v2890, %v2891
  %v2893 = vand.u32 %v2892, 4294901760
  %2894 = vmatpush.msra.mxu0 %v2893
  %v2895 = vand.u32 %v2809, 4294901760
  %v2896 = vsub.f32 %v2809, %v2895
  %v2897 = vand.u32 %v2896, 4294901760
  %v2898 = vsub.f32 %v2896, %v2897
  %v2899 = vand.u32 %v2898, 4294901760
  %2900 = vmatpush.msra.mxu0 %v2899
  %v2901 = vand.u32 %v2808, 4294901760
  %v2902 = vsub.f32 %v2808, %v2901
  %v2903 = vand.u32 %v2902, 4294901760
  %v2904 = vsub.f32 %v2902, %v2903
  %v2905 = vand.u32 %v2904, 4294901760
  %2906 = vmatpush.msra.mxu0 %v2905
  %v2907 = vand.u32 %v2807, 4294901760
  %v2908 = vsub.f32 %v2807, %v2907
  %v2909 = vand.u32 %v2908, 4294901760
  %v2910 = vsub.f32 %v2908, %v2909
  %v2911 = vand.u32 %v2910, 4294901760
  %2912 = vmatpush.msra.mxu0 %v2911
  %v2913 = vand.u32 %v2806, 4294901760
  %v2914 = vsub.f32 %v2806, %v2913
  %v2915 = vand.u32 %v2914, 4294901760
  %v2916 = vsub.f32 %v2914, %v2915
  %v2917 = vand.u32 %v2916, 4294901760
  %2918 = vmatpush.msra.mxu0 %v2917
  %v2919 = vand.u32 %v2805, 4294901760
  %v2920 = vsub.f32 %v2805, %v2919
  %v2921 = vand.u32 %v2920, 4294901760
  %v2922 = vsub.f32 %v2920, %v2921
  %v2923 = vand.u32 %v2922, 4294901760
  %2924 = vmatpush.msra.mxu0 %v2923
  %v2925 = vand.u32 %v2804, 4294901760
  %v2926 = vsub.f32 %v2804, %v2925
  %v2927 = vand.u32 %v2926, 4294901760
  %v2928 = vsub.f32 %v2926, %v2927
  %v2929 = vand.u32 %v2928, 4294901760
  %2930 = vmatpush.msra.mxu0 %v2929
  %v2931 = vand.u32 %v2803, 4294901760
  %v2932 = vsub.f32 %v2803, %v2931
  %v2933 = vand.u32 %v2932, 4294901760
  %v2934 = vsub.f32 %v2932, %v2933
  %v2935 = vand.u32 %v2934, 4294901760
  %2936 = vmatpush.msra.mxu0 %v2935
  %v2937 = vand.u32 %v2813, 4294901760
  %2938 = vmatmul.f32.gmra.mxu0 %v2937
  %v2939 = vpop.f32.mrf.mxu0
  %v2940 = vadd.f32 %v2855, %v2939
  %v2941 = vand.u32 %v2816, 4294901760
  %2942 = vmatmul.f32.gmra.mxu0 %v2941
  %v2943 = vpop.f32.mrf.mxu0
  %v2944 = vadd.f32 %v2863, %v2943
  %v2945 = vand.u32 %v2819, 4294901760
  %2946 = vmatmul.f32.gmra.mxu0 %v2945
  %v2947 = vpop.f32.mrf.mxu0
  %v2948 = vadd.f32 %v2871, %v2947
  %v2949 = vand.u32 %v2822, 4294901760
  %2950 = vmatmul.f32.gmra.mxu0 %v2949
  %v2951 = vpop.f32.mrf.mxu0
  %v2952 = vadd.f32 %v2879, %v2951
  %2953 = vdwg.mxu0
  %2954 = vmatpush.msra.mxu0 0.0
  %2955 = vmatpush.msra.mxu0 0.0
  %2956 = vmatpush.msra.mxu0 0.0
  %2957 = vmatpush.msra.mxu0 0.0
  %2958 = vmatpush.msra.mxu0 0.0
  %2959 = vmatpush.msra.mxu0 0.0
  %2960 = vmatpush.msra.mxu0 0.0
  %2961 = vmatpush.msra.mxu0 0.0
  %v2962 = vand.u32 %v2810, 4294901760
  %v2963 = vsub.f32 %v2810, %v2962
  %2964 = vmatpush.msra.mxu0 %v2963
  %v2965 = vand.u32 %v2809, 4294901760
  %v2966 = vsub.f32 %v2809, %v2965
  %2967 = vmatpush.msra.mxu0 %v2966
  %v2968 = vand.u32 %v2808, 4294901760
  %v2969 = vsub.f32 %v2808, %v2968
  %2970 = vmatpush.msra.mxu0 %v2969
  %v2971 = vand.u32 %v2807, 4294901760
  %v2972 = vsub.f32 %v2807, %v2971
  %2973 = vmatpush.msra.mxu0 %v2972
  %v2974 = vand.u32 %v2806, 4294901760
  %v2975 = vsub.f32 %v2806, %v2974
  %2976 = vmatpush.msra.mxu0 %v2975
  %v2977 = vand.u32 %v2805, 4294901760
  %v2978 = vsub.f32 %v2805, %v2977
  %2979 = vmatpush.msra.mxu0 %v2978
  %v2980 = vand.u32 %v2804, 4294901760
  %v2981 = vsub.f32 %v2804, %v2980
  %2982 = vmatpush.msra.mxu0 %v2981
  %v2983 = vand.u32 %v2803, 4294901760
  %v2984 = vsub.f32 %v2803, %v2983
  %2985 = vmatpush.msra.mxu0 %v2984
  %v2986 = vand.u32 %v2813, 4294901760
  %v2987 = vsub.f32 %v2813, %v2986
  %2988 = vmatmul.f32.gmra.mxu0 %v2987
  %v2989 = vpop.f32.mrf.mxu0
  %v2990 = vadd.f32 %v2940, %v2989
  %v2991 = vand.u32 %v2816, 4294901760
  %v2992 = vsub.f32 %v2816, %v2991
  %2993 = vmatmul.f32.gmra.mxu0 %v2992
  %v2994 = vpop.f32.mrf.mxu0
  %v2995 = vadd.f32 %v2944, %v2994
  %v2996 = vand.u32 %v2819, 4294901760
  %v2997 = vsub.f32 %v2819, %v2996
  %2998 = vmatmul.f32.gmra.mxu0 %v2997
  %v2999 = vpop.f32.mrf.mxu0
  %v3000 = vadd.f32 %v2948, %v2999
  %v3001 = vand.u32 %v2822, 4294901760
  %v3002 = vsub.f32 %v2822, %v3001
  %3003 = vmatmul.f32.gmra.mxu0 %v3002
  %v3004 = vpop.f32.mrf.mxu0
  %v3005 = vadd.f32 %v2952, %v3004
  %3006 = vdwg.mxu0
  %3007 = vmatpush.msra.mxu0 0.0
  %3008 = vmatpush.msra.mxu0 0.0
  %3009 = vmatpush.msra.mxu0 0.0
  %3010 = vmatpush.msra.mxu0 0.0
  %3011 = vmatpush.msra.mxu0 0.0
  %3012 = vmatpush.msra.mxu0 0.0
  %3013 = vmatpush.msra.mxu0 0.0
  %3014 = vmatpush.msra.mxu0 0.0
  %v3015 = vand.u32 %v2810, 4294901760
  %3016 = vmatpush.msra.mxu0 %v3015
  %v3017 = vand.u32 %v2809, 4294901760
  %3018 = vmatpush.msra.mxu0 %v3017
  %v3019 = vand.u32 %v2808, 4294901760
  %3020 = vmatpush.msra.mxu0 %v3019
  %v3021 = vand.u32 %v2807, 4294901760
  %3022 = vmatpush.msra.mxu0 %v3021
  %v3023 = vand.u32 %v2806, 4294901760
  %3024 = vmatpush.msra.mxu0 %v3023
  %v3025 = vand.u32 %v2805, 4294901760
  %3026 = vmatpush.msra.mxu0 %v3025
  %v3027 = vand.u32 %v2804, 4294901760
  %3028 = vmatpush.msra.mxu0 %v3027
  %v3029 = vand.u32 %v2803, 4294901760
  %3030 = vmatpush.msra.mxu0 %v3029
  %v3031 = vand.u32 %v2813, 4294901760
  %v3032 = vsub.f32 %v2813, %v3031
  %v3033 = vand.u32 %v3032, 4294901760
  %3034 = vmatmul.f32.gmra.mxu0 %v3033
  %v3035 = vpop.f32.mrf.mxu0
  %v3036 = vadd.f32 %v2990, %v3035
  %v3037 = vand.u32 %v2816, 4294901760
  %v3038 = vsub.f32 %v2816, %v3037
  %v3039 = vand.u32 %v3038, 4294901760
  %3040 = vmatmul.f32.gmra.mxu0 %v3039
  %v3041 = vpop.f32.mrf.mxu0
  %v3042 = vadd.f32 %v2995, %v3041
  %v3043 = vand.u32 %v2819, 4294901760
  %v3044 = vsub.f32 %v2819, %v3043
  %v3045 = vand.u32 %v3044, 4294901760
  %3046 = vmatmul.f32.gmra.mxu0 %v3045
  %v3047 = vpop.f32.mrf.mxu0
  %v3048 = vadd.f32 %v3000, %v3047
  %v3049 = vand.u32 %v2822, 4294901760
  %v3050 = vsub.f32 %v2822, %v3049
  %v3051 = vand.u32 %v3050, 4294901760
  %3052 = vmatmul.f32.gmra.mxu0 %v3051
  %v3053 = vpop.f32.mrf.mxu0
  %v3054 = vadd.f32 %v3005, %v3053
  %3055 = vdwg.mxu0
  %3056 = vmatpush.msra.mxu0 0.0
  %3057 = vmatpush.msra.mxu0 0.0
  %3058 = vmatpush.msra.mxu0 0.0
  %3059 = vmatpush.msra.mxu0 0.0
  %3060 = vmatpush.msra.mxu0 0.0
  %3061 = vmatpush.msra.mxu0 0.0
  %3062 = vmatpush.msra.mxu0 0.0
  %3063 = vmatpush.msra.mxu0 0.0
  %v3064 = vand.u32 %v2810, 4294901760
  %v3065 = vsub.f32 %v2810, %v3064
  %v3066 = vand.u32 %v3065, 4294901760
  %3067 = vmatpush.msra.mxu0 %v3066
  %v3068 = vand.u32 %v2809, 4294901760
  %v3069 = vsub.f32 %v2809, %v3068
  %v3070 = vand.u32 %v3069, 4294901760
  %3071 = vmatpush.msra.mxu0 %v3070
  %v3072 = vand.u32 %v2808, 4294901760
  %v3073 = vsub.f32 %v2808, %v3072
  %v3074 = vand.u32 %v3073, 4294901760
  %3075 = vmatpush.msra.mxu0 %v3074
  %v3076 = vand.u32 %v2807, 4294901760
  %v3077 = vsub.f32 %v2807, %v3076
  %v3078 = vand.u32 %v3077, 4294901760
  %3079 = vmatpush.msra.mxu0 %v3078
  %v3080 = vand.u32 %v2806, 4294901760
  %v3081 = vsub.f32 %v2806, %v3080
  %v3082 = vand.u32 %v3081, 4294901760
  %3083 = vmatpush.msra.mxu0 %v3082
  %v3084 = vand.u32 %v2805, 4294901760
  %v3085 = vsub.f32 %v2805, %v3084
  %v3086 = vand.u32 %v3085, 4294901760
  %3087 = vmatpush.msra.mxu0 %v3086
  %v3088 = vand.u32 %v2804, 4294901760
  %v3089 = vsub.f32 %v2804, %v3088
  %v3090 = vand.u32 %v3089, 4294901760
  %3091 = vmatpush.msra.mxu0 %v3090
  %v3092 = vand.u32 %v2803, 4294901760
  %v3093 = vsub.f32 %v2803, %v3092
  %v3094 = vand.u32 %v3093, 4294901760
  %3095 = vmatpush.msra.mxu0 %v3094
  %v3096 = vand.u32 %v2813, 4294901760
  %3097 = vmatmul.f32.gmra.mxu0 %v3096
  %v3098 = vpop.f32.mrf.mxu0
  %v3099 = vadd.f32 %v3036, %v3098
  %v3100 = vand.u32 %v2816, 4294901760
  %3101 = vmatmul.f32.gmra.mxu0 %v3100
  %v3102 = vpop.f32.mrf.mxu0
  %v3103 = vadd.f32 %v3042, %v3102
  %v3104 = vand.u32 %v2819, 4294901760
  %3105 = vmatmul.f32.gmra.mxu0 %v3104
  %v3106 = vpop.f32.mrf.mxu0
  %v3107 = vadd.f32 %v3048, %v3106
  %v3108 = vand.u32 %v2822, 4294901760
  %3109 = vmatmul.f32.gmra.mxu0 %v3108
  %v3110 = vpop.f32.mrf.mxu0
  %v3111 = vadd.f32 %v3054, %v3110
  %3112 = vdwg.mxu0
  %3113 = vmatpush.msra.mxu0 0.0
  %3114 = vmatpush.msra.mxu0 0.0
  %3115 = vmatpush.msra.mxu0 0.0
  %3116 = vmatpush.msra.mxu0 0.0
  %3117 = vmatpush.msra.mxu0 0.0
  %3118 = vmatpush.msra.mxu0 0.0
  %3119 = vmatpush.msra.mxu0 0.0
  %3120 = vmatpush.msra.mxu0 0.0
  %v3121 = vand.u32 %v2810, 4294901760
  %3122 = vmatpush.msra.mxu0 %v3121
  %v3123 = vand.u32 %v2809, 4294901760
  %3124 = vmatpush.msra.mxu0 %v3123
  %v3125 = vand.u32 %v2808, 4294901760
  %3126 = vmatpush.msra.mxu0 %v3125
  %v3127 = vand.u32 %v2807, 4294901760
  %3128 = vmatpush.msra.mxu0 %v3127
  %v3129 = vand.u32 %v2806, 4294901760
  %3130 = vmatpush.msra.mxu0 %v3129
  %v3131 = vand.u32 %v2805, 4294901760
  %3132 = vmatpush.msra.mxu0 %v3131
  %v3133 = vand.u32 %v2804, 4294901760
  %3134 = vmatpush.msra.mxu0 %v3133
  %v3135 = vand.u32 %v2803, 4294901760
  %3136 = vmatpush.msra.mxu0 %v3135
  %v3137 = vand.u32 %v2813, 4294901760
  %3138 = vmatmul.f32.gmra.mxu0 %v3137
  %v3139 = vpop.f32.mrf.mxu0
  %v3140 = vadd.f32 %v3099, %v3139
  %v3141 = vand.u32 %v2816, 4294901760
  %3142 = vmatmul.f32.gmra.mxu0 %v3141
  %v3143 = vpop.f32.mrf.mxu0
  %v3144 = vadd.f32 %v3103, %v3143
  %v3145 = vand.u32 %v2819, 4294901760
  %3146 = vmatmul.f32.gmra.mxu0 %v3145
  %v3147 = vpop.f32.mrf.mxu0
  %v3148 = vadd.f32 %v3107, %v3147
  %v3149 = vand.u32 %v2822, 4294901760
  %3150 = vmatmul.f32.gmra.mxu0 %v3149
  %v3151 = vpop.f32.mrf.mxu0
  %v3152 = vadd.f32 %v3111, %v3151
  %3153 = vdwg.mxu0
  %v3154 = vld [vmem:[%s1 + $0x6] sm:$0x1]
  %v3155 = vperm.slane %v3154, 0
  %v3156 = vmul.f32 %v3140, %v3155
  %v3157 = vmul.f32 %v3144, %v3155
  %v3158 = vmul.f32 %v3148, %v3155
  %v3159 = vmul.f32 %v3152, %v3155
  %v3160 = vld [vmem:[%s1 + $0x7] sm:$0x1]
  %v3161 = vperm.slane %v3160, 0
  %v3162 = vadd.f32 %v3156, %v3161
  %v3163 = vadd.f32 %v3157, %v3161
  %v3164 = vadd.f32 %v3158, %v3161
  %v3165 = vadd.f32 %v3159, %v3161
  %v3166 = vadd.f32 %v2473, %v3162
  %v3167 = vadd.f32 %v2474, %v3163
  %v3168 = vadd.f32 %v2475, %v3164
  %v3169 = vadd.f32 %v2476, %v3165
  %v3170 = vld [vmem:[%s1 + $0xd0] sm:$0xff]
  %v3171 = vld [vmem:[%s1 + $0xd8] sm:$0xff]
  %v3172 = vld [vmem:[%s1 + $0xe0] sm:$0xff]
  %v3173 = vld [vmem:[%s1 + $0xe8] sm:$0xff]
  %v3175 = vsel %vm488, %v3166, 0
  %v3178 = vsel %vm488, %v3167, 0
  %v3181 = vsel %vm488, %v3168, 0
  %v3184 = vsel %vm488, %v3169, 0
  %3186 = vmatpush.msra.mxu0 0.0
  %3187 = vmatpush.msra.mxu0 0.0
  %3188 = vmatpush.msra.mxu0 0.0
  %3189 = vmatpush.msra.mxu0 0.0
  %3190 = vmatpush.msra.mxu0 0.0
  %3191 = vmatpush.msra.mxu0 0.0
  %3192 = vmatpush.msra.mxu0 0.0
  %3193 = vmatpush.msra.mxu0 0.0
  %3194 = vmatpush.msra.mxu0 0.0
  %3195 = vmatpush.msra.mxu0 0.0
  %3196 = vmatpush.msra.mxu0 0.0
  %3197 = vmatpush.msra.mxu0 0.0
  %v3198 = vand.u32 %v3173, 4294901760
  %3199 = vmatpush.msra.mxu0 %v3198
  %v3200 = vand.u32 %v3172, 4294901760
  %3201 = vmatpush.msra.mxu0 %v3200
  %v3202 = vand.u32 %v3171, 4294901760
  %3203 = vmatpush.msra.mxu0 %v3202
  %v3204 = vand.u32 %v3170, 4294901760
  %3205 = vmatpush.msra.mxu0 %v3204
  %v3206 = vand.u32 %v3175, 4294901760
  %v3207 = vsub.f32 %v3175, %v3206
  %v3208 = vand.u32 %v3207, 4294901760
  %v3209 = vsub.f32 %v3207, %v3208
  %v3210 = vand.u32 %v3209, 4294901760
  %3211 = vmatmul.f32.gmra.mxu0 %v3210
  %v3212 = vpop.f32.mrf.mxu0
  %v3213 = vadd.f32 0.0, %v3212
  %v3214 = vand.u32 %v3178, 4294901760
  %v3215 = vsub.f32 %v3178, %v3214
  %v3216 = vand.u32 %v3215, 4294901760
  %v3217 = vsub.f32 %v3215, %v3216
  %v3218 = vand.u32 %v3217, 4294901760
  %3219 = vmatmul.f32.gmra.mxu0 %v3218
  %v3220 = vpop.f32.mrf.mxu0
  %v3221 = vadd.f32 0.0, %v3220
  %v3222 = vand.u32 %v3181, 4294901760
  %v3223 = vsub.f32 %v3181, %v3222
  %v3224 = vand.u32 %v3223, 4294901760
  %v3225 = vsub.f32 %v3223, %v3224
  %v3226 = vand.u32 %v3225, 4294901760
  %3227 = vmatmul.f32.gmra.mxu0 %v3226
  %v3228 = vpop.f32.mrf.mxu0
  %v3229 = vadd.f32 0.0, %v3228
  %v3230 = vand.u32 %v3184, 4294901760
  %v3231 = vsub.f32 %v3184, %v3230
  %v3232 = vand.u32 %v3231, 4294901760
  %v3233 = vsub.f32 %v3231, %v3232
  %v3234 = vand.u32 %v3233, 4294901760
  %3235 = vmatmul.f32.gmra.mxu0 %v3234
  %v3236 = vpop.f32.mrf.mxu0
  %v3237 = vadd.f32 0.0, %v3236
  %3238 = vdwg.mxu0
  %3239 = vmatpush.msra.mxu0 0.0
  %3240 = vmatpush.msra.mxu0 0.0
  %3241 = vmatpush.msra.mxu0 0.0
  %3242 = vmatpush.msra.mxu0 0.0
  %3243 = vmatpush.msra.mxu0 0.0
  %3244 = vmatpush.msra.mxu0 0.0
  %3245 = vmatpush.msra.mxu0 0.0
  %3246 = vmatpush.msra.mxu0 0.0
  %3247 = vmatpush.msra.mxu0 0.0
  %3248 = vmatpush.msra.mxu0 0.0
  %3249 = vmatpush.msra.mxu0 0.0
  %3250 = vmatpush.msra.mxu0 0.0
  %v3251 = vand.u32 %v3173, 4294901760
  %v3252 = vsub.f32 %v3173, %v3251
  %v3253 = vand.u32 %v3252, 4294901760
  %v3254 = vsub.f32 %v3252, %v3253
  %v3255 = vand.u32 %v3254, 4294901760
  %3256 = vmatpush.msra.mxu0 %v3255
  %v3257 = vand.u32 %v3172, 4294901760
  %v3258 = vsub.f32 %v3172, %v3257
  %v3259 = vand.u32 %v3258, 4294901760
  %v3260 = vsub.f32 %v3258, %v3259
  %v3261 = vand.u32 %v3260, 4294901760
  %3262 = vmatpush.msra.mxu0 %v3261
  %v3263 = vand.u32 %v3171, 4294901760
  %v3264 = vsub.f32 %v3171, %v3263
  %v3265 = vand.u32 %v3264, 4294901760
  %v3266 = vsub.f32 %v3264, %v3265
  %v3267 = vand.u32 %v3266, 4294901760
  %3268 = vmatpush.msra.mxu0 %v3267
  %v3269 = vand.u32 %v3170, 4294901760
  %v3270 = vsub.f32 %v3170, %v3269
  %v3271 = vand.u32 %v3270, 4294901760
  %v3272 = vsub.f32 %v3270, %v3271
  %v3273 = vand.u32 %v3272, 4294901760
  %3274 = vmatpush.msra.mxu0 %v3273
  %v3275 = vand.u32 %v3175, 4294901760
  %3276 = vmatmul.f32.gmra.mxu0 %v3275
  %v3277 = vpop.f32.mrf.mxu0
  %v3278 = vadd.f32 %v3213, %v3277
  %v3279 = vand.u32 %v3178, 4294901760
  %3280 = vmatmul.f32.gmra.mxu0 %v3279
  %v3281 = vpop.f32.mrf.mxu0
  %v3282 = vadd.f32 %v3221, %v3281
  %v3283 = vand.u32 %v3181, 4294901760
  %3284 = vmatmul.f32.gmra.mxu0 %v3283
  %v3285 = vpop.f32.mrf.mxu0
  %v3286 = vadd.f32 %v3229, %v3285
  %v3287 = vand.u32 %v3184, 4294901760
  %3288 = vmatmul.f32.gmra.mxu0 %v3287
  %v3289 = vpop.f32.mrf.mxu0
  %v3290 = vadd.f32 %v3237, %v3289
  %3291 = vdwg.mxu0
  %3292 = vmatpush.msra.mxu0 0.0
  %3293 = vmatpush.msra.mxu0 0.0
  %3294 = vmatpush.msra.mxu0 0.0
  %3295 = vmatpush.msra.mxu0 0.0
  %3296 = vmatpush.msra.mxu0 0.0
  %3297 = vmatpush.msra.mxu0 0.0
  %3298 = vmatpush.msra.mxu0 0.0
  %3299 = vmatpush.msra.mxu0 0.0
  %3300 = vmatpush.msra.mxu0 0.0
  %3301 = vmatpush.msra.mxu0 0.0
  %3302 = vmatpush.msra.mxu0 0.0
  %3303 = vmatpush.msra.mxu0 0.0
  %v3304 = vand.u32 %v3173, 4294901760
  %v3305 = vsub.f32 %v3173, %v3304
  %3306 = vmatpush.msra.mxu0 %v3305
  %v3307 = vand.u32 %v3172, 4294901760
  %v3308 = vsub.f32 %v3172, %v3307
  %3309 = vmatpush.msra.mxu0 %v3308
  %v3310 = vand.u32 %v3171, 4294901760
  %v3311 = vsub.f32 %v3171, %v3310
  %3312 = vmatpush.msra.mxu0 %v3311
  %v3313 = vand.u32 %v3170, 4294901760
  %v3314 = vsub.f32 %v3170, %v3313
  %3315 = vmatpush.msra.mxu0 %v3314
  %v3316 = vand.u32 %v3175, 4294901760
  %v3317 = vsub.f32 %v3175, %v3316
  %3318 = vmatmul.f32.gmra.mxu0 %v3317
  %v3319 = vpop.f32.mrf.mxu0
  %v3320 = vadd.f32 %v3278, %v3319
  %v3321 = vand.u32 %v3178, 4294901760
  %v3322 = vsub.f32 %v3178, %v3321
  %3323 = vmatmul.f32.gmra.mxu0 %v3322
  %v3324 = vpop.f32.mrf.mxu0
  %v3325 = vadd.f32 %v3282, %v3324
  %v3326 = vand.u32 %v3181, 4294901760
  %v3327 = vsub.f32 %v3181, %v3326
  %3328 = vmatmul.f32.gmra.mxu0 %v3327
  %v3329 = vpop.f32.mrf.mxu0
  %v3330 = vadd.f32 %v3286, %v3329
  %v3331 = vand.u32 %v3184, 4294901760
  %v3332 = vsub.f32 %v3184, %v3331
  %3333 = vmatmul.f32.gmra.mxu0 %v3332
  %v3334 = vpop.f32.mrf.mxu0
  %v3335 = vadd.f32 %v3290, %v3334
  %3336 = vdwg.mxu0
  %3337 = vmatpush.msra.mxu0 0.0
  %3338 = vmatpush.msra.mxu0 0.0
  %3339 = vmatpush.msra.mxu0 0.0
  %3340 = vmatpush.msra.mxu0 0.0
  %3341 = vmatpush.msra.mxu0 0.0
  %3342 = vmatpush.msra.mxu0 0.0
  %3343 = vmatpush.msra.mxu0 0.0
  %3344 = vmatpush.msra.mxu0 0.0
  %3345 = vmatpush.msra.mxu0 0.0
  %3346 = vmatpush.msra.mxu0 0.0
  %3347 = vmatpush.msra.mxu0 0.0
  %3348 = vmatpush.msra.mxu0 0.0
  %v3349 = vand.u32 %v3173, 4294901760
  %3350 = vmatpush.msra.mxu0 %v3349
  %v3351 = vand.u32 %v3172, 4294901760
  %3352 = vmatpush.msra.mxu0 %v3351
  %v3353 = vand.u32 %v3171, 4294901760
  %3354 = vmatpush.msra.mxu0 %v3353
  %v3355 = vand.u32 %v3170, 4294901760
  %3356 = vmatpush.msra.mxu0 %v3355
  %v3357 = vand.u32 %v3175, 4294901760
  %v3358 = vsub.f32 %v3175, %v3357
  %v3359 = vand.u32 %v3358, 4294901760
  %3360 = vmatmul.f32.gmra.mxu0 %v3359
  %v3361 = vpop.f32.mrf.mxu0
  %v3362 = vadd.f32 %v3320, %v3361
  %v3363 = vand.u32 %v3178, 4294901760
  %v3364 = vsub.f32 %v3178, %v3363
  %v3365 = vand.u32 %v3364, 4294901760
  %3366 = vmatmul.f32.gmra.mxu0 %v3365
  %v3367 = vpop.f32.mrf.mxu0
  %v3368 = vadd.f32 %v3325, %v3367
  %v3369 = vand.u32 %v3181, 4294901760
  %v3370 = vsub.f32 %v3181, %v3369
  %v3371 = vand.u32 %v3370, 4294901760
  %3372 = vmatmul.f32.gmra.mxu0 %v3371
  %v3373 = vpop.f32.mrf.mxu0
  %v3374 = vadd.f32 %v3330, %v3373
  %v3375 = vand.u32 %v3184, 4294901760
  %v3376 = vsub.f32 %v3184, %v3375
  %v3377 = vand.u32 %v3376, 4294901760
  %3378 = vmatmul.f32.gmra.mxu0 %v3377
  %v3379 = vpop.f32.mrf.mxu0
  %v3380 = vadd.f32 %v3335, %v3379
  %3381 = vdwg.mxu0
  %3382 = vmatpush.msra.mxu0 0.0
  %3383 = vmatpush.msra.mxu0 0.0
  %3384 = vmatpush.msra.mxu0 0.0
  %3385 = vmatpush.msra.mxu0 0.0
  %3386 = vmatpush.msra.mxu0 0.0
  %3387 = vmatpush.msra.mxu0 0.0
  %3388 = vmatpush.msra.mxu0 0.0
  %3389 = vmatpush.msra.mxu0 0.0
  %3390 = vmatpush.msra.mxu0 0.0
  %3391 = vmatpush.msra.mxu0 0.0
  %3392 = vmatpush.msra.mxu0 0.0
  %3393 = vmatpush.msra.mxu0 0.0
  %v3394 = vand.u32 %v3173, 4294901760
  %v3395 = vsub.f32 %v3173, %v3394
  %v3396 = vand.u32 %v3395, 4294901760
  %3397 = vmatpush.msra.mxu0 %v3396
  %v3398 = vand.u32 %v3172, 4294901760
  %v3399 = vsub.f32 %v3172, %v3398
  %v3400 = vand.u32 %v3399, 4294901760
  %3401 = vmatpush.msra.mxu0 %v3400
  %v3402 = vand.u32 %v3171, 4294901760
  %v3403 = vsub.f32 %v3171, %v3402
  %v3404 = vand.u32 %v3403, 4294901760
  %3405 = vmatpush.msra.mxu0 %v3404
  %v3406 = vand.u32 %v3170, 4294901760
  %v3407 = vsub.f32 %v3170, %v3406
  %v3408 = vand.u32 %v3407, 4294901760
  %3409 = vmatpush.msra.mxu0 %v3408
  %v3410 = vand.u32 %v3175, 4294901760
  %3411 = vmatmul.f32.gmra.mxu0 %v3410
  %v3412 = vpop.f32.mrf.mxu0
  %v3413 = vadd.f32 %v3362, %v3412
  %v3414 = vand.u32 %v3178, 4294901760
  %3415 = vmatmul.f32.gmra.mxu0 %v3414
  %v3416 = vpop.f32.mrf.mxu0
  %v3417 = vadd.f32 %v3368, %v3416
  %v3418 = vand.u32 %v3181, 4294901760
  %3419 = vmatmul.f32.gmra.mxu0 %v3418
  %v3420 = vpop.f32.mrf.mxu0
  %v3421 = vadd.f32 %v3374, %v3420
  %v3422 = vand.u32 %v3184, 4294901760
  %3423 = vmatmul.f32.gmra.mxu0 %v3422
  %v3424 = vpop.f32.mrf.mxu0
  %v3425 = vadd.f32 %v3380, %v3424
  %3426 = vdwg.mxu0
  %3427 = vmatpush.msra.mxu0 0.0
  %3428 = vmatpush.msra.mxu0 0.0
  %3429 = vmatpush.msra.mxu0 0.0
  %3430 = vmatpush.msra.mxu0 0.0
  %3431 = vmatpush.msra.mxu0 0.0
  %3432 = vmatpush.msra.mxu0 0.0
  %3433 = vmatpush.msra.mxu0 0.0
  %3434 = vmatpush.msra.mxu0 0.0
  %3435 = vmatpush.msra.mxu0 0.0
  %3436 = vmatpush.msra.mxu0 0.0
  %3437 = vmatpush.msra.mxu0 0.0
  %3438 = vmatpush.msra.mxu0 0.0
  %v3439 = vand.u32 %v3173, 4294901760
  %3440 = vmatpush.msra.mxu0 %v3439
  %v3441 = vand.u32 %v3172, 4294901760
  %3442 = vmatpush.msra.mxu0 %v3441
  %v3443 = vand.u32 %v3171, 4294901760
  %3444 = vmatpush.msra.mxu0 %v3443
  %v3445 = vand.u32 %v3170, 4294901760
  %3446 = vmatpush.msra.mxu0 %v3445
  %v3447 = vand.u32 %v3175, 4294901760
  %3448 = vmatmul.f32.gmra.mxu0 %v3447
  %v3449 = vpop.f32.mrf.mxu0
  %v3450 = vadd.f32 %v3413, %v3449
  %v3451 = vand.u32 %v3178, 4294901760
  %3452 = vmatmul.f32.gmra.mxu0 %v3451
  %v3453 = vpop.f32.mrf.mxu0
  %v3454 = vadd.f32 %v3417, %v3453
  %v3455 = vand.u32 %v3181, 4294901760
  %3456 = vmatmul.f32.gmra.mxu0 %v3455
  %v3457 = vpop.f32.mrf.mxu0
  %v3458 = vadd.f32 %v3421, %v3457
  %v3459 = vand.u32 %v3184, 4294901760
  %3460 = vmatmul.f32.gmra.mxu0 %v3459
  %v3461 = vpop.f32.mrf.mxu0
  %v3462 = vadd.f32 %v3425, %v3461
  %3463 = vdwg.mxu0
  %v3464 = vld [vmem:[%s1 + $0xc8] sm:$0x1]
  %v3465 = vperm.slane %v3464, 0
  %v3466 = vmul.f32 %v3450, %v3465
  %v3467 = vmul.f32 %v3454, %v3465
  %v3468 = vmul.f32 %v3458, %v3465
  %v3469 = vmul.f32 %v3462, %v3465
  %v3470 = vld [vmem:[%s1 + $0xc9] sm:$0x1]
  %v3471 = vperm.slane %v3470, 0
  %v3472 = vadd.f32 %v3466, %v3471
  %v3473 = vadd.f32 %v3467, %v3471
  %v3474 = vadd.f32 %v3468, %v3471
  %v3475 = vadd.f32 %v3469, %v3471
  %v3476 = vld [vmem:[%s1 + $0xf0] sm:$0xff]
  %v3477 = vld [vmem:[%s1 + $0xf8] sm:$0xff]
  %v3478 = vld [vmem:[%s1 + $0x100] sm:$0xff]
  %v3479 = vld [vmem:[%s1 + $0x108] sm:$0xff]
  %3484 = vrot.lane.b32.xlu0 %v3472, 112
  %v3485 = vpop.permute.xlu0 %3484
  %3486 = vrot.lane.b32.xlu0 %v3473, 112
  %v3487 = vpop.permute.xlu0 %3486
  %3488 = vrot.lane.b32.xlu0 %v3474, 112
  %v3489 = vpop.permute.xlu0 %3488
  %3490 = vrot.lane.b32.xlu0 %v3475, 112
  %v3491 = vpop.permute.xlu0 %3490
  %v3492 = vsel %vm807, %v3472, 0
  %v3494 = vsel %vm807, %v3473, 0
  %v3496 = vsel %vm807, %v3474, 0
  %v3498 = vsel %vm807, %v3475, 0
  %v3500 = vsel %vm807, %v3485, 0
  %v3502 = vsel %vm807, %v3487, 0
  %v3504 = vsel %vm807, %v3489, 0
  %v3506 = vsel %vm807, %v3491, 0
  %3508 = vmatpush.xpose.msra.mxu0 0.0
  %3509 = vmatpush.xpose.msra.mxu0 0.0
  %3510 = vmatpush.xpose.msra.mxu0 0.0
  %3511 = vmatpush.xpose.msra.mxu0 0.0
  %3512 = vmatpush.xpose.msra.mxu0 0.0
  %3513 = vmatpush.xpose.msra.mxu0 0.0
  %3514 = vmatpush.xpose.msra.mxu0 0.0
  %3515 = vmatpush.xpose.msra.mxu0 0.0
  %3516 = vmatpush.xpose.msra.mxu0 0.0
  %3517 = vmatpush.xpose.msra.mxu0 0.0
  %3518 = vmatpush.xpose.msra.mxu0 0.0
  %3519 = vmatpush.xpose.msra.mxu0 0.0
  %v3520 = vand.u32 %v3506, 4294901760
  %3521 = vmatpush.xpose.msra.mxu0 %v3520
  %v3522 = vand.u32 %v3504, 4294901760
  %3523 = vmatpush.xpose.msra.mxu0 %v3522
  %v3524 = vand.u32 %v3502, 4294901760
  %3525 = vmatpush.xpose.msra.mxu0 %v3524
  %v3526 = vand.u32 %v3500, 4294901760
  %3527 = vmatpush.xpose.msra.mxu0 %v3526
  %v3528 = vand.u32 %v3492, 4294901760
  %v3529 = vsub.f32 %v3492, %v3528
  %v3530 = vand.u32 %v3529, 4294901760
  %v3531 = vsub.f32 %v3529, %v3530
  %v3532 = vand.u32 %v3531, 4294901760
  %3533 = vmatmul.f32.gmra.mxu0 %v3532
  %v3534 = vpop.f32.mrf.mxu0
  %v3535 = vadd.f32 %v3476, %v3534
  %v3536 = vand.u32 %v3494, 4294901760
  %v3537 = vsub.f32 %v3494, %v3536
  %v3538 = vand.u32 %v3537, 4294901760
  %v3539 = vsub.f32 %v3537, %v3538
  %v3540 = vand.u32 %v3539, 4294901760
  %3541 = vmatmul.f32.gmra.mxu0 %v3540
  %v3542 = vpop.f32.mrf.mxu0
  %v3543 = vadd.f32 %v3477, %v3542
  %v3544 = vand.u32 %v3496, 4294901760
  %v3545 = vsub.f32 %v3496, %v3544
  %v3546 = vand.u32 %v3545, 4294901760
  %v3547 = vsub.f32 %v3545, %v3546
  %v3548 = vand.u32 %v3547, 4294901760
  %3549 = vmatmul.f32.gmra.mxu0 %v3548
  %v3550 = vpop.f32.mrf.mxu0
  %v3551 = vadd.f32 %v3478, %v3550
  %v3552 = vand.u32 %v3498, 4294901760
  %v3553 = vsub.f32 %v3498, %v3552
  %v3554 = vand.u32 %v3553, 4294901760
  %v3555 = vsub.f32 %v3553, %v3554
  %v3556 = vand.u32 %v3555, 4294901760
  %3557 = vmatmul.f32.gmra.mxu0 %v3556
  %v3558 = vpop.f32.mrf.mxu0
  %v3559 = vadd.f32 %v3479, %v3558
  %3560 = vdwg.mxu0
  %3561 = vmatpush.xpose.msra.mxu0 0.0
  %3562 = vmatpush.xpose.msra.mxu0 0.0
  %3563 = vmatpush.xpose.msra.mxu0 0.0
  %3564 = vmatpush.xpose.msra.mxu0 0.0
  %3565 = vmatpush.xpose.msra.mxu0 0.0
  %3566 = vmatpush.xpose.msra.mxu0 0.0
  %3567 = vmatpush.xpose.msra.mxu0 0.0
  %3568 = vmatpush.xpose.msra.mxu0 0.0
  %3569 = vmatpush.xpose.msra.mxu0 0.0
  %3570 = vmatpush.xpose.msra.mxu0 0.0
  %3571 = vmatpush.xpose.msra.mxu0 0.0
  %3572 = vmatpush.xpose.msra.mxu0 0.0
  %v3573 = vand.u32 %v3506, 4294901760
  %v3574 = vsub.f32 %v3506, %v3573
  %v3575 = vand.u32 %v3574, 4294901760
  %v3576 = vsub.f32 %v3574, %v3575
  %v3577 = vand.u32 %v3576, 4294901760
  %3578 = vmatpush.xpose.msra.mxu0 %v3577
  %v3579 = vand.u32 %v3504, 4294901760
  %v3580 = vsub.f32 %v3504, %v3579
  %v3581 = vand.u32 %v3580, 4294901760
  %v3582 = vsub.f32 %v3580, %v3581
  %v3583 = vand.u32 %v3582, 4294901760
  %3584 = vmatpush.xpose.msra.mxu0 %v3583
  %v3585 = vand.u32 %v3502, 4294901760
  %v3586 = vsub.f32 %v3502, %v3585
  %v3587 = vand.u32 %v3586, 4294901760
  %v3588 = vsub.f32 %v3586, %v3587
  %v3589 = vand.u32 %v3588, 4294901760
  %3590 = vmatpush.xpose.msra.mxu0 %v3589
  %v3591 = vand.u32 %v3500, 4294901760
  %v3592 = vsub.f32 %v3500, %v3591
  %v3593 = vand.u32 %v3592, 4294901760
  %v3594 = vsub.f32 %v3592, %v3593
  %v3595 = vand.u32 %v3594, 4294901760
  %3596 = vmatpush.xpose.msra.mxu0 %v3595
  %v3597 = vand.u32 %v3492, 4294901760
  %3598 = vmatmul.f32.gmra.mxu0 %v3597
  %v3599 = vpop.f32.mrf.mxu0
  %v3600 = vadd.f32 %v3535, %v3599
  %v3601 = vand.u32 %v3494, 4294901760
  %3602 = vmatmul.f32.gmra.mxu0 %v3601
  %v3603 = vpop.f32.mrf.mxu0
  %v3604 = vadd.f32 %v3543, %v3603
  %v3605 = vand.u32 %v3496, 4294901760
  %3606 = vmatmul.f32.gmra.mxu0 %v3605
  %v3607 = vpop.f32.mrf.mxu0
  %v3608 = vadd.f32 %v3551, %v3607
  %v3609 = vand.u32 %v3498, 4294901760
  %3610 = vmatmul.f32.gmra.mxu0 %v3609
  %v3611 = vpop.f32.mrf.mxu0
  %v3612 = vadd.f32 %v3559, %v3611
  %3613 = vdwg.mxu0
  %3614 = vmatpush.xpose.msra.mxu0 0.0
  %3615 = vmatpush.xpose.msra.mxu0 0.0
  %3616 = vmatpush.xpose.msra.mxu0 0.0
  %3617 = vmatpush.xpose.msra.mxu0 0.0
  %3618 = vmatpush.xpose.msra.mxu0 0.0
  %3619 = vmatpush.xpose.msra.mxu0 0.0
  %3620 = vmatpush.xpose.msra.mxu0 0.0
  %3621 = vmatpush.xpose.msra.mxu0 0.0
  %3622 = vmatpush.xpose.msra.mxu0 0.0
  %3623 = vmatpush.xpose.msra.mxu0 0.0
  %3624 = vmatpush.xpose.msra.mxu0 0.0
  %3625 = vmatpush.xpose.msra.mxu0 0.0
  %v3626 = vand.u32 %v3506, 4294901760
  %v3627 = vsub.f32 %v3506, %v3626
  %3628 = vmatpush.xpose.msra.mxu0 %v3627
  %v3629 = vand.u32 %v3504, 4294901760
  %v3630 = vsub.f32 %v3504, %v3629
  %3631 = vmatpush.xpose.msra.mxu0 %v3630
  %v3632 = vand.u32 %v3502, 4294901760
  %v3633 = vsub.f32 %v3502, %v3632
  %3634 = vmatpush.xpose.msra.mxu0 %v3633
  %v3635 = vand.u32 %v3500, 4294901760
  %v3636 = vsub.f32 %v3500, %v3635
  %3637 = vmatpush.xpose.msra.mxu0 %v3636
  %v3638 = vand.u32 %v3492, 4294901760
  %v3639 = vsub.f32 %v3492, %v3638
  %3640 = vmatmul.f32.gmra.mxu0 %v3639
  %v3641 = vpop.f32.mrf.mxu0
  %v3642 = vadd.f32 %v3600, %v3641
  %v3643 = vand.u32 %v3494, 4294901760
  %v3644 = vsub.f32 %v3494, %v3643
  %3645 = vmatmul.f32.gmra.mxu0 %v3644
  %v3646 = vpop.f32.mrf.mxu0
  %v3647 = vadd.f32 %v3604, %v3646
  %v3648 = vand.u32 %v3496, 4294901760
  %v3649 = vsub.f32 %v3496, %v3648
  %3650 = vmatmul.f32.gmra.mxu0 %v3649
  %v3651 = vpop.f32.mrf.mxu0
  %v3652 = vadd.f32 %v3608, %v3651
  %v3653 = vand.u32 %v3498, 4294901760
  %v3654 = vsub.f32 %v3498, %v3653
  %3655 = vmatmul.f32.gmra.mxu0 %v3654
  %v3656 = vpop.f32.mrf.mxu0
  %v3657 = vadd.f32 %v3612, %v3656
  %3658 = vdwg.mxu0
  %3659 = vmatpush.xpose.msra.mxu0 0.0
  %3660 = vmatpush.xpose.msra.mxu0 0.0
  %3661 = vmatpush.xpose.msra.mxu0 0.0
  %3662 = vmatpush.xpose.msra.mxu0 0.0
  %3663 = vmatpush.xpose.msra.mxu0 0.0
  %3664 = vmatpush.xpose.msra.mxu0 0.0
  %3665 = vmatpush.xpose.msra.mxu0 0.0
  %3666 = vmatpush.xpose.msra.mxu0 0.0
  %3667 = vmatpush.xpose.msra.mxu0 0.0
  %3668 = vmatpush.xpose.msra.mxu0 0.0
  %3669 = vmatpush.xpose.msra.mxu0 0.0
  %3670 = vmatpush.xpose.msra.mxu0 0.0
  %v3671 = vand.u32 %v3506, 4294901760
  %3672 = vmatpush.xpose.msra.mxu0 %v3671
  %v3673 = vand.u32 %v3504, 4294901760
  %3674 = vmatpush.xpose.msra.mxu0 %v3673
  %v3675 = vand.u32 %v3502, 4294901760
  %3676 = vmatpush.xpose.msra.mxu0 %v3675
  %v3677 = vand.u32 %v3500, 4294901760
  %3678 = vmatpush.xpose.msra.mxu0 %v3677
  %v3679 = vand.u32 %v3492, 4294901760
  %v3680 = vsub.f32 %v3492, %v3679
  %v3681 = vand.u32 %v3680, 4294901760
  %3682 = vmatmul.f32.gmra.mxu0 %v3681
  %v3683 = vpop.f32.mrf.mxu0
  %v3684 = vadd.f32 %v3642, %v3683
  %v3685 = vand.u32 %v3494, 4294901760
  %v3686 = vsub.f32 %v3494, %v3685
  %v3687 = vand.u32 %v3686, 4294901760
  %3688 = vmatmul.f32.gmra.mxu0 %v3687
  %v3689 = vpop.f32.mrf.mxu0
  %v3690 = vadd.f32 %v3647, %v3689
  %v3691 = vand.u32 %v3496, 4294901760
  %v3692 = vsub.f32 %v3496, %v3691
  %v3693 = vand.u32 %v3692, 4294901760
  %3694 = vmatmul.f32.gmra.mxu0 %v3693
  %v3695 = vpop.f32.mrf.mxu0
  %v3696 = vadd.f32 %v3652, %v3695
  %v3697 = vand.u32 %v3498, 4294901760
  %v3698 = vsub.f32 %v3498, %v3697
  %v3699 = vand.u32 %v3698, 4294901760
  %3700 = vmatmul.f32.gmra.mxu0 %v3699
  %v3701 = vpop.f32.mrf.mxu0
  %v3702 = vadd.f32 %v3657, %v3701
  %3703 = vdwg.mxu0
  %3704 = vmatpush.xpose.msra.mxu0 0.0
  %3705 = vmatpush.xpose.msra.mxu0 0.0
  %3706 = vmatpush.xpose.msra.mxu0 0.0
  %3707 = vmatpush.xpose.msra.mxu0 0.0
  %3708 = vmatpush.xpose.msra.mxu0 0.0
  %3709 = vmatpush.xpose.msra.mxu0 0.0
  %3710 = vmatpush.xpose.msra.mxu0 0.0
  %3711 = vmatpush.xpose.msra.mxu0 0.0
  %3712 = vmatpush.xpose.msra.mxu0 0.0
  %3713 = vmatpush.xpose.msra.mxu0 0.0
  %3714 = vmatpush.xpose.msra.mxu0 0.0
  %3715 = vmatpush.xpose.msra.mxu0 0.0
  %v3716 = vand.u32 %v3506, 4294901760
  %v3717 = vsub.f32 %v3506, %v3716
  %v3718 = vand.u32 %v3717, 4294901760
  %3719 = vmatpush.xpose.msra.mxu0 %v3718
  %v3720 = vand.u32 %v3504, 4294901760
  %v3721 = vsub.f32 %v3504, %v3720
  %v3722 = vand.u32 %v3721, 4294901760
  %3723 = vmatpush.xpose.msra.mxu0 %v3722
  %v3724 = vand.u32 %v3502, 4294901760
  %v3725 = vsub.f32 %v3502, %v3724
  %v3726 = vand.u32 %v3725, 4294901760
  %3727 = vmatpush.xpose.msra.mxu0 %v3726
  %v3728 = vand.u32 %v3500, 4294901760
  %v3729 = vsub.f32 %v3500, %v3728
  %v3730 = vand.u32 %v3729, 4294901760
  %3731 = vmatpush.xpose.msra.mxu0 %v3730
  %v3732 = vand.u32 %v3492, 4294901760
  %3733 = vmatmul.f32.gmra.mxu0 %v3732
  %v3734 = vpop.f32.mrf.mxu0
  %v3735 = vadd.f32 %v3684, %v3734
  %v3736 = vand.u32 %v3494, 4294901760
  %3737 = vmatmul.f32.gmra.mxu0 %v3736
  %v3738 = vpop.f32.mrf.mxu0
  %v3739 = vadd.f32 %v3690, %v3738
  %v3740 = vand.u32 %v3496, 4294901760
  %3741 = vmatmul.f32.gmra.mxu0 %v3740
  %v3742 = vpop.f32.mrf.mxu0
  %v3743 = vadd.f32 %v3696, %v3742
  %v3744 = vand.u32 %v3498, 4294901760
  %3745 = vmatmul.f32.gmra.mxu0 %v3744
  %v3746 = vpop.f32.mrf.mxu0
  %v3747 = vadd.f32 %v3702, %v3746
  %3748 = vdwg.mxu0
  %3749 = vmatpush.xpose.msra.mxu0 0.0
  %3750 = vmatpush.xpose.msra.mxu0 0.0
  %3751 = vmatpush.xpose.msra.mxu0 0.0
  %3752 = vmatpush.xpose.msra.mxu0 0.0
  %3753 = vmatpush.xpose.msra.mxu0 0.0
  %3754 = vmatpush.xpose.msra.mxu0 0.0
  %3755 = vmatpush.xpose.msra.mxu0 0.0
  %3756 = vmatpush.xpose.msra.mxu0 0.0
  %3757 = vmatpush.xpose.msra.mxu0 0.0
  %3758 = vmatpush.xpose.msra.mxu0 0.0
  %3759 = vmatpush.xpose.msra.mxu0 0.0
  %3760 = vmatpush.xpose.msra.mxu0 0.0
  %v3761 = vand.u32 %v3506, 4294901760
  %3762 = vmatpush.xpose.msra.mxu0 %v3761
  %v3763 = vand.u32 %v3504, 4294901760
  %3764 = vmatpush.xpose.msra.mxu0 %v3763
  %v3765 = vand.u32 %v3502, 4294901760
  %3766 = vmatpush.xpose.msra.mxu0 %v3765
  %v3767 = vand.u32 %v3500, 4294901760
  %3768 = vmatpush.xpose.msra.mxu0 %v3767
  %v3769 = vand.u32 %v3492, 4294901760
  %3770 = vmatmul.f32.gmra.mxu0 %v3769
  %v3771 = vpop.f32.mrf.mxu0
  %v3772 = vadd.f32 %v3735, %v3771
  %v3773 = vand.u32 %v3494, 4294901760
  %3774 = vmatmul.f32.gmra.mxu0 %v3773
  %v3775 = vpop.f32.mrf.mxu0
  %v3776 = vadd.f32 %v3739, %v3775
  %v3777 = vand.u32 %v3496, 4294901760
  %3778 = vmatmul.f32.gmra.mxu0 %v3777
  %v3779 = vpop.f32.mrf.mxu0
  %v3780 = vadd.f32 %v3743, %v3779
  %v3781 = vand.u32 %v3498, 4294901760
  %3782 = vmatmul.f32.gmra.mxu0 %v3781
  %v3783 = vpop.f32.mrf.mxu0
  %v3784 = vadd.f32 %v3747, %v3783
  %3785 = vdwg.mxu0
  %v3786 = vsel %vm488, %v3772, -inf
  %3787 = vmax.xlane.f32.xlu0 %v3786
  %v3788 = vpop.xlane.xlu0 %3787
  %v3789 = vsel %vm488, %v3776, -inf
  %3790 = vmax.xlane.f32.xlu0 %v3789
  %v3791 = vpop.xlane.xlu0 %3790
  %v3792 = vsel %vm488, %v3780, -inf
  %3793 = vmax.xlane.f32.xlu0 %v3792
  %v3794 = vpop.xlane.xlu0 %3793
  %v3795 = vsel %vm488, %v3784, -inf
  %3796 = vmax.xlane.f32.xlu0 %v3795
  %v3797 = vpop.xlane.xlu0 %3796
  %v3798 = vsub.f32 %v3772, %v3788
  %v3799 = vsub.f32 %v3776, %v3791
  %v3800 = vsub.f32 %v3780, %v3794
  %v3801 = vsub.f32 %v3784, %v3797
  %v3802 = vmul.f32 %v3798, 1.442695
  %v3803 = vpow.pop %v3802
  %v3804 = vmul.f32 %v3799, 1.442695
  %v3805 = vpow.pop %v3804
  %v3806 = vmul.f32 %v3800, 1.442695
  %v3807 = vpow.pop %v3806
  %v3808 = vmul.f32 %v3801, 1.442695
  %v3809 = vpow.pop %v3808
  %v3810 = vsel %vm488, %v3803, 0.0
  %3811 = vadd.xlane.f32.xlu0 %v3810
  %v3812 = vpop.xlane.xlu0 %3811
  %v3813 = vsel %vm488, %v3805, 0.0
  %3814 = vadd.xlane.f32.xlu0 %v3813
  %v3815 = vpop.xlane.xlu0 %3814
  %v3816 = vsel %vm488, %v3807, 0.0
  %3817 = vadd.xlane.f32.xlu0 %v3816
  %v3818 = vpop.xlane.xlu0 %3817
  %v3819 = vsel %vm488, %v3809, 0.0
  %3820 = vadd.xlane.f32.xlu0 %v3819
  %v3821 = vpop.xlane.xlu0 %3820
  %v3822 = vrcp.pop %v3812
  %v3823 = vrcp.pop %v3815
  %v3824 = vrcp.pop %v3818
  %v3825 = vrcp.pop %v3821
  %v3826 = vmul.f32 %v3803, %v3822
  %v3827 = vmul.f32 %v3805, %v3823
  %v3828 = vmul.f32 %v3807, %v3824
  %v3829 = vmul.f32 %v3809, %v3825
  %3830 = vrot.lane.b32.xlu0 %v3472, 96
  %v3831 = vpop.permute.xlu0 %3830
  %3832 = vrot.lane.b32.xlu0 %v3473, 96
  %v3833 = vpop.permute.xlu0 %3832
  %3834 = vrot.lane.b32.xlu0 %v3474, 96
  %v3835 = vpop.permute.xlu0 %3834
  %3836 = vrot.lane.b32.xlu0 %v3475, 96
  %v3837 = vpop.permute.xlu0 %3836
  %v3843 = vsel %vm488, %v3826, 0
  %v3846 = vsel %vm488, %v3827, 0
  %v3849 = vsel %vm488, %v3828, 0
  %v3852 = vsel %vm488, %v3829, 0
  %3854 = vmatpush.msra.mxu0 0.0
  %3855 = vmatpush.msra.mxu0 0.0
  %3856 = vmatpush.msra.mxu0 0.0
  %3857 = vmatpush.msra.mxu0 0.0
  %3858 = vmatpush.msra.mxu0 0.0
  %3859 = vmatpush.msra.mxu0 0.0
  %3860 = vmatpush.msra.mxu0 0.0
  %3861 = vmatpush.msra.mxu0 0.0
  %3862 = vmatpush.msra.mxu0 0.0
  %3863 = vmatpush.msra.mxu0 0.0
  %3864 = vmatpush.msra.mxu0 0.0
  %3865 = vmatpush.msra.mxu0 0.0
  %v3866 = vand.u32 %v3837, 4294901760
  %3867 = vmatpush.msra.mxu0 %v3866
  %v3868 = vand.u32 %v3835, 4294901760
  %3869 = vmatpush.msra.mxu0 %v3868
  %v3870 = vand.u32 %v3833, 4294901760
  %3871 = vmatpush.msra.mxu0 %v3870
  %v3872 = vand.u32 %v3831, 4294901760
  %3873 = vmatpush.msra.mxu0 %v3872
  %v3874 = vand.u32 %v3843, 4294901760
  %v3875 = vsub.f32 %v3843, %v3874
  %v3876 = vand.u32 %v3875, 4294901760
  %v3877 = vsub.f32 %v3875, %v3876
  %v3878 = vand.u32 %v3877, 4294901760
  %3879 = vmatmul.f32.gmra.mxu0 %v3878
  %v3880 = vpop.f32.mrf.mxu0
  %v3881 = vadd.f32 0.0, %v3880
  %v3882 = vand.u32 %v3846, 4294901760
  %v3883 = vsub.f32 %v3846, %v3882
  %v3884 = vand.u32 %v3883, 4294901760
  %v3885 = vsub.f32 %v3883, %v3884
  %v3886 = vand.u32 %v3885, 4294901760
  %3887 = vmatmul.f32.gmra.mxu0 %v3886
  %v3888 = vpop.f32.mrf.mxu0
  %v3889 = vadd.f32 0.0, %v3888
  %v3890 = vand.u32 %v3849, 4294901760
  %v3891 = vsub.f32 %v3849, %v3890
  %v3892 = vand.u32 %v3891, 4294901760
  %v3893 = vsub.f32 %v3891, %v3892
  %v3894 = vand.u32 %v3893, 4294901760
  %3895 = vmatmul.f32.gmra.mxu0 %v3894
  %v3896 = vpop.f32.mrf.mxu0
  %v3897 = vadd.f32 0.0, %v3896
  %v3898 = vand.u32 %v3852, 4294901760
  %v3899 = vsub.f32 %v3852, %v3898
  %v3900 = vand.u32 %v3899, 4294901760
  %v3901 = vsub.f32 %v3899, %v3900
  %v3902 = vand.u32 %v3901, 4294901760
  %3903 = vmatmul.f32.gmra.mxu0 %v3902
  %v3904 = vpop.f32.mrf.mxu0
  %v3905 = vadd.f32 0.0, %v3904
  %3906 = vdwg.mxu0
  %3907 = vmatpush.msra.mxu0 0.0
  %3908 = vmatpush.msra.mxu0 0.0
  %3909 = vmatpush.msra.mxu0 0.0
  %3910 = vmatpush.msra.mxu0 0.0
  %3911 = vmatpush.msra.mxu0 0.0
  %3912 = vmatpush.msra.mxu0 0.0
  %3913 = vmatpush.msra.mxu0 0.0
  %3914 = vmatpush.msra.mxu0 0.0
  %3915 = vmatpush.msra.mxu0 0.0
  %3916 = vmatpush.msra.mxu0 0.0
  %3917 = vmatpush.msra.mxu0 0.0
  %3918 = vmatpush.msra.mxu0 0.0
  %v3919 = vand.u32 %v3837, 4294901760
  %v3920 = vsub.f32 %v3837, %v3919
  %v3921 = vand.u32 %v3920, 4294901760
  %v3922 = vsub.f32 %v3920, %v3921
  %v3923 = vand.u32 %v3922, 4294901760
  %3924 = vmatpush.msra.mxu0 %v3923
  %v3925 = vand.u32 %v3835, 4294901760
  %v3926 = vsub.f32 %v3835, %v3925
  %v3927 = vand.u32 %v3926, 4294901760
  %v3928 = vsub.f32 %v3926, %v3927
  %v3929 = vand.u32 %v3928, 4294901760
  %3930 = vmatpush.msra.mxu0 %v3929
  %v3931 = vand.u32 %v3833, 4294901760
  %v3932 = vsub.f32 %v3833, %v3931
  %v3933 = vand.u32 %v3932, 4294901760
  %v3934 = vsub.f32 %v3932, %v3933
  %v3935 = vand.u32 %v3934, 4294901760
  %3936 = vmatpush.msra.mxu0 %v3935
  %v3937 = vand.u32 %v3831, 4294901760
  %v3938 = vsub.f32 %v3831, %v3937
  %v3939 = vand.u32 %v3938, 4294901760
  %v3940 = vsub.f32 %v3938, %v3939
  %v3941 = vand.u32 %v3940, 4294901760
  %3942 = vmatpush.msra.mxu0 %v3941
  %v3943 = vand.u32 %v3843, 4294901760
  %3944 = vmatmul.f32.gmra.mxu0 %v3943
  %v3945 = vpop.f32.mrf.mxu0
  %v3946 = vadd.f32 %v3881, %v3945
  %v3947 = vand.u32 %v3846, 4294901760
  %3948 = vmatmul.f32.gmra.mxu0 %v3947
  %v3949 = vpop.f32.mrf.mxu0
  %v3950 = vadd.f32 %v3889, %v3949
  %v3951 = vand.u32 %v3849, 4294901760
  %3952 = vmatmul.f32.gmra.mxu0 %v3951
  %v3953 = vpop.f32.mrf.mxu0
  %v3954 = vadd.f32 %v3897, %v3953
  %v3955 = vand.u32 %v3852, 4294901760
  %3956 = vmatmul.f32.gmra.mxu0 %v3955
  %v3957 = vpop.f32.mrf.mxu0
  %v3958 = vadd.f32 %v3905, %v3957
  %3959 = vdwg.mxu0
  %3960 = vmatpush.msra.mxu0 0.0
  %3961 = vmatpush.msra.mxu0 0.0
  %3962 = vmatpush.msra.mxu0 0.0
  %3963 = vmatpush.msra.mxu0 0.0
  %3964 = vmatpush.msra.mxu0 0.0
  %3965 = vmatpush.msra.mxu0 0.0
  %3966 = vmatpush.msra.mxu0 0.0
  %3967 = vmatpush.msra.mxu0 0.0
  %3968 = vmatpush.msra.mxu0 0.0
  %3969 = vmatpush.msra.mxu0 0.0
  %3970 = vmatpush.msra.mxu0 0.0
  %3971 = vmatpush.msra.mxu0 0.0
  %v3972 = vand.u32 %v3837, 4294901760
  %v3973 = vsub.f32 %v3837, %v3972
  %3974 = vmatpush.msra.mxu0 %v3973
  %v3975 = vand.u32 %v3835, 4294901760
  %v3976 = vsub.f32 %v3835, %v3975
  %3977 = vmatpush.msra.mxu0 %v3976
  %v3978 = vand.u32 %v3833, 4294901760
  %v3979 = vsub.f32 %v3833, %v3978
  %3980 = vmatpush.msra.mxu0 %v3979
  %v3981 = vand.u32 %v3831, 4294901760
  %v3982 = vsub.f32 %v3831, %v3981
  %3983 = vmatpush.msra.mxu0 %v3982
  %v3984 = vand.u32 %v3843, 4294901760
  %v3985 = vsub.f32 %v3843, %v3984
  %3986 = vmatmul.f32.gmra.mxu0 %v3985
  %v3987 = vpop.f32.mrf.mxu0
  %v3988 = vadd.f32 %v3946, %v3987
  %v3989 = vand.u32 %v3846, 4294901760
  %v3990 = vsub.f32 %v3846, %v3989
  %3991 = vmatmul.f32.gmra.mxu0 %v3990
  %v3992 = vpop.f32.mrf.mxu0
  %v3993 = vadd.f32 %v3950, %v3992
  %v3994 = vand.u32 %v3849, 4294901760
  %v3995 = vsub.f32 %v3849, %v3994
  %3996 = vmatmul.f32.gmra.mxu0 %v3995
  %v3997 = vpop.f32.mrf.mxu0
  %v3998 = vadd.f32 %v3954, %v3997
  %v3999 = vand.u32 %v3852, 4294901760
  %v4000 = vsub.f32 %v3852, %v3999
  %4001 = vmatmul.f32.gmra.mxu0 %v4000
  %v4002 = vpop.f32.mrf.mxu0
  %v4003 = vadd.f32 %v3958, %v4002
  %4004 = vdwg.mxu0
  %4005 = vmatpush.msra.mxu0 0.0
  %4006 = vmatpush.msra.mxu0 0.0
  %4007 = vmatpush.msra.mxu0 0.0
  %4008 = vmatpush.msra.mxu0 0.0
  %4009 = vmatpush.msra.mxu0 0.0
  %4010 = vmatpush.msra.mxu0 0.0
  %4011 = vmatpush.msra.mxu0 0.0
  %4012 = vmatpush.msra.mxu0 0.0
  %4013 = vmatpush.msra.mxu0 0.0
  %4014 = vmatpush.msra.mxu0 0.0
  %4015 = vmatpush.msra.mxu0 0.0
  %4016 = vmatpush.msra.mxu0 0.0
  %v4017 = vand.u32 %v3837, 4294901760
  %4018 = vmatpush.msra.mxu0 %v4017
  %v4019 = vand.u32 %v3835, 4294901760
  %4020 = vmatpush.msra.mxu0 %v4019
  %v4021 = vand.u32 %v3833, 4294901760
  %4022 = vmatpush.msra.mxu0 %v4021
  %v4023 = vand.u32 %v3831, 4294901760
  %4024 = vmatpush.msra.mxu0 %v4023
  %v4025 = vand.u32 %v3843, 4294901760
  %v4026 = vsub.f32 %v3843, %v4025
  %v4027 = vand.u32 %v4026, 4294901760
  %4028 = vmatmul.f32.gmra.mxu0 %v4027
  %v4029 = vpop.f32.mrf.mxu0
  %v4030 = vadd.f32 %v3988, %v4029
  %v4031 = vand.u32 %v3846, 4294901760
  %v4032 = vsub.f32 %v3846, %v4031
  %v4033 = vand.u32 %v4032, 4294901760
  %4034 = vmatmul.f32.gmra.mxu0 %v4033
  %v4035 = vpop.f32.mrf.mxu0
  %v4036 = vadd.f32 %v3993, %v4035
  %v4037 = vand.u32 %v3849, 4294901760
  %v4038 = vsub.f32 %v3849, %v4037
  %v4039 = vand.u32 %v4038, 4294901760
  %4040 = vmatmul.f32.gmra.mxu0 %v4039
  %v4041 = vpop.f32.mrf.mxu0
  %v4042 = vadd.f32 %v3998, %v4041
  %v4043 = vand.u32 %v3852, 4294901760
  %v4044 = vsub.f32 %v3852, %v4043
  %v4045 = vand.u32 %v4044, 4294901760
  %4046 = vmatmul.f32.gmra.mxu0 %v4045
  %v4047 = vpop.f32.mrf.mxu0
  %v4048 = vadd.f32 %v4003, %v4047
  %4049 = vdwg.mxu0
  %4050 = vmatpush.msra.mxu0 0.0
  %4051 = vmatpush.msra.mxu0 0.0
  %4052 = vmatpush.msra.mxu0 0.0
  %4053 = vmatpush.msra.mxu0 0.0
  %4054 = vmatpush.msra.mxu0 0.0
  %4055 = vmatpush.msra.mxu0 0.0
  %4056 = vmatpush.msra.mxu0 0.0
  %4057 = vmatpush.msra.mxu0 0.0
  %4058 = vmatpush.msra.mxu0 0.0
  %4059 = vmatpush.msra.mxu0 0.0
  %4060 = vmatpush.msra.mxu0 0.0
  %4061 = vmatpush.msra.mxu0 0.0
  %v4062 = vand.u32 %v3837, 4294901760
  %v4063 = vsub.f32 %v3837, %v4062
  %v4064 = vand.u32 %v4063, 4294901760
  %4065 = vmatpush.msra.mxu0 %v4064
  %v4066 = vand.u32 %v3835, 4294901760
  %v4067 = vsub.f32 %v3835, %v4066
  %v4068 = vand.u32 %v4067, 4294901760
  %4069 = vmatpush.msra.mxu0 %v4068
  %v4070 = vand.u32 %v3833, 4294901760
  %v4071 = vsub.f32 %v3833, %v4070
  %v4072 = vand.u32 %v4071, 4294901760
  %4073 = vmatpush.msra.mxu0 %v4072
  %v4074 = vand.u32 %v3831, 4294901760
  %v4075 = vsub.f32 %v3831, %v4074
  %v4076 = vand.u32 %v4075, 4294901760
  %4077 = vmatpush.msra.mxu0 %v4076
  %v4078 = vand.u32 %v3843, 4294901760
  %4079 = vmatmul.f32.gmra.mxu0 %v4078
  %v4080 = vpop.f32.mrf.mxu0
  %v4081 = vadd.f32 %v4030, %v4080
  %v4082 = vand.u32 %v3846, 4294901760
  %4083 = vmatmul.f32.gmra.mxu0 %v4082
  %v4084 = vpop.f32.mrf.mxu0
  %v4085 = vadd.f32 %v4036, %v4084
  %v4086 = vand.u32 %v3849, 4294901760
  %4087 = vmatmul.f32.gmra.mxu0 %v4086
  %v4088 = vpop.f32.mrf.mxu0
  %v4089 = vadd.f32 %v4042, %v4088
  %v4090 = vand.u32 %v3852, 4294901760
  %4091 = vmatmul.f32.gmra.mxu0 %v4090
  %v4092 = vpop.f32.mrf.mxu0
  %v4093 = vadd.f32 %v4048, %v4092
  %4094 = vdwg.mxu0
  %4095 = vmatpush.msra.mxu0 0.0
  %4096 = vmatpush.msra.mxu0 0.0
  %4097 = vmatpush.msra.mxu0 0.0
  %4098 = vmatpush.msra.mxu0 0.0
  %4099 = vmatpush.msra.mxu0 0.0
  %4100 = vmatpush.msra.mxu0 0.0
  %4101 = vmatpush.msra.mxu0 0.0
  %4102 = vmatpush.msra.mxu0 0.0
  %4103 = vmatpush.msra.mxu0 0.0
  %4104 = vmatpush.msra.mxu0 0.0
  %4105 = vmatpush.msra.mxu0 0.0
  %4106 = vmatpush.msra.mxu0 0.0
  %v4107 = vand.u32 %v3837, 4294901760
  %4108 = vmatpush.msra.mxu0 %v4107
  %v4109 = vand.u32 %v3835, 4294901760
  %4110 = vmatpush.msra.mxu0 %v4109
  %v4111 = vand.u32 %v3833, 4294901760
  %4112 = vmatpush.msra.mxu0 %v4111
  %v4113 = vand.u32 %v3831, 4294901760
  %4114 = vmatpush.msra.mxu0 %v4113
  %v4115 = vand.u32 %v3843, 4294901760
  %4116 = vmatmul.f32.gmra.mxu0 %v4115
  %v4117 = vpop.f32.mrf.mxu0
  %v4118 = vadd.f32 %v4081, %v4117
  %v4119 = vand.u32 %v3846, 4294901760
  %4120 = vmatmul.f32.gmra.mxu0 %v4119
  %v4121 = vpop.f32.mrf.mxu0
  %v4122 = vadd.f32 %v4085, %v4121
  %v4123 = vand.u32 %v3849, 4294901760
  %4124 = vmatmul.f32.gmra.mxu0 %v4123
  %v4125 = vpop.f32.mrf.mxu0
  %v4126 = vadd.f32 %v4089, %v4125
  %v4127 = vand.u32 %v3852, 4294901760
  %4128 = vmatmul.f32.gmra.mxu0 %v4127
  %v4129 = vpop.f32.mrf.mxu0
  %v4130 = vadd.f32 %v4093, %v4129
  %4131 = vdwg.mxu0
  %4132 = vrot.lane.b32.xlu0 %v3472, 120
  %v4133 = vpop.permute.xlu0 %4132
  %4134 = vrot.lane.b32.xlu0 %v3473, 120
  %v4135 = vpop.permute.xlu0 %4134
  %4136 = vrot.lane.b32.xlu0 %v3474, 120
  %v4137 = vpop.permute.xlu0 %4136
  %4138 = vrot.lane.b32.xlu0 %v3475, 120
  %v4139 = vpop.permute.xlu0 %4138
  %4140 = vrot.lane.b32.xlu0 %v3472, 104
  %v4141 = vpop.permute.xlu0 %4140
  %4142 = vrot.lane.b32.xlu0 %v3473, 104
  %v4143 = vpop.permute.xlu0 %4142
  %4144 = vrot.lane.b32.xlu0 %v3474, 104
  %v4145 = vpop.permute.xlu0 %4144
  %4146 = vrot.lane.b32.xlu0 %v3475, 104
  %v4147 = vpop.permute.xlu0 %4146
  %4152 = vrot.lane.b32.xlu0 %v3476, 96
  %v4153 = vpop.permute.xlu0 %4152
  %4154 = vrot.lane.b32.xlu0 %v3477, 96
  %v4155 = vpop.permute.xlu0 %4154
  %4156 = vrot.lane.b32.xlu0 %v3478, 96
  %v4157 = vpop.permute.xlu0 %4156
  %4158 = vrot.lane.b32.xlu0 %v3479, 96
  %v4159 = vpop.permute.xlu0 %4158
  %v4164 = vsel %vm807, %v4133, 0
  %v4166 = vsel %vm807, %v4135, 0
  %v4168 = vsel %vm807, %v4137, 0
  %v4170 = vsel %vm807, %v4139, 0
  %v4172 = vsel %vm807, %v4141, 0
  %v4174 = vsel %vm807, %v4143, 0
  %v4176 = vsel %vm807, %v4145, 0
  %v4178 = vsel %vm807, %v4147, 0
  %4180 = vmatpush.xpose.msra.mxu0 0.0
  %4181 = vmatpush.xpose.msra.mxu0 0.0
  %4182 = vmatpush.xpose.msra.mxu0 0.0
  %4183 = vmatpush.xpose.msra.mxu0 0.0
  %4184 = vmatpush.xpose.msra.mxu0 0.0
  %4185 = vmatpush.xpose.msra.mxu0 0.0
  %4186 = vmatpush.xpose.msra.mxu0 0.0
  %4187 = vmatpush.xpose.msra.mxu0 0.0
  %4188 = vmatpush.xpose.msra.mxu0 0.0
  %4189 = vmatpush.xpose.msra.mxu0 0.0
  %4190 = vmatpush.xpose.msra.mxu0 0.0
  %4191 = vmatpush.xpose.msra.mxu0 0.0
  %v4192 = vand.u32 %v4178, 4294901760
  %4193 = vmatpush.xpose.msra.mxu0 %v4192
  %v4194 = vand.u32 %v4176, 4294901760
  %4195 = vmatpush.xpose.msra.mxu0 %v4194
  %v4196 = vand.u32 %v4174, 4294901760
  %4197 = vmatpush.xpose.msra.mxu0 %v4196
  %v4198 = vand.u32 %v4172, 4294901760
  %4199 = vmatpush.xpose.msra.mxu0 %v4198
  %v4200 = vand.u32 %v4164, 4294901760
  %v4201 = vsub.f32 %v4164, %v4200
  %v4202 = vand.u32 %v4201, 4294901760
  %v4203 = vsub.f32 %v4201, %v4202
  %v4204 = vand.u32 %v4203, 4294901760
  %4205 = vmatmul.f32.gmra.mxu0 %v4204
  %v4206 = vpop.f32.mrf.mxu0
  %v4207 = vadd.f32 %v4153, %v4206
  %v4208 = vand.u32 %v4166, 4294901760
  %v4209 = vsub.f32 %v4166, %v4208
  %v4210 = vand.u32 %v4209, 4294901760
  %v4211 = vsub.f32 %v4209, %v4210
  %v4212 = vand.u32 %v4211, 4294901760
  %4213 = vmatmul.f32.gmra.mxu0 %v4212
  %v4214 = vpop.f32.mrf.mxu0
  %v4215 = vadd.f32 %v4155, %v4214
  %v4216 = vand.u32 %v4168, 4294901760
  %v4217 = vsub.f32 %v4168, %v4216
  %v4218 = vand.u32 %v4217, 4294901760
  %v4219 = vsub.f32 %v4217, %v4218
  %v4220 = vand.u32 %v4219, 4294901760
  %4221 = vmatmul.f32.gmra.mxu0 %v4220
  %v4222 = vpop.f32.mrf.mxu0
  %v4223 = vadd.f32 %v4157, %v4222
  %v4224 = vand.u32 %v4170, 4294901760
  %v4225 = vsub.f32 %v4170, %v4224
  %v4226 = vand.u32 %v4225, 4294901760
  %v4227 = vsub.f32 %v4225, %v4226
  %v4228 = vand.u32 %v4227, 4294901760
  %4229 = vmatmul.f32.gmra.mxu0 %v4228
  %v4230 = vpop.f32.mrf.mxu0
  %v4231 = vadd.f32 %v4159, %v4230
  %4232 = vdwg.mxu0
  %4233 = vmatpush.xpose.msra.mxu0 0.0
  %4234 = vmatpush.xpose.msra.mxu0 0.0
  %4235 = vmatpush.xpose.msra.mxu0 0.0
  %4236 = vmatpush.xpose.msra.mxu0 0.0
  %4237 = vmatpush.xpose.msra.mxu0 0.0
  %4238 = vmatpush.xpose.msra.mxu0 0.0
  %4239 = vmatpush.xpose.msra.mxu0 0.0
  %4240 = vmatpush.xpose.msra.mxu0 0.0
  %4241 = vmatpush.xpose.msra.mxu0 0.0
  %4242 = vmatpush.xpose.msra.mxu0 0.0
  %4243 = vmatpush.xpose.msra.mxu0 0.0
  %4244 = vmatpush.xpose.msra.mxu0 0.0
  %v4245 = vand.u32 %v4178, 4294901760
  %v4246 = vsub.f32 %v4178, %v4245
  %v4247 = vand.u32 %v4246, 4294901760
  %v4248 = vsub.f32 %v4246, %v4247
  %v4249 = vand.u32 %v4248, 4294901760
  %4250 = vmatpush.xpose.msra.mxu0 %v4249
  %v4251 = vand.u32 %v4176, 4294901760
  %v4252 = vsub.f32 %v4176, %v4251
  %v4253 = vand.u32 %v4252, 4294901760
  %v4254 = vsub.f32 %v4252, %v4253
  %v4255 = vand.u32 %v4254, 4294901760
  %4256 = vmatpush.xpose.msra.mxu0 %v4255
  %v4257 = vand.u32 %v4174, 4294901760
  %v4258 = vsub.f32 %v4174, %v4257
  %v4259 = vand.u32 %v4258, 4294901760
  %v4260 = vsub.f32 %v4258, %v4259
  %v4261 = vand.u32 %v4260, 4294901760
  %4262 = vmatpush.xpose.msra.mxu0 %v4261
  %v4263 = vand.u32 %v4172, 4294901760
  %v4264 = vsub.f32 %v4172, %v4263
  %v4265 = vand.u32 %v4264, 4294901760
  %v4266 = vsub.f32 %v4264, %v4265
  %v4267 = vand.u32 %v4266, 4294901760
  %4268 = vmatpush.xpose.msra.mxu0 %v4267
  %v4269 = vand.u32 %v4164, 4294901760
  %4270 = vmatmul.f32.gmra.mxu0 %v4269
  %v4271 = vpop.f32.mrf.mxu0
  %v4272 = vadd.f32 %v4207, %v4271
  %v4273 = vand.u32 %v4166, 4294901760
  %4274 = vmatmul.f32.gmra.mxu0 %v4273
  %v4275 = vpop.f32.mrf.mxu0
  %v4276 = vadd.f32 %v4215, %v4275
  %v4277 = vand.u32 %v4168, 4294901760
  %4278 = vmatmul.f32.gmra.mxu0 %v4277
  %v4279 = vpop.f32.mrf.mxu0
  %v4280 = vadd.f32 %v4223, %v4279
  %v4281 = vand.u32 %v4170, 4294901760
  %4282 = vmatmul.f32.gmra.mxu0 %v4281
  %v4283 = vpop.f32.mrf.mxu0
  %v4284 = vadd.f32 %v4231, %v4283
  %4285 = vdwg.mxu0
  %4286 = vmatpush.xpose.msra.mxu0 0.0
  %4287 = vmatpush.xpose.msra.mxu0 0.0
  %4288 = vmatpush.xpose.msra.mxu0 0.0
  %4289 = vmatpush.xpose.msra.mxu0 0.0
  %4290 = vmatpush.xpose.msra.mxu0 0.0
  %4291 = vmatpush.xpose.msra.mxu0 0.0
  %4292 = vmatpush.xpose.msra.mxu0 0.0
  %4293 = vmatpush.xpose.msra.mxu0 0.0
  %4294 = vmatpush.xpose.msra.mxu0 0.0
  %4295 = vmatpush.xpose.msra.mxu0 0.0
  %4296 = vmatpush.xpose.msra.mxu0 0.0
  %4297 = vmatpush.xpose.msra.mxu0 0.0
  %v4298 = vand.u32 %v4178, 4294901760
  %v4299 = vsub.f32 %v4178, %v4298
  %4300 = vmatpush.xpose.msra.mxu0 %v4299
  %v4301 = vand.u32 %v4176, 4294901760
  %v4302 = vsub.f32 %v4176, %v4301
  %4303 = vmatpush.xpose.msra.mxu0 %v4302
  %v4304 = vand.u32 %v4174, 4294901760
  %v4305 = vsub.f32 %v4174, %v4304
  %4306 = vmatpush.xpose.msra.mxu0 %v4305
  %v4307 = vand.u32 %v4172, 4294901760
  %v4308 = vsub.f32 %v4172, %v4307
  %4309 = vmatpush.xpose.msra.mxu0 %v4308
  %v4310 = vand.u32 %v4164, 4294901760
  %v4311 = vsub.f32 %v4164, %v4310
  %4312 = vmatmul.f32.gmra.mxu0 %v4311
  %v4313 = vpop.f32.mrf.mxu0
  %v4314 = vadd.f32 %v4272, %v4313
  %v4315 = vand.u32 %v4166, 4294901760
  %v4316 = vsub.f32 %v4166, %v4315
  %4317 = vmatmul.f32.gmra.mxu0 %v4316
  %v4318 = vpop.f32.mrf.mxu0
  %v4319 = vadd.f32 %v4276, %v4318
  %v4320 = vand.u32 %v4168, 4294901760
  %v4321 = vsub.f32 %v4168, %v4320
  %4322 = vmatmul.f32.gmra.mxu0 %v4321
  %v4323 = vpop.f32.mrf.mxu0
  %v4324 = vadd.f32 %v4280, %v4323
  %v4325 = vand.u32 %v4170, 4294901760
  %v4326 = vsub.f32 %v4170, %v4325
  %4327 = vmatmul.f32.gmra.mxu0 %v4326
  %v4328 = vpop.f32.mrf.mxu0
  %v4329 = vadd.f32 %v4284, %v4328
  %4330 = vdwg.mxu0
  %4331 = vmatpush.xpose.msra.mxu0 0.0
  %4332 = vmatpush.xpose.msra.mxu0 0.0
  %4333 = vmatpush.xpose.msra.mxu0 0.0
  %4334 = vmatpush.xpose.msra.mxu0 0.0
  %4335 = vmatpush.xpose.msra.mxu0 0.0
  %4336 = vmatpush.xpose.msra.mxu0 0.0
  %4337 = vmatpush.xpose.msra.mxu0 0.0
  %4338 = vmatpush.xpose.msra.mxu0 0.0
  %4339 = vmatpush.xpose.msra.mxu0 0.0
  %4340 = vmatpush.xpose.msra.mxu0 0.0
  %4341 = vmatpush.xpose.msra.mxu0 0.0
  %4342 = vmatpush.xpose.msra.mxu0 0.0
  %v4343 = vand.u32 %v4178, 4294901760
  %4344 = vmatpush.xpose.msra.mxu0 %v4343
  %v4345 = vand.u32 %v4176, 4294901760
  %4346 = vmatpush.xpose.msra.mxu0 %v4345
  %v4347 = vand.u32 %v4174, 4294901760
  %4348 = vmatpush.xpose.msra.mxu0 %v4347
  %v4349 = vand.u32 %v4172, 4294901760
  %4350 = vmatpush.xpose.msra.mxu0 %v4349
  %v4351 = vand.u32 %v4164, 4294901760
  %v4352 = vsub.f32 %v4164, %v4351
  %v4353 = vand.u32 %v4352, 4294901760
  %4354 = vmatmul.f32.gmra.mxu0 %v4353
  %v4355 = vpop.f32.mrf.mxu0
  %v4356 = vadd.f32 %v4314, %v4355
  %v4357 = vand.u32 %v4166, 4294901760
  %v4358 = vsub.f32 %v4166, %v4357
  %v4359 = vand.u32 %v4358, 4294901760
  %4360 = vmatmul.f32.gmra.mxu0 %v4359
  %v4361 = vpop.f32.mrf.mxu0
  %v4362 = vadd.f32 %v4319, %v4361
  %v4363 = vand.u32 %v4168, 4294901760
  %v4364 = vsub.f32 %v4168, %v4363
  %v4365 = vand.u32 %v4364, 4294901760
  %4366 = vmatmul.f32.gmra.mxu0 %v4365
  %v4367 = vpop.f32.mrf.mxu0
  %v4368 = vadd.f32 %v4324, %v4367
  %v4369 = vand.u32 %v4170, 4294901760
  %v4370 = vsub.f32 %v4170, %v4369
  %v4371 = vand.u32 %v4370, 4294901760
  %4372 = vmatmul.f32.gmra.mxu0 %v4371
  %v4373 = vpop.f32.mrf.mxu0
  %v4374 = vadd.f32 %v4329, %v4373
  %4375 = vdwg.mxu0
  %4376 = vmatpush.xpose.msra.mxu0 0.0
  %4377 = vmatpush.xpose.msra.mxu0 0.0
  %4378 = vmatpush.xpose.msra.mxu0 0.0
  %4379 = vmatpush.xpose.msra.mxu0 0.0
  %4380 = vmatpush.xpose.msra.mxu0 0.0
  %4381 = vmatpush.xpose.msra.mxu0 0.0
  %4382 = vmatpush.xpose.msra.mxu0 0.0
  %4383 = vmatpush.xpose.msra.mxu0 0.0
  %4384 = vmatpush.xpose.msra.mxu0 0.0
  %4385 = vmatpush.xpose.msra.mxu0 0.0
  %4386 = vmatpush.xpose.msra.mxu0 0.0
  %4387 = vmatpush.xpose.msra.mxu0 0.0
  %v4388 = vand.u32 %v4178, 4294901760
  %v4389 = vsub.f32 %v4178, %v4388
  %v4390 = vand.u32 %v4389, 4294901760
  %4391 = vmatpush.xpose.msra.mxu0 %v4390
  %v4392 = vand.u32 %v4176, 4294901760
  %v4393 = vsub.f32 %v4176, %v4392
  %v4394 = vand.u32 %v4393, 4294901760
  %4395 = vmatpush.xpose.msra.mxu0 %v4394
  %v4396 = vand.u32 %v4174, 4294901760
  %v4397 = vsub.f32 %v4174, %v4396
  %v4398 = vand.u32 %v4397, 4294901760
  %4399 = vmatpush.xpose.msra.mxu0 %v4398
  %v4400 = vand.u32 %v4172, 4294901760
  %v4401 = vsub.f32 %v4172, %v4400
  %v4402 = vand.u32 %v4401, 4294901760
  %4403 = vmatpush.xpose.msra.mxu0 %v4402
  %v4404 = vand.u32 %v4164, 4294901760
  %4405 = vmatmul.f32.gmra.mxu0 %v4404
  %v4406 = vpop.f32.mrf.mxu0
  %v4407 = vadd.f32 %v4356, %v4406
  %v4408 = vand.u32 %v4166, 4294901760
  %4409 = vmatmul.f32.gmra.mxu0 %v4408
  %v4410 = vpop.f32.mrf.mxu0
  %v4411 = vadd.f32 %v4362, %v4410
  %v4412 = vand.u32 %v4168, 4294901760
  %4413 = vmatmul.f32.gmra.mxu0 %v4412
  %v4414 = vpop.f32.mrf.mxu0
  %v4415 = vadd.f32 %v4368, %v4414
  %v4416 = vand.u32 %v4170, 4294901760
  %4417 = vmatmul.f32.gmra.mxu0 %v4416
  %v4418 = vpop.f32.mrf.mxu0
  %v4419 = vadd.f32 %v4374, %v4418
  %4420 = vdwg.mxu0
  %4421 = vmatpush.xpose.msra.mxu0 0.0
  %4422 = vmatpush.xpose.msra.mxu0 0.0
  %4423 = vmatpush.xpose.msra.mxu0 0.0
  %4424 = vmatpush.xpose.msra.mxu0 0.0
  %4425 = vmatpush.xpose.msra.mxu0 0.0
  %4426 = vmatpush.xpose.msra.mxu0 0.0
  %4427 = vmatpush.xpose.msra.mxu0 0.0
  %4428 = vmatpush.xpose.msra.mxu0 0.0
  %4429 = vmatpush.xpose.msra.mxu0 0.0
  %4430 = vmatpush.xpose.msra.mxu0 0.0
  %4431 = vmatpush.xpose.msra.mxu0 0.0
  %4432 = vmatpush.xpose.msra.mxu0 0.0
  %v4433 = vand.u32 %v4178, 4294901760
  %4434 = vmatpush.xpose.msra.mxu0 %v4433
  %v4435 = vand.u32 %v4176, 4294901760
  %4436 = vmatpush.xpose.msra.mxu0 %v4435
  %v4437 = vand.u32 %v4174, 4294901760
  %4438 = vmatpush.xpose.msra.mxu0 %v4437
  %v4439 = vand.u32 %v4172, 4294901760
  %4440 = vmatpush.xpose.msra.mxu0 %v4439
  %v4441 = vand.u32 %v4164, 4294901760
  %4442 = vmatmul.f32.gmra.mxu0 %v4441
  %v4443 = vpop.f32.mrf.mxu0
  %v4444 = vadd.f32 %v4407, %v4443
  %v4445 = vand.u32 %v4166, 4294901760
  %4446 = vmatmul.f32.gmra.mxu0 %v4445
  %v4447 = vpop.f32.mrf.mxu0
  %v4448 = vadd.f32 %v4411, %v4447
  %v4449 = vand.u32 %v4168, 4294901760
  %4450 = vmatmul.f32.gmra.mxu0 %v4449
  %v4451 = vpop.f32.mrf.mxu0
  %v4452 = vadd.f32 %v4415, %v4451
  %v4453 = vand.u32 %v4170, 4294901760
  %4454 = vmatmul.f32.gmra.mxu0 %v4453
  %v4455 = vpop.f32.mrf.mxu0
  %v4456 = vadd.f32 %v4419, %v4455
  %4457 = vdwg.mxu0
  %v4458 = vsel %vm488, %v4444, -inf
  %4459 = vmax.xlane.f32.xlu0 %v4458
  %v4460 = vpop.xlane.xlu0 %4459
  %v4461 = vsel %vm488, %v4448, -inf
  %4462 = vmax.xlane.f32.xlu0 %v4461
  %v4463 = vpop.xlane.xlu0 %4462
  %v4464 = vsel %vm488, %v4452, -inf
  %4465 = vmax.xlane.f32.xlu0 %v4464
  %v4466 = vpop.xlane.xlu0 %4465
  %v4467 = vsel %vm488, %v4456, -inf
  %4468 = vmax.xlane.f32.xlu0 %v4467
  %v4469 = vpop.xlane.xlu0 %4468
  %v4470 = vsub.f32 %v4444, %v4460
  %v4471 = vsub.f32 %v4448, %v4463
  %v4472 = vsub.f32 %v4452, %v4466
  %v4473 = vsub.f32 %v4456, %v4469
  %v4474 = vmul.f32 %v4470, 1.442695
  %v4475 = vpow.pop %v4474
  %v4476 = vmul.f32 %v4471, 1.442695
  %v4477 = vpow.pop %v4476
  %v4478 = vmul.f32 %v4472, 1.442695
  %v4479 = vpow.pop %v4478
  %v4480 = vmul.f32 %v4473, 1.442695
  %v4481 = vpow.pop %v4480
  %v4482 = vsel %vm488, %v4475, 0.0
  %4483 = vadd.xlane.f32.xlu0 %v4482
  %v4484 = vpop.xlane.xlu0 %4483
  %v4485 = vsel %vm488, %v4477, 0.0
  %4486 = vadd.xlane.f32.xlu0 %v4485
  %v4487 = vpop.xlane.xlu0 %4486
  %v4488 = vsel %vm488, %v4479, 0.0
  %4489 = vadd.xlane.f32.xlu0 %v4488
  %v4490 = vpop.xlane.xlu0 %4489
  %v4491 = vsel %vm488, %v4481, 0.0
  %4492 = vadd.xlane.f32.xlu0 %v4491
  %v4493 = vpop.xlane.xlu0 %4492
  %v4494 = vrcp.pop %v4484
  %v4495 = vrcp.pop %v4487
  %v4496 = vrcp.pop %v4490
  %v4497 = vrcp.pop %v4493
  %v4498 = vmul.f32 %v4475, %v4494
  %v4499 = vmul.f32 %v4477, %v4495
  %v4500 = vmul.f32 %v4479, %v4496
  %v4501 = vmul.f32 %v4481, %v4497
  %4502 = vrot.lane.b32.xlu0 %v3472, 80
  %v4503 = vpop.permute.xlu0 %4502
  %4504 = vrot.lane.b32.xlu0 %v3473, 80
  %v4505 = vpop.permute.xlu0 %4504
  %4506 = vrot.lane.b32.xlu0 %v3474, 80
  %v4507 = vpop.permute.xlu0 %4506
  %4508 = vrot.lane.b32.xlu0 %v3475, 80
  %v4509 = vpop.permute.xlu0 %4508
  %v4515 = vsel %vm488, %v4498, 0
  %v4518 = vsel %vm488, %v4499, 0
  %v4521 = vsel %vm488, %v4500, 0
  %v4524 = vsel %vm488, %v4501, 0
  %4526 = vmatpush.msra.mxu0 0.0
  %4527 = vmatpush.msra.mxu0 0.0
  %4528 = vmatpush.msra.mxu0 0.0
  %4529 = vmatpush.msra.mxu0 0.0
  %4530 = vmatpush.msra.mxu0 0.0
  %4531 = vmatpush.msra.mxu0 0.0
  %4532 = vmatpush.msra.mxu0 0.0
  %4533 = vmatpush.msra.mxu0 0.0
  %4534 = vmatpush.msra.mxu0 0.0
  %4535 = vmatpush.msra.mxu0 0.0
  %4536 = vmatpush.msra.mxu0 0.0
  %4537 = vmatpush.msra.mxu0 0.0
  %v4538 = vand.u32 %v4509, 4294901760
  %4539 = vmatpush.msra.mxu0 %v4538
  %v4540 = vand.u32 %v4507, 4294901760
  %4541 = vmatpush.msra.mxu0 %v4540
  %v4542 = vand.u32 %v4505, 4294901760
  %4543 = vmatpush.msra.mxu0 %v4542
  %v4544 = vand.u32 %v4503, 4294901760
  %4545 = vmatpush.msra.mxu0 %v4544
  %v4546 = vand.u32 %v4515, 4294901760
  %v4547 = vsub.f32 %v4515, %v4546
  %v4548 = vand.u32 %v4547, 4294901760
  %v4549 = vsub.f32 %v4547, %v4548
  %v4550 = vand.u32 %v4549, 4294901760
  %4551 = vmatmul.f32.gmra.mxu0 %v4550
  %v4552 = vpop.f32.mrf.mxu0
  %v4553 = vadd.f32 0.0, %v4552
  %v4554 = vand.u32 %v4518, 4294901760
  %v4555 = vsub.f32 %v4518, %v4554
  %v4556 = vand.u32 %v4555, 4294901760
  %v4557 = vsub.f32 %v4555, %v4556
  %v4558 = vand.u32 %v4557, 4294901760
  %4559 = vmatmul.f32.gmra.mxu0 %v4558
  %v4560 = vpop.f32.mrf.mxu0
  %v4561 = vadd.f32 0.0, %v4560
  %v4562 = vand.u32 %v4521, 4294901760
  %v4563 = vsub.f32 %v4521, %v4562
  %v4564 = vand.u32 %v4563, 4294901760
  %v4565 = vsub.f32 %v4563, %v4564
  %v4566 = vand.u32 %v4565, 4294901760
  %4567 = vmatmul.f32.gmra.mxu0 %v4566
  %v4568 = vpop.f32.mrf.mxu0
  %v4569 = vadd.f32 0.0, %v4568
  %v4570 = vand.u32 %v4524, 4294901760
  %v4571 = vsub.f32 %v4524, %v4570
  %v4572 = vand.u32 %v4571, 4294901760
  %v4573 = vsub.f32 %v4571, %v4572
  %v4574 = vand.u32 %v4573, 4294901760
  %4575 = vmatmul.f32.gmra.mxu0 %v4574
  %v4576 = vpop.f32.mrf.mxu0
  %v4577 = vadd.f32 0.0, %v4576
  %4578 = vdwg.mxu0
  %4579 = vmatpush.msra.mxu0 0.0
  %4580 = vmatpush.msra.mxu0 0.0
  %4581 = vmatpush.msra.mxu0 0.0
  %4582 = vmatpush.msra.mxu0 0.0
  %4583 = vmatpush.msra.mxu0 0.0
  %4584 = vmatpush.msra.mxu0 0.0
  %4585 = vmatpush.msra.mxu0 0.0
  %4586 = vmatpush.msra.mxu0 0.0
  %4587 = vmatpush.msra.mxu0 0.0
  %4588 = vmatpush.msra.mxu0 0.0
  %4589 = vmatpush.msra.mxu0 0.0
  %4590 = vmatpush.msra.mxu0 0.0
  %v4591 = vand.u32 %v4509, 4294901760
  %v4592 = vsub.f32 %v4509, %v4591
  %v4593 = vand.u32 %v4592, 4294901760
  %v4594 = vsub.f32 %v4592, %v4593
  %v4595 = vand.u32 %v4594, 4294901760
  %4596 = vmatpush.msra.mxu0 %v4595
  %v4597 = vand.u32 %v4507, 4294901760
  %v4598 = vsub.f32 %v4507, %v4597
  %v4599 = vand.u32 %v4598, 4294901760
  %v4600 = vsub.f32 %v4598, %v4599
  %v4601 = vand.u32 %v4600, 4294901760
  %4602 = vmatpush.msra.mxu0 %v4601
  %v4603 = vand.u32 %v4505, 4294901760
  %v4604 = vsub.f32 %v4505, %v4603
  %v4605 = vand.u32 %v4604, 4294901760
  %v4606 = vsub.f32 %v4604, %v4605
  %v4607 = vand.u32 %v4606, 4294901760
  %4608 = vmatpush.msra.mxu0 %v4607
  %v4609 = vand.u32 %v4503, 4294901760
  %v4610 = vsub.f32 %v4503, %v4609
  %v4611 = vand.u32 %v4610, 4294901760
  %v4612 = vsub.f32 %v4610, %v4611
  %v4613 = vand.u32 %v4612, 4294901760
  %4614 = vmatpush.msra.mxu0 %v4613
  %v4615 = vand.u32 %v4515, 4294901760
  %4616 = vmatmul.f32.gmra.mxu0 %v4615
  %v4617 = vpop.f32.mrf.mxu0
  %v4618 = vadd.f32 %v4553, %v4617
  %v4619 = vand.u32 %v4518, 4294901760
  %4620 = vmatmul.f32.gmra.mxu0 %v4619
  %v4621 = vpop.f32.mrf.mxu0
  %v4622 = vadd.f32 %v4561, %v4621
  %v4623 = vand.u32 %v4521, 4294901760
  %4624 = vmatmul.f32.gmra.mxu0 %v4623
  %v4625 = vpop.f32.mrf.mxu0
  %v4626 = vadd.f32 %v4569, %v4625
  %v4627 = vand.u32 %v4524, 4294901760
  %4628 = vmatmul.f32.gmra.mxu0 %v4627
  %v4629 = vpop.f32.mrf.mxu0
  %v4630 = vadd.f32 %v4577, %v4629
  %4631 = vdwg.mxu0
  %4632 = vmatpush.msra.mxu0 0.0
  %4633 = vmatpush.msra.mxu0 0.0
  %4634 = vmatpush.msra.mxu0 0.0
  %4635 = vmatpush.msra.mxu0 0.0
  %4636 = vmatpush.msra.mxu0 0.0
  %4637 = vmatpush.msra.mxu0 0.0
  %4638 = vmatpush.msra.mxu0 0.0
  %4639 = vmatpush.msra.mxu0 0.0
  %4640 = vmatpush.msra.mxu0 0.0
  %4641 = vmatpush.msra.mxu0 0.0
  %4642 = vmatpush.msra.mxu0 0.0
  %4643 = vmatpush.msra.mxu0 0.0
  %v4644 = vand.u32 %v4509, 4294901760
  %v4645 = vsub.f32 %v4509, %v4644
  %4646 = vmatpush.msra.mxu0 %v4645
  %v4647 = vand.u32 %v4507, 4294901760
  %v4648 = vsub.f32 %v4507, %v4647
  %4649 = vmatpush.msra.mxu0 %v4648
  %v4650 = vand.u32 %v4505, 4294901760
  %v4651 = vsub.f32 %v4505, %v4650
  %4652 = vmatpush.msra.mxu0 %v4651
  %v4653 = vand.u32 %v4503, 4294901760
  %v4654 = vsub.f32 %v4503, %v4653
  %4655 = vmatpush.msra.mxu0 %v4654
  %v4656 = vand.u32 %v4515, 4294901760
  %v4657 = vsub.f32 %v4515, %v4656
  %4658 = vmatmul.f32.gmra.mxu0 %v4657
  %v4659 = vpop.f32.mrf.mxu0
  %v4660 = vadd.f32 %v4618, %v4659
  %v4661 = vand.u32 %v4518, 4294901760
  %v4662 = vsub.f32 %v4518, %v4661
  %4663 = vmatmul.f32.gmra.mxu0 %v4662
  %v4664 = vpop.f32.mrf.mxu0
  %v4665 = vadd.f32 %v4622, %v4664
  %v4666 = vand.u32 %v4521, 4294901760
  %v4667 = vsub.f32 %v4521, %v4666
  %4668 = vmatmul.f32.gmra.mxu0 %v4667
  %v4669 = vpop.f32.mrf.mxu0
  %v4670 = vadd.f32 %v4626, %v4669
  %v4671 = vand.u32 %v4524, 4294901760
  %v4672 = vsub.f32 %v4524, %v4671
  %4673 = vmatmul.f32.gmra.mxu0 %v4672
  %v4674 = vpop.f32.mrf.mxu0
  %v4675 = vadd.f32 %v4630, %v4674
  %4676 = vdwg.mxu0
  %4677 = vmatpush.msra.mxu0 0.0
  %4678 = vmatpush.msra.mxu0 0.0
  %4679 = vmatpush.msra.mxu0 0.0
  %4680 = vmatpush.msra.mxu0 0.0
  %4681 = vmatpush.msra.mxu0 0.0
  %4682 = vmatpush.msra.mxu0 0.0
  %4683 = vmatpush.msra.mxu0 0.0
  %4684 = vmatpush.msra.mxu0 0.0
  %4685 = vmatpush.msra.mxu0 0.0
  %4686 = vmatpush.msra.mxu0 0.0
  %4687 = vmatpush.msra.mxu0 0.0
  %4688 = vmatpush.msra.mxu0 0.0
  %v4689 = vand.u32 %v4509, 4294901760
  %4690 = vmatpush.msra.mxu0 %v4689
  %v4691 = vand.u32 %v4507, 4294901760
  %4692 = vmatpush.msra.mxu0 %v4691
  %v4693 = vand.u32 %v4505, 4294901760
  %4694 = vmatpush.msra.mxu0 %v4693
  %v4695 = vand.u32 %v4503, 4294901760
  %4696 = vmatpush.msra.mxu0 %v4695
  %v4697 = vand.u32 %v4515, 4294901760
  %v4698 = vsub.f32 %v4515, %v4697
  %v4699 = vand.u32 %v4698, 4294901760
  %4700 = vmatmul.f32.gmra.mxu0 %v4699
  %v4701 = vpop.f32.mrf.mxu0
  %v4702 = vadd.f32 %v4660, %v4701
  %v4703 = vand.u32 %v4518, 4294901760
  %v4704 = vsub.f32 %v4518, %v4703
  %v4705 = vand.u32 %v4704, 4294901760
  %4706 = vmatmul.f32.gmra.mxu0 %v4705
  %v4707 = vpop.f32.mrf.mxu0
  %v4708 = vadd.f32 %v4665, %v4707
  %v4709 = vand.u32 %v4521, 4294901760
  %v4710 = vsub.f32 %v4521, %v4709
  %v4711 = vand.u32 %v4710, 4294901760
  %4712 = vmatmul.f32.gmra.mxu0 %v4711
  %v4713 = vpop.f32.mrf.mxu0
  %v4714 = vadd.f32 %v4670, %v4713
  %v4715 = vand.u32 %v4524, 4294901760
  %v4716 = vsub.f32 %v4524, %v4715
  %v4717 = vand.u32 %v4716, 4294901760
  %4718 = vmatmul.f32.gmra.mxu0 %v4717
  %v4719 = vpop.f32.mrf.mxu0
  %v4720 = vadd.f32 %v4675, %v4719
  %4721 = vdwg.mxu0
  %4722 = vmatpush.msra.mxu0 0.0
  %4723 = vmatpush.msra.mxu0 0.0
  %4724 = vmatpush.msra.mxu0 0.0
  %4725 = vmatpush.msra.mxu0 0.0
  %4726 = vmatpush.msra.mxu0 0.0
  %4727 = vmatpush.msra.mxu0 0.0
  %4728 = vmatpush.msra.mxu0 0.0
  %4729 = vmatpush.msra.mxu0 0.0
  %4730 = vmatpush.msra.mxu0 0.0
  %4731 = vmatpush.msra.mxu0 0.0
  %4732 = vmatpush.msra.mxu0 0.0
  %4733 = vmatpush.msra.mxu0 0.0
  %v4734 = vand.u32 %v4509, 4294901760
  %v4735 = vsub.f32 %v4509, %v4734
  %v4736 = vand.u32 %v4735, 4294901760
  %4737 = vmatpush.msra.mxu0 %v4736
  %v4738 = vand.u32 %v4507, 4294901760
  %v4739 = vsub.f32 %v4507, %v4738
  %v4740 = vand.u32 %v4739, 4294901760
  %4741 = vmatpush.msra.mxu0 %v4740
  %v4742 = vand.u32 %v4505, 4294901760
  %v4743 = vsub.f32 %v4505, %v4742
  %v4744 = vand.u32 %v4743, 4294901760
  %4745 = vmatpush.msra.mxu0 %v4744
  %v4746 = vand.u32 %v4503, 4294901760
  %v4747 = vsub.f32 %v4503, %v4746
  %v4748 = vand.u32 %v4747, 4294901760
  %4749 = vmatpush.msra.mxu0 %v4748
  %v4750 = vand.u32 %v4515, 4294901760
  %4751 = vmatmul.f32.gmra.mxu0 %v4750
  %v4752 = vpop.f32.mrf.mxu0
  %v4753 = vadd.f32 %v4702, %v4752
  %v4754 = vand.u32 %v4518, 4294901760
  %4755 = vmatmul.f32.gmra.mxu0 %v4754
  %v4756 = vpop.f32.mrf.mxu0
  %v4757 = vadd.f32 %v4708, %v4756
  %v4758 = vand.u32 %v4521, 4294901760
  %4759 = vmatmul.f32.gmra.mxu0 %v4758
  %v4760 = vpop.f32.mrf.mxu0
  %v4761 = vadd.f32 %v4714, %v4760
  %v4762 = vand.u32 %v4524, 4294901760
  %4763 = vmatmul.f32.gmra.mxu0 %v4762
  %v4764 = vpop.f32.mrf.mxu0
  %v4765 = vadd.f32 %v4720, %v4764
  %4766 = vdwg.mxu0
  %4767 = vmatpush.msra.mxu0 0.0
  %4768 = vmatpush.msra.mxu0 0.0
  %4769 = vmatpush.msra.mxu0 0.0
  %4770 = vmatpush.msra.mxu0 0.0
  %4771 = vmatpush.msra.mxu0 0.0
  %4772 = vmatpush.msra.mxu0 0.0
  %4773 = vmatpush.msra.mxu0 0.0
  %4774 = vmatpush.msra.mxu0 0.0
  %4775 = vmatpush.msra.mxu0 0.0
  %4776 = vmatpush.msra.mxu0 0.0
  %4777 = vmatpush.msra.mxu0 0.0
  %4778 = vmatpush.msra.mxu0 0.0
  %v4779 = vand.u32 %v4509, 4294901760
  %4780 = vmatpush.msra.mxu0 %v4779
  %v4781 = vand.u32 %v4507, 4294901760
  %4782 = vmatpush.msra.mxu0 %v4781
  %v4783 = vand.u32 %v4505, 4294901760
  %4784 = vmatpush.msra.mxu0 %v4783
  %v4785 = vand.u32 %v4503, 4294901760
  %4786 = vmatpush.msra.mxu0 %v4785
  %v4787 = vand.u32 %v4515, 4294901760
  %4788 = vmatmul.f32.gmra.mxu0 %v4787
  %v4789 = vpop.f32.mrf.mxu0
  %v4790 = vadd.f32 %v4753, %v4789
  %v4791 = vand.u32 %v4518, 4294901760
  %4792 = vmatmul.f32.gmra.mxu0 %v4791
  %v4793 = vpop.f32.mrf.mxu0
  %v4794 = vadd.f32 %v4757, %v4793
  %v4795 = vand.u32 %v4521, 4294901760
  %4796 = vmatmul.f32.gmra.mxu0 %v4795
  %v4797 = vpop.f32.mrf.mxu0
  %v4798 = vadd.f32 %v4761, %v4797
  %v4799 = vand.u32 %v4524, 4294901760
  %4800 = vmatmul.f32.gmra.mxu0 %v4799
  %v4801 = vpop.f32.mrf.mxu0
  %v4802 = vadd.f32 %v4765, %v4801
  %4803 = vdwg.mxu0
  %4808 = vrot.lane.b32.xlu0 %v4790, 16
  %v4809 = vpop.permute.xlu0 %4808
  %4810 = vrot.lane.b32.xlu0 %v4794, 16
  %v4811 = vpop.permute.xlu0 %4810
  %4812 = vrot.lane.b32.xlu0 %v4798, 16
  %v4813 = vpop.permute.xlu0 %4812
  %4814 = vrot.lane.b32.xlu0 %v4802, 16
  %v4815 = vpop.permute.xlu0 %4814
  %v4820 = vsel %vm17, %v4118, %v4809
  %v4821 = vsel %vm17, %v4122, %v4811
  %v4822 = vsel %vm17, %v4126, %v4813
  %v4823 = vsel %vm17, %v4130, %v4815
  %v4824 = vadd.f32 %v4820, 3.0
  %v4825 = vadd.f32 %v4821, 3.0
  %v4826 = vadd.f32 %v4822, 3.0
  %v4827 = vadd.f32 %v4823, 3.0
  %v4828 = vmax.f32 %v4824, 0.0
  %v4829 = vmax.f32 %v4825, 0.0
  %v4830 = vmax.f32 %v4826, 0.0
  %v4831 = vmax.f32 %v4827, 0.0
  %v4832 = vmin.f32 %v4828, 6.0
  %v4833 = vmin.f32 %v4829, 6.0
  %v4834 = vmin.f32 %v4830, 6.0
  %v4835 = vmin.f32 %v4831, 6.0
  %v4836 = vmul.f32 %v4820, %v4832
  %v4837 = vmul.f32 %v4821, %v4833
  %v4838 = vmul.f32 %v4822, %v4834
  %v4839 = vmul.f32 %v4823, %v4835
  %v4840 = vmul.f32 %v4836, %v2162
  %v4841 = vmul.f32 %v4837, %v2162
  %v4842 = vmul.f32 %v4838, %v2162
  %v4843 = vmul.f32 %v4839, %v2162
  %v4844 = vld [vmem:[%s1 + $0x110] sm:$0xff]
  %v4845 = vld [vmem:[%s1 + $0x118] sm:$0xff]
  %v4846 = vld [vmem:[%s1 + $0x120] sm:$0xff]
  %v4847 = vld [vmem:[%s1 + $0x128] sm:$0xff]
  %v4849 = vsel %vm488, %v4840, 0
  %v4852 = vsel %vm488, %v4841, 0
  %v4855 = vsel %vm488, %v4842, 0
  %v4858 = vsel %vm488, %v4843, 0
  %4860 = vmatpush.msra.mxu0 0.0
  %4861 = vmatpush.msra.mxu0 0.0
  %4862 = vmatpush.msra.mxu0 0.0
  %4863 = vmatpush.msra.mxu0 0.0
  %4864 = vmatpush.msra.mxu0 0.0
  %4865 = vmatpush.msra.mxu0 0.0
  %4866 = vmatpush.msra.mxu0 0.0
  %4867 = vmatpush.msra.mxu0 0.0
  %4868 = vmatpush.msra.mxu0 0.0
  %4869 = vmatpush.msra.mxu0 0.0
  %4870 = vmatpush.msra.mxu0 0.0
  %4871 = vmatpush.msra.mxu0 0.0
  %v4872 = vand.u32 %v4847, 4294901760
  %4873 = vmatpush.msra.mxu0 %v4872
  %v4874 = vand.u32 %v4846, 4294901760
  %4875 = vmatpush.msra.mxu0 %v4874
  %v4876 = vand.u32 %v4845, 4294901760
  %4877 = vmatpush.msra.mxu0 %v4876
  %v4878 = vand.u32 %v4844, 4294901760
  %4879 = vmatpush.msra.mxu0 %v4878
  %v4880 = vand.u32 %v4849, 4294901760
  %v4881 = vsub.f32 %v4849, %v4880
  %v4882 = vand.u32 %v4881, 4294901760
  %v4883 = vsub.f32 %v4881, %v4882
  %v4884 = vand.u32 %v4883, 4294901760
  %4885 = vmatmul.f32.gmra.mxu0 %v4884
  %v4886 = vpop.f32.mrf.mxu0
  %v4887 = vadd.f32 0.0, %v4886
  %v4888 = vand.u32 %v4852, 4294901760
  %v4889 = vsub.f32 %v4852, %v4888
  %v4890 = vand.u32 %v4889, 4294901760
  %v4891 = vsub.f32 %v4889, %v4890
  %v4892 = vand.u32 %v4891, 4294901760
  %4893 = vmatmul.f32.gmra.mxu0 %v4892
  %v4894 = vpop.f32.mrf.mxu0
  %v4895 = vadd.f32 0.0, %v4894
  %v4896 = vand.u32 %v4855, 4294901760
  %v4897 = vsub.f32 %v4855, %v4896
  %v4898 = vand.u32 %v4897, 4294901760
  %v4899 = vsub.f32 %v4897, %v4898
  %v4900 = vand.u32 %v4899, 4294901760
  %4901 = vmatmul.f32.gmra.mxu0 %v4900
  %v4902 = vpop.f32.mrf.mxu0
  %v4903 = vadd.f32 0.0, %v4902
  %v4904 = vand.u32 %v4858, 4294901760
  %v4905 = vsub.f32 %v4858, %v4904
  %v4906 = vand.u32 %v4905, 4294901760
  %v4907 = vsub.f32 %v4905, %v4906
  %v4908 = vand.u32 %v4907, 4294901760
  %4909 = vmatmul.f32.gmra.mxu0 %v4908
  %v4910 = vpop.f32.mrf.mxu0
  %v4911 = vadd.f32 0.0, %v4910
  %4912 = vdwg.mxu0
  %4913 = vmatpush.msra.mxu0 0.0
  %4914 = vmatpush.msra.mxu0 0.0
  %4915 = vmatpush.msra.mxu0 0.0
  %4916 = vmatpush.msra.mxu0 0.0
  %4917 = vmatpush.msra.mxu0 0.0
  %4918 = vmatpush.msra.mxu0 0.0
  %4919 = vmatpush.msra.mxu0 0.0
  %4920 = vmatpush.msra.mxu0 0.0
  %4921 = vmatpush.msra.mxu0 0.0
  %4922 = vmatpush.msra.mxu0 0.0
  %4923 = vmatpush.msra.mxu0 0.0
  %4924 = vmatpush.msra.mxu0 0.0
  %v4925 = vand.u32 %v4847, 4294901760
  %v4926 = vsub.f32 %v4847, %v4925
  %v4927 = vand.u32 %v4926, 4294901760
  %v4928 = vsub.f32 %v4926, %v4927
  %v4929 = vand.u32 %v4928, 4294901760
  %4930 = vmatpush.msra.mxu0 %v4929
  %v4931 = vand.u32 %v4846, 4294901760
  %v4932 = vsub.f32 %v4846, %v4931
  %v4933 = vand.u32 %v4932, 4294901760
  %v4934 = vsub.f32 %v4932, %v4933
  %v4935 = vand.u32 %v4934, 4294901760
  %4936 = vmatpush.msra.mxu0 %v4935
  %v4937 = vand.u32 %v4845, 4294901760
  %v4938 = vsub.f32 %v4845, %v4937
  %v4939 = vand.u32 %v4938, 4294901760
  %v4940 = vsub.f32 %v4938, %v4939
  %v4941 = vand.u32 %v4940, 4294901760
  %4942 = vmatpush.msra.mxu0 %v4941
  %v4943 = vand.u32 %v4844, 4294901760
  %v4944 = vsub.f32 %v4844, %v4943
  %v4945 = vand.u32 %v4944, 4294901760
  %v4946 = vsub.f32 %v4944, %v4945
  %v4947 = vand.u32 %v4946, 4294901760
  %4948 = vmatpush.msra.mxu0 %v4947
  %v4949 = vand.u32 %v4849, 4294901760
  %4950 = vmatmul.f32.gmra.mxu0 %v4949
  %v4951 = vpop.f32.mrf.mxu0
  %v4952 = vadd.f32 %v4887, %v4951
  %v4953 = vand.u32 %v4852, 4294901760
  %4954 = vmatmul.f32.gmra.mxu0 %v4953
  %v4955 = vpop.f32.mrf.mxu0
  %v4956 = vadd.f32 %v4895, %v4955
  %v4957 = vand.u32 %v4855, 4294901760
  %4958 = vmatmul.f32.gmra.mxu0 %v4957
  %v4959 = vpop.f32.mrf.mxu0
  %v4960 = vadd.f32 %v4903, %v4959
  %v4961 = vand.u32 %v4858, 4294901760
  %4962 = vmatmul.f32.gmra.mxu0 %v4961
  %v4963 = vpop.f32.mrf.mxu0
  %v4964 = vadd.f32 %v4911, %v4963
  %4965 = vdwg.mxu0
  %4966 = vmatpush.msra.mxu0 0.0
  %4967 = vmatpush.msra.mxu0 0.0
  %4968 = vmatpush.msra.mxu0 0.0
  %4969 = vmatpush.msra.mxu0 0.0
  %4970 = vmatpush.msra.mxu0 0.0
  %4971 = vmatpush.msra.mxu0 0.0
  %4972 = vmatpush.msra.mxu0 0.0
  %4973 = vmatpush.msra.mxu0 0.0
  %4974 = vmatpush.msra.mxu0 0.0
  %4975 = vmatpush.msra.mxu0 0.0
  %4976 = vmatpush.msra.mxu0 0.0
  %4977 = vmatpush.msra.mxu0 0.0
  %v4978 = vand.u32 %v4847, 4294901760
  %v4979 = vsub.f32 %v4847, %v4978
  %4980 = vmatpush.msra.mxu0 %v4979
  %v4981 = vand.u32 %v4846, 4294901760
  %v4982 = vsub.f32 %v4846, %v4981
  %4983 = vmatpush.msra.mxu0 %v4982
  %v4984 = vand.u32 %v4845, 4294901760
  %v4985 = vsub.f32 %v4845, %v4984
  %4986 = vmatpush.msra.mxu0 %v4985
  %v4987 = vand.u32 %v4844, 4294901760
  %v4988 = vsub.f32 %v4844, %v4987
  %4989 = vmatpush.msra.mxu0 %v4988
  %v4990 = vand.u32 %v4849, 4294901760
  %v4991 = vsub.f32 %v4849, %v4990
  %4992 = vmatmul.f32.gmra.mxu0 %v4991
  %v4993 = vpop.f32.mrf.mxu0
  %v4994 = vadd.f32 %v4952, %v4993
  %v4995 = vand.u32 %v4852, 4294901760
  %v4996 = vsub.f32 %v4852, %v4995
  %4997 = vmatmul.f32.gmra.mxu0 %v4996
  %v4998 = vpop.f32.mrf.mxu0
  %v4999 = vadd.f32 %v4956, %v4998
  %v5000 = vand.u32 %v4855, 4294901760
  %v5001 = vsub.f32 %v4855, %v5000
  %5002 = vmatmul.f32.gmra.mxu0 %v5001
  %v5003 = vpop.f32.mrf.mxu0
  %v5004 = vadd.f32 %v4960, %v5003
  %v5005 = vand.u32 %v4858, 4294901760
  %v5006 = vsub.f32 %v4858, %v5005
  %5007 = vmatmul.f32.gmra.mxu0 %v5006
  %v5008 = vpop.f32.mrf.mxu0
  %v5009 = vadd.f32 %v4964, %v5008
  %5010 = vdwg.mxu0
  %5011 = vmatpush.msra.mxu0 0.0
  %5012 = vmatpush.msra.mxu0 0.0
  %5013 = vmatpush.msra.mxu0 0.0
  %5014 = vmatpush.msra.mxu0 0.0
  %5015 = vmatpush.msra.mxu0 0.0
  %5016 = vmatpush.msra.mxu0 0.0
  %5017 = vmatpush.msra.mxu0 0.0
  %5018 = vmatpush.msra.mxu0 0.0
  %5019 = vmatpush.msra.mxu0 0.0
  %5020 = vmatpush.msra.mxu0 0.0
  %5021 = vmatpush.msra.mxu0 0.0
  %5022 = vmatpush.msra.mxu0 0.0
  %v5023 = vand.u32 %v4847, 4294901760
  %5024 = vmatpush.msra.mxu0 %v5023
  %v5025 = vand.u32 %v4846, 4294901760
  %5026 = vmatpush.msra.mxu0 %v5025
  %v5027 = vand.u32 %v4845, 4294901760
  %5028 = vmatpush.msra.mxu0 %v5027
  %v5029 = vand.u32 %v4844, 4294901760
  %5030 = vmatpush.msra.mxu0 %v5029
  %v5031 = vand.u32 %v4849, 4294901760
  %v5032 = vsub.f32 %v4849, %v5031
  %v5033 = vand.u32 %v5032, 4294901760
  %5034 = vmatmul.f32.gmra.mxu0 %v5033
  %v5035 = vpop.f32.mrf.mxu0
  %v5036 = vadd.f32 %v4994, %v5035
  %v5037 = vand.u32 %v4852, 4294901760
  %v5038 = vsub.f32 %v4852, %v5037
  %v5039 = vand.u32 %v5038, 4294901760
  %5040 = vmatmul.f32.gmra.mxu0 %v5039
  %v5041 = vpop.f32.mrf.mxu0
  %v5042 = vadd.f32 %v4999, %v5041
  %v5043 = vand.u32 %v4855, 4294901760
  %v5044 = vsub.f32 %v4855, %v5043
  %v5045 = vand.u32 %v5044, 4294901760
  %5046 = vmatmul.f32.gmra.mxu0 %v5045
  %v5047 = vpop.f32.mrf.mxu0
  %v5048 = vadd.f32 %v5004, %v5047
  %v5049 = vand.u32 %v4858, 4294901760
  %v5050 = vsub.f32 %v4858, %v5049
  %v5051 = vand.u32 %v5050, 4294901760
  %5052 = vmatmul.f32.gmra.mxu0 %v5051
  %v5053 = vpop.f32.mrf.mxu0
  %v5054 = vadd.f32 %v5009, %v5053
  %5055 = vdwg.mxu0
  %5056 = vmatpush.msra.mxu0 0.0
  %5057 = vmatpush.msra.mxu0 0.0
  %5058 = vmatpush.msra.mxu0 0.0
  %5059 = vmatpush.msra.mxu0 0.0
  %5060 = vmatpush.msra.mxu0 0.0
  %5061 = vmatpush.msra.mxu0 0.0
  %5062 = vmatpush.msra.mxu0 0.0
  %5063 = vmatpush.msra.mxu0 0.0
  %5064 = vmatpush.msra.mxu0 0.0
  %5065 = vmatpush.msra.mxu0 0.0
  %5066 = vmatpush.msra.mxu0 0.0
  %5067 = vmatpush.msra.mxu0 0.0
  %v5068 = vand.u32 %v4847, 4294901760
  %v5069 = vsub.f32 %v4847, %v5068
  %v5070 = vand.u32 %v5069, 4294901760
  %5071 = vmatpush.msra.mxu0 %v5070
  %v5072 = vand.u32 %v4846, 4294901760
  %v5073 = vsub.f32 %v4846, %v5072
  %v5074 = vand.u32 %v5073, 4294901760
  %5075 = vmatpush.msra.mxu0 %v5074
  %v5076 = vand.u32 %v4845, 4294901760
  %v5077 = vsub.f32 %v4845, %v5076
  %v5078 = vand.u32 %v5077, 4294901760
  %5079 = vmatpush.msra.mxu0 %v5078
  %v5080 = vand.u32 %v4844, 4294901760
  %v5081 = vsub.f32 %v4844, %v5080
  %v5082 = vand.u32 %v5081, 4294901760
  %5083 = vmatpush.msra.mxu0 %v5082
  %v5084 = vand.u32 %v4849, 4294901760
  %5085 = vmatmul.f32.gmra.mxu0 %v5084
  %v5086 = vpop.f32.mrf.mxu0
  %v5087 = vadd.f32 %v5036, %v5086
  %v5088 = vand.u32 %v4852, 4294901760
  %5089 = vmatmul.f32.gmra.mxu0 %v5088
  %v5090 = vpop.f32.mrf.mxu0
  %v5091 = vadd.f32 %v5042, %v5090
  %v5092 = vand.u32 %v4855, 4294901760
  %5093 = vmatmul.f32.gmra.mxu0 %v5092
  %v5094 = vpop.f32.mrf.mxu0
  %v5095 = vadd.f32 %v5048, %v5094
  %v5096 = vand.u32 %v4858, 4294901760
  %5097 = vmatmul.f32.gmra.mxu0 %v5096
  %v5098 = vpop.f32.mrf.mxu0
  %v5099 = vadd.f32 %v5054, %v5098
  %5100 = vdwg.mxu0
  %5101 = vmatpush.msra.mxu0 0.0
  %5102 = vmatpush.msra.mxu0 0.0
  %5103 = vmatpush.msra.mxu0 0.0
  %5104 = vmatpush.msra.mxu0 0.0
  %5105 = vmatpush.msra.mxu0 0.0
  %5106 = vmatpush.msra.mxu0 0.0
  %5107 = vmatpush.msra.mxu0 0.0
  %5108 = vmatpush.msra.mxu0 0.0
  %5109 = vmatpush.msra.mxu0 0.0
  %5110 = vmatpush.msra.mxu0 0.0
  %5111 = vmatpush.msra.mxu0 0.0
  %5112 = vmatpush.msra.mxu0 0.0
  %v5113 = vand.u32 %v4847, 4294901760
  %5114 = vmatpush.msra.mxu0 %v5113
  %v5115 = vand.u32 %v4846, 4294901760
  %5116 = vmatpush.msra.mxu0 %v5115
  %v5117 = vand.u32 %v4845, 4294901760
  %5118 = vmatpush.msra.mxu0 %v5117
  %v5119 = vand.u32 %v4844, 4294901760
  %5120 = vmatpush.msra.mxu0 %v5119
  %v5121 = vand.u32 %v4849, 4294901760
  %5122 = vmatmul.f32.gmra.mxu0 %v5121
  %v5123 = vpop.f32.mrf.mxu0
  %v5124 = vadd.f32 %v5087, %v5123
  %v5125 = vand.u32 %v4852, 4294901760
  %5126 = vmatmul.f32.gmra.mxu0 %v5125
  %v5127 = vpop.f32.mrf.mxu0
  %v5128 = vadd.f32 %v5091, %v5127
  %v5129 = vand.u32 %v4855, 4294901760
  %5130 = vmatmul.f32.gmra.mxu0 %v5129
  %v5131 = vpop.f32.mrf.mxu0
  %v5132 = vadd.f32 %v5095, %v5131
  %v5133 = vand.u32 %v4858, 4294901760
  %5134 = vmatmul.f32.gmra.mxu0 %v5133
  %v5135 = vpop.f32.mrf.mxu0
  %v5136 = vadd.f32 %v5099, %v5135
  %5137 = vdwg.mxu0
  %v5138 = vld [vmem:[%s1 + $0xca] sm:$0x1]
  %v5139 = vperm.slane %v5138, 0
  %v5140 = vmul.f32 %v5124, %v5139
  %v5141 = vmul.f32 %v5128, %v5139
  %v5142 = vmul.f32 %v5132, %v5139
  %v5143 = vmul.f32 %v5136, %v5139
  %v5144 = vld [vmem:[%s1 + $0xcb] sm:$0x1]
  %v5145 = vperm.slane %v5144, 0
  %v5146 = vadd.f32 %v5140, %v5145
  %v5147 = vadd.f32 %v5141, %v5145
  %v5148 = vadd.f32 %v5142, %v5145
  %v5149 = vadd.f32 %v5143, %v5145
  %v5150 = vadd.f32 %v3166, %v5146
  %v5151 = vadd.f32 %v3167, %v5147
  %v5152 = vadd.f32 %v3168, %v5148
  %v5153 = vadd.f32 %v3169, %v5149
  %v5154 = vld [vmem:[%s1 + $0x130] sm:$0xff]
  %v5155 = vld [vmem:[%s1 + $0x138] sm:$0xff]
  %v5156 = vld [vmem:[%s1 + $0x140] sm:$0xff]
  %v5157 = vld [vmem:[%s1 + $0x148] sm:$0xff]
  %v5159 = vsel %vm488, %v5150, 0
  %v5162 = vsel %vm488, %v5151, 0
  %v5165 = vsel %vm488, %v5152, 0
  %v5168 = vsel %vm488, %v5153, 0
  %5170 = vmatpush.msra.mxu0 0.0
  %5171 = vmatpush.msra.mxu0 0.0
  %5172 = vmatpush.msra.mxu0 0.0
  %5173 = vmatpush.msra.mxu0 0.0
  %5174 = vmatpush.msra.mxu0 0.0
  %5175 = vmatpush.msra.mxu0 0.0
  %5176 = vmatpush.msra.mxu0 0.0
  %5177 = vmatpush.msra.mxu0 0.0
  %5178 = vmatpush.msra.mxu0 0.0
  %5179 = vmatpush.msra.mxu0 0.0
  %5180 = vmatpush.msra.mxu0 0.0
  %5181 = vmatpush.msra.mxu0 0.0
  %v5182 = vand.u32 %v5157, 4294901760
  %5183 = vmatpush.msra.mxu0 %v5182
  %v5184 = vand.u32 %v5156, 4294901760
  %5185 = vmatpush.msra.mxu0 %v5184
  %v5186 = vand.u32 %v5155, 4294901760
  %5187 = vmatpush.msra.mxu0 %v5186
  %v5188 = vand.u32 %v5154, 4294901760
  %5189 = vmatpush.msra.mxu0 %v5188
  %v5190 = vand.u32 %v5159, 4294901760
  %v5191 = vsub.f32 %v5159, %v5190
  %v5192 = vand.u32 %v5191, 4294901760
  %v5193 = vsub.f32 %v5191, %v5192
  %v5194 = vand.u32 %v5193, 4294901760
  %5195 = vmatmul.f32.gmra.mxu0 %v5194
  %v5196 = vpop.f32.mrf.mxu0
  %v5197 = vadd.f32 0.0, %v5196
  %v5198 = vand.u32 %v5162, 4294901760
  %v5199 = vsub.f32 %v5162, %v5198
  %v5200 = vand.u32 %v5199, 4294901760
  %v5201 = vsub.f32 %v5199, %v5200
  %v5202 = vand.u32 %v5201, 4294901760
  %5203 = vmatmul.f32.gmra.mxu0 %v5202
  %v5204 = vpop.f32.mrf.mxu0
  %v5205 = vadd.f32 0.0, %v5204
  %v5206 = vand.u32 %v5165, 4294901760
  %v5207 = vsub.f32 %v5165, %v5206
  %v5208 = vand.u32 %v5207, 4294901760
  %v5209 = vsub.f32 %v5207, %v5208
  %v5210 = vand.u32 %v5209, 4294901760
  %5211 = vmatmul.f32.gmra.mxu0 %v5210
  %v5212 = vpop.f32.mrf.mxu0
  %v5213 = vadd.f32 0.0, %v5212
  %v5214 = vand.u32 %v5168, 4294901760
  %v5215 = vsub.f32 %v5168, %v5214
  %v5216 = vand.u32 %v5215, 4294901760
  %v5217 = vsub.f32 %v5215, %v5216
  %v5218 = vand.u32 %v5217, 4294901760
  %5219 = vmatmul.f32.gmra.mxu0 %v5218
  %v5220 = vpop.f32.mrf.mxu0
  %v5221 = vadd.f32 0.0, %v5220
  %5222 = vdwg.mxu0
  %5223 = vmatpush.msra.mxu0 0.0
  %5224 = vmatpush.msra.mxu0 0.0
  %5225 = vmatpush.msra.mxu0 0.0
  %5226 = vmatpush.msra.mxu0 0.0
  %5227 = vmatpush.msra.mxu0 0.0
  %5228 = vmatpush.msra.mxu0 0.0
  %5229 = vmatpush.msra.mxu0 0.0
  %5230 = vmatpush.msra.mxu0 0.0
  %5231 = vmatpush.msra.mxu0 0.0
  %5232 = vmatpush.msra.mxu0 0.0
  %5233 = vmatpush.msra.mxu0 0.0
  %5234 = vmatpush.msra.mxu0 0.0
  %v5235 = vand.u32 %v5157, 4294901760
  %v5236 = vsub.f32 %v5157, %v5235
  %v5237 = vand.u32 %v5236, 4294901760
  %v5238 = vsub.f32 %v5236, %v5237
  %v5239 = vand.u32 %v5238, 4294901760
  %5240 = vmatpush.msra.mxu0 %v5239
  %v5241 = vand.u32 %v5156, 4294901760
  %v5242 = vsub.f32 %v5156, %v5241
  %v5243 = vand.u32 %v5242, 4294901760
  %v5244 = vsub.f32 %v5242, %v5243
  %v5245 = vand.u32 %v5244, 4294901760
  %5246 = vmatpush.msra.mxu0 %v5245
  %v5247 = vand.u32 %v5155, 4294901760
  %v5248 = vsub.f32 %v5155, %v5247
  %v5249 = vand.u32 %v5248, 4294901760
  %v5250 = vsub.f32 %v5248, %v5249
  %v5251 = vand.u32 %v5250, 4294901760
  %5252 = vmatpush.msra.mxu0 %v5251
  %v5253 = vand.u32 %v5154, 4294901760
  %v5254 = vsub.f32 %v5154, %v5253
  %v5255 = vand.u32 %v5254, 4294901760
  %v5256 = vsub.f32 %v5254, %v5255
  %v5257 = vand.u32 %v5256, 4294901760
  %5258 = vmatpush.msra.mxu0 %v5257
  %v5259 = vand.u32 %v5159, 4294901760
  %5260 = vmatmul.f32.gmra.mxu0 %v5259
  %v5261 = vpop.f32.mrf.mxu0
  %v5262 = vadd.f32 %v5197, %v5261
  %v5263 = vand.u32 %v5162, 4294901760
  %5264 = vmatmul.f32.gmra.mxu0 %v5263
  %v5265 = vpop.f32.mrf.mxu0
  %v5266 = vadd.f32 %v5205, %v5265
  %v5267 = vand.u32 %v5165, 4294901760
  %5268 = vmatmul.f32.gmra.mxu0 %v5267
  %v5269 = vpop.f32.mrf.mxu0
  %v5270 = vadd.f32 %v5213, %v5269
  %v5271 = vand.u32 %v5168, 4294901760
  %5272 = vmatmul.f32.gmra.mxu0 %v5271
  %v5273 = vpop.f32.mrf.mxu0
  %v5274 = vadd.f32 %v5221, %v5273
  %5275 = vdwg.mxu0
  %5276 = vmatpush.msra.mxu0 0.0
  %5277 = vmatpush.msra.mxu0 0.0
  %5278 = vmatpush.msra.mxu0 0.0
  %5279 = vmatpush.msra.mxu0 0.0
  %5280 = vmatpush.msra.mxu0 0.0
  %5281 = vmatpush.msra.mxu0 0.0
  %5282 = vmatpush.msra.mxu0 0.0
  %5283 = vmatpush.msra.mxu0 0.0
  %5284 = vmatpush.msra.mxu0 0.0
  %5285 = vmatpush.msra.mxu0 0.0
  %5286 = vmatpush.msra.mxu0 0.0
  %5287 = vmatpush.msra.mxu0 0.0
  %v5288 = vand.u32 %v5157, 4294901760
  %v5289 = vsub.f32 %v5157, %v5288
  %5290 = vmatpush.msra.mxu0 %v5289
  %v5291 = vand.u32 %v5156, 4294901760
  %v5292 = vsub.f32 %v5156, %v5291
  %5293 = vmatpush.msra.mxu0 %v5292
  %v5294 = vand.u32 %v5155, 4294901760
  %v5295 = vsub.f32 %v5155, %v5294
  %5296 = vmatpush.msra.mxu0 %v5295
  %v5297 = vand.u32 %v5154, 4294901760
  %v5298 = vsub.f32 %v5154, %v5297
  %5299 = vmatpush.msra.mxu0 %v5298
  %v5300 = vand.u32 %v5159, 4294901760
  %v5301 = vsub.f32 %v5159, %v5300
  %5302 = vmatmul.f32.gmra.mxu0 %v5301
  %v5303 = vpop.f32.mrf.mxu0
  %v5304 = vadd.f32 %v5262, %v5303
  %v5305 = vand.u32 %v5162, 4294901760
  %v5306 = vsub.f32 %v5162, %v5305
  %5307 = vmatmul.f32.gmra.mxu0 %v5306
  %v5308 = vpop.f32.mrf.mxu0
  %v5309 = vadd.f32 %v5266, %v5308
  %v5310 = vand.u32 %v5165, 4294901760
  %v5311 = vsub.f32 %v5165, %v5310
  %5312 = vmatmul.f32.gmra.mxu0 %v5311
  %v5313 = vpop.f32.mrf.mxu0
  %v5314 = vadd.f32 %v5270, %v5313
  %v5315 = vand.u32 %v5168, 4294901760
  %v5316 = vsub.f32 %v5168, %v5315
  %5317 = vmatmul.f32.gmra.mxu0 %v5316
  %v5318 = vpop.f32.mrf.mxu0
  %v5319 = vadd.f32 %v5274, %v5318
  %5320 = vdwg.mxu0
  %5321 = vmatpush.msra.mxu0 0.0
  %5322 = vmatpush.msra.mxu0 0.0
  %5323 = vmatpush.msra.mxu0 0.0
  %5324 = vmatpush.msra.mxu0 0.0
  %5325 = vmatpush.msra.mxu0 0.0
  %5326 = vmatpush.msra.mxu0 0.0
  %5327 = vmatpush.msra.mxu0 0.0
  %5328 = vmatpush.msra.mxu0 0.0
  %5329 = vmatpush.msra.mxu0 0.0
  %5330 = vmatpush.msra.mxu0 0.0
  %5331 = vmatpush.msra.mxu0 0.0
  %5332 = vmatpush.msra.mxu0 0.0
  %v5333 = vand.u32 %v5157, 4294901760
  %5334 = vmatpush.msra.mxu0 %v5333
  %v5335 = vand.u32 %v5156, 4294901760
  %5336 = vmatpush.msra.mxu0 %v5335
  %v5337 = vand.u32 %v5155, 4294901760
  %5338 = vmatpush.msra.mxu0 %v5337
  %v5339 = vand.u32 %v5154, 4294901760
  %5340 = vmatpush.msra.mxu0 %v5339
  %v5341 = vand.u32 %v5159, 4294901760
  %v5342 = vsub.f32 %v5159, %v5341
  %v5343 = vand.u32 %v5342, 4294901760
  %5344 = vmatmul.f32.gmra.mxu0 %v5343
  %v5345 = vpop.f32.mrf.mxu0
  %v5346 = vadd.f32 %v5304, %v5345
  %v5347 = vand.u32 %v5162, 4294901760
  %v5348 = vsub.f32 %v5162, %v5347
  %v5349 = vand.u32 %v5348, 4294901760
  %5350 = vmatmul.f32.gmra.mxu0 %v5349
  %v5351 = vpop.f32.mrf.mxu0
  %v5352 = vadd.f32 %v5309, %v5351
  %v5353 = vand.u32 %v5165, 4294901760
  %v5354 = vsub.f32 %v5165, %v5353
  %v5355 = vand.u32 %v5354, 4294901760
  %5356 = vmatmul.f32.gmra.mxu0 %v5355
  %v5357 = vpop.f32.mrf.mxu0
  %v5358 = vadd.f32 %v5314, %v5357
  %v5359 = vand.u32 %v5168, 4294901760
  %v5360 = vsub.f32 %v5168, %v5359
  %v5361 = vand.u32 %v5360, 4294901760
  %5362 = vmatmul.f32.gmra.mxu0 %v5361
  %v5363 = vpop.f32.mrf.mxu0
  %v5364 = vadd.f32 %v5319, %v5363
  %5365 = vdwg.mxu0
  %5366 = vmatpush.msra.mxu0 0.0
  %5367 = vmatpush.msra.mxu0 0.0
  %5368 = vmatpush.msra.mxu0 0.0
  %5369 = vmatpush.msra.mxu0 0.0
  %5370 = vmatpush.msra.mxu0 0.0
  %5371 = vmatpush.msra.mxu0 0.0
  %5372 = vmatpush.msra.mxu0 0.0
  %5373 = vmatpush.msra.mxu0 0.0
  %5374 = vmatpush.msra.mxu0 0.0
  %5375 = vmatpush.msra.mxu0 0.0
  %5376 = vmatpush.msra.mxu0 0.0
  %5377 = vmatpush.msra.mxu0 0.0
  %v5378 = vand.u32 %v5157, 4294901760
  %v5379 = vsub.f32 %v5157, %v5378
  %v5380 = vand.u32 %v5379, 4294901760
  %5381 = vmatpush.msra.mxu0 %v5380
  %v5382 = vand.u32 %v5156, 4294901760
  %v5383 = vsub.f32 %v5156, %v5382
  %v5384 = vand.u32 %v5383, 4294901760
  %5385 = vmatpush.msra.mxu0 %v5384
  %v5386 = vand.u32 %v5155, 4294901760
  %v5387 = vsub.f32 %v5155, %v5386
  %v5388 = vand.u32 %v5387, 4294901760
  %5389 = vmatpush.msra.mxu0 %v5388
  %v5390 = vand.u32 %v5154, 4294901760
  %v5391 = vsub.f32 %v5154, %v5390
  %v5392 = vand.u32 %v5391, 4294901760
  %5393 = vmatpush.msra.mxu0 %v5392
  %v5394 = vand.u32 %v5159, 4294901760
  %5395 = vmatmul.f32.gmra.mxu0 %v5394
  %v5396 = vpop.f32.mrf.mxu0
  %v5397 = vadd.f32 %v5346, %v5396
  %v5398 = vand.u32 %v5162, 4294901760
  %5399 = vmatmul.f32.gmra.mxu0 %v5398
  %v5400 = vpop.f32.mrf.mxu0
  %v5401 = vadd.f32 %v5352, %v5400
  %v5402 = vand.u32 %v5165, 4294901760
  %5403 = vmatmul.f32.gmra.mxu0 %v5402
  %v5404 = vpop.f32.mrf.mxu0
  %v5405 = vadd.f32 %v5358, %v5404
  %v5406 = vand.u32 %v5168, 4294901760
  %5407 = vmatmul.f32.gmra.mxu0 %v5406
  %v5408 = vpop.f32.mrf.mxu0
  %v5409 = vadd.f32 %v5364, %v5408
  %5410 = vdwg.mxu0
  %5411 = vmatpush.msra.mxu0 0.0
  %5412 = vmatpush.msra.mxu0 0.0
  %5413 = vmatpush.msra.mxu0 0.0
  %5414 = vmatpush.msra.mxu0 0.0
  %5415 = vmatpush.msra.mxu0 0.0
  %5416 = vmatpush.msra.mxu0 0.0
  %5417 = vmatpush.msra.mxu0 0.0
  %5418 = vmatpush.msra.mxu0 0.0
  %5419 = vmatpush.msra.mxu0 0.0
  %5420 = vmatpush.msra.mxu0 0.0
  %5421 = vmatpush.msra.mxu0 0.0
  %5422 = vmatpush.msra.mxu0 0.0
  %v5423 = vand.u32 %v5157, 4294901760
  %5424 = vmatpush.msra.mxu0 %v5423
  %v5425 = vand.u32 %v5156, 4294901760
  %5426 = vmatpush.msra.mxu0 %v5425
  %v5427 = vand.u32 %v5155, 4294901760
  %5428 = vmatpush.msra.mxu0 %v5427
  %v5429 = vand.u32 %v5154, 4294901760
  %5430 = vmatpush.msra.mxu0 %v5429
  %v5431 = vand.u32 %v5159, 4294901760
  %5432 = vmatmul.f32.gmra.mxu0 %v5431
  %v5433 = vpop.f32.mrf.mxu0
  %v5434 = vadd.f32 %v5397, %v5433
  %v5435 = vand.u32 %v5162, 4294901760
  %5436 = vmatmul.f32.gmra.mxu0 %v5435
  %v5437 = vpop.f32.mrf.mxu0
  %v5438 = vadd.f32 %v5401, %v5437
  %v5439 = vand.u32 %v5165, 4294901760
  %5440 = vmatmul.f32.gmra.mxu0 %v5439
  %v5441 = vpop.f32.mrf.mxu0
  %v5442 = vadd.f32 %v5405, %v5441
  %v5443 = vand.u32 %v5168, 4294901760
  %5444 = vmatmul.f32.gmra.mxu0 %v5443
  %v5445 = vpop.f32.mrf.mxu0
  %v5446 = vadd.f32 %v5409, %v5445
  %5447 = vdwg.mxu0
  %v5448 = vld [vmem:[%s1 + $0xcc] sm:$0x1]
  %v5449 = vperm.slane %v5448, 0
  %v5450 = vmul.f32 %v5434, %v5449
  %v5451 = vmul.f32 %v5438, %v5449
  %v5452 = vmul.f32 %v5442, %v5449
  %v5453 = vmul.f32 %v5446, %v5449
  %v5454 = vld [vmem:[%s1 + $0xcd] sm:$0x1]
  %v5455 = vperm.slane %v5454, 0
  %v5456 = vadd.f32 %v5450, %v5455
  %v5457 = vadd.f32 %v5451, %v5455
  %v5458 = vadd.f32 %v5452, %v5455
  %v5459 = vadd.f32 %v5453, %v5455
  %v5460 = vadd.f32 %v5456, 3.0
  %v5461 = vadd.f32 %v5457, 3.0
  %v5462 = vadd.f32 %v5458, 3.0
  %v5463 = vadd.f32 %v5459, 3.0
  %v5464 = vmax.f32 %v5460, 0.0
  %v5465 = vmax.f32 %v5461, 0.0
  %v5466 = vmax.f32 %v5462, 0.0
  %v5467 = vmax.f32 %v5463, 0.0
  %v5468 = vmin.f32 %v5464, 6.0
  %v5469 = vmin.f32 %v5465, 6.0
  %v5470 = vmin.f32 %v5466, 6.0
  %v5471 = vmin.f32 %v5467, 6.0
  %v5472 = vmul.f32 %v5456, %v5468
  %v5473 = vmul.f32 %v5457, %v5469
  %v5474 = vmul.f32 %v5458, %v5470
  %v5475 = vmul.f32 %v5459, %v5471
  %v5476 = vmul.f32 %v5472, %v2162
  %v5477 = vmul.f32 %v5473, %v2162
  %v5478 = vmul.f32 %v5474, %v2162
  %v5479 = vmul.f32 %v5475, %v2162
  %v5480 = vld [vmem:[%s1 + $0x150] sm:$0xff]
  %v5481 = vld [vmem:[%s1 + $0x158] sm:$0xff]
  %v5482 = vld [vmem:[%s1 + $0x160] sm:$0xff]
  %v5483 = vld [vmem:[%s1 + $0x168] sm:$0xff]
  %v5484 = vld [vmem:[%s1 + $0x170] sm:$0xff]
  %v5485 = vld [vmem:[%s1 + $0x178] sm:$0xff]
  %v5486 = vld [vmem:[%s1 + $0x180] sm:$0xff]
  %v5487 = vld [vmem:[%s1 + $0x188] sm:$0xff]
  %v5489 = vsel %vm2811, %v5476, 0
  %v5492 = vsel %vm2811, %v5477, 0
  %v5495 = vsel %vm2811, %v5478, 0
  %v5498 = vsel %vm2811, %v5479, 0
  %5500 = vmatpush.msra.mxu0 0.0
  %5501 = vmatpush.msra.mxu0 0.0
  %5502 = vmatpush.msra.mxu0 0.0
  %5503 = vmatpush.msra.mxu0 0.0
  %5504 = vmatpush.msra.mxu0 0.0
  %5505 = vmatpush.msra.mxu0 0.0
  %5506 = vmatpush.msra.mxu0 0.0
  %5507 = vmatpush.msra.mxu0 0.0
  %v5508 = vand.u32 %v5487, 4294901760
  %5509 = vmatpush.msra.mxu0 %v5508
  %v5510 = vand.u32 %v5486, 4294901760
  %5511 = vmatpush.msra.mxu0 %v5510
  %v5512 = vand.u32 %v5485, 4294901760
  %5513 = vmatpush.msra.mxu0 %v5512
  %v5514 = vand.u32 %v5484, 4294901760
  %5515 = vmatpush.msra.mxu0 %v5514
  %v5516 = vand.u32 %v5483, 4294901760
  %5517 = vmatpush.msra.mxu0 %v5516
  %v5518 = vand.u32 %v5482, 4294901760
  %5519 = vmatpush.msra.mxu0 %v5518
  %v5520 = vand.u32 %v5481, 4294901760
  %5521 = vmatpush.msra.mxu0 %v5520
  %v5522 = vand.u32 %v5480, 4294901760
  %5523 = vmatpush.msra.mxu0 %v5522
  %v5524 = vand.u32 %v5489, 4294901760
  %v5525 = vsub.f32 %v5489, %v5524
  %v5526 = vand.u32 %v5525, 4294901760
  %v5527 = vsub.f32 %v5525, %v5526
  %v5528 = vand.u32 %v5527, 4294901760
  %5529 = vmatmul.f32.gmra.mxu0 %v5528
  %v5530 = vpop.f32.mrf.mxu0
  %v5531 = vadd.f32 0.0, %v5530
  %v5532 = vand.u32 %v5492, 4294901760
  %v5533 = vsub.f32 %v5492, %v5532
  %v5534 = vand.u32 %v5533, 4294901760
  %v5535 = vsub.f32 %v5533, %v5534
  %v5536 = vand.u32 %v5535, 4294901760
  %5537 = vmatmul.f32.gmra.mxu0 %v5536
  %v5538 = vpop.f32.mrf.mxu0
  %v5539 = vadd.f32 0.0, %v5538
  %v5540 = vand.u32 %v5495, 4294901760
  %v5541 = vsub.f32 %v5495, %v5540
  %v5542 = vand.u32 %v5541, 4294901760
  %v5543 = vsub.f32 %v5541, %v5542
  %v5544 = vand.u32 %v5543, 4294901760
  %5545 = vmatmul.f32.gmra.mxu0 %v5544
  %v5546 = vpop.f32.mrf.mxu0
  %v5547 = vadd.f32 0.0, %v5546
  %v5548 = vand.u32 %v5498, 4294901760
  %v5549 = vsub.f32 %v5498, %v5548
  %v5550 = vand.u32 %v5549, 4294901760
  %v5551 = vsub.f32 %v5549, %v5550
  %v5552 = vand.u32 %v5551, 4294901760
  %5553 = vmatmul.f32.gmra.mxu0 %v5552
  %v5554 = vpop.f32.mrf.mxu0
  %v5555 = vadd.f32 0.0, %v5554
  %5556 = vdwg.mxu0
  %5557 = vmatpush.msra.mxu0 0.0
  %5558 = vmatpush.msra.mxu0 0.0
  %5559 = vmatpush.msra.mxu0 0.0
  %5560 = vmatpush.msra.mxu0 0.0
  %5561 = vmatpush.msra.mxu0 0.0
  %5562 = vmatpush.msra.mxu0 0.0
  %5563 = vmatpush.msra.mxu0 0.0
  %5564 = vmatpush.msra.mxu0 0.0
  %v5565 = vand.u32 %v5487, 4294901760
  %v5566 = vsub.f32 %v5487, %v5565
  %v5567 = vand.u32 %v5566, 4294901760
  %v5568 = vsub.f32 %v5566, %v5567
  %v5569 = vand.u32 %v5568, 4294901760
  %5570 = vmatpush.msra.mxu0 %v5569
  %v5571 = vand.u32 %v5486, 4294901760
  %v5572 = vsub.f32 %v5486, %v5571
  %v5573 = vand.u32 %v5572, 4294901760
  %v5574 = vsub.f32 %v5572, %v5573
  %v5575 = vand.u32 %v5574, 4294901760
  %5576 = vmatpush.msra.mxu0 %v5575
  %v5577 = vand.u32 %v5485, 4294901760
  %v5578 = vsub.f32 %v5485, %v5577
  %v5579 = vand.u32 %v5578, 4294901760
  %v5580 = vsub.f32 %v5578, %v5579
  %v5581 = vand.u32 %v5580, 4294901760
  %5582 = vmatpush.msra.mxu0 %v5581
  %v5583 = vand.u32 %v5484, 4294901760
  %v5584 = vsub.f32 %v5484, %v5583
  %v5585 = vand.u32 %v5584, 4294901760
  %v5586 = vsub.f32 %v5584, %v5585
  %v5587 = vand.u32 %v5586, 4294901760
  %5588 = vmatpush.msra.mxu0 %v5587
  %v5589 = vand.u32 %v5483, 4294901760
  %v5590 = vsub.f32 %v5483, %v5589
  %v5591 = vand.u32 %v5590, 4294901760
  %v5592 = vsub.f32 %v5590, %v5591
  %v5593 = vand.u32 %v5592, 4294901760
  %5594 = vmatpush.msra.mxu0 %v5593
  %v5595 = vand.u32 %v5482, 4294901760
  %v5596 = vsub.f32 %v5482, %v5595
  %v5597 = vand.u32 %v5596, 4294901760
  %v5598 = vsub.f32 %v5596, %v5597
  %v5599 = vand.u32 %v5598, 4294901760
  %5600 = vmatpush.msra.mxu0 %v5599
  %v5601 = vand.u32 %v5481, 4294901760
  %v5602 = vsub.f32 %v5481, %v5601
  %v5603 = vand.u32 %v5602, 4294901760
  %v5604 = vsub.f32 %v5602, %v5603
  %v5605 = vand.u32 %v5604, 4294901760
  %5606 = vmatpush.msra.mxu0 %v5605
  %v5607 = vand.u32 %v5480, 4294901760
  %v5608 = vsub.f32 %v5480, %v5607
  %v5609 = vand.u32 %v5608, 4294901760
  %v5610 = vsub.f32 %v5608, %v5609
  %v5611 = vand.u32 %v5610, 4294901760
  %5612 = vmatpush.msra.mxu0 %v5611
  %v5613 = vand.u32 %v5489, 4294901760
  %5614 = vmatmul.f32.gmra.mxu0 %v5613
  %v5615 = vpop.f32.mrf.mxu0
  %v5616 = vadd.f32 %v5531, %v5615
  %v5617 = vand.u32 %v5492, 4294901760
  %5618 = vmatmul.f32.gmra.mxu0 %v5617
  %v5619 = vpop.f32.mrf.mxu0
  %v5620 = vadd.f32 %v5539, %v5619
  %v5621 = vand.u32 %v5495, 4294901760
  %5622 = vmatmul.f32.gmra.mxu0 %v5621
  %v5623 = vpop.f32.mrf.mxu0
  %v5624 = vadd.f32 %v5547, %v5623
  %v5625 = vand.u32 %v5498, 4294901760
  %5626 = vmatmul.f32.gmra.mxu0 %v5625
  %v5627 = vpop.f32.mrf.mxu0
  %v5628 = vadd.f32 %v5555, %v5627
  %5629 = vdwg.mxu0
  %5630 = vmatpush.msra.mxu0 0.0
  %5631 = vmatpush.msra.mxu0 0.0
  %5632 = vmatpush.msra.mxu0 0.0
  %5633 = vmatpush.msra.mxu0 0.0
  %5634 = vmatpush.msra.mxu0 0.0
  %5635 = vmatpush.msra.mxu0 0.0
  %5636 = vmatpush.msra.mxu0 0.0
  %5637 = vmatpush.msra.mxu0 0.0
  %v5638 = vand.u32 %v5487, 4294901760
  %v5639 = vsub.f32 %v5487, %v5638
  %5640 = vmatpush.msra.mxu0 %v5639
  %v5641 = vand.u32 %v5486, 4294901760
  %v5642 = vsub.f32 %v5486, %v5641
  %5643 = vmatpush.msra.mxu0 %v5642
  %v5644 = vand.u32 %v5485, 4294901760
  %v5645 = vsub.f32 %v5485, %v5644
  %5646 = vmatpush.msra.mxu0 %v5645
  %v5647 = vand.u32 %v5484, 4294901760
  %v5648 = vsub.f32 %v5484, %v5647
  %5649 = vmatpush.msra.mxu0 %v5648
  %v5650 = vand.u32 %v5483, 4294901760
  %v5651 = vsub.f32 %v5483, %v5650
  %5652 = vmatpush.msra.mxu0 %v5651
  %v5653 = vand.u32 %v5482, 4294901760
  %v5654 = vsub.f32 %v5482, %v5653
  %5655 = vmatpush.msra.mxu0 %v5654
  %v5656 = vand.u32 %v5481, 4294901760
  %v5657 = vsub.f32 %v5481, %v5656
  %5658 = vmatpush.msra.mxu0 %v5657
  %v5659 = vand.u32 %v5480, 4294901760
  %v5660 = vsub.f32 %v5480, %v5659
  %5661 = vmatpush.msra.mxu0 %v5660
  %v5662 = vand.u32 %v5489, 4294901760
  %v5663 = vsub.f32 %v5489, %v5662
  %5664 = vmatmul.f32.gmra.mxu0 %v5663
  %v5665 = vpop.f32.mrf.mxu0
  %v5666 = vadd.f32 %v5616, %v5665
  %v5667 = vand.u32 %v5492, 4294901760
  %v5668 = vsub.f32 %v5492, %v5667
  %5669 = vmatmul.f32.gmra.mxu0 %v5668
  %v5670 = vpop.f32.mrf.mxu0
  %v5671 = vadd.f32 %v5620, %v5670
  %v5672 = vand.u32 %v5495, 4294901760
  %v5673 = vsub.f32 %v5495, %v5672
  %5674 = vmatmul.f32.gmra.mxu0 %v5673
  %v5675 = vpop.f32.mrf.mxu0
  %v5676 = vadd.f32 %v5624, %v5675
  %v5677 = vand.u32 %v5498, 4294901760
  %v5678 = vsub.f32 %v5498, %v5677
  %5679 = vmatmul.f32.gmra.mxu0 %v5678
  %v5680 = vpop.f32.mrf.mxu0
  %v5681 = vadd.f32 %v5628, %v5680
  %5682 = vdwg.mxu0
  %5683 = vmatpush.msra.mxu0 0.0
  %5684 = vmatpush.msra.mxu0 0.0
  %5685 = vmatpush.msra.mxu0 0.0
  %5686 = vmatpush.msra.mxu0 0.0
  %5687 = vmatpush.msra.mxu0 0.0
  %5688 = vmatpush.msra.mxu0 0.0
  %5689 = vmatpush.msra.mxu0 0.0
  %5690 = vmatpush.msra.mxu0 0.0
  %v5691 = vand.u32 %v5487, 4294901760
  %5692 = vmatpush.msra.mxu0 %v5691
  %v5693 = vand.u32 %v5486, 4294901760
  %5694 = vmatpush.msra.mxu0 %v5693
  %v5695 = vand.u32 %v5485, 4294901760
  %5696 = vmatpush.msra.mxu0 %v5695
  %v5697 = vand.u32 %v5484, 4294901760
  %5698 = vmatpush.msra.mxu0 %v5697
  %v5699 = vand.u32 %v5483, 4294901760
  %5700 = vmatpush.msra.mxu0 %v5699
  %v5701 = vand.u32 %v5482, 4294901760
  %5702 = vmatpush.msra.mxu0 %v5701
  %v5703 = vand.u32 %v5481, 4294901760
  %5704 = vmatpush.msra.mxu0 %v5703
  %v5705 = vand.u32 %v5480, 4294901760
  %5706 = vmatpush.msra.mxu0 %v5705
  %v5707 = vand.u32 %v5489, 4294901760
  %v5708 = vsub.f32 %v5489, %v5707
  %v5709 = vand.u32 %v5708, 4294901760
  %5710 = vmatmul.f32.gmra.mxu0 %v5709
  %v5711 = vpop.f32.mrf.mxu0
  %v5712 = vadd.f32 %v5666, %v5711
  %v5713 = vand.u32 %v5492, 4294901760
  %v5714 = vsub.f32 %v5492, %v5713
  %v5715 = vand.u32 %v5714, 4294901760
  %5716 = vmatmul.f32.gmra.mxu0 %v5715
  %v5717 = vpop.f32.mrf.mxu0
  %v5718 = vadd.f32 %v5671, %v5717
  %v5719 = vand.u32 %v5495, 4294901760
  %v5720 = vsub.f32 %v5495, %v5719
  %v5721 = vand.u32 %v5720, 4294901760
  %5722 = vmatmul.f32.gmra.mxu0 %v5721
  %v5723 = vpop.f32.mrf.mxu0
  %v5724 = vadd.f32 %v5676, %v5723
  %v5725 = vand.u32 %v5498, 4294901760
  %v5726 = vsub.f32 %v5498, %v5725
  %v5727 = vand.u32 %v5726, 4294901760
  %5728 = vmatmul.f32.gmra.mxu0 %v5727
  %v5729 = vpop.f32.mrf.mxu0
  %v5730 = vadd.f32 %v5681, %v5729
  %5731 = vdwg.mxu0
  %5732 = vmatpush.msra.mxu0 0.0
  %5733 = vmatpush.msra.mxu0 0.0
  %5734 = vmatpush.msra.mxu0 0.0
  %5735 = vmatpush.msra.mxu0 0.0
  %5736 = vmatpush.msra.mxu0 0.0
  %5737 = vmatpush.msra.mxu0 0.0
  %5738 = vmatpush.msra.mxu0 0.0
  %5739 = vmatpush.msra.mxu0 0.0
  %v5740 = vand.u32 %v5487, 4294901760
  %v5741 = vsub.f32 %v5487, %v5740
  %v5742 = vand.u32 %v5741, 4294901760
  %5743 = vmatpush.msra.mxu0 %v5742
  %v5744 = vand.u32 %v5486, 4294901760
  %v5745 = vsub.f32 %v5486, %v5744
  %v5746 = vand.u32 %v5745, 4294901760
  %5747 = vmatpush.msra.mxu0 %v5746
  %v5748 = vand.u32 %v5485, 4294901760
  %v5749 = vsub.f32 %v5485, %v5748
  %v5750 = vand.u32 %v5749, 4294901760
  %5751 = vmatpush.msra.mxu0 %v5750
  %v5752 = vand.u32 %v5484, 4294901760
  %v5753 = vsub.f32 %v5484, %v5752
  %v5754 = vand.u32 %v5753, 4294901760
  %5755 = vmatpush.msra.mxu0 %v5754
  %v5756 = vand.u32 %v5483, 4294901760
  %v5757 = vsub.f32 %v5483, %v5756
  %v5758 = vand.u32 %v5757, 4294901760
  %5759 = vmatpush.msra.mxu0 %v5758
  %v5760 = vand.u32 %v5482, 4294901760
  %v5761 = vsub.f32 %v5482, %v5760
  %v5762 = vand.u32 %v5761, 4294901760
  %5763 = vmatpush.msra.mxu0 %v5762
  %v5764 = vand.u32 %v5481, 4294901760
  %v5765 = vsub.f32 %v5481, %v5764
  %v5766 = vand.u32 %v5765, 4294901760
  %5767 = vmatpush.msra.mxu0 %v5766
  %v5768 = vand.u32 %v5480, 4294901760
  %v5769 = vsub.f32 %v5480, %v5768
  %v5770 = vand.u32 %v5769, 4294901760
  %5771 = vmatpush.msra.mxu0 %v5770
  %v5772 = vand.u32 %v5489, 4294901760
  %5773 = vmatmul.f32.gmra.mxu0 %v5772
  %v5774 = vpop.f32.mrf.mxu0
  %v5775 = vadd.f32 %v5712, %v5774
  %v5776 = vand.u32 %v5492, 4294901760
  %5777 = vmatmul.f32.gmra.mxu0 %v5776
  %v5778 = vpop.f32.mrf.mxu0
  %v5779 = vadd.f32 %v5718, %v5778
  %v5780 = vand.u32 %v5495, 4294901760
  %5781 = vmatmul.f32.gmra.mxu0 %v5780
  %v5782 = vpop.f32.mrf.mxu0
  %v5783 = vadd.f32 %v5724, %v5782
  %v5784 = vand.u32 %v5498, 4294901760
  %5785 = vmatmul.f32.gmra.mxu0 %v5784
  %v5786 = vpop.f32.mrf.mxu0
  %v5787 = vadd.f32 %v5730, %v5786
  %5788 = vdwg.mxu0
  %5789 = vmatpush.msra.mxu0 0.0
  %5790 = vmatpush.msra.mxu0 0.0
  %5791 = vmatpush.msra.mxu0 0.0
  %5792 = vmatpush.msra.mxu0 0.0
  %5793 = vmatpush.msra.mxu0 0.0
  %5794 = vmatpush.msra.mxu0 0.0
  %5795 = vmatpush.msra.mxu0 0.0
  %5796 = vmatpush.msra.mxu0 0.0
  %v5797 = vand.u32 %v5487, 4294901760
  %5798 = vmatpush.msra.mxu0 %v5797
  %v5799 = vand.u32 %v5486, 4294901760
  %5800 = vmatpush.msra.mxu0 %v5799
  %v5801 = vand.u32 %v5485, 4294901760
  %5802 = vmatpush.msra.mxu0 %v5801
  %v5803 = vand.u32 %v5484, 4294901760
  %5804 = vmatpush.msra.mxu0 %v5803
  %v5805 = vand.u32 %v5483, 4294901760
  %5806 = vmatpush.msra.mxu0 %v5805
  %v5807 = vand.u32 %v5482, 4294901760
  %5808 = vmatpush.msra.mxu0 %v5807
  %v5809 = vand.u32 %v5481, 4294901760
  %5810 = vmatpush.msra.mxu0 %v5809
  %v5811 = vand.u32 %v5480, 4294901760
  %5812 = vmatpush.msra.mxu0 %v5811
  %v5813 = vand.u32 %v5489, 4294901760
  %5814 = vmatmul.f32.gmra.mxu0 %v5813
  %v5815 = vpop.f32.mrf.mxu0
  %v5816 = vadd.f32 %v5775, %v5815
  %v5817 = vand.u32 %v5492, 4294901760
  %5818 = vmatmul.f32.gmra.mxu0 %v5817
  %v5819 = vpop.f32.mrf.mxu0
  %v5820 = vadd.f32 %v5779, %v5819
  %v5821 = vand.u32 %v5495, 4294901760
  %5822 = vmatmul.f32.gmra.mxu0 %v5821
  %v5823 = vpop.f32.mrf.mxu0
  %v5824 = vadd.f32 %v5783, %v5823
  %v5825 = vand.u32 %v5498, 4294901760
  %5826 = vmatmul.f32.gmra.mxu0 %v5825
  %v5827 = vpop.f32.mrf.mxu0
  %v5828 = vadd.f32 %v5787, %v5827
  %5829 = vdwg.mxu0
  %v5830 = vld [vmem:[%s1 + $0xce] sm:$0x1]
  %v5831 = vperm.slane %v5830, 0
  %v5832 = vmul.f32 %v5816, %v5831
  %v5833 = vmul.f32 %v5820, %v5831
  %v5834 = vmul.f32 %v5824, %v5831
  %v5835 = vmul.f32 %v5828, %v5831
  %v5836 = vld [vmem:[%s1 + $0xcf] sm:$0x1]
  %v5837 = vperm.slane %v5836, 0
  %v5838 = vadd.f32 %v5832, %v5837
  %v5839 = vadd.f32 %v5833, %v5837
  %v5840 = vadd.f32 %v5834, %v5837
  %v5841 = vadd.f32 %v5835, %v5837
  %v5842 = vadd.f32 %v5150, %v5838
  %v5843 = vadd.f32 %v5151, %v5839
  %v5844 = vadd.f32 %v5152, %v5840
  %v5845 = vadd.f32 %v5153, %v5841
  %v5846 = vld [vmem:[%s1 + $0x1b8] sm:$0xff]
  %v5848 = vsel %vm488, %v5846, 0
  %5850 = vmatpush.msra.mxu0 0.0
  %5851 = vmatpush.msra.mxu0 0.0
  %5852 = vmatpush.msra.mxu0 0.0
  %5853 = vmatpush.msra.mxu0 0.0
  %5854 = vmatpush.msra.mxu0 0.0
  %5855 = vmatpush.msra.mxu0 0.0
  %5856 = vmatpush.msra.mxu0 0.0
  %5857 = vmatpush.msra.mxu0 0.0
  %5858 = vmatpush.msra.mxu0 0.0
  %5859 = vmatpush.msra.mxu0 0.0
  %5860 = vmatpush.msra.mxu0 0.0
  %5861 = vmatpush.msra.mxu0 0.0
  %v5862 = vand.u32 %v5845, 4294901760
  %5863 = vmatpush.msra.mxu0 %v5862
  %v5864 = vand.u32 %v5844, 4294901760
  %5865 = vmatpush.msra.mxu0 %v5864
  %v5866 = vand.u32 %v5843, 4294901760
  %5867 = vmatpush.msra.mxu0 %v5866
  %v5868 = vand.u32 %v5842, 4294901760
  %5869 = vmatpush.msra.mxu0 %v5868
  %v5870 = vand.u32 %v5848, 4294901760
  %v5871 = vsub.f32 %v5848, %v5870
  %v5872 = vand.u32 %v5871, 4294901760
  %v5873 = vsub.f32 %v5871, %v5872
  %v5874 = vand.u32 %v5873, 4294901760
  %5875 = vmatmul.f32.gmra.mxu0 %v5874
  %v5876 = vpop.f32.mrf.mxu0
  %v5877 = vadd.f32 0.0, %v5876
  %5878 = vdwg.mxu0
  %5879 = vmatpush.msra.mxu0 0.0
  %5880 = vmatpush.msra.mxu0 0.0
  %5881 = vmatpush.msra.mxu0 0.0
  %5882 = vmatpush.msra.mxu0 0.0
  %5883 = vmatpush.msra.mxu0 0.0
  %5884 = vmatpush.msra.mxu0 0.0
  %5885 = vmatpush.msra.mxu0 0.0
  %5886 = vmatpush.msra.mxu0 0.0
  %5887 = vmatpush.msra.mxu0 0.0
  %5888 = vmatpush.msra.mxu0 0.0
  %5889 = vmatpush.msra.mxu0 0.0
  %5890 = vmatpush.msra.mxu0 0.0
  %v5891 = vand.u32 %v5845, 4294901760
  %v5892 = vsub.f32 %v5845, %v5891
  %v5893 = vand.u32 %v5892, 4294901760
  %v5894 = vsub.f32 %v5892, %v5893
  %v5895 = vand.u32 %v5894, 4294901760
  %5896 = vmatpush.msra.mxu0 %v5895
  %v5897 = vand.u32 %v5844, 4294901760
  %v5898 = vsub.f32 %v5844, %v5897
  %v5899 = vand.u32 %v5898, 4294901760
  %v5900 = vsub.f32 %v5898, %v5899
  %v5901 = vand.u32 %v5900, 4294901760
  %5902 = vmatpush.msra.mxu0 %v5901
  %v5903 = vand.u32 %v5843, 4294901760
  %v5904 = vsub.f32 %v5843, %v5903
  %v5905 = vand.u32 %v5904, 4294901760
  %v5906 = vsub.f32 %v5904, %v5905
  %v5907 = vand.u32 %v5906, 4294901760
  %5908 = vmatpush.msra.mxu0 %v5907
  %v5909 = vand.u32 %v5842, 4294901760
  %v5910 = vsub.f32 %v5842, %v5909
  %v5911 = vand.u32 %v5910, 4294901760
  %v5912 = vsub.f32 %v5910, %v5911
  %v5913 = vand.u32 %v5912, 4294901760
  %5914 = vmatpush.msra.mxu0 %v5913
  %v5915 = vand.u32 %v5848, 4294901760
  %5916 = vmatmul.f32.gmra.mxu0 %v5915
  %v5917 = vpop.f32.mrf.mxu0
  %v5918 = vadd.f32 %v5877, %v5917
  %5919 = vdwg.mxu0
  %5920 = vmatpush.msra.mxu0 0.0
  %5921 = vmatpush.msra.mxu0 0.0
  %5922 = vmatpush.msra.mxu0 0.0
  %5923 = vmatpush.msra.mxu0 0.0
  %5924 = vmatpush.msra.mxu0 0.0
  %5925 = vmatpush.msra.mxu0 0.0
  %5926 = vmatpush.msra.mxu0 0.0
  %5927 = vmatpush.msra.mxu0 0.0
  %5928 = vmatpush.msra.mxu0 0.0
  %5929 = vmatpush.msra.mxu0 0.0
  %5930 = vmatpush.msra.mxu0 0.0
  %5931 = vmatpush.msra.mxu0 0.0
  %v5932 = vand.u32 %v5845, 4294901760
  %v5933 = vsub.f32 %v5845, %v5932
  %5934 = vmatpush.msra.mxu0 %v5933
  %v5935 = vand.u32 %v5844, 4294901760
  %v5936 = vsub.f32 %v5844, %v5935
  %5937 = vmatpush.msra.mxu0 %v5936
  %v5938 = vand.u32 %v5843, 4294901760
  %v5939 = vsub.f32 %v5843, %v5938
  %5940 = vmatpush.msra.mxu0 %v5939
  %v5941 = vand.u32 %v5842, 4294901760
  %v5942 = vsub.f32 %v5842, %v5941
  %5943 = vmatpush.msra.mxu0 %v5942
  %v5944 = vand.u32 %v5848, 4294901760
  %v5945 = vsub.f32 %v5848, %v5944
  %5946 = vmatmul.f32.gmra.mxu0 %v5945
  %v5947 = vpop.f32.mrf.mxu0
  %v5948 = vadd.f32 %v5918, %v5947
  %5949 = vdwg.mxu0
  %5950 = vmatpush.msra.mxu0 0.0
  %5951 = vmatpush.msra.mxu0 0.0
  %5952 = vmatpush.msra.mxu0 0.0
  %5953 = vmatpush.msra.mxu0 0.0
  %5954 = vmatpush.msra.mxu0 0.0
  %5955 = vmatpush.msra.mxu0 0.0
  %5956 = vmatpush.msra.mxu0 0.0
  %5957 = vmatpush.msra.mxu0 0.0
  %5958 = vmatpush.msra.mxu0 0.0
  %5959 = vmatpush.msra.mxu0 0.0
  %5960 = vmatpush.msra.mxu0 0.0
  %5961 = vmatpush.msra.mxu0 0.0
  %v5962 = vand.u32 %v5845, 4294901760
  %5963 = vmatpush.msra.mxu0 %v5962
  %v5964 = vand.u32 %v5844, 4294901760
  %5965 = vmatpush.msra.mxu0 %v5964
  %v5966 = vand.u32 %v5843, 4294901760
  %5967 = vmatpush.msra.mxu0 %v5966
  %v5968 = vand.u32 %v5842, 4294901760
  %5969 = vmatpush.msra.mxu0 %v5968
  %v5970 = vand.u32 %v5848, 4294901760
  %v5971 = vsub.f32 %v5848, %v5970
  %v5972 = vand.u32 %v5971, 4294901760
  %5973 = vmatmul.f32.gmra.mxu0 %v5972
  %v5974 = vpop.f32.mrf.mxu0
  %v5975 = vadd.f32 %v5948, %v5974
  %5976 = vdwg.mxu0
  %5977 = vmatpush.msra.mxu0 0.0
  %5978 = vmatpush.msra.mxu0 0.0
  %5979 = vmatpush.msra.mxu0 0.0
  %5980 = vmatpush.msra.mxu0 0.0
  %5981 = vmatpush.msra.mxu0 0.0
  %5982 = vmatpush.msra.mxu0 0.0
  %5983 = vmatpush.msra.mxu0 0.0
  %5984 = vmatpush.msra.mxu0 0.0
  %5985 = vmatpush.msra.mxu0 0.0
  %5986 = vmatpush.msra.mxu0 0.0
  %5987 = vmatpush.msra.mxu0 0.0
  %5988 = vmatpush.msra.mxu0 0.0
  %v5989 = vand.u32 %v5845, 4294901760
  %v5990 = vsub.f32 %v5845, %v5989
  %v5991 = vand.u32 %v5990, 4294901760
  %5992 = vmatpush.msra.mxu0 %v5991
  %v5993 = vand.u32 %v5844, 4294901760
  %v5994 = vsub.f32 %v5844, %v5993
  %v5995 = vand.u32 %v5994, 4294901760
  %5996 = vmatpush.msra.mxu0 %v5995
  %v5997 = vand.u32 %v5843, 4294901760
  %v5998 = vsub.f32 %v5843, %v5997
  %v5999 = vand.u32 %v5998, 4294901760
  %6000 = vmatpush.msra.mxu0 %v5999
  %v6001 = vand.u32 %v5842, 4294901760
  %v6002 = vsub.f32 %v5842, %v6001
  %v6003 = vand.u32 %v6002, 4294901760
  %6004 = vmatpush.msra.mxu0 %v6003
  %v6005 = vand.u32 %v5848, 4294901760
  %6006 = vmatmul.f32.gmra.mxu0 %v6005
  %v6007 = vpop.f32.mrf.mxu0
  %v6008 = vadd.f32 %v5975, %v6007
  %6009 = vdwg.mxu0
  %6010 = vmatpush.msra.mxu0 0.0
  %6011 = vmatpush.msra.mxu0 0.0
  %6012 = vmatpush.msra.mxu0 0.0
  %6013 = vmatpush.msra.mxu0 0.0
  %6014 = vmatpush.msra.mxu0 0.0
  %6015 = vmatpush.msra.mxu0 0.0
  %6016 = vmatpush.msra.mxu0 0.0
  %6017 = vmatpush.msra.mxu0 0.0
  %6018 = vmatpush.msra.mxu0 0.0
  %6019 = vmatpush.msra.mxu0 0.0
  %6020 = vmatpush.msra.mxu0 0.0
  %6021 = vmatpush.msra.mxu0 0.0
  %v6022 = vand.u32 %v5845, 4294901760
  %6023 = vmatpush.msra.mxu0 %v6022
  %v6024 = vand.u32 %v5844, 4294901760
  %6025 = vmatpush.msra.mxu0 %v6024
  %v6026 = vand.u32 %v5843, 4294901760
  %6027 = vmatpush.msra.mxu0 %v6026
  %v6028 = vand.u32 %v5842, 4294901760
  %6029 = vmatpush.msra.mxu0 %v6028
  %v6030 = vand.u32 %v5848, 4294901760
  %6031 = vmatmul.f32.gmra.mxu0 %v6030
  %v6032 = vpop.f32.mrf.mxu0
  %v6033 = vadd.f32 %v6008, %v6032
  %6034 = vdwg.mxu0
  %v6035 = vld [vmem:[%s1 + $0x190] sm:$0x1]
  %v6036 = vperm.slane %v6035, 0
  %v6037 = vmul.f32 %v6033, %v6036
  %v6038 = vld [vmem:[%s1 + $0x191] sm:$0x1]
  %v6039 = vperm.slane %v6038, 0
  %v6040 = vadd.f32 %v6037, %v6039
  %v6041 = vld [vmem:[%s1 + $0x198] sm:$0xff]
  %v6042 = vld [vmem:[%s1 + $0x1a0] sm:$0xff]
  %v6043 = vld [vmem:[%s1 + $0x1a8] sm:$0xff]
  %v6044 = vld [vmem:[%s1 + $0x1b0] sm:$0xff]
  %v6045 = vld [vmem:[%s1 + $0x192] sm:$0x1]
  %v6046 = vperm.slane %v6045, 0
  %v6048 = vsel %vm488, %v6040, 0
  %6050 = vmatpush.msra.mxu0 0.0
  %6051 = vmatpush.msra.mxu0 0.0
  %6052 = vmatpush.msra.mxu0 0.0
  %6053 = vmatpush.msra.mxu0 0.0
  %6054 = vmatpush.msra.mxu0 0.0
  %6055 = vmatpush.msra.mxu0 0.0
  %6056 = vmatpush.msra.mxu0 0.0
  %6057 = vmatpush.msra.mxu0 0.0
  %6058 = vmatpush.msra.mxu0 0.0
  %6059 = vmatpush.msra.mxu0 0.0
  %6060 = vmatpush.msra.mxu0 0.0
  %6061 = vmatpush.msra.mxu0 0.0
  %v6062 = vand.u32 %v6044, 4294901760
  %6063 = vmatpush.msra.mxu0 %v6062
  %v6064 = vand.u32 %v6043, 4294901760
  %6065 = vmatpush.msra.mxu0 %v6064
  %v6066 = vand.u32 %v6042, 4294901760
  %6067 = vmatpush.msra.mxu0 %v6066
  %v6068 = vand.u32 %v6041, 4294901760
  %6069 = vmatpush.msra.mxu0 %v6068
  %v6070 = vand.u32 %v6048, 4294901760
  %v6071 = vsub.f32 %v6048, %v6070
  %v6072 = vand.u32 %v6071, 4294901760
  %v6073 = vsub.f32 %v6071, %v6072
  %v6074 = vand.u32 %v6073, 4294901760
  %6075 = vmatmul.f32.gmra.mxu0 %v6074
  %v6076 = vpop.f32.mrf.mxu0
  %v6077 = vadd.f32 %v6046, %v6076
  %6078 = vdwg.mxu0
  %6079 = vmatpush.msra.mxu0 0.0
  %6080 = vmatpush.msra.mxu0 0.0
  %6081 = vmatpush.msra.mxu0 0.0
  %6082 = vmatpush.msra.mxu0 0.0
  %6083 = vmatpush.msra.mxu0 0.0
  %6084 = vmatpush.msra.mxu0 0.0
  %6085 = vmatpush.msra.mxu0 0.0
  %6086 = vmatpush.msra.mxu0 0.0
  %6087 = vmatpush.msra.mxu0 0.0
  %6088 = vmatpush.msra.mxu0 0.0
  %6089 = vmatpush.msra.mxu0 0.0
  %6090 = vmatpush.msra.mxu0 0.0
  %v6091 = vand.u32 %v6044, 4294901760
  %v6092 = vsub.f32 %v6044, %v6091
  %v6093 = vand.u32 %v6092, 4294901760
  %v6094 = vsub.f32 %v6092, %v6093
  %v6095 = vand.u32 %v6094, 4294901760
  %6096 = vmatpush.msra.mxu0 %v6095
  %v6097 = vand.u32 %v6043, 4294901760
  %v6098 = vsub.f32 %v6043, %v6097
  %v6099 = vand.u32 %v6098, 4294901760
  %v6100 = vsub.f32 %v6098, %v6099
  %v6101 = vand.u32 %v6100, 4294901760
  %6102 = vmatpush.msra.mxu0 %v6101
  %v6103 = vand.u32 %v6042, 4294901760
  %v6104 = vsub.f32 %v6042, %v6103
  %v6105 = vand.u32 %v6104, 4294901760
  %v6106 = vsub.f32 %v6104, %v6105
  %v6107 = vand.u32 %v6106, 4294901760
  %6108 = vmatpush.msra.mxu0 %v6107
  %v6109 = vand.u32 %v6041, 4294901760
  %v6110 = vsub.f32 %v6041, %v6109
  %v6111 = vand.u32 %v6110, 4294901760
  %v6112 = vsub.f32 %v6110, %v6111
  %v6113 = vand.u32 %v6112, 4294901760
  %6114 = vmatpush.msra.mxu0 %v6113
  %v6115 = vand.u32 %v6048, 4294901760
  %6116 = vmatmul.f32.gmra.mxu0 %v6115
  %v6117 = vpop.f32.mrf.mxu0
  %v6118 = vadd.f32 %v6077, %v6117
  %6119 = vdwg.mxu0
  %6120 = vmatpush.msra.mxu0 0.0
  %6121 = vmatpush.msra.mxu0 0.0
  %6122 = vmatpush.msra.mxu0 0.0
  %6123 = vmatpush.msra.mxu0 0.0
  %6124 = vmatpush.msra.mxu0 0.0
  %6125 = vmatpush.msra.mxu0 0.0
  %6126 = vmatpush.msra.mxu0 0.0
  %6127 = vmatpush.msra.mxu0 0.0
  %6128 = vmatpush.msra.mxu0 0.0
  %6129 = vmatpush.msra.mxu0 0.0
  %6130 = vmatpush.msra.mxu0 0.0
  %6131 = vmatpush.msra.mxu0 0.0
  %v6132 = vand.u32 %v6044, 4294901760
  %v6133 = vsub.f32 %v6044, %v6132
  %6134 = vmatpush.msra.mxu0 %v6133
  %v6135 = vand.u32 %v6043, 4294901760
  %v6136 = vsub.f32 %v6043, %v6135
  %6137 = vmatpush.msra.mxu0 %v6136
  %v6138 = vand.u32 %v6042, 4294901760
  %v6139 = vsub.f32 %v6042, %v6138
  %6140 = vmatpush.msra.mxu0 %v6139
  %v6141 = vand.u32 %v6041, 4294901760
  %v6142 = vsub.f32 %v6041, %v6141
  %6143 = vmatpush.msra.mxu0 %v6142
  %v6144 = vand.u32 %v6048, 4294901760
  %v6145 = vsub.f32 %v6048, %v6144
  %6146 = vmatmul.f32.gmra.mxu0 %v6145
  %v6147 = vpop.f32.mrf.mxu0
  %v6148 = vadd.f32 %v6118, %v6147
  %6149 = vdwg.mxu0
  %6150 = vmatpush.msra.mxu0 0.0
  %6151 = vmatpush.msra.mxu0 0.0
  %6152 = vmatpush.msra.mxu0 0.0
  %6153 = vmatpush.msra.mxu0 0.0
  %6154 = vmatpush.msra.mxu0 0.0
  %6155 = vmatpush.msra.mxu0 0.0
  %6156 = vmatpush.msra.mxu0 0.0
  %6157 = vmatpush.msra.mxu0 0.0
  %6158 = vmatpush.msra.mxu0 0.0
  %6159 = vmatpush.msra.mxu0 0.0
  %6160 = vmatpush.msra.mxu0 0.0
  %6161 = vmatpush.msra.mxu0 0.0
  %v6162 = vand.u32 %v6044, 4294901760
  %6163 = vmatpush.msra.mxu0 %v6162
  %v6164 = vand.u32 %v6043, 4294901760
  %6165 = vmatpush.msra.mxu0 %v6164
  %v6166 = vand.u32 %v6042, 4294901760
  %6167 = vmatpush.msra.mxu0 %v6166
  %v6168 = vand.u32 %v6041, 4294901760
  %6169 = vmatpush.msra.mxu0 %v6168
  %v6170 = vand.u32 %v6048, 4294901760
  %v6171 = vsub.f32 %v6048, %v6170
  %v6172 = vand.u32 %v6171, 4294901760
  %6173 = vmatmul.f32.gmra.mxu0 %v6172
  %v6174 = vpop.f32.mrf.mxu0
  %v6175 = vadd.f32 %v6148, %v6174
  %6176 = vdwg.mxu0
  %6177 = vmatpush.msra.mxu0 0.0
  %6178 = vmatpush.msra.mxu0 0.0
  %6179 = vmatpush.msra.mxu0 0.0
  %6180 = vmatpush.msra.mxu0 0.0
  %6181 = vmatpush.msra.mxu0 0.0
  %6182 = vmatpush.msra.mxu0 0.0
  %6183 = vmatpush.msra.mxu0 0.0
  %6184 = vmatpush.msra.mxu0 0.0
  %6185 = vmatpush.msra.mxu0 0.0
  %6186 = vmatpush.msra.mxu0 0.0
  %6187 = vmatpush.msra.mxu0 0.0
  %6188 = vmatpush.msra.mxu0 0.0
  %v6189 = vand.u32 %v6044, 4294901760
  %v6190 = vsub.f32 %v6044, %v6189
  %v6191 = vand.u32 %v6190, 4294901760
  %6192 = vmatpush.msra.mxu0 %v6191
  %v6193 = vand.u32 %v6043, 4294901760
  %v6194 = vsub.f32 %v6043, %v6193
  %v6195 = vand.u32 %v6194, 4294901760
  %6196 = vmatpush.msra.mxu0 %v6195
  %v6197 = vand.u32 %v6042, 4294901760
  %v6198 = vsub.f32 %v6042, %v6197
  %v6199 = vand.u32 %v6198, 4294901760
  %6200 = vmatpush.msra.mxu0 %v6199
  %v6201 = vand.u32 %v6041, 4294901760
  %v6202 = vsub.f32 %v6041, %v6201
  %v6203 = vand.u32 %v6202, 4294901760
  %6204 = vmatpush.msra.mxu0 %v6203
  %v6205 = vand.u32 %v6048, 4294901760
  %6206 = vmatmul.f32.gmra.mxu0 %v6205
  %v6207 = vpop.f32.mrf.mxu0
  %v6208 = vadd.f32 %v6175, %v6207
  %6209 = vdwg.mxu0
  %6210 = vmatpush.msra.mxu0 0.0
  %6211 = vmatpush.msra.mxu0 0.0
  %6212 = vmatpush.msra.mxu0 0.0
  %6213 = vmatpush.msra.mxu0 0.0
  %6214 = vmatpush.msra.mxu0 0.0
  %6215 = vmatpush.msra.mxu0 0.0
  %6216 = vmatpush.msra.mxu0 0.0
  %6217 = vmatpush.msra.mxu0 0.0
  %6218 = vmatpush.msra.mxu0 0.0
  %6219 = vmatpush.msra.mxu0 0.0
  %6220 = vmatpush.msra.mxu0 0.0
  %6221 = vmatpush.msra.mxu0 0.0
  %v6222 = vand.u32 %v6044, 4294901760
  %6223 = vmatpush.msra.mxu0 %v6222
  %v6224 = vand.u32 %v6043, 4294901760
  %6225 = vmatpush.msra.mxu0 %v6224
  %v6226 = vand.u32 %v6042, 4294901760
  %6227 = vmatpush.msra.mxu0 %v6226
  %v6228 = vand.u32 %v6041, 4294901760
  %6229 = vmatpush.msra.mxu0 %v6228
  %v6230 = vand.u32 %v6048, 4294901760
  %6231 = vmatmul.f32.gmra.mxu0 %v6230
  %v6232 = vpop.f32.mrf.mxu0
  %v6233 = vadd.f32 %v6208, %v6232
  %6234 = vdwg.mxu0
  %6235 = vst.msk [vmem:[%s2] sm:$0xff] %vm488, %v5842
  %6236 = vst.msk [vmem:[%s2 + $0x8] sm:$0xff] %vm488, %v5843
  %6237 = vst.msk [vmem:[%s2 + $0x10] sm:$0xff] %vm488, %v5844
  %6238 = vst.msk [vmem:[%s2 + $0x18] sm:$0xff] %vm488, %v5845
  %6239 = vst.msk [vmem:[%s2 + $0x20] sm:$0xff] %vm488, %v6233
  // Predicated region
  $region10: #{levit_forward.1} parent=0 // pred_check
    _
  $region11: #{levit_forward.1} parent=0 // pred_check_branch
    %6241 = sbr.rel (0) target = $region13
  $region12: #{levit_forward.1} parent=0 // pred_region
    _
  $region13: #{levit_forward.1} parent=0 // pred_fallthru
    _
  // Predicated region
  $region14: #{levit_forward.1} parent=0 // pred_check
    _
  $region15: #{levit_forward.1} parent=0 // pred_check_branch
    %6243 = sbr.rel (0) target = $region17
  $region16: #{levit_forward.1} parent=0 // pred_region
    _
  $region17: #{levit_forward.1} parent=0 // pred_fallthru
    _

</llo_original>
